<compile_context>
chip_gen: v7x
topology: tpu7x:2x2x1
jax: 0.10.0
libtpu: 0.0.40
codegen_flags: <defaults>
</compile_context>

<pallas_src>
import functools

import jax
import jax.numpy as jnp
from jax.experimental import pallas as pl
from jax.experimental.pallas import tpu as pltpu

Z_DIM = 100          # arg.z_dim in the PyTorch module
_K5 = 5              # conv kernel size
_PAD = 2             # 'same' padding for 5x5
_VMEM_LIMIT = 32 * 1024 * 1024  # safe scoped-VMEM budget on v5e/v6e/v7x


def _round_up(x, m):
    return ((x + m - 1) // m) * m


# --------------------------------------------------------------------------- kernels
def _matmul_bias_relu_kernel(x_ref, w_ref, b_ref, o_ref, acc_ref, *, relu):
    """Tiled y = relu?(x @ w + b).  Grid = (M tiles, K tiles); K is a reduction."""
    k = pl.program_id(1)

    @pl.when(k == 0)
    def _init():
        acc_ref[...] = jnp.zeros_like(acc_ref)

    acc_ref[...] += jnp.dot(x_ref[...], w_ref[...],
                            preferred_element_type=jnp.float32)

    @pl.when(k == pl.num_programs(1) - 1)
    def _finish():
        y = acc_ref[...] + b_ref[...]
        if relu:
            y = jnp.maximum(y, 0.0)
        o_ref[...] = y.astype(o_ref.dtype)


def _conv_relu_pool_kernel(a_ref, b_ref, c_ref, d_ref, w_ref, bias_ref, o_ref,
                           acc_a, acc_b, acc_c, acc_d):
    """Fused conv(im2col-matmul) + bias + ReLU + 2x2 max-pool.

    a/b/c/d are the im2col patch rows of the four corners of every 2x2 pool
    window; they share the resident weight tile.  Grid = (M tiles, K tiles).
    """
    k = pl.program_id(1)

    @pl.when(k == 0)
    def _init():
        acc_a[...] = jnp.zeros_like(acc_a)
        acc_b[...] = jnp.zeros_like(acc_b)
        acc_c[...] = jnp.zeros_like(acc_c)
        acc_d[...] = jnp.zeros_like(acc_d)

    w = w_ref[...]
    acc_a[...] += jnp.dot(a_ref[...], w, preferred_element_type=jnp.float32)
    acc_b[...] += jnp.dot(b_ref[...], w, preferred_element_type=jnp.float32)
    acc_c[...] += jnp.dot(c_ref[...], w, preferred_element_type=jnp.float32)
    acc_d[...] += jnp.dot(d_ref[...], w, preferred_element_type=jnp.float32)

    @pl.when(k == pl.num_programs(1) - 1)
    def _finish():
        # maxpool(relu(x + b)) == relu(max(x) + b): relu is monotone and the bias
        # is shared by all four corners, so bias + ReLU go after the 4-way max.
        m = jnp.maximum(jnp.maximum(acc_a[...], acc_b[...]),
                        jnp.maximum(acc_c[...], acc_d[...]))
        o_ref[...] = jnp.maximum(m + bias_ref[...], 0.0).astype(o_ref.dtype)


# ------------------------------------------------------------------ wrapper-side glue
def _im2col_full(x, k=_K5, pad=_PAD):
    """x: (B,H,W,C) -> (B,H,W,k*k*C) stride-1 'same' patches, (di,dj,c) ordering."""
    B, H, W, C = x.shape
    xp = jnp.pad(x, ((0, 0), (pad, pad), (pad, pad), (0, 0)))
    taps = []
    for di in range(k):
        for dj in range(k):
            taps.append(xp[:, di:di + H, dj:dj + W, :])
    patches = jnp.stack(taps, axis=3)                    # (B,H,W,k*k,C)
    return patches.reshape(B, H, W, k * k * C)


def _pool_parities(patches):
    """(B,H,W,K) -> 4 matrices (B*(H//2)*(W//2), K), one per 2x2-window corner."""
    B, H, W, K = patches.shape
    M = B * (H // 2) * (W // 2)
    return [patches[:, pi::2, pj::2, :].reshape(M, K)
            for pi in (0, 1) for pj in (0, 1)]


def _w_as_matrix(w):
    """PyTorch conv weight (Cout,Cin,kh,kw) -> (kh*kw*Cin, Cout) matmul weight."""
    Cout, Cin, kh, kw = w.shape
    return jnp.transpose(w, (2, 3, 1, 0)).reshape(kh * kw * Cin, Cout)


# ------------------------------------------------------------------ pallas entrypoints
def pallas_linear(x, w, b, *, relu, out_dtype=jnp.float32, tm_max=256, tk_max=512):
    """y = relu?(x @ w + b), tiled over (M, K), bf16 operands, f32 accumulation."""
    M, K = x.shape
    N = w.shape[1]
    tm = min(tm_max, _round_up(M, 32))
    tk = min(tk_max, _round_up(K, 128))
    Mp, Kp = _round_up(M, tm), _round_up(K, tk)

    xp = jnp.pad(x.astype(jnp.bfloat16), ((0, Mp - M), (0, Kp - K)))
    wp = jnp.pad(w.astype(jnp.bfloat16), ((0, Kp - K), (0, 0)))
    bp = b.reshape(1, N).astype(jnp.float32)

    out = pl.pallas_call(
        functools.partial(_matmul_bias_relu_kernel, relu=relu),
        out_shape=jax.ShapeDtypeStruct((Mp, N), out_dtype),
        grid=(Mp // tm, Kp // tk),
        in_specs=[
            pl.BlockSpec((tm, tk), lambda i, k: (i, k)),
            pl.BlockSpec((tk, N), lambda i, k: (k, 0)),
            pl.BlockSpec((1, N), lambda i, k: (0, 0)),
        ],
        out_specs=pl.BlockSpec((tm, N), lambda i, k: (i, 0)),
        scratch_shapes=[pltpu.VMEM((tm, N), jnp.float32)],
        compiler_params=pltpu.CompilerParams(
            dimension_semantics=("parallel", "arbitrary"),
            vmem_limit_bytes=_VMEM_LIMIT),
    )(xp, wp, bp)
    return out[:M]


def pallas_conv5x5_relu_pool(x, w, b, *, out_dtype=jnp.bfloat16,
                             tm_max=256, tk_max=512):
    """Fused Conv2d(5x5, pad=2) + ReLU + MaxPool2x2.  x: NHWC, w: (Cout,Cin,5,5)."""
    B, H, W, Cin = x.shape
    Cout = w.shape[0]
    Ho, Wo = H // 2, W // 2

    parities = _pool_parities(_im2col_full(x.astype(jnp.bfloat16)))   # 4 x (M, K)
    M, K = parities[0].shape
    w_mat = _w_as_matrix(w).astype(jnp.bfloat16)

    tm = min(tm_max, _round_up(M, 32))
    tk = min(tk_max, _round_up(K, 128))
    Mp, Kp = _round_up(M, tm), _round_up(K, tk)

    parities = [jnp.pad(p, ((0, Mp - M), (0, Kp - K))) for p in parities]
    wp = jnp.pad(w_mat, ((0, Kp - K), (0, 0)))
    bp = b.reshape(1, Cout).astype(jnp.float32)

    out = pl.pallas_call(
        _conv_relu_pool_kernel,
        out_shape=jax.ShapeDtypeStruct((Mp, Cout), out_dtype),
        grid=(Mp // tm, Kp // tk),
        in_specs=[pl.BlockSpec((tm, tk), lambda i, k: (i, k)) for _ in range(4)]
                + [pl.BlockSpec((tk, Cout), lambda i, k: (k, 0)),
                   pl.BlockSpec((1, Cout), lambda i, k: (0, 0))],
        out_specs=pl.BlockSpec((tm, Cout), lambda i, k: (i, 0)),
        scratch_shapes=[pltpu.VMEM((tm, Cout), jnp.float32) for _ in range(4)],
        compiler_params=pltpu.CompilerParams(
            dimension_semantics=("parallel", "arbitrary"),
            vmem_limit_bytes=_VMEM_LIMIT),
    )(*parities, wp, bp)
    return out[:M].reshape(B, Ho, Wo, Cout)


# ------------------------------------------------------------------- pure-JAX reference
def _conv_relu_pool_ref(x, w, b, *, out_dtype=jnp.bfloat16):
    """Independent reference: plain im2col matmul -> bias -> ReLU -> reshape maxpool."""
    B, H, W, Cin = x.shape
    Cout = w.shape[0]
    patches = _im2col_full(x.astype(jnp.bfloat16)).reshape(B * H * W, -1)
    w_mat = _w_as_matrix(w).astype(jnp.bfloat16)
    y = jnp.dot(patches, w_mat, preferred_element_type=jnp.float32)
    y = jnp.maximum(y + b.astype(jnp.float32)[None, :], 0.0).reshape(B, H, W, Cout)
    y = jnp.max(y.reshape(B, H // 2, 2, W // 2, 2, Cout), axis=(2, 4))
    return y.astype(out_dtype)


def _linear_ref(x, w, b, *, relu, out_dtype=jnp.float32):
    y = jnp.dot(x.astype(jnp.bfloat16), w.astype(jnp.bfloat16),
                preferred_element_type=jnp.float32) + b.astype(jnp.float32)[None, :]
    if relu:
        y = jnp.maximum(y, 0.0)
    return y.astype(out_dtype)


# ----------------------------------------------------------------------------- forward
def private_encoder_forward(params, x, use_pallas=True):
    B = x.shape[0]
    x = jnp.broadcast_to(x, (B, 3, 28, 28)).astype(jnp.float32)   # torch .expand
    x = jnp.transpose(x, (0, 2, 3, 1))                            # NCHW -> NHWC

    conv = pallas_conv5x5_relu_pool if use_pallas else _conv_relu_pool_ref
    linear = pallas_linear if use_pallas else _linear_ref

    h = conv(x, params["conv1_w"], params["conv1_b"])   # (B, 14, 14, 32) bf16
    h = conv(h, params["conv2_w"], params["conv2_b"])   # (B,  7,  7, 64) bf16

    # PyTorch flattens NCHW (C, H, W) order -> keep FC weight-layout compatibility.
    flat = jnp.transpose(h, (0, 3, 1, 2)).reshape(B, -1)          # (B, 3136)
    z = linear(flat, params["fc_w"], params["fc_b"], relu=True)   # (B, z_dim) f32
    return z


def init_params(key, z_dim=Z_DIM, scale=0.05):
    ks = jax.random.split(key, 6)
    return dict(
        conv1_w=scale * jax.random.normal(ks[0], (32, 3, 5, 5), jnp.float32),
        conv1_b=scale * jax.random.normal(ks[1], (32,), jnp.float32),
        conv2_w=scale * jax.random.normal(ks[2], (64, 32, 5, 5), jnp.float32),
        conv2_b=scale * jax.random.normal(ks[3], (64,), jnp.float32),
        fc_w=scale * jax.random.normal(ks[4], (7 * 7 * 64, z_dim), jnp.float32),
        fc_b=scale * jax.random.normal(ks[5], (z_dim,), jnp.float32),
    )


# -------------------------------------------------------------------------------- main
if __name__ == "__main__":
    root = jax.random.PRNGKey(0)
    params = init_params(root)
    images = jax.random.normal(root, (2, 1, 28, 28), dtype=jnp.float32)  # MNIST-like

    fwd = jax.jit(functools.partial(private_encoder_forward, use_pallas=True))
    z = jax.block_until_ready(fwd(params, images))

    assert z.shape == (2, Z_DIM)
    assert bool(jnp.all(jnp.isfinite(z)))

    ref_fwd = jax.jit(functools.partial(private_encoder_forward, use_pallas=False))
    z_ref = jax.block_until_ready(ref_fwd(params, images))
    assert jnp.allclose(z, z_ref, rtol=1e-2, atol=1e-2), "mismatch vs JAX reference"

    print("KERNEL_OK")
</pallas_src>

<mosaic_0001>
module attributes {stable_mosaic.version = 11 : i64} {
  func.func @_conv_relu_pool_kernel(%arg0: i32, %arg1: i32, %arg2: memref<256x128xbf16, #tpu.memory_space<vmem>>, %arg3: memref<256x128xbf16, #tpu.memory_space<vmem>>, %arg4: memref<256x128xbf16, #tpu.memory_space<vmem>>, %arg5: memref<256x128xbf16, #tpu.memory_space<vmem>>, %arg6: memref<128x32xbf16, #tpu.memory_space<vmem>>, %arg7: memref<1x32xf32, #tpu.memory_space<vmem>>, %arg8: memref<256x32xbf16, #tpu.memory_space<vmem>>, %arg9: memref<256x32xf32, #tpu.memory_space<vmem>>, %arg10: memref<256x32xf32, #tpu.memory_space<vmem>>, %arg11: memref<256x32xf32, #tpu.memory_space<vmem>>, %arg12: memref<256x32xf32, #tpu.memory_space<vmem>>) attributes {dimension_semantics = [#tpu.dimension_semantics<parallel>, #tpu.dimension_semantics<arbitrary>], iteration_bounds = array<i64: 2, 1>, scalar_prefetch = 0 : i64, scratch_operands = 4 : i64, tpu.core_type = #tpu.core_type<tc>, window_params = [{transform_indices = @transform_0, window_bounds = array<i64: 256, 128>}, {transform_indices = @transform_1, window_bounds = array<i64: 256, 128>}, {transform_indices = @transform_2, window_bounds = array<i64: 256, 128>}, {transform_indices = @transform_3, window_bounds = array<i64: 256, 128>}, {transform_indices = @transform_4, window_bounds = array<i64: 128, 32>}, {pipeline_mode = #tpu.pipeline_mode<synchronous>, transform_indices = @transform_5, window_bounds = array<i64: 1, 32>}, {transform_indices = @transform_6, window_bounds = array<i64: 256, 32>}]} {
    %c0_i32 = arith.constant 0 : i32
    %0 = arith.cmpi eq, %arg1, %c0_i32 : i32
    %1 = arith.extui %0 : i1 to i32
    %c0_i32_0 = arith.constant 0 : i32
    %2 = arith.cmpi ne, %1, %c0_i32_0 : i32
    scf.if %2 {
      %cst_31 = arith.constant 0.000000e+00 : f32
      %27 = vector.broadcast %cst_31 : f32 to vector<256x32xf32>
      %c0_32 = arith.constant 0 : index
      %c0_33 = arith.constant 0 : index
      %28 = vector.load %arg9[%c0_32, %c0_33] : memref<256x32xf32, #tpu.memory_space<vmem>>, vector<256x32xf32>
      tpu.vector_store %arg9[%c0_32, %c0_33], %27 {strides = array<i32>} : memref<256x32xf32, #tpu.memory_space<vmem>>, vector<256x32xf32>,
      %cst_34 = arith.constant 0.000000e+00 : f32
      %29 = vector.broadcast %cst_34 : f32 to vector<256x32xf32>
      %c0_35 = arith.constant 0 : index
      %c0_36 = arith.constant 0 : index
      %30 = vector.load %arg10[%c0_35, %c0_36] : memref<256x32xf32, #tpu.memory_space<vmem>>, vector<256x32xf32>
      tpu.vector_store %arg10[%c0_35, %c0_36], %29 {strides = array<i32>} : memref<256x32xf32, #tpu.memory_space<vmem>>, vector<256x32xf32>,
      %cst_37 = arith.constant 0.000000e+00 : f32
      %31 = vector.broadcast %cst_37 : f32 to vector<256x32xf32>
      %c0_38 = arith.constant 0 : index
      %c0_39 = arith.constant 0 : index
      %32 = vector.load %arg11[%c0_38, %c0_39] : memref<256x32xf32, #tpu.memory_space<vmem>>, vector<256x32xf32>
      tpu.vector_store %arg11[%c0_38, %c0_39], %31 {strides = array<i32>} : memref<256x32xf32, #tpu.memory_space<vmem>>, vector<256x32xf32>,
      %cst_40 = arith.constant 0.000000e+00 : f32
      %33 = vector.broadcast %cst_40 : f32 to vector<256x32xf32>
      %c0_41 = arith.constant 0 : index
      %c0_42 = arith.constant 0 : index
      %34 = vector.load %arg12[%c0_41, %c0_42] : memref<256x32xf32, #tpu.memory_space<vmem>>, vector<256x32xf32>
      tpu.vector_store %arg12[%c0_41, %c0_42], %33 {strides = array<i32>} : memref<256x32xf32, #tpu.memory_space<vmem>>, vector<256x32xf32>,
    } else {
    }
    %c0 = arith.constant 0 : index
    %c0_1 = arith.constant 0 : index
    %3 = vector.load %arg6[%c0, %c0_1] : memref<128x32xbf16, #tpu.memory_space<vmem>>, vector<128x32xbf16>
    %c0_2 = arith.constant 0 : index
    %c0_3 = arith.constant 0 : index
    %4 = vector.load %arg9[%c0_2, %c0_3] : memref<256x32xf32, #tpu.memory_space<vmem>>, vector<256x32xf32>
    %c0_4 = arith.constant 0 : index
    %c0_5 = arith.constant 0 : index
    %5 = vector.load %arg2[%c0_4, %c0_5] : memref<256x128xbf16, #tpu.memory_space<vmem>>, vector<256x128xbf16>
    %cst = arith.constant dense<0.000000e+00> : vector<256x32xf32>
    %6 = tpu.matmul %5, %3, %cst {dimension_numbers = #tpu.dot_dimension_numbers<[1], [0], [0], [1], [0, 0, 1, 1], [], []>} : vector<256x128xbf16>, vector<128x32xbf16>, vector<256x32xf32> -> vector<256x32xf32>
    %7 = arith.addf %4, %6 : vector<256x32xf32>
    %c0_6 = arith.constant 0 : index
    %c0_7 = arith.constant 0 : index
    %8 = vector.load %arg9[%c0_6, %c0_7] : memref<256x32xf32, #tpu.memory_space<vmem>>, vector<256x32xf32>
    tpu.vector_store %arg9[%c0_6, %c0_7], %7 {strides = array<i32>} : memref<256x32xf32, #tpu.memory_space<vmem>>, vector<256x32xf32>,
    %c0_8 = arith.constant 0 : index
    %c0_9 = arith.constant 0 : index
    %9 = vector.load %arg10[%c0_8, %c0_9] : memref<256x32xf32, #tpu.memory_space<vmem>>, vector<256x32xf32>
    %c0_10 = arith.constant 0 : index
    %c0_11 = arith.constant 0 : index
    %10 = vector.load %arg3[%c0_10, %c0_11] : memref<256x128xbf16, #tpu.memory_space<vmem>>, vector<256x128xbf16>
    %cst_12 = arith.constant dense<0.000000e+00> : vector<256x32xf32>
    %11 = tpu.matmul %10, %3, %cst_12 {dimension_numbers = #tpu.dot_dimension_numbers<[1], [0], [0], [1], [0, 0, 1, 1], [], []>} : vector<256x128xbf16>, vector<128x32xbf16>, vector<256x32xf32> -> vector<256x32xf32>
    %12 = arith.addf %9, %11 : vector<256x32xf32>
    %c0_13 = arith.constant 0 : index
    %c0_14 = arith.constant 0 : index
    %13 = vector.load %arg10[%c0_13, %c0_14] : memref<256x32xf32, #tpu.memory_space<vmem>>, vector<256x32xf32>
    tpu.vector_store %arg10[%c0_13, %c0_14], %12 {strides = array<i32>} : memref<256x32xf32, #tpu.memory_space<vmem>>, vector<256x32xf32>,
    %c0_15 = arith.constant 0 : index
    %c0_16 = arith.constant 0 : index
    %14 = vector.load %arg11[%c0_15, %c0_16] : memref<256x32xf32, #tpu.memory_space<vmem>>, vector<256x32xf32>
    %c0_17 = arith.constant 0 : index
    %c0_18 = arith.constant 0 : index
    %15 = vector.load %arg4[%c0_17, %c0_18] : memref<256x128xbf16, #tpu.memory_space<vmem>>, vector<256x128xbf16>
    %cst_19 = arith.constant dense<0.000000e+00> : vector<256x32xf32>
    %16 = tpu.matmul %15, %3, %cst_19 {dimension_numbers = #tpu.dot_dimension_numbers<[1], [0], [0], [1], [0, 0, 1, 1], [], []>} : vector<256x128xbf16>, vector<128x32xbf16>, vector<256x32xf32> -> vector<256x32xf32>
    %17 = arith.addf %14, %16 : vector<256x32xf32>
    %c0_20 = arith.constant 0 : index
    %c0_21 = arith.constant 0 : index
    %18 = vector.load %arg11[%c0_20, %c0_21] : memref<256x32xf32, #tpu.memory_space<vmem>>, vector<256x32xf32>
    tpu.vector_store %arg11[%c0_20, %c0_21], %17 {strides = array<i32>} : memref<256x32xf32, #tpu.memory_space<vmem>>, vector<256x32xf32>,
    %c0_22 = arith.constant 0 : index
    %c0_23 = arith.constant 0 : index
    %19 = vector.load %arg12[%c0_22, %c0_23] : memref<256x32xf32, #tpu.memory_space<vmem>>, vector<256x32xf32>
    %c0_24 = arith.constant 0 : index
    %c0_25 = arith.constant 0 : index
    %20 = vector.load %arg5[%c0_24, %c0_25] : memref<256x128xbf16, #tpu.memory_space<vmem>>, vector<256x128xbf16>
    %cst_26 = arith.constant dense<0.000000e+00> : vector<256x32xf32>
    %21 = tpu.matmul %20, %3, %cst_26 {dimension_numbers = #tpu.dot_dimension_numbers<[1], [0], [0], [1], [0, 0, 1, 1], [], []>} : vector<256x128xbf16>, vector<128x32xbf16>, vector<256x32xf32> -> vector<256x32xf32>
    %22 = arith.addf %19, %21 : vector<256x32xf32>
    %c0_27 = arith.constant 0 : index
    %c0_28 = arith.constant 0 : index
    %23 = vector.load %arg12[%c0_27, %c0_28] : memref<256x32xf32, #tpu.memory_space<vmem>>, vector<256x32xf32>
    tpu.vector_store %arg12[%c0_27, %c0_28], %22 {strides = array<i32>} : memref<256x32xf32, #tpu.memory_space<vmem>>, vector<256x32xf32>,
    %c0_i32_29 = arith.constant 0 : i32
    %24 = arith.cmpi eq, %arg1, %c0_i32_29 : i32
    %25 = arith.extui %24 : i1 to i32
    %c0_i32_30 = arith.constant 0 : i32
    %26 = arith.cmpi ne, %25, %c0_i32_30 : i32
    scf.if %26 {
      %c0_31 = arith.constant 0 : index
      %c0_32 = arith.constant 0 : index
      %27 = vector.load %arg9[%c0_31, %c0_32] : memref<256x32xf32, #tpu.memory_space<vmem>>, vector<256x32xf32>
      %c0_33 = arith.constant 0 : index
      %c0_34 = arith.constant 0 : index
      %28 = vector.load %arg10[%c0_33, %c0_34] : memref<256x32xf32, #tpu.memory_space<vmem>>, vector<256x32xf32>
      %29 = arith.maximumf %27, %28 : vector<256x32xf32>
      %c0_35 = arith.constant 0 : index
      %c0_36 = arith.constant 0 : index
      %30 = vector.load %arg11[%c0_35, %c0_36] : memref<256x32xf32, #tpu.memory_space<vmem>>, vector<256x32xf32>
      %c0_37 = arith.constant 0 : index
      %c0_38 = arith.constant 0 : index
      %31 = vector.load %arg12[%c0_37, %c0_38] : memref<256x32xf32, #tpu.memory_space<vmem>>, vector<256x32xf32>
      %32 = arith.maximumf %30, %31 : vector<256x32xf32>
      %33 = arith.maximumf %29, %32 : vector<256x32xf32>
      %c0_39 = arith.constant 0 : index
      %c0_40 = arith.constant 0 : index
      %34 = vector.load %arg7[%c0_39, %c0_40] : memref<1x32xf32, #tpu.memory_space<vmem>>, vector<1x32xf32>
      %35 = vector.broadcast %34 : vector<1x32xf32> to vector<256x32xf32>
      %36 = arith.addf %33, %35 : vector<256x32xf32>
      %cst_41 = arith.constant 0.000000e+00 : f32
      %37 = vector.broadcast %cst_41 : f32 to vector<256x32xf32>
      %38 = arith.maximumf %36, %37 : vector<256x32xf32>
      %39 = arith.truncf %38 : vector<256x32xf32> to vector<256x32xbf16>
      %c0_42 = arith.constant 0 : index
      %c0_43 = arith.constant 0 : index
      %40 = vector.load %arg8[%c0_42, %c0_43] : memref<256x32xbf16, #tpu.memory_space<vmem>>, vector<256x32xbf16>
      tpu.vector_store %arg8[%c0_42, %c0_43], %39 {strides = array<i32>} : memref<256x32xbf16, #tpu.memory_space<vmem>>, vector<256x32xbf16>,
    } else {
    }
    return
  }
  func.func @transform_0(%arg0: i32, %arg1: i32) -> (i32, i32) {
    %c0_i32 = arith.constant 0 : i32
    return %arg0, %arg1 : i32, i32
  }
  func.func @transform_1(%arg0: i32, %arg1: i32) -> (i32, i32) {
    %c0_i32 = arith.constant 0 : i32
    return %arg0, %arg1 : i32, i32
  }
  func.func @transform_2(%arg0: i32, %arg1: i32) -> (i32, i32) {
    %c0_i32 = arith.constant 0 : i32
    return %arg0, %arg1 : i32, i32
  }
  func.func @transform_3(%arg0: i32, %arg1: i32) -> (i32, i32) {
    %c0_i32 = arith.constant 0 : i32
    return %arg0, %arg1 : i32, i32
  }
  func.func @transform_4(%arg0: i32, %arg1: i32) -> (i32, i32) {
    %c0_i32 = arith.constant 0 : i32
    %c0_i32_0 = arith.constant 0 : i32
    return %arg1, %c0_i32 : i32, i32
  }
  func.func @transform_5(%arg0: i32, %arg1: i32) -> (i32, i32) {
    %c0_i32 = arith.constant 0 : i32
    %c0_i32_0 = arith.constant 0 : i32
    %c0_i32_1 = arith.constant 0 : i32
    return %c0_i32, %c0_i32_0 : i32, i32
  }
  func.func @transform_6(%arg0: i32, %arg1: i32) -> (i32, i32) {
    %c0_i32 = arith.constant 0 : i32
    %c0_i32_0 = arith.constant 0 : i32
    return %arg0, %c0_i32 : i32, i32
  }
}

module attributes {stable_mosaic.version = 11 : i64} {
  func.func @_conv_relu_pool_kernel(%arg0: i32, %arg1: i32, %arg2: memref<128x512xbf16, #tpu.memory_space<vmem>>, %arg3: memref<128x512xbf16, #tpu.memory_space<vmem>>, %arg4: memref<128x512xbf16, #tpu.memory_space<vmem>>, %arg5: memref<128x512xbf16, #tpu.memory_space<vmem>>, %arg6: memref<512x64xbf16, #tpu.memory_space<vmem>>, %arg7: memref<1x64xf32, #tpu.memory_space<vmem>>, %arg8: memref<128x64xbf16, #tpu.memory_space<vmem>>, %arg9: memref<128x64xf32, #tpu.memory_space<vmem>>, %arg10: memref<128x64xf32, #tpu.memory_space<vmem>>, %arg11: memref<128x64xf32, #tpu.memory_space<vmem>>, %arg12: memref<128x64xf32, #tpu.memory_space<vmem>>) attributes {dimension_semantics = [#tpu.dimension_semantics<parallel>, #tpu.dimension_semantics<arbitrary>], iteration_bounds = array<i64: 1, 2>, scalar_prefetch = 0 : i64, scratch_operands = 4 : i64, tpu.core_type = #tpu.core_type<tc>, window_params = [{transform_indices = @transform_0, window_bounds = array<i64: 128, 512>}, {transform_indices = @transform_1, window_bounds = array<i64: 128, 512>}, {transform_indices = @transform_2, window_bounds = array<i64: 128, 512>}, {transform_indices = @transform_3, window_bounds = array<i64: 128, 512>}, {transform_indices = @transform_4, window_bounds = array<i64: 512, 64>}, {pipeline_mode = #tpu.pipeline_mode<synchronous>, transform_indices = @transform_5, window_bounds = array<i64: 1, 64>}, {transform_indices = @transform_6, window_bounds = array<i64: 128, 64>}]} {
    %c0_i32 = arith.constant 0 : i32
    %0 = arith.cmpi eq, %arg1, %c0_i32 : i32
    %1 = arith.extui %0 : i1 to i32
    %c0_i32_0 = arith.constant 0 : i32
    %2 = arith.cmpi ne, %1, %c0_i32_0 : i32
    scf.if %2 {
      %cst_30 = arith.constant 0.000000e+00 : f32
      %27 = vector.broadcast %cst_30 : f32 to vector<128x64xf32>
      %c0_31 = arith.constant 0 : index
      %c0_32 = arith.constant 0 : index
      %28 = vector.load %arg9[%c0_31, %c0_32] : memref<128x64xf32, #tpu.memory_space<vmem>>, vector<128x64xf32>
      tpu.vector_store %arg9[%c0_31, %c0_32], %27 {strides = array<i32>} : memref<128x64xf32, #tpu.memory_space<vmem>>, vector<128x64xf32>,
      %cst_33 = arith.constant 0.000000e+00 : f32
      %29 = vector.broadcast %cst_33 : f32 to vector<128x64xf32>
      %c0_34 = arith.constant 0 : index
      %c0_35 = arith.constant 0 : index
      %30 = vector.load %arg10[%c0_34, %c0_35] : memref<128x64xf32, #tpu.memory_space<vmem>>, vector<128x64xf32>
      tpu.vector_store %arg10[%c0_34, %c0_35], %29 {strides = array<i32>} : memref<128x64xf32, #tpu.memory_space<vmem>>, vector<128x64xf32>,
      %cst_36 = arith.constant 0.000000e+00 : f32
      %31 = vector.broadcast %cst_36 : f32 to vector<128x64xf32>
      %c0_37 = arith.constant 0 : index
      %c0_38 = arith.constant 0 : index
      %32 = vector.load %arg11[%c0_37, %c0_38] : memref<128x64xf32, #tpu.memory_space<vmem>>, vector<128x64xf32>
      tpu.vector_store %arg11[%c0_37, %c0_38], %31 {strides = array<i32>} : memref<128x64xf32, #tpu.memory_space<vmem>>, vector<128x64xf32>,
      %cst_39 = arith.constant 0.000000e+00 : f32
      %33 = vector.broadcast %cst_39 : f32 to vector<128x64xf32>
      %c0_40 = arith.constant 0 : index
      %c0_41 = arith.constant 0 : index
      %34 = vector.load %arg12[%c0_40, %c0_41] : memref<128x64xf32, #tpu.memory_space<vmem>>, vector<128x64xf32>
      tpu.vector_store %arg12[%c0_40, %c0_41], %33 {strides = array<i32>} : memref<128x64xf32, #tpu.memory_space<vmem>>, vector<128x64xf32>,
    } else {
    }
    %c0 = arith.constant 0 : index
    %c0_1 = arith.constant 0 : index
    %3 = vector.load %arg6[%c0, %c0_1] : memref<512x64xbf16, #tpu.memory_space<vmem>>, vector<512x64xbf16>
    %c0_2 = arith.constant 0 : index
    %c0_3 = arith.constant 0 : index
    %4 = vector.load %arg9[%c0_2, %c0_3] : memref<128x64xf32, #tpu.memory_space<vmem>>, vector<128x64xf32>
    %c0_4 = arith.constant 0 : index
    %c0_5 = arith.constant 0 : index
    %5 = vector.load %arg2[%c0_4, %c0_5] : memref<128x512xbf16, #tpu.memory_space<vmem>>, vector<128x512xbf16>
    %cst = arith.constant dense<0.000000e+00> : vector<128x64xf32>
    %6 = tpu.matmul %5, %3, %cst {dimension_numbers = #tpu.dot_dimension_numbers<[1], [0], [0], [1], [0, 0, 1, 1], [], []>} : vector<128x512xbf16>, vector<512x64xbf16>, vector<128x64xf32> -> vector<128x64xf32>
    %7 = arith.addf %4, %6 : vector<128x64xf32>
    %c0_6 = arith.constant 0 : index
    %c0_7 = arith.constant 0 : index
    %8 = vector.load %arg9[%c0_6, %c0_7] : memref<128x64xf32, #tpu.memory_space<vmem>>, vector<128x64xf32>
    tpu.vector_store %arg9[%c0_6, %c0_7], %7 {strides = array<i32>} : memref<128x64xf32, #tpu.memory_space<vmem>>, vector<128x64xf32>,
    %c0_8 = arith.constant 0 : index
    %c0_9 = arith.constant 0 : index
    %9 = vector.load %arg10[%c0_8, %c0_9] : memref<128x64xf32, #tpu.memory_space<vmem>>, vector<128x64xf32>
    %c0_10 = arith.constant 0 : index
    %c0_11 = arith.constant 0 : index
    %10 = vector.load %arg3[%c0_10, %c0_11] : memref<128x512xbf16, #tpu.memory_space<vmem>>, vector<128x512xbf16>
    %cst_12 = arith.constant dense<0.000000e+00> : vector<128x64xf32>
    %11 = tpu.matmul %10, %3, %cst_12 {dimension_numbers = #tpu.dot_dimension_numbers<[1], [0], [0], [1], [0, 0, 1, 1], [], []>} : vector<128x512xbf16>, vector<512x64xbf16>, vector<128x64xf32> -> vector<128x64xf32>
    %12 = arith.addf %9, %11 : vector<128x64xf32>
    %c0_13 = arith.constant 0 : index
    %c0_14 = arith.constant 0 : index
    %13 = vector.load %arg10[%c0_13, %c0_14] : memref<128x64xf32, #tpu.memory_space<vmem>>, vector<128x64xf32>
    tpu.vector_store %arg10[%c0_13, %c0_14], %12 {strides = array<i32>} : memref<128x64xf32, #tpu.memory_space<vmem>>, vector<128x64xf32>,
    %c0_15 = arith.constant 0 : index
    %c0_16 = arith.constant 0 : index
    %14 = vector.load %arg11[%c0_15, %c0_16] : memref<128x64xf32, #tpu.memory_space<vmem>>, vector<128x64xf32>
    %c0_17 = arith.constant 0 : index
    %c0_18 = arith.constant 0 : index
    %15 = vector.load %arg4[%c0_17, %c0_18] : memref<128x512xbf16, #tpu.memory_space<vmem>>, vector<128x512xbf16>
    %cst_19 = arith.constant dense<0.000000e+00> : vector<128x64xf32>
    %16 = tpu.matmul %15, %3, %cst_19 {dimension_numbers = #tpu.dot_dimension_numbers<[1], [0], [0], [1], [0, 0, 1, 1], [], []>} : vector<128x512xbf16>, vector<512x64xbf16>, vector<128x64xf32> -> vector<128x64xf32>
    %17 = arith.addf %14, %16 : vector<128x64xf32>
    %c0_20 = arith.constant 0 : index
    %c0_21 = arith.constant 0 : index
    %18 = vector.load %arg11[%c0_20, %c0_21] : memref<128x64xf32, #tpu.memory_space<vmem>>, vector<128x64xf32>
    tpu.vector_store %arg11[%c0_20, %c0_21], %17 {strides = array<i32>} : memref<128x64xf32, #tpu.memory_space<vmem>>, vector<128x64xf32>,
    %c0_22 = arith.constant 0 : index
    %c0_23 = arith.constant 0 : index
    %19 = vector.load %arg12[%c0_22, %c0_23] : memref<128x64xf32, #tpu.memory_space<vmem>>, vector<128x64xf32>
    %c0_24 = arith.constant 0 : index
    %c0_25 = arith.constant 0 : index
    %20 = vector.load %arg5[%c0_24, %c0_25] : memref<128x512xbf16, #tpu.memory_space<vmem>>, vector<128x512xbf16>
    %cst_26 = arith.constant dense<0.000000e+00> : vector<128x64xf32>
    %21 = tpu.matmul %20, %3, %cst_26 {dimension_numbers = #tpu.dot_dimension_numbers<[1], [0], [0], [1], [0, 0, 1, 1], [], []>} : vector<128x512xbf16>, vector<512x64xbf16>, vector<128x64xf32> -> vector<128x64xf32>
    %22 = arith.addf %19, %21 : vector<128x64xf32>
    %c0_27 = arith.constant 0 : index
    %c0_28 = arith.constant 0 : index
    %23 = vector.load %arg12[%c0_27, %c0_28] : memref<128x64xf32, #tpu.memory_space<vmem>>, vector<128x64xf32>
    tpu.vector_store %arg12[%c0_27, %c0_28], %22 {strides = array<i32>} : memref<128x64xf32, #tpu.memory_space<vmem>>, vector<128x64xf32>,
    %c1_i32 = arith.constant 1 : i32
    %24 = arith.cmpi eq, %arg1, %c1_i32 : i32
    %25 = arith.extui %24 : i1 to i32
    %c0_i32_29 = arith.constant 0 : i32
    %26 = arith.cmpi ne, %25, %c0_i32_29 : i32
    scf.if %26 {
      %c0_30 = arith.constant 0 : index
      %c0_31 = arith.constant 0 : index
      %27 = vector.load %arg9[%c0_30, %c0_31] : memref<128x64xf32, #tpu.memory_space<vmem>>, vector<128x64xf32>
      %c0_32 = arith.constant 0 : index
      %c0_33 = arith.constant 0 : index
      %28 = vector.load %arg10[%c0_32, %c0_33] : memref<128x64xf32, #tpu.memory_space<vmem>>, vector<128x64xf32>
      %29 = arith.maximumf %27, %28 : vector<128x64xf32>
      %c0_34 = arith.constant 0 : index
      %c0_35 = arith.constant 0 : index
      %30 = vector.load %arg11[%c0_34, %c0_35] : memref<128x64xf32, #tpu.memory_space<vmem>>, vector<128x64xf32>
      %c0_36 = arith.constant 0 : index
      %c0_37 = arith.constant 0 : index
      %31 = vector.load %arg12[%c0_36, %c0_37] : memref<128x64xf32, #tpu.memory_space<vmem>>, vector<128x64xf32>
      %32 = arith.maximumf %30, %31 : vector<128x64xf32>
      %33 = arith.maximumf %29, %32 : vector<128x64xf32>
      %c0_38 = arith.constant 0 : index
      %c0_39 = arith.constant 0 : index
      %34 = vector.load %arg7[%c0_38, %c0_39] : memref<1x64xf32, #tpu.memory_space<vmem>>, vector<1x64xf32>
      %35 = vector.broadcast %34 : vector<1x64xf32> to vector<128x64xf32>
      %36 = arith.addf %33, %35 : vector<128x64xf32>
      %cst_40 = arith.constant 0.000000e+00 : f32
      %37 = vector.broadcast %cst_40 : f32 to vector<128x64xf32>
      %38 = arith.maximumf %36, %37 : vector<128x64xf32>
      %39 = arith.truncf %38 : vector<128x64xf32> to vector<128x64xbf16>
      %c0_41 = arith.constant 0 : index
      %c0_42 = arith.constant 0 : index
      %40 = vector.load %arg8[%c0_41, %c0_42] : memref<128x64xbf16, #tpu.memory_space<vmem>>, vector<128x64xbf16>
      tpu.vector_store %arg8[%c0_41, %c0_42], %39 {strides = array<i32>} : memref<128x64xbf16, #tpu.memory_space<vmem>>, vector<128x64xbf16>,
    } else {
    }
    return
  }
  func.func @transform_0(%arg0: i32, %arg1: i32) -> (i32, i32) {
    %c0_i32 = arith.constant 0 : i32
    return %arg0, %arg1 : i32, i32
  }
  func.func @transform_1(%arg0: i32, %arg1: i32) -> (i32, i32) {
    %c0_i32 = arith.constant 0 : i32
    return %arg0, %arg1 : i32, i32
  }
  func.func @transform_2(%arg0: i32, %arg1: i32) -> (i32, i32) {
    %c0_i32 = arith.constant 0 : i32
    return %arg0, %arg1 : i32, i32
  }
  func.func @transform_3(%arg0: i32, %arg1: i32) -> (i32, i32) {
    %c0_i32 = arith.constant 0 : i32
    return %arg0, %arg1 : i32, i32
  }
  func.func @transform_4(%arg0: i32, %arg1: i32) -> (i32, i32) {
    %c0_i32 = arith.constant 0 : i32
    %c0_i32_0 = arith.constant 0 : i32
    return %arg1, %c0_i32 : i32, i32
  }
  func.func @transform_5(%arg0: i32, %arg1: i32) -> (i32, i32) {
    %c0_i32 = arith.constant 0 : i32
    %c0_i32_0 = arith.constant 0 : i32
    %c0_i32_1 = arith.constant 0 : i32
    return %c0_i32, %c0_i32_0 : i32, i32
  }
  func.func @transform_6(%arg0: i32, %arg1: i32) -> (i32, i32) {
    %c0_i32 = arith.constant 0 : i32
    %c0_i32_0 = arith.constant 0 : i32
    return %arg0, %c0_i32 : i32, i32
  }
}

module attributes {stable_mosaic.version = 11 : i64} {
  func.func @_matmul_bias_relu_kernel(%arg0: i32, %arg1: i32, %arg2: memref<32x512xbf16, #tpu.memory_space<vmem>>, %arg3: memref<512x100xbf16, #tpu.memory_space<vmem>>, %arg4: memref<1x100xf32, #tpu.memory_space<vmem>>, %arg5: memref<32x100xf32, #tpu.memory_space<vmem>>, %arg6: memref<32x100xf32, #tpu.memory_space<vmem>>) attributes {dimension_semantics = [#tpu.dimension_semantics<parallel>, #tpu.dimension_semantics<arbitrary>], iteration_bounds = array<i64: 1, 7>, scalar_prefetch = 0 : i64, scratch_operands = 1 : i64, tpu.core_type = #tpu.core_type<tc>, window_params = [{transform_indices = @transform_0, window_bounds = array<i64: 32, 512>}, {transform_indices = @transform_1, window_bounds = array<i64: 512, 100>}, {pipeline_mode = #tpu.pipeline_mode<synchronous>, transform_indices = @transform_2, window_bounds = array<i64: 1, 100>}, {transform_indices = @transform_3, window_bounds = array<i64: 32, 100>}]} {
    %c0_i32 = arith.constant 0 : i32
    %0 = arith.cmpi eq, %arg1, %c0_i32 : i32
    %1 = arith.extui %0 : i1 to i32
    %c0_i32_0 = arith.constant 0 : i32
    %2 = arith.cmpi ne, %1, %c0_i32_0 : i32
    scf.if %2 {
      %cst_9 = arith.constant 0.000000e+00 : f32
      %12 = vector.broadcast %cst_9 : f32 to vector<32x100xf32>
      %c0_10 = arith.constant 0 : index
      %c0_11 = arith.constant 0 : index
      %13 = vector.load %arg6[%c0_10, %c0_11] : memref<32x100xf32, #tpu.memory_space<vmem>>, vector<32x100xf32>
      tpu.vector_store %arg6[%c0_10, %c0_11], %12 {strides = array<i32>} : memref<32x100xf32, #tpu.memory_space<vmem>>, vector<32x100xf32>,
    } else {
    }
    %c0 = arith.constant 0 : index
    %c0_1 = arith.constant 0 : index
    %3 = vector.load %arg6[%c0, %c0_1] : memref<32x100xf32, #tpu.memory_space<vmem>>, vector<32x100xf32>
    %c0_2 = arith.constant 0 : index
    %c0_3 = arith.constant 0 : index
    %4 = vector.load %arg2[%c0_2, %c0_3] : memref<32x512xbf16, #tpu.memory_space<vmem>>, vector<32x512xbf16>
    %c0_4 = arith.constant 0 : index
    %c0_5 = arith.constant 0 : index
    %5 = vector.load %arg3[%c0_4, %c0_5] : memref<512x100xbf16, #tpu.memory_space<vmem>>, vector<512x100xbf16>
    %cst = arith.constant dense<0.000000e+00> : vector<32x100xf32>
    %6 = tpu.matmul %4, %5, %cst {dimension_numbers = #tpu.dot_dimension_numbers<[1], [0], [0], [1], [0, 0, 1, 1], [], []>} : vector<32x512xbf16>, vector<512x100xbf16>, vector<32x100xf32> -> vector<32x100xf32>
    %7 = arith.addf %3, %6 : vector<32x100xf32>
    %c0_6 = arith.constant 0 : index
    %c0_7 = arith.constant 0 : index
    %8 = vector.load %arg6[%c0_6, %c0_7] : memref<32x100xf32, #tpu.memory_space<vmem>>, vector<32x100xf32>
    tpu.vector_store %arg6[%c0_6, %c0_7], %7 {strides = array<i32>} : memref<32x100xf32, #tpu.memory_space<vmem>>, vector<32x100xf32>,
    %c6_i32 = arith.constant 6 : i32
    %9 = arith.cmpi eq, %arg1, %c6_i32 : i32
    %10 = arith.extui %9 : i1 to i32
    %c0_i32_8 = arith.constant 0 : i32
    %11 = arith.cmpi ne, %10, %c0_i32_8 : i32
    scf.if %11 {
      %c0_9 = arith.constant 0 : index
      %c0_10 = arith.constant 0 : index
      %12 = vector.load %arg6[%c0_9, %c0_10] : memref<32x100xf32, #tpu.memory_space<vmem>>, vector<32x100xf32>
      %c0_11 = arith.constant 0 : index
      %c0_12 = arith.constant 0 : index
      %13 = vector.load %arg4[%c0_11, %c0_12] : memref<1x100xf32, #tpu.memory_space<vmem>>, vector<1x100xf32>
      %14 = vector.broadcast %13 : vector<1x100xf32> to vector<32x100xf32>
      %15 = arith.addf %12, %14 : vector<32x100xf32>
      %cst_13 = arith.constant 0.000000e+00 : f32
      %16 = vector.broadcast %cst_13 : f32 to vector<32x100xf32>
      %17 = arith.maximumf %15, %16 : vector<32x100xf32>
      %c0_14 = arith.constant 0 : index
      %c0_15 = arith.constant 0 : index
      %18 = vector.load %arg5[%c0_14, %c0_15] : memref<32x100xf32, #tpu.memory_space<vmem>>, vector<32x100xf32>
      tpu.vector_store %arg5[%c0_14, %c0_15], %17 {strides = array<i32>} : memref<32x100xf32, #tpu.memory_space<vmem>>, vector<32x100xf32>,
    } else {
    }
    return
  }
  func.func @transform_0(%arg0: i32, %arg1: i32) -> (i32, i32) {
    %c0_i32 = arith.constant 0 : i32
    return %arg0, %arg1 : i32, i32
  }
  func.func @transform_1(%arg0: i32, %arg1: i32) -> (i32, i32) {
    %c0_i32 = arith.constant 0 : i32
    %c0_i32_0 = arith.constant 0 : i32
    return %arg1, %c0_i32 : i32, i32
  }
  func.func @transform_2(%arg0: i32, %arg1: i32) -> (i32, i32) {
    %c0_i32 = arith.constant 0 : i32
    %c0_i32_0 = arith.constant 0 : i32
    %c0_i32_1 = arith.constant 0 : i32
    return %c0_i32, %c0_i32_0 : i32, i32
  }
  func.func @transform_3(%arg0: i32, %arg1: i32) -> (i32, i32) {
    %c0_i32 = arith.constant 0 : i32
    %c0_i32_0 = arith.constant 0 : i32
    return %arg0, %c0_i32 : i32, i32
  }
}

</mosaic_0001>

<llo_original>
// kernel: private_encoder_forward.3
$region0: #{private_encoder_forward.3}
  #allocation0 [shape = 'u32[]', space=smem, size = 0x4, offset = 0x4, fixed_abs, tag = 'smem constant byte address 0x4 - core index']
  #allocation1 [shape = 'u32[144,128]{1,0:T(1,128)}', space=vmem, size = 0x12000, scoped, tag = 'internal scratch']
  #allocation2 [shape = 'f32[256,32]{1,0:T(8,128)}', space=vmem, size = 0x20000, scoped, tag = 'scratch operand']
  #allocation3 [shape = 'f32[256,32]{1,0:T(8,128)}', space=vmem, size = 0x20000, scoped, tag = 'scratch operand']
  #allocation4 [shape = 'f32[256,32]{1,0:T(8,128)}', space=vmem, size = 0x20000, scoped, tag = 'scratch operand']
  #allocation5 [shape = 'f32[256,32]{1,0:T(8,128)}', space=vmem, size = 0x20000, scoped, tag = 'scratch operand']
  %s0 = inlined_call_operand.vmem [shape: bf16[512,128], index: 0, kind: input, shape index: {}]
  %s1 = inlined_call_operand.vmem [shape: bf16[512,128], index: 1, kind: input, shape index: {}]
  %s2 = inlined_call_operand.vmem [shape: bf16[512,128], index: 2, kind: input, shape index: {}]
  %s3 = inlined_call_operand.vmem [shape: bf16[512,128], index: 3, kind: input, shape index: {}]
  %s4 = inlined_call_operand.vmem [shape: bf16[128,32], index: 4, kind: input, shape index: {}]
  %s5 = inlined_call_operand.vmem [shape: f32[1,32], index: 5, kind: input, shape index: {}]
  %s6 = inlined_call_operand.vmem [shape: bf16[512,32], index: 6, kind: output, shape index: {}]
  %s7 = sld [smem:[#allocation0]]
  $region65: #{private_encoder_forward.3} parent=0
    _
  %s9 = ssub.s32 1, %s7
  %s10 = scalar_select 0, %s9, %s7
  loop: start=0, step=1, limit=4
  $region2: #{private_encoder_forward.3} parent=0 // loop_pre_header
    _
  $region3: #{private_encoder_forward.3} parent=0 // loop_header
    %s12 = sphi 0, %s16
    %p13 = scmp.ge.s32.totalorder %s12, 4
    %s19 = sphi 0, %s31
    %s20 = sphi 0, %s27
    %s21 = sphi 0, %s19
    %s22 = sphi 0, %s20
    %s23 = sphi 0, %s21
    %s24 = sphi 0, %s22
    %s36 = sphi 0, %s38
    %s39 = sphi 0, %s36
    %s40 = sphi 0, %s39
    %s56 = sphi 0, %s40
    %s64 = sphi 0, %s66
    %s67 = sphi 0, %s64
    %s68 = sphi 0, %s67
    %s84 = sphi 0, %s68
    %s92 = sphi 0, %s94
    %s95 = sphi 0, %s92
    %s96 = sphi 0, %s95
    %s112 = sphi 0, %s96
    %s120 = sphi 0, %s122
    %s123 = sphi 0, %s120
    %s124 = sphi 0, %s123
    %s140 = sphi 0, %s124
    %s146 = sphi 0, %s148
    %s149 = sphi 0, %s146
    %s150 = sphi 0, %s149
    %s166 = sphi 0, %s150
    %s170 = sphi 0, %s170
    %s172 = sphi 0, %s170
    %s173 = sphi 0, %s172
    %s187 = sphi 0, %s173
    %s193 = sphi 0, %s195
    %s196 = sphi 0, %s193
    %s197 = sphi 0, %s196
    %s213 = sphi 0, %s197
  $region4: #{private_encoder_forward.3} parent=0 // loop_header_branch
    %15 = sbr.rel (%p13) target = $region8
  $region5: #{private_encoder_forward.3} parent=0 // loop_body
    %s17 = ssub.s32 %s12, 1
    %s18 = ssub.s32 %s12, 2
    %s25 = sadd.s32 1, %s20
    %p26 = scmp.ge.s32.totalorder %s25, 1
    %s27 = scalar_select %p26, 0, %s25
    %s28 = sadd.s32 1, %s19
    %s29 = scalar_select %p26, %s28, %s19
    %p30 = scmp.ge.s32.totalorder %s29, 2
    %s31 = scalar_select %p30, 0, %s29
    %s32 = ssub.s32 %s19, %s31
    %s33 = ssub.s32 %s20, %s27
    %s34 = sor.u32 %s32, %s33
    %p35 = scmp.eq.s32.totalorder %s34, 0
    %s37 = sadd.s32 %s36, 1
    %s38 = scalar_select %p35, %s36, %s37
    %p41 = pneg %p35
    %p42 = scmp.eq.s32.totalorder %s12, 1
    %p43 = por %p41, %p42
    %p44 = scmp.ne.s32.totalorder %s36, %s39
    %p45 = scmp.eq.s32.totalorder %s12, 0
    %p46 = por %p44, %p45
    %p47 = scmp.ne.s32.totalorder %s36, %s39
    %p48 = scmp.eq.s32.totalorder %s17, 1
    %p49 = por %p47, %p48
    %p50 = scmp.ne.s32.totalorder %s39, %s40
    %p51 = scmp.eq.s32.totalorder %s17, 0
    %p52 = por %p50, %p51
    %p53 = scmp.ne.s32.totalorder %s39, %s40
    %p54 = scmp.eq.s32.totalorder %s18, 1
    %p55 = por %p53, %p54
    %p57 = scmp.ne.s32.totalorder %s40, %s56
    %p58 = scmp.eq.s32.totalorder %s18, 0
    %p59 = por %p57, %p58
    %s60 = ssub.s32 %s19, %s31
    %s61 = ssub.s32 %s20, %s27
    %s62 = sor.u32 %s60, %s61
    %p63 = scmp.eq.s32.totalorder %s62, 0
    %s65 = sadd.s32 %s64, 1
    %s66 = scalar_select %p63, %s64, %s65
    %p69 = pneg %p63
    %p70 = scmp.eq.s32.totalorder %s12, 1
    %p71 = por %p69, %p70
    %p72 = scmp.ne.s32.totalorder %s64, %s67
    %p73 = scmp.eq.s32.totalorder %s12, 0
    %p74 = por %p72, %p73
    %p75 = scmp.ne.s32.totalorder %s64, %s67
    %p76 = scmp.eq.s32.totalorder %s17, 1
    %p77 = por %p75, %p76
    %p78 = scmp.ne.s32.totalorder %s67, %s68
    %p79 = scmp.eq.s32.totalorder %s17, 0
    %p80 = por %p78, %p79
    %p81 = scmp.ne.s32.totalorder %s67, %s68
    %p82 = scmp.eq.s32.totalorder %s18, 1
    %p83 = por %p81, %p82
    %p85 = scmp.ne.s32.totalorder %s68, %s84
    %p86 = scmp.eq.s32.totalorder %s18, 0
    %p87 = por %p85, %p86
    %s88 = ssub.s32 %s19, %s31
    %s89 = ssub.s32 %s20, %s27
    %s90 = sor.u32 %s88, %s89
    %p91 = scmp.eq.s32.totalorder %s90, 0
    %s93 = sadd.s32 %s92, 1
    %s94 = scalar_select %p91, %s92, %s93
    %p97 = pneg %p91
    %p98 = scmp.eq.s32.totalorder %s12, 1
    %p99 = por %p97, %p98
    %p100 = scmp.ne.s32.totalorder %s92, %s95
    %p101 = scmp.eq.s32.totalorder %s12, 0
    %p102 = por %p100, %p101
    %p103 = scmp.ne.s32.totalorder %s92, %s95
    %p104 = scmp.eq.s32.totalorder %s17, 1
    %p105 = por %p103, %p104
    %p106 = scmp.ne.s32.totalorder %s95, %s96
    %p107 = scmp.eq.s32.totalorder %s17, 0
    %p108 = por %p106, %p107
    %p109 = scmp.ne.s32.totalorder %s95, %s96
    %p110 = scmp.eq.s32.totalorder %s18, 1
    %p111 = por %p109, %p110
    %p113 = scmp.ne.s32.totalorder %s96, %s112
    %p114 = scmp.eq.s32.totalorder %s18, 0
    %p115 = por %p113, %p114
    %s116 = ssub.s32 %s19, %s31
    %s117 = ssub.s32 %s20, %s27
    %s118 = sor.u32 %s116, %s117
    %p119 = scmp.eq.s32.totalorder %s118, 0
    %s121 = sadd.s32 %s120, 1
    %s122 = scalar_select %p119, %s120, %s121
    %p125 = pneg %p119
    %p126 = scmp.eq.s32.totalorder %s12, 1
    %p127 = por %p125, %p126
    %p128 = scmp.ne.s32.totalorder %s120, %s123
    %p129 = scmp.eq.s32.totalorder %s12, 0
    %p130 = por %p128, %p129
    %p131 = scmp.ne.s32.totalorder %s120, %s123
    %p132 = scmp.eq.s32.totalorder %s17, 1
    %p133 = por %p131, %p132
    %p134 = scmp.ne.s32.totalorder %s123, %s124
    %p135 = scmp.eq.s32.totalorder %s17, 0
    %p136 = por %p134, %p135
    %p137 = scmp.ne.s32.totalorder %s123, %s124
    %p138 = scmp.eq.s32.totalorder %s18, 1
    %p139 = por %p137, %p138
    %p141 = scmp.ne.s32.totalorder %s124, %s140
    %p142 = scmp.eq.s32.totalorder %s18, 0
    %p143 = por %p141, %p142
    %s144 = ssub.s32 %s20, %s27
    %p145 = scmp.eq.s32.totalorder %s144, 0
    %s147 = sadd.s32 %s146, 1
    %s148 = scalar_select %p145, %s146, %s147
    %p151 = pneg %p145
    %p152 = scmp.eq.s32.totalorder %s12, 1
    %p153 = por %p151, %p152
    %p154 = scmp.ne.s32.totalorder %s146, %s149
    %p155 = scmp.eq.s32.totalorder %s12, 0
    %p156 = por %p154, %p155
    %p157 = scmp.ne.s32.totalorder %s146, %s149
    %p158 = scmp.eq.s32.totalorder %s17, 1
    %p159 = por %p157, %p158
    %p160 = scmp.ne.s32.totalorder %s149, %s150
    %p161 = scmp.eq.s32.totalorder %s17, 0
    %p162 = por %p160, %p161
    %p163 = scmp.ne.s32.totalorder %s149, %s150
    %p164 = scmp.eq.s32.totalorder %s18, 1
    %p165 = por %p163, %p164
    %p167 = scmp.ne.s32.totalorder %s150, %s166
    %p168 = scmp.eq.s32.totalorder %s18, 0
    %p169 = por %p167, %p168
    %s171 = sadd.s32 %s170, 1
    %p174 = scmp.eq.s32.totalorder %s12, 1
    %p175 = scmp.ne.s32.totalorder %s170, %s172
    %p176 = scmp.eq.s32.totalorder %s12, 0
    %p177 = por %p175, %p176
    %p178 = scmp.ne.s32.totalorder %s170, %s172
    %p179 = scmp.eq.s32.totalorder %s17, 1
    %p180 = por %p178, %p179
    %p181 = scmp.ne.s32.totalorder %s172, %s173
    %p182 = scmp.eq.s32.totalorder %s17, 0
    %p183 = por %p181, %p182
    %p184 = scmp.ne.s32.totalorder %s172, %s173
    %p185 = scmp.eq.s32.totalorder %s18, 1
    %p186 = por %p184, %p185
    %p188 = scmp.ne.s32.totalorder %s173, %s187
    %p189 = scmp.eq.s32.totalorder %s18, 0
    %p190 = por %p188, %p189
    %s191 = ssub.s32 %s19, %s31
    %p192 = scmp.eq.s32.totalorder %s191, 0
    %s194 = sadd.s32 %s193, 1
    %s195 = scalar_select %p192, %s193, %s194
    %p198 = pneg %p192
    %p199 = scmp.eq.s32.totalorder %s12, 1
    %p200 = por %p198, %p199
    %p201 = scmp.ne.s32.totalorder %s193, %s196
    %p202 = scmp.eq.s32.totalorder %s12, 0
    %p203 = por %p201, %p202
    %p204 = scmp.ne.s32.totalorder %s193, %s196
    %p205 = scmp.eq.s32.totalorder %s17, 1
    %p206 = por %p204, %p205
    %p207 = scmp.ne.s32.totalorder %s196, %s197
    %p208 = scmp.eq.s32.totalorder %s17, 0
    %p209 = por %p207, %p208
    %p210 = scmp.ne.s32.totalorder %s196, %s197
    %p211 = scmp.eq.s32.totalorder %s18, 1
    %p212 = por %p210, %p211
    %p214 = scmp.ne.s32.totalorder %s197, %s213
    %p215 = scmp.eq.s32.totalorder %s18, 0
    %p216 = por %p214, %p215
    %p217 = scmp.le.s32.totalorder 1, %s12
    %p218 = scmp.lt.s32.totalorder %s12, 3
    %p219 = pnand %p217, %p218
    %p220 = pneg %p219
    // Predicated region
    $region9: #{private_encoder_forward.3} parent=5 // pred_check
      _
    $region10: #{private_encoder_forward.3} parent=5 // pred_check_branch
      %222 = sbr.rel (%p219) target = $region12
    $region11: #{private_encoder_forward.3} parent=5 // pred_region
      %s223 = ssub.s32 %s12, 1
      // Predicated region
      $region13: #{private_encoder_forward.3} parent=11 // pred_check
        %p224 = pneg %p162
      $region14: #{private_encoder_forward.3} parent=11 // pred_check_branch
        %226 = sbr.rel (%p224) target = $region16
      $region15: #{private_encoder_forward.3} parent=11 // pred_region
        %s227 = smul.u32 16, %s22
        %p228 = scmp.lt.s32.totalorder %s227, 15
        %s229 = scalar_select %p228, %s227, 15
        %s230 = smul.addr %s229, 4
        %s231 = scalar_lea.vmem %s4, %s230
        %s232 = smul.u32 16, %s22
      $region16: #{private_encoder_forward.3} parent=11 // pred_fallthru
        _
      // Predicated region
      $region17: #{private_encoder_forward.3} parent=11 // pred_check
        %p233 = pneg %p183
      $region18: #{private_encoder_forward.3} parent=11 // pred_check_branch
        %235 = sbr.rel (%p233) target = $region20
      $region19: #{private_encoder_forward.3} parent=11 // pred_region
        _
      $region20: #{private_encoder_forward.3} parent=11 // pred_fallthru
        _
    $region12: #{private_encoder_forward.3} parent=5 // pred_fallthru
      _
    %p236 = scmp.lt.s32.totalorder %s12, 2
    // Predicated region
    $region21: #{private_encoder_forward.3} parent=5 // pred_check
      %p237 = pneg %p236
    $region22: #{private_encoder_forward.3} parent=5 // pred_check_branch
      %239 = sbr.rel (%p237) target = $region24
    $region23: #{private_encoder_forward.3} parent=5 // pred_region
      // Predicated region
      $region25: #{private_encoder_forward.3} parent=23 // pred_check
        %p240 = pneg %p46
      $region26: #{private_encoder_forward.3} parent=23 // pred_check_branch
        %242 = sbr.rel (%p240) target = $region28
      $region27: #{private_encoder_forward.3} parent=23 // pred_region
        %s243 = smul.u32 32, %s19
        %p244 = scmp.lt.s32.totalorder %s243, 63
        %s245 = scalar_select %p244, %s243, 63
        %p246 = scmp.lt.s32.totalorder %s20, 0
        %s247 = scalar_select %p246, %s20, 0
        %s248 = sadd.s32 %s247, %s245
        %s249 = smul.addr %s248, 4
        %s250 = scalar_lea.vmem %s0, %s249
        %s251 = smul.u32 32, %s19
      $region28: #{private_encoder_forward.3} parent=23 // pred_fallthru
        _
      // Predicated region
      $region29: #{private_encoder_forward.3} parent=23 // pred_check
        %p252 = pneg %p74
      $region30: #{private_encoder_forward.3} parent=23 // pred_check_branch
        %254 = sbr.rel (%p252) target = $region32
      $region31: #{private_encoder_forward.3} parent=23 // pred_region
        %s255 = smul.u32 32, %s19
        %p256 = scmp.lt.s32.totalorder %s255, 63
        %s257 = scalar_select %p256, %s255, 63
        %p258 = scmp.lt.s32.totalorder %s20, 0
        %s259 = scalar_select %p258, %s20, 0
        %s260 = sadd.s32 %s259, %s257
        %s261 = smul.addr %s260, 4
        %s262 = scalar_lea.vmem %s1, %s261
        %s263 = smul.u32 32, %s19
      $region32: #{private_encoder_forward.3} parent=23 // pred_fallthru
        _
      // Predicated region
      $region33: #{private_encoder_forward.3} parent=23 // pred_check
        %p264 = pneg %p102
      $region34: #{private_encoder_forward.3} parent=23 // pred_check_branch
        %266 = sbr.rel (%p264) target = $region36
      $region35: #{private_encoder_forward.3} parent=23 // pred_region
        %s267 = smul.u32 32, %s19
        %p268 = scmp.lt.s32.totalorder %s267, 63
        %s269 = scalar_select %p268, %s267, 63
        %p270 = scmp.lt.s32.totalorder %s20, 0
        %s271 = scalar_select %p270, %s20, 0
        %s272 = sadd.s32 %s271, %s269
        %s273 = smul.addr %s272, 4
        %s274 = scalar_lea.vmem %s2, %s273
        %s275 = smul.u32 32, %s19
      $region36: #{private_encoder_forward.3} parent=23 // pred_fallthru
        _
      // Predicated region
      $region37: #{private_encoder_forward.3} parent=23 // pred_check
        %p276 = pneg %p130
      $region38: #{private_encoder_forward.3} parent=23 // pred_check_branch
        %278 = sbr.rel (%p276) target = $region40
      $region39: #{private_encoder_forward.3} parent=23 // pred_region
        %s279 = smul.u32 32, %s19
        %p280 = scmp.lt.s32.totalorder %s279, 63
        %s281 = scalar_select %p280, %s279, 63
        %p282 = scmp.lt.s32.totalorder %s20, 0
        %s283 = scalar_select %p282, %s20, 0
        %s284 = sadd.s32 %s283, %s281
        %s285 = smul.addr %s284, 4
        %s286 = scalar_lea.vmem %s3, %s285
        %s287 = smul.u32 32, %s19
      $region40: #{private_encoder_forward.3} parent=23 // pred_fallthru
        _
    $region24: #{private_encoder_forward.3} parent=5 // pred_fallthru
      _
    %p288 = scmp.le.s32.totalorder 1, %s12
    %p289 = scmp.lt.s32.totalorder %s12, 3
    %p290 = pnand %p288, %p289
    %p291 = pneg %p290
    // Predicated region
    $region41: #{private_encoder_forward.3} parent=5 // pred_check
      _
    $region42: #{private_encoder_forward.3} parent=5 // pred_check_branch
      %293 = sbr.rel (%p290) target = $region44
    $region43: #{private_encoder_forward.3} parent=5 // pred_region
      %s294 = ssub.s32 %s12, 1
      %s295 = smul.u32 32, %s21
      %p296 = scmp.lt.s32.totalorder %s295, 63
      %s297 = scalar_select %p296, %s295, 63
      %p298 = scmp.lt.s32.totalorder %s22, 0
      %s299 = scalar_select %p298, %s22, 0
      %s300 = sadd.s32 %s299, %s297
      %s301 = smul.addr %s300, 4
      %s302 = scalar_lea.vmem %s0, %s301
      %p303 = pneg %p52
      %p304 = pneg %p49
      %s305 = smul.u32 32, %s21
      %p306 = scmp.lt.s32.totalorder %s305, 63
      %s307 = scalar_select %p306, %s305, 63
      %p308 = scmp.lt.s32.totalorder %s22, 0
      %s309 = scalar_select %p308, %s22, 0
      %s310 = sadd.s32 %s309, %s307
      %s311 = smul.addr %s310, 4
      %s312 = scalar_lea.vmem %s1, %s311
      %p313 = pneg %p80
      %p314 = pneg %p77
      %s315 = smul.u32 32, %s21
      %p316 = scmp.lt.s32.totalorder %s315, 63
      %s317 = scalar_select %p316, %s315, 63
      %p318 = scmp.lt.s32.totalorder %s22, 0
      %s319 = scalar_select %p318, %s22, 0
      %s320 = sadd.s32 %s319, %s317
      %s321 = smul.addr %s320, 4
      %s322 = scalar_lea.vmem %s2, %s321
      %p323 = pneg %p108
      %p324 = pneg %p105
      %s325 = smul.u32 32, %s21
      %p326 = scmp.lt.s32.totalorder %s325, 63
      %s327 = scalar_select %p326, %s325, 63
      %p328 = scmp.lt.s32.totalorder %s22, 0
      %s329 = scalar_select %p328, %s22, 0
      %s330 = sadd.s32 %s329, %s327
      %s331 = smul.addr %s330, 4
      %s332 = scalar_lea.vmem %s3, %s331
      %p333 = pneg %p136
      %p334 = pneg %p133
      %s335 = smul.u32 16, %s22
      %p336 = scmp.lt.s32.totalorder %s335, 15
      %s337 = scalar_select %p336, %s335, 15
      %s338 = smul.addr %s337, 4
      %s339 = scalar_lea.vmem %s4, %s338
      %p340 = pneg %p162
      %p341 = pneg %p159
      %p342 = pneg %p183
      %p343 = pneg %p180
      %p344 = pneg %p209
      %p345 = pneg %p206
      %s346 = smul.u32 32, %s21
      %p347 = scmp.lt.s32.totalorder %s346, 63
      %s348 = scalar_select %p347, %s346, 63
      %s349 = smul.addr %s348, 4
      %s350 = scalar_lea.vmem %s6, %s349
      %s351 = smul.u32 32, %s21
      %p352 = scmp.lt.s32.totalorder %s351, 63
      %s353 = scalar_select %p352, %s351, 63
      %p354 = scmp.lt.s32.totalorder %s22, 0
      %s355 = scalar_select %p354, %s22, 0
      %s356 = sadd.s32 %s355, %s353
      %s357 = smul.addr %s356, 4
      %s358 = scalar_lea.vmem %s0, %s357
      %s359 = smul.u32 32, %s21
      %s360 = smul.u32 32, %s21
      %p361 = scmp.lt.s32.totalorder %s360, 63
      %s362 = scalar_select %p361, %s360, 63
      %p363 = scmp.lt.s32.totalorder %s22, 0
      %s364 = scalar_select %p363, %s22, 0
      %s365 = sadd.s32 %s364, %s362
      %s366 = smul.addr %s365, 4
      %s367 = scalar_lea.vmem %s1, %s366
      %s368 = smul.u32 32, %s21
      %s369 = smul.u32 32, %s21
      %p370 = scmp.lt.s32.totalorder %s369, 63
      %s371 = scalar_select %p370, %s369, 63
      %p372 = scmp.lt.s32.totalorder %s22, 0
      %s373 = scalar_select %p372, %s22, 0
      %s374 = sadd.s32 %s373, %s371
      %s375 = smul.addr %s374, 4
      %s376 = scalar_lea.vmem %s2, %s375
      %s377 = smul.u32 32, %s21
      %s378 = smul.u32 32, %s21
      %p379 = scmp.lt.s32.totalorder %s378, 63
      %s380 = scalar_select %p379, %s378, 63
      %p381 = scmp.lt.s32.totalorder %s22, 0
      %s382 = scalar_select %p381, %s22, 0
      %s383 = sadd.s32 %s382, %s380
      %s384 = smul.addr %s383, 4
      %s385 = scalar_lea.vmem %s3, %s384
      %s386 = smul.u32 32, %s21
      %s387 = smul.u32 16, %s22
      %p388 = scmp.lt.s32.totalorder %s387, 15
      %s389 = scalar_select %p388, %s387, 15
      %s390 = smul.addr %s389, 4
      %s391 = scalar_lea.vmem %s4, %s390
      %s392 = smul.u32 16, %s22
      %s393 = smul.u32 32, %s21
      %p394 = scmp.lt.s32.totalorder %s393, 63
      %s395 = scalar_select %p394, %s393, 63
      %s396 = smul.addr %s395, 4
      %s397 = scalar_lea.vmem %s6, %s396
      %s398 = smul.u32 32, %s21
      %p400 = scmp.eq.s32.totalorder %s22, 0
      // Predicated region
      $region45: #{private_encoder_forward.3} parent=43 // pred_check
        %p401 = pneg %p400
      $region46: #{private_encoder_forward.3} parent=43 // pred_check_branch
        %403 = sbr.rel (%p401) target = $region48
      $region47: #{private_encoder_forward.3} parent=43 // pred_region
        %vm404 = vcmask 261120
        %405 = vst.msk [vmem:[#allocation2] sm:$0xff] %vm404, 0.0
        %406 = vst.msk [vmem:[#allocation2 + $0x8] sm:$0xff] %vm404, 0.0
        %407 = vst.msk [vmem:[#allocation2 + $0x10] sm:$0xff] %vm404, 0.0
        %408 = vst.msk [vmem:[#allocation2 + $0x18] sm:$0xff] %vm404, 0.0
        %409 = vst.msk [vmem:[#allocation2 + $0x20] sm:$0xff] %vm404, 0.0
        %410 = vst.msk [vmem:[#allocation2 + $0x28] sm:$0xff] %vm404, 0.0
        %411 = vst.msk [vmem:[#allocation2 + $0x30] sm:$0xff] %vm404, 0.0
        %412 = vst.msk [vmem:[#allocation2 + $0x38] sm:$0xff] %vm404, 0.0
        %413 = vst.msk [vmem:[#allocation2 + $0x40] sm:$0xff] %vm404, 0.0
        %414 = vst.msk [vmem:[#allocation2 + $0x48] sm:$0xff] %vm404, 0.0
        %415 = vst.msk [vmem:[#allocation2 + $0x50] sm:$0xff] %vm404, 0.0
        %416 = vst.msk [vmem:[#allocation2 + $0x58] sm:$0xff] %vm404, 0.0
        %417 = vst.msk [vmem:[#allocation2 + $0x60] sm:$0xff] %vm404, 0.0
        %418 = vst.msk [vmem:[#allocation2 + $0x68] sm:$0xff] %vm404, 0.0
        %419 = vst.msk [vmem:[#allocation2 + $0x70] sm:$0xff] %vm404, 0.0
        %420 = vst.msk [vmem:[#allocation2 + $0x78] sm:$0xff] %vm404, 0.0
        %421 = vst.msk [vmem:[#allocation2 + $0x80] sm:$0xff] %vm404, 0.0
        %422 = vst.msk [vmem:[#allocation2 + $0x88] sm:$0xff] %vm404, 0.0
        %423 = vst.msk [vmem:[#allocation2 + $0x90] sm:$0xff] %vm404, 0.0
        %424 = vst.msk [vmem:[#allocation2 + $0x98] sm:$0xff] %vm404, 0.0
        %425 = vst.msk [vmem:[#allocation2 + $0xa0] sm:$0xff] %vm404, 0.0
        %426 = vst.msk [vmem:[#allocation2 + $0xa8] sm:$0xff] %vm404, 0.0
        %427 = vst.msk [vmem:[#allocation2 + $0xb0] sm:$0xff] %vm404, 0.0
        %428 = vst.msk [vmem:[#allocation2 + $0xb8] sm:$0xff] %vm404, 0.0
        %429 = vst.msk [vmem:[#allocation2 + $0xc0] sm:$0xff] %vm404, 0.0
        %430 = vst.msk [vmem:[#allocation2 + $0xc8] sm:$0xff] %vm404, 0.0
        %431 = vst.msk [vmem:[#allocation2 + $0xd0] sm:$0xff] %vm404, 0.0
        %432 = vst.msk [vmem:[#allocation2 + $0xd8] sm:$0xff] %vm404, 0.0
        %433 = vst.msk [vmem:[#allocation2 + $0xe0] sm:$0xff] %vm404, 0.0
        %434 = vst.msk [vmem:[#allocation2 + $0xe8] sm:$0xff] %vm404, 0.0
        %435 = vst.msk [vmem:[#allocation2 + $0xf0] sm:$0xff] %vm404, 0.0
        %436 = vst.msk [vmem:[#allocation2 + $0xf8] sm:$0xff] %vm404, 0.0
        %437 = vst.msk [vmem:[#allocation3] sm:$0xff] %vm404, 0.0
        %438 = vst.msk [vmem:[#allocation3 + $0x8] sm:$0xff] %vm404, 0.0
        %439 = vst.msk [vmem:[#allocation3 + $0x10] sm:$0xff] %vm404, 0.0
        %440 = vst.msk [vmem:[#allocation3 + $0x18] sm:$0xff] %vm404, 0.0
        %441 = vst.msk [vmem:[#allocation3 + $0x20] sm:$0xff] %vm404, 0.0
        %442 = vst.msk [vmem:[#allocation3 + $0x28] sm:$0xff] %vm404, 0.0
        %443 = vst.msk [vmem:[#allocation3 + $0x30] sm:$0xff] %vm404, 0.0
        %444 = vst.msk [vmem:[#allocation3 + $0x38] sm:$0xff] %vm404, 0.0
        %445 = vst.msk [vmem:[#allocation3 + $0x40] sm:$0xff] %vm404, 0.0
        %446 = vst.msk [vmem:[#allocation3 + $0x48] sm:$0xff] %vm404, 0.0
        %447 = vst.msk [vmem:[#allocation3 + $0x50] sm:$0xff] %vm404, 0.0
        %448 = vst.msk [vmem:[#allocation3 + $0x58] sm:$0xff] %vm404, 0.0
        %449 = vst.msk [vmem:[#allocation3 + $0x60] sm:$0xff] %vm404, 0.0
        %450 = vst.msk [vmem:[#allocation3 + $0x68] sm:$0xff] %vm404, 0.0
        %451 = vst.msk [vmem:[#allocation3 + $0x70] sm:$0xff] %vm404, 0.0
        %452 = vst.msk [vmem:[#allocation3 + $0x78] sm:$0xff] %vm404, 0.0
        %453 = vst.msk [vmem:[#allocation3 + $0x80] sm:$0xff] %vm404, 0.0
        %454 = vst.msk [vmem:[#allocation3 + $0x88] sm:$0xff] %vm404, 0.0
        %455 = vst.msk [vmem:[#allocation3 + $0x90] sm:$0xff] %vm404, 0.0
        %456 = vst.msk [vmem:[#allocation3 + $0x98] sm:$0xff] %vm404, 0.0
        %457 = vst.msk [vmem:[#allocation3 + $0xa0] sm:$0xff] %vm404, 0.0
        %458 = vst.msk [vmem:[#allocation3 + $0xa8] sm:$0xff] %vm404, 0.0
        %459 = vst.msk [vmem:[#allocation3 + $0xb0] sm:$0xff] %vm404, 0.0
        %460 = vst.msk [vmem:[#allocation3 + $0xb8] sm:$0xff] %vm404, 0.0
        %461 = vst.msk [vmem:[#allocation3 + $0xc0] sm:$0xff] %vm404, 0.0
        %462 = vst.msk [vmem:[#allocation3 + $0xc8] sm:$0xff] %vm404, 0.0
        %463 = vst.msk [vmem:[#allocation3 + $0xd0] sm:$0xff] %vm404, 0.0
        %464 = vst.msk [vmem:[#allocation3 + $0xd8] sm:$0xff] %vm404, 0.0
        %465 = vst.msk [vmem:[#allocation3 + $0xe0] sm:$0xff] %vm404, 0.0
        %466 = vst.msk [vmem:[#allocation3 + $0xe8] sm:$0xff] %vm404, 0.0
        %467 = vst.msk [vmem:[#allocation3 + $0xf0] sm:$0xff] %vm404, 0.0
        %468 = vst.msk [vmem:[#allocation3 + $0xf8] sm:$0xff] %vm404, 0.0
        %469 = vst.msk [vmem:[#allocation4] sm:$0xff] %vm404, 0.0
        %470 = vst.msk [vmem:[#allocation4 + $0x8] sm:$0xff] %vm404, 0.0
        %471 = vst.msk [vmem:[#allocation4 + $0x10] sm:$0xff] %vm404, 0.0
        %472 = vst.msk [vmem:[#allocation4 + $0x18] sm:$0xff] %vm404, 0.0
        %473 = vst.msk [vmem:[#allocation4 + $0x20] sm:$0xff] %vm404, 0.0
        %474 = vst.msk [vmem:[#allocation4 + $0x28] sm:$0xff] %vm404, 0.0
        %475 = vst.msk [vmem:[#allocation4 + $0x30] sm:$0xff] %vm404, 0.0
        %476 = vst.msk [vmem:[#allocation4 + $0x38] sm:$0xff] %vm404, 0.0
        %477 = vst.msk [vmem:[#allocation4 + $0x40] sm:$0xff] %vm404, 0.0
        %478 = vst.msk [vmem:[#allocation4 + $0x48] sm:$0xff] %vm404, 0.0
        %479 = vst.msk [vmem:[#allocation4 + $0x50] sm:$0xff] %vm404, 0.0
        %480 = vst.msk [vmem:[#allocation4 + $0x58] sm:$0xff] %vm404, 0.0
        %481 = vst.msk [vmem:[#allocation4 + $0x60] sm:$0xff] %vm404, 0.0
        %482 = vst.msk [vmem:[#allocation4 + $0x68] sm:$0xff] %vm404, 0.0
        %483 = vst.msk [vmem:[#allocation4 + $0x70] sm:$0xff] %vm404, 0.0
        %484 = vst.msk [vmem:[#allocation4 + $0x78] sm:$0xff] %vm404, 0.0
        %485 = vst.msk [vmem:[#allocation4 + $0x80] sm:$0xff] %vm404, 0.0
        %486 = vst.msk [vmem:[#allocation4 + $0x88] sm:$0xff] %vm404, 0.0
        %487 = vst.msk [vmem:[#allocation4 + $0x90] sm:$0xff] %vm404, 0.0
        %488 = vst.msk [vmem:[#allocation4 + $0x98] sm:$0xff] %vm404, 0.0
        %489 = vst.msk [vmem:[#allocation4 + $0xa0] sm:$0xff] %vm404, 0.0
        %490 = vst.msk [vmem:[#allocation4 + $0xa8] sm:$0xff] %vm404, 0.0
        %491 = vst.msk [vmem:[#allocation4 + $0xb0] sm:$0xff] %vm404, 0.0
        %492 = vst.msk [vmem:[#allocation4 + $0xb8] sm:$0xff] %vm404, 0.0
        %493 = vst.msk [vmem:[#allocation4 + $0xc0] sm:$0xff] %vm404, 0.0
        %494 = vst.msk [vmem:[#allocation4 + $0xc8] sm:$0xff] %vm404, 0.0
        %495 = vst.msk [vmem:[#allocation4 + $0xd0] sm:$0xff] %vm404, 0.0
        %496 = vst.msk [vmem:[#allocation4 + $0xd8] sm:$0xff] %vm404, 0.0
        %497 = vst.msk [vmem:[#allocation4 + $0xe0] sm:$0xff] %vm404, 0.0
        %498 = vst.msk [vmem:[#allocation4 + $0xe8] sm:$0xff] %vm404, 0.0
        %499 = vst.msk [vmem:[#allocation4 + $0xf0] sm:$0xff] %vm404, 0.0
        %500 = vst.msk [vmem:[#allocation4 + $0xf8] sm:$0xff] %vm404, 0.0
        %501 = vst.msk [vmem:[#allocation5] sm:$0xff] %vm404, 0.0
        %502 = vst.msk [vmem:[#allocation5 + $0x8] sm:$0xff] %vm404, 0.0
        %503 = vst.msk [vmem:[#allocation5 + $0x10] sm:$0xff] %vm404, 0.0
        %504 = vst.msk [vmem:[#allocation5 + $0x18] sm:$0xff] %vm404, 0.0
        %505 = vst.msk [vmem:[#allocation5 + $0x20] sm:$0xff] %vm404, 0.0
        %506 = vst.msk [vmem:[#allocation5 + $0x28] sm:$0xff] %vm404, 0.0
        %507 = vst.msk [vmem:[#allocation5 + $0x30] sm:$0xff] %vm404, 0.0
        %508 = vst.msk [vmem:[#allocation5 + $0x38] sm:$0xff] %vm404, 0.0
        %509 = vst.msk [vmem:[#allocation5 + $0x40] sm:$0xff] %vm404, 0.0
        %510 = vst.msk [vmem:[#allocation5 + $0x48] sm:$0xff] %vm404, 0.0
        %511 = vst.msk [vmem:[#allocation5 + $0x50] sm:$0xff] %vm404, 0.0
        %512 = vst.msk [vmem:[#allocation5 + $0x58] sm:$0xff] %vm404, 0.0
        %513 = vst.msk [vmem:[#allocation5 + $0x60] sm:$0xff] %vm404, 0.0
        %514 = vst.msk [vmem:[#allocation5 + $0x68] sm:$0xff] %vm404, 0.0
        %515 = vst.msk [vmem:[#allocation5 + $0x70] sm:$0xff] %vm404, 0.0
        %516 = vst.msk [vmem:[#allocation5 + $0x78] sm:$0xff] %vm404, 0.0
        %517 = vst.msk [vmem:[#allocation5 + $0x80] sm:$0xff] %vm404, 0.0
        %518 = vst.msk [vmem:[#allocation5 + $0x88] sm:$0xff] %vm404, 0.0
        %519 = vst.msk [vmem:[#allocation5 + $0x90] sm:$0xff] %vm404, 0.0
        %520 = vst.msk [vmem:[#allocation5 + $0x98] sm:$0xff] %vm404, 0.0
        %521 = vst.msk [vmem:[#allocation5 + $0xa0] sm:$0xff] %vm404, 0.0
        %522 = vst.msk [vmem:[#allocation5 + $0xa8] sm:$0xff] %vm404, 0.0
        %523 = vst.msk [vmem:[#allocation5 + $0xb0] sm:$0xff] %vm404, 0.0
        %524 = vst.msk [vmem:[#allocation5 + $0xb8] sm:$0xff] %vm404, 0.0
        %525 = vst.msk [vmem:[#allocation5 + $0xc0] sm:$0xff] %vm404, 0.0
        %526 = vst.msk [vmem:[#allocation5 + $0xc8] sm:$0xff] %vm404, 0.0
        %527 = vst.msk [vmem:[#allocation5 + $0xd0] sm:$0xff] %vm404, 0.0
        %528 = vst.msk [vmem:[#allocation5 + $0xd8] sm:$0xff] %vm404, 0.0
        %529 = vst.msk [vmem:[#allocation5 + $0xe0] sm:$0xff] %vm404, 0.0
        %530 = vst.msk [vmem:[#allocation5 + $0xe8] sm:$0xff] %vm404, 0.0
        %531 = vst.msk [vmem:[#allocation5 + $0xf0] sm:$0xff] %vm404, 0.0
        %532 = vst.msk [vmem:[#allocation5 + $0xf8] sm:$0xff] %vm404, 0.0
      $region48: #{private_encoder_forward.3} parent=43 // pred_fallthru
        _
      %v533 = vld [vmem:[%s391] sm:$0xf]
      %v534 = vld [vmem:[%s391 + $0x4] sm:$0xf]
      %v535 = vld [vmem:[%s391 + $0x8] sm:$0xf]
      %v536 = vld [vmem:[%s391 + $0xc] sm:$0xf]
      %v537 = vld [vmem:[%s391 + $0x10] sm:$0xf]
      %v538 = vld [vmem:[%s391 + $0x14] sm:$0xf]
      %v539 = vld [vmem:[%s391 + $0x18] sm:$0xf]
      %v540 = vld [vmem:[%s391 + $0x1c] sm:$0xf]
      %v541 = vld [vmem:[%s391 + $0x20] sm:$0xf]
      %v542 = vld [vmem:[%s391 + $0x24] sm:$0xf]
      %v543 = vld [vmem:[%s391 + $0x28] sm:$0xf]
      %v544 = vld [vmem:[%s391 + $0x2c] sm:$0xf]
      %v545 = vld [vmem:[%s391 + $0x30] sm:$0xf]
      %v546 = vld [vmem:[%s391 + $0x34] sm:$0xf]
      %v547 = vld [vmem:[%s391 + $0x38] sm:$0xf]
      %v548 = vld [vmem:[%s391 + $0x3c] sm:$0xf]
      %v549 = vld [vmem:[#allocation2] sm:$0xff]
      %v550 = vld [vmem:[#allocation2 + $0x8] sm:$0xff]
      %v551 = vld [vmem:[#allocation2 + $0x10] sm:$0xff]
      %v552 = vld [vmem:[#allocation2 + $0x18] sm:$0xff]
      %v553 = vld [vmem:[#allocation2 + $0x20] sm:$0xff]
      %v554 = vld [vmem:[#allocation2 + $0x28] sm:$0xff]
      %v555 = vld [vmem:[#allocation2 + $0x30] sm:$0xff]
      %v556 = vld [vmem:[#allocation2 + $0x38] sm:$0xff]
      %v557 = vld [vmem:[#allocation2 + $0x40] sm:$0xff]
      %v558 = vld [vmem:[#allocation2 + $0x48] sm:$0xff]
      %v559 = vld [vmem:[#allocation2 + $0x50] sm:$0xff]
      %v560 = vld [vmem:[#allocation2 + $0x58] sm:$0xff]
      %v561 = vld [vmem:[#allocation2 + $0x60] sm:$0xff]
      %v562 = vld [vmem:[#allocation2 + $0x68] sm:$0xff]
      %v563 = vld [vmem:[#allocation2 + $0x70] sm:$0xff]
      %v564 = vld [vmem:[#allocation2 + $0x78] sm:$0xff]
      %v565 = vld [vmem:[#allocation2 + $0x80] sm:$0xff]
      %v566 = vld [vmem:[#allocation2 + $0x88] sm:$0xff]
      %v567 = vld [vmem:[#allocation2 + $0x90] sm:$0xff]
      %v568 = vld [vmem:[#allocation2 + $0x98] sm:$0xff]
      %v569 = vld [vmem:[#allocation2 + $0xa0] sm:$0xff]
      %v570 = vld [vmem:[#allocation2 + $0xa8] sm:$0xff]
      %v571 = vld [vmem:[#allocation2 + $0xb0] sm:$0xff]
      %v572 = vld [vmem:[#allocation2 + $0xb8] sm:$0xff]
      %v573 = vld [vmem:[#allocation2 + $0xc0] sm:$0xff]
      %v574 = vld [vmem:[#allocation2 + $0xc8] sm:$0xff]
      %v575 = vld [vmem:[#allocation2 + $0xd0] sm:$0xff]
      %v576 = vld [vmem:[#allocation2 + $0xd8] sm:$0xff]
      %v577 = vld [vmem:[#allocation2 + $0xe0] sm:$0xff]
      %v578 = vld [vmem:[#allocation2 + $0xe8] sm:$0xff]
      %v579 = vld [vmem:[#allocation2 + $0xf0] sm:$0xff]
      %v580 = vld [vmem:[#allocation2 + $0xf8] sm:$0xff]
      %v581 = vld [vmem:[%s358] sm:$0xf]
      %v582 = vld [vmem:[%s358 + $0x4] sm:$0xf]
      %v583 = vld [vmem:[%s358 + $0x8] sm:$0xf]
      %v584 = vld [vmem:[%s358 + $0xc] sm:$0xf]
      %v585 = vld [vmem:[%s358 + $0x10] sm:$0xf]
      %v586 = vld [vmem:[%s358 + $0x14] sm:$0xf]
      %v587 = vld [vmem:[%s358 + $0x18] sm:$0xf]
      %v588 = vld [vmem:[%s358 + $0x1c] sm:$0xf]
      %v589 = vld [vmem:[%s358 + $0x20] sm:$0xf]
      %v590 = vld [vmem:[%s358 + $0x24] sm:$0xf]
      %v591 = vld [vmem:[%s358 + $0x28] sm:$0xf]
      %v592 = vld [vmem:[%s358 + $0x2c] sm:$0xf]
      %v593 = vld [vmem:[%s358 + $0x30] sm:$0xf]
      %v594 = vld [vmem:[%s358 + $0x34] sm:$0xf]
      %v595 = vld [vmem:[%s358 + $0x38] sm:$0xf]
      %v596 = vld [vmem:[%s358 + $0x3c] sm:$0xf]
      %v597 = vld [vmem:[%s358 + $0x40] sm:$0xf]
      %v598 = vld [vmem:[%s358 + $0x44] sm:$0xf]
      %v599 = vld [vmem:[%s358 + $0x48] sm:$0xf]
      %v600 = vld [vmem:[%s358 + $0x4c] sm:$0xf]
      %v601 = vld [vmem:[%s358 + $0x50] sm:$0xf]
      %v602 = vld [vmem:[%s358 + $0x54] sm:$0xf]
      %v603 = vld [vmem:[%s358 + $0x58] sm:$0xf]
      %v604 = vld [vmem:[%s358 + $0x5c] sm:$0xf]
      %v605 = vld [vmem:[%s358 + $0x60] sm:$0xf]
      %v606 = vld [vmem:[%s358 + $0x64] sm:$0xf]
      %v607 = vld [vmem:[%s358 + $0x68] sm:$0xf]
      %v608 = vld [vmem:[%s358 + $0x6c] sm:$0xf]
      %v609 = vld [vmem:[%s358 + $0x70] sm:$0xf]
      %v610 = vld [vmem:[%s358 + $0x74] sm:$0xf]
      %v611 = vld [vmem:[%s358 + $0x78] sm:$0xf]
      %v612 = vld [vmem:[%s358 + $0x7c] sm:$0xf]
      %v645 = vunpack.c.l.b16 %v581
      %v646 = vunpack.c.l.b16 %v582
      %v647 = vunpack.c.l.b16 %v583
      %v648 = vunpack.c.l.b16 %v584
      %v649 = vunpack.c.l.b16 %v585
      %v650 = vunpack.c.l.b16 %v586
      %v651 = vunpack.c.l.b16 %v587
      %v652 = vunpack.c.l.b16 %v588
      %v653 = vunpack.c.l.b16 %v589
      %v654 = vunpack.c.l.b16 %v590
      %v655 = vunpack.c.l.b16 %v591
      %v656 = vunpack.c.l.b16 %v592
      %v657 = vunpack.c.l.b16 %v593
      %v658 = vunpack.c.l.b16 %v594
      %v659 = vunpack.c.l.b16 %v595
      %v660 = vunpack.c.l.b16 %v596
      %v661 = vunpack.c.l.b16 %v597
      %v662 = vunpack.c.l.b16 %v598
      %v663 = vunpack.c.l.b16 %v599
      %v664 = vunpack.c.l.b16 %v600
      %v665 = vunpack.c.l.b16 %v601
      %v666 = vunpack.c.l.b16 %v602
      %v667 = vunpack.c.l.b16 %v603
      %v668 = vunpack.c.l.b16 %v604
      %v669 = vunpack.c.l.b16 %v605
      %v670 = vunpack.c.l.b16 %v606
      %v671 = vunpack.c.l.b16 %v607
      %v672 = vunpack.c.l.b16 %v608
      %v673 = vunpack.c.l.b16 %v609
      %v674 = vunpack.c.l.b16 %v610
      %v675 = vunpack.c.l.b16 %v611
      %v676 = vunpack.c.l.b16 %v612
      %v677 = vpack.c.b16 %v646, %v645
      %v678 = vpack.c.b16 %v648, %v647
      %v679 = vpack.c.b16 %v650, %v649
      %v680 = vpack.c.b16 %v652, %v651
      %v681 = vpack.c.b16 %v654, %v653
      %v682 = vpack.c.b16 %v656, %v655
      %v683 = vpack.c.b16 %v658, %v657
      %v684 = vpack.c.b16 %v660, %v659
      %v685 = vpack.c.b16 %v662, %v661
      %v686 = vpack.c.b16 %v664, %v663
      %v687 = vpack.c.b16 %v666, %v665
      %v688 = vpack.c.b16 %v668, %v667
      %v689 = vpack.c.b16 %v670, %v669
      %v690 = vpack.c.b16 %v672, %v671
      %v691 = vpack.c.b16 %v674, %v673
      %v692 = vpack.c.b16 %v676, %v675
      %v725 = vunpack.c.l.b16 %v533
      %v726 = vunpack.c.l.b16 %v534
      %v727 = vunpack.c.l.b16 %v535
      %v728 = vunpack.c.l.b16 %v536
      %v729 = vunpack.c.l.b16 %v537
      %v730 = vunpack.c.l.b16 %v538
      %v731 = vunpack.c.l.b16 %v539
      %v732 = vunpack.c.l.b16 %v540
      %v733 = vunpack.c.l.b16 %v541
      %v734 = vunpack.c.l.b16 %v542
      %v735 = vunpack.c.l.b16 %v543
      %v736 = vunpack.c.l.b16 %v544
      %v737 = vunpack.c.l.b16 %v545
      %v738 = vunpack.c.l.b16 %v546
      %v739 = vunpack.c.l.b16 %v547
      %v740 = vunpack.c.l.b16 %v548
      %v741 = vpack.c.b16 %v726, %v725
      %v742 = vpack.c.b16 %v728, %v727
      %v743 = vpack.c.b16 %v730, %v729
      %v744 = vpack.c.b16 %v732, %v731
      %v745 = vpack.c.b16 %v734, %v733
      %v746 = vpack.c.b16 %v736, %v735
      %v747 = vpack.c.b16 %v738, %v737
      %v748 = vpack.c.b16 %v740, %v739
      %757 = vmatprep.subr.bf16.mxu0 0
      %758 = vmatpush1.bf16.msra.mxu0 %v741
      %759 = vmatprep.subr.bf16.mxu0 0
      %760 = vmatpush1.bf16.msra.mxu0 %v742
      %761 = vmatprep.subr.bf16.mxu0 0
      %762 = vmatpush1.bf16.msra.mxu0 %v743
      %763 = vmatprep.subr.bf16.mxu0 0
      %764 = vmatpush1.bf16.msra.mxu0 %v744
      %765 = vmatprep.subr.bf16.mxu0 0
      %766 = vmatpush1.bf16.msra.mxu0 %v745
      %767 = vmatprep.subr.bf16.mxu0 0
      %768 = vmatpush1.bf16.msra.mxu0 %v746
      %769 = vmatprep.subr.bf16.mxu0 0
      %770 = vmatpush1.bf16.msra.mxu0 %v747
      %771 = vmatprep.subr.bf16.mxu0 0
      %772 = vmatpush1.bf16.msra.mxu0 %v748
      %773 = vmatprep.subr.bf16.mxu0 0
      %774 = vmatpush1.bf16.msra.mxu0 0
      %775 = vmatprep.subr.bf16.mxu0 0
      %776 = vmatpush1.bf16.msra.mxu0 0
      %777 = vmatprep.subr.bf16.mxu0 0
      %778 = vmatpush1.bf16.msra.mxu0 0
      %779 = vmatprep.subr.bf16.mxu0 0
      %780 = vmatpush1.bf16.msra.mxu0 0
      %781 = vmatprep.subr.bf16.mxu0 0
      %782 = vmatpush1.bf16.msra.mxu0 0
      %783 = vmatprep.subr.bf16.mxu0 0
      %784 = vmatpush1.bf16.msra.mxu0 0
      %785 = vmatprep.subr.bf16.mxu0 0
      %786 = vmatpush1.bf16.msra.mxu0 0
      %787 = vmatprep.subr.bf16.mxu0 0
      %788 = vmatpush1.bf16.msra.mxu0 0
      %789 = vmatprep.mubr.bf16.mxu0 0
      %790 = vmatmul.mubr.bf16.gmra.mrb[0].mxu0 %v677
      %v791 = vpop.f32.mrb[0].mxu0
      %v792 = vadd.f32 0.0, %v791
      %v793 = vpop.f32.mrb[0].mxu0
      %v794 = vpop.f32.mrb[0].mxu0
      %v795 = vadd.f32 0.0, %v794
      %v796 = vpop.f32.mrb[0].mxu0
      %797 = vmatprep.mubr.bf16.mxu0 0
      %798 = vmatmul.mubr.bf16.gmra.mrb[0].mxu0 %v678
      %v799 = vpop.f32.mrb[0].mxu0
      %v800 = vadd.f32 0.0, %v799
      %v801 = vpop.f32.mrb[0].mxu0
      %v802 = vpop.f32.mrb[0].mxu0
      %v803 = vadd.f32 0.0, %v802
      %v804 = vpop.f32.mrb[0].mxu0
      %805 = vmatprep.mubr.bf16.mxu0 0
      %806 = vmatmul.mubr.bf16.gmra.mrb[0].mxu0 %v679
      %v807 = vpop.f32.mrb[0].mxu0
      %v808 = vadd.f32 0.0, %v807
      %v809 = vpop.f32.mrb[0].mxu0
      %v810 = vpop.f32.mrb[0].mxu0
      %v811 = vadd.f32 0.0, %v810
      %v812 = vpop.f32.mrb[0].mxu0
      %813 = vmatprep.mubr.bf16.mxu0 0
      %814 = vmatmul.mubr.bf16.gmra.mrb[0].mxu0 %v680
      %v815 = vpop.f32.mrb[0].mxu0
      %v816 = vadd.f32 0.0, %v815
      %v817 = vpop.f32.mrb[0].mxu0
      %v818 = vpop.f32.mrb[0].mxu0
      %v819 = vadd.f32 0.0, %v818
      %v820 = vpop.f32.mrb[0].mxu0
      %821 = vmatprep.mubr.bf16.mxu0 0
      %822 = vmatmul.mubr.bf16.gmra.mrb[0].mxu0 %v681
      %v823 = vpop.f32.mrb[0].mxu0
      %v824 = vadd.f32 0.0, %v823
      %v825 = vpop.f32.mrb[0].mxu0
      %v826 = vpop.f32.mrb[0].mxu0
      %v827 = vadd.f32 0.0, %v826
      %v828 = vpop.f32.mrb[0].mxu0
      %829 = vmatprep.mubr.bf16.mxu0 0
      %830 = vmatmul.mubr.bf16.gmra.mrb[0].mxu0 %v682
      %v831 = vpop.f32.mrb[0].mxu0
      %v832 = vadd.f32 0.0, %v831
      %v833 = vpop.f32.mrb[0].mxu0
      %v834 = vpop.f32.mrb[0].mxu0
      %v835 = vadd.f32 0.0, %v834
      %v836 = vpop.f32.mrb[0].mxu0
      %837 = vmatprep.mubr.bf16.mxu0 0
      %838 = vmatmul.mubr.bf16.gmra.mrb[0].mxu0 %v683
      %v839 = vpop.f32.mrb[0].mxu0
      %v840 = vadd.f32 0.0, %v839
      %v841 = vpop.f32.mrb[0].mxu0
      %v842 = vpop.f32.mrb[0].mxu0
      %v843 = vadd.f32 0.0, %v842
      %v844 = vpop.f32.mrb[0].mxu0
      %845 = vmatprep.mubr.bf16.mxu0 0
      %846 = vmatmul.mubr.bf16.gmra.mrb[0].mxu0 %v684
      %v847 = vpop.f32.mrb[0].mxu0
      %v848 = vadd.f32 0.0, %v847
      %v849 = vpop.f32.mrb[0].mxu0
      %v850 = vpop.f32.mrb[0].mxu0
      %v851 = vadd.f32 0.0, %v850
      %v852 = vpop.f32.mrb[0].mxu0
      %853 = vmatprep.mubr.bf16.mxu0 0
      %854 = vmatmul.mubr.bf16.gmra.mrb[0].mxu0 %v685
      %v855 = vpop.f32.mrb[0].mxu0
      %v856 = vadd.f32 0.0, %v855
      %v857 = vpop.f32.mrb[0].mxu0
      %v858 = vpop.f32.mrb[0].mxu0
      %v859 = vadd.f32 0.0, %v858
      %v860 = vpop.f32.mrb[0].mxu0
      %861 = vmatprep.mubr.bf16.mxu0 0
      %862 = vmatmul.mubr.bf16.gmra.mrb[0].mxu0 %v686
      %v863 = vpop.f32.mrb[0].mxu0
      %v864 = vadd.f32 0.0, %v863
      %v865 = vpop.f32.mrb[0].mxu0
      %v866 = vpop.f32.mrb[0].mxu0
      %v867 = vadd.f32 0.0, %v866
      %v868 = vpop.f32.mrb[0].mxu0
      %869 = vmatprep.mubr.bf16.mxu0 0
      %870 = vmatmul.mubr.bf16.gmra.mrb[0].mxu0 %v687
      %v871 = vpop.f32.mrb[0].mxu0
      %v872 = vadd.f32 0.0, %v871
      %v873 = vpop.f32.mrb[0].mxu0
      %v874 = vpop.f32.mrb[0].mxu0
      %v875 = vadd.f32 0.0, %v874
      %v876 = vpop.f32.mrb[0].mxu0
      %877 = vmatprep.mubr.bf16.mxu0 0
      %878 = vmatmul.mubr.bf16.gmra.mrb[0].mxu0 %v688
      %v879 = vpop.f32.mrb[0].mxu0
      %v880 = vadd.f32 0.0, %v879
      %v881 = vpop.f32.mrb[0].mxu0
      %v882 = vpop.f32.mrb[0].mxu0
      %v883 = vadd.f32 0.0, %v882
      %v884 = vpop.f32.mrb[0].mxu0
      %885 = vmatprep.mubr.bf16.mxu0 0
      %886 = vmatmul.mubr.bf16.gmra.mrb[0].mxu0 %v689
      %v887 = vpop.f32.mrb[0].mxu0
      %v888 = vadd.f32 0.0, %v887
      %v889 = vpop.f32.mrb[0].mxu0
      %v890 = vpop.f32.mrb[0].mxu0
      %v891 = vadd.f32 0.0, %v890
      %v892 = vpop.f32.mrb[0].mxu0
      %893 = vmatprep.mubr.bf16.mxu0 0
      %894 = vmatmul.mubr.bf16.gmra.mrb[0].mxu0 %v690
      %v895 = vpop.f32.mrb[0].mxu0
      %v896 = vadd.f32 0.0, %v895
      %v897 = vpop.f32.mrb[0].mxu0
      %v898 = vpop.f32.mrb[0].mxu0
      %v899 = vadd.f32 0.0, %v898
      %v900 = vpop.f32.mrb[0].mxu0
      %901 = vmatprep.mubr.bf16.mxu0 0
      %902 = vmatmul.mubr.bf16.gmra.mrb[0].mxu0 %v691
      %v903 = vpop.f32.mrb[0].mxu0
      %v904 = vadd.f32 0.0, %v903
      %v905 = vpop.f32.mrb[0].mxu0
      %v906 = vpop.f32.mrb[0].mxu0
      %v907 = vadd.f32 0.0, %v906
      %v908 = vpop.f32.mrb[0].mxu0
      %909 = vmatprep.mubr.bf16.mxu0 0
      %910 = vmatmul.mubr.bf16.gmra.mrb[0].mxu0 %v692
      %v911 = vpop.f32.mrb[0].mxu0
      %v912 = vadd.f32 0.0, %v911
      %v913 = vpop.f32.mrb[0].mxu0
      %v914 = vpop.f32.mrb[0].mxu0
      %v915 = vadd.f32 0.0, %v914
      %v916 = vpop.f32.mrb[0].mxu0
      %917 = vdwg.mxu0
      %v918 = vadd.f32 %v549, %v792
      %v919 = vadd.f32 %v550, %v795
      %v920 = vadd.f32 %v551, %v800
      %v921 = vadd.f32 %v552, %v803
      %v922 = vadd.f32 %v553, %v808
      %v923 = vadd.f32 %v554, %v811
      %v924 = vadd.f32 %v555, %v816
      %v925 = vadd.f32 %v556, %v819
      %v926 = vadd.f32 %v557, %v824
      %v927 = vadd.f32 %v558, %v827
      %v928 = vadd.f32 %v559, %v832
      %v929 = vadd.f32 %v560, %v835
      %v930 = vadd.f32 %v561, %v840
      %v931 = vadd.f32 %v562, %v843
      %v932 = vadd.f32 %v563, %v848
      %v933 = vadd.f32 %v564, %v851
      %v934 = vadd.f32 %v565, %v856
      %v935 = vadd.f32 %v566, %v859
      %v936 = vadd.f32 %v567, %v864
      %v937 = vadd.f32 %v568, %v867
      %v938 = vadd.f32 %v569, %v872
      %v939 = vadd.f32 %v570, %v875
      %v940 = vadd.f32 %v571, %v880
      %v941 = vadd.f32 %v572, %v883
      %v942 = vadd.f32 %v573, %v888
      %v943 = vadd.f32 %v574, %v891
      %v944 = vadd.f32 %v575, %v896
      %v945 = vadd.f32 %v576, %v899
      %v946 = vadd.f32 %v577, %v904
      %v947 = vadd.f32 %v578, %v907
      %v948 = vadd.f32 %v579, %v912
      %v949 = vadd.f32 %v580, %v915
      %vm950 = vcmask 261120
      %951 = vst.msk [vmem:[#allocation2] sm:$0xff] %vm950, %v918
      %952 = vst.msk [vmem:[#allocation2 + $0x8] sm:$0xff] %vm950, %v919
      %953 = vst.msk [vmem:[#allocation2 + $0x10] sm:$0xff] %vm950, %v920
      %954 = vst.msk [vmem:[#allocation2 + $0x18] sm:$0xff] %vm950, %v921
      %955 = vst.msk [vmem:[#allocation2 + $0x20] sm:$0xff] %vm950, %v922
      %956 = vst.msk [vmem:[#allocation2 + $0x28] sm:$0xff] %vm950, %v923
      %957 = vst.msk [vmem:[#allocation2 + $0x30] sm:$0xff] %vm950, %v924
      %958 = vst.msk [vmem:[#allocation2 + $0x38] sm:$0xff] %vm950, %v925
      %959 = vst.msk [vmem:[#allocation2 + $0x40] sm:$0xff] %vm950, %v926
      %960 = vst.msk [vmem:[#allocation2 + $0x48] sm:$0xff] %vm950, %v927
      %961 = vst.msk [vmem:[#allocation2 + $0x50] sm:$0xff] %vm950, %v928
      %962 = vst.msk [vmem:[#allocation2 + $0x58] sm:$0xff] %vm950, %v929
      %963 = vst.msk [vmem:[#allocation2 + $0x60] sm:$0xff] %vm950, %v930
      %964 = vst.msk [vmem:[#allocation2 + $0x68] sm:$0xff] %vm950, %v931
      %965 = vst.msk [vmem:[#allocation2 + $0x70] sm:$0xff] %vm950, %v932
      %966 = vst.msk [vmem:[#allocation2 + $0x78] sm:$0xff] %vm950, %v933
      %967 = vst.msk [vmem:[#allocation2 + $0x80] sm:$0xff] %vm950, %v934
      %968 = vst.msk [vmem:[#allocation2 + $0x88] sm:$0xff] %vm950, %v935
      %969 = vst.msk [vmem:[#allocation2 + $0x90] sm:$0xff] %vm950, %v936
      %970 = vst.msk [vmem:[#allocation2 + $0x98] sm:$0xff] %vm950, %v937
      %971 = vst.msk [vmem:[#allocation2 + $0xa0] sm:$0xff] %vm950, %v938
      %972 = vst.msk [vmem:[#allocation2 + $0xa8] sm:$0xff] %vm950, %v939
      %973 = vst.msk [vmem:[#allocation2 + $0xb0] sm:$0xff] %vm950, %v940
      %974 = vst.msk [vmem:[#allocation2 + $0xb8] sm:$0xff] %vm950, %v941
      %975 = vst.msk [vmem:[#allocation2 + $0xc0] sm:$0xff] %vm950, %v942
      %976 = vst.msk [vmem:[#allocation2 + $0xc8] sm:$0xff] %vm950, %v943
      %977 = vst.msk [vmem:[#allocation2 + $0xd0] sm:$0xff] %vm950, %v944
      %978 = vst.msk [vmem:[#allocation2 + $0xd8] sm:$0xff] %vm950, %v945
      %979 = vst.msk [vmem:[#allocation2 + $0xe0] sm:$0xff] %vm950, %v946
      %980 = vst.msk [vmem:[#allocation2 + $0xe8] sm:$0xff] %vm950, %v947
      %981 = vst.msk [vmem:[#allocation2 + $0xf0] sm:$0xff] %vm950, %v948
      %982 = vst.msk [vmem:[#allocation2 + $0xf8] sm:$0xff] %vm950, %v949
      %v983 = vld [vmem:[#allocation3] sm:$0xff]
      %v984 = vld [vmem:[#allocation3 + $0x8] sm:$0xff]
      %v985 = vld [vmem:[#allocation3 + $0x10] sm:$0xff]
      %v986 = vld [vmem:[#allocation3 + $0x18] sm:$0xff]
      %v987 = vld [vmem:[#allocation3 + $0x20] sm:$0xff]
      %v988 = vld [vmem:[#allocation3 + $0x28] sm:$0xff]
      %v989 = vld [vmem:[#allocation3 + $0x30] sm:$0xff]
      %v990 = vld [vmem:[#allocation3 + $0x38] sm:$0xff]
      %v991 = vld [vmem:[#allocation3 + $0x40] sm:$0xff]
      %v992 = vld [vmem:[#allocation3 + $0x48] sm:$0xff]
      %v993 = vld [vmem:[#allocation3 + $0x50] sm:$0xff]
      %v994 = vld [vmem:[#allocation3 + $0x58] sm:$0xff]
      %v995 = vld [vmem:[#allocation3 + $0x60] sm:$0xff]
      %v996 = vld [vmem:[#allocation3 + $0x68] sm:$0xff]
      %v997 = vld [vmem:[#allocation3 + $0x70] sm:$0xff]
      %v998 = vld [vmem:[#allocation3 + $0x78] sm:$0xff]
      %v999 = vld [vmem:[#allocation3 + $0x80] sm:$0xff]
      %v1000 = vld [vmem:[#allocation3 + $0x88] sm:$0xff]
      %v1001 = vld [vmem:[#allocation3 + $0x90] sm:$0xff]
      %v1002 = vld [vmem:[#allocation3 + $0x98] sm:$0xff]
      %v1003 = vld [vmem:[#allocation3 + $0xa0] sm:$0xff]
      %v1004 = vld [vmem:[#allocation3 + $0xa8] sm:$0xff]
      %v1005 = vld [vmem:[#allocation3 + $0xb0] sm:$0xff]
      %v1006 = vld [vmem:[#allocation3 + $0xb8] sm:$0xff]
      %v1007 = vld [vmem:[#allocation3 + $0xc0] sm:$0xff]
      %v1008 = vld [vmem:[#allocation3 + $0xc8] sm:$0xff]
      %v1009 = vld [vmem:[#allocation3 + $0xd0] sm:$0xff]
      %v1010 = vld [vmem:[#allocation3 + $0xd8] sm:$0xff]
      %v1011 = vld [vmem:[#allocation3 + $0xe0] sm:$0xff]
      %v1012 = vld [vmem:[#allocation3 + $0xe8] sm:$0xff]
      %v1013 = vld [vmem:[#allocation3 + $0xf0] sm:$0xff]
      %v1014 = vld [vmem:[#allocation3 + $0xf8] sm:$0xff]
      %v1015 = vld [vmem:[%s367] sm:$0xf]
      %v1016 = vld [vmem:[%s367 + $0x4] sm:$0xf]
      %v1017 = vld [vmem:[%s367 + $0x8] sm:$0xf]
      %v1018 = vld [vmem:[%s367 + $0xc] sm:$0xf]
      %v1019 = vld [vmem:[%s367 + $0x10] sm:$0xf]
      %v1020 = vld [vmem:[%s367 + $0x14] sm:$0xf]
      %v1021 = vld [vmem:[%s367 + $0x18] sm:$0xf]
      %v1022 = vld [vmem:[%s367 + $0x1c] sm:$0xf]
      %v1023 = vld [vmem:[%s367 + $0x20] sm:$0xf]
      %v1024 = vld [vmem:[%s367 + $0x24] sm:$0xf]
      %v1025 = vld [vmem:[%s367 + $0x28] sm:$0xf]
      %v1026 = vld [vmem:[%s367 + $0x2c] sm:$0xf]
      %v1027 = vld [vmem:[%s367 + $0x30] sm:$0xf]
      %v1028 = vld [vmem:[%s367 + $0x34] sm:$0xf]
      %v1029 = vld [vmem:[%s367 + $0x38] sm:$0xf]
      %v1030 = vld [vmem:[%s367 + $0x3c] sm:$0xf]
      %v1031 = vld [vmem:[%s367 + $0x40] sm:$0xf]
      %v1032 = vld [vmem:[%s367 + $0x44] sm:$0xf]
      %v1033 = vld [vmem:[%s367 + $0x48] sm:$0xf]
      %v1034 = vld [vmem:[%s367 + $0x4c] sm:$0xf]
      %v1035 = vld [vmem:[%s367 + $0x50] sm:$0xf]
      %v1036 = vld [vmem:[%s367 + $0x54] sm:$0xf]
      %v1037 = vld [vmem:[%s367 + $0x58] sm:$0xf]
      %v1038 = vld [vmem:[%s367 + $0x5c] sm:$0xf]
      %v1039 = vld [vmem:[%s367 + $0x60] sm:$0xf]
      %v1040 = vld [vmem:[%s367 + $0x64] sm:$0xf]
      %v1041 = vld [vmem:[%s367 + $0x68] sm:$0xf]
      %v1042 = vld [vmem:[%s367 + $0x6c] sm:$0xf]
      %v1043 = vld [vmem:[%s367 + $0x70] sm:$0xf]
      %v1044 = vld [vmem:[%s367 + $0x74] sm:$0xf]
      %v1045 = vld [vmem:[%s367 + $0x78] sm:$0xf]
      %v1046 = vld [vmem:[%s367 + $0x7c] sm:$0xf]
      %v1079 = vunpack.c.l.b16 %v1015
      %v1080 = vunpack.c.l.b16 %v1016
      %v1081 = vunpack.c.l.b16 %v1017
      %v1082 = vunpack.c.l.b16 %v1018
      %v1083 = vunpack.c.l.b16 %v1019
      %v1084 = vunpack.c.l.b16 %v1020
      %v1085 = vunpack.c.l.b16 %v1021
      %v1086 = vunpack.c.l.b16 %v1022
      %v1087 = vunpack.c.l.b16 %v1023
      %v1088 = vunpack.c.l.b16 %v1024
      %v1089 = vunpack.c.l.b16 %v1025
      %v1090 = vunpack.c.l.b16 %v1026
      %v1091 = vunpack.c.l.b16 %v1027
      %v1092 = vunpack.c.l.b16 %v1028
      %v1093 = vunpack.c.l.b16 %v1029
      %v1094 = vunpack.c.l.b16 %v1030
      %v1095 = vunpack.c.l.b16 %v1031
      %v1096 = vunpack.c.l.b16 %v1032
      %v1097 = vunpack.c.l.b16 %v1033
      %v1098 = vunpack.c.l.b16 %v1034
      %v1099 = vunpack.c.l.b16 %v1035
      %v1100 = vunpack.c.l.b16 %v1036
      %v1101 = vunpack.c.l.b16 %v1037
      %v1102 = vunpack.c.l.b16 %v1038
      %v1103 = vunpack.c.l.b16 %v1039
      %v1104 = vunpack.c.l.b16 %v1040
      %v1105 = vunpack.c.l.b16 %v1041
      %v1106 = vunpack.c.l.b16 %v1042
      %v1107 = vunpack.c.l.b16 %v1043
      %v1108 = vunpack.c.l.b16 %v1044
      %v1109 = vunpack.c.l.b16 %v1045
      %v1110 = vunpack.c.l.b16 %v1046
      %v1111 = vpack.c.b16 %v1080, %v1079
      %v1112 = vpack.c.b16 %v1082, %v1081
      %v1113 = vpack.c.b16 %v1084, %v1083
      %v1114 = vpack.c.b16 %v1086, %v1085
      %v1115 = vpack.c.b16 %v1088, %v1087
      %v1116 = vpack.c.b16 %v1090, %v1089
      %v1117 = vpack.c.b16 %v1092, %v1091
      %v1118 = vpack.c.b16 %v1094, %v1093
      %v1119 = vpack.c.b16 %v1096, %v1095
      %v1120 = vpack.c.b16 %v1098, %v1097
      %v1121 = vpack.c.b16 %v1100, %v1099
      %v1122 = vpack.c.b16 %v1102, %v1101
      %v1123 = vpack.c.b16 %v1104, %v1103
      %v1124 = vpack.c.b16 %v1106, %v1105
      %v1125 = vpack.c.b16 %v1108, %v1107
      %v1126 = vpack.c.b16 %v1110, %v1109
      %1143 = vmatprep.subr.bf16.mxu0 0
      %1144 = vmatpush1.bf16.msra.mxu0 %v741
      %1145 = vmatprep.subr.bf16.mxu0 0
      %1146 = vmatpush1.bf16.msra.mxu0 %v742
      %1147 = vmatprep.subr.bf16.mxu0 0
      %1148 = vmatpush1.bf16.msra.mxu0 %v743
      %1149 = vmatprep.subr.bf16.mxu0 0
      %1150 = vmatpush1.bf16.msra.mxu0 %v744
      %1151 = vmatprep.subr.bf16.mxu0 0
      %1152 = vmatpush1.bf16.msra.mxu0 %v745
      %1153 = vmatprep.subr.bf16.mxu0 0
      %1154 = vmatpush1.bf16.msra.mxu0 %v746
      %1155 = vmatprep.subr.bf16.mxu0 0
      %1156 = vmatpush1.bf16.msra.mxu0 %v747
      %1157 = vmatprep.subr.bf16.mxu0 0
      %1158 = vmatpush1.bf16.msra.mxu0 %v748
      %1159 = vmatprep.subr.bf16.mxu0 0
      %1160 = vmatpush1.bf16.msra.mxu0 0
      %1161 = vmatprep.subr.bf16.mxu0 0
      %1162 = vmatpush1.bf16.msra.mxu0 0
      %1163 = vmatprep.subr.bf16.mxu0 0
      %1164 = vmatpush1.bf16.msra.mxu0 0
      %1165 = vmatprep.subr.bf16.mxu0 0
      %1166 = vmatpush1.bf16.msra.mxu0 0
      %1167 = vmatprep.subr.bf16.mxu0 0
      %1168 = vmatpush1.bf16.msra.mxu0 0
      %1169 = vmatprep.subr.bf16.mxu0 0
      %1170 = vmatpush1.bf16.msra.mxu0 0
      %1171 = vmatprep.subr.bf16.mxu0 0
      %1172 = vmatpush1.bf16.msra.mxu0 0
      %1173 = vmatprep.subr.bf16.mxu0 0
      %1174 = vmatpush1.bf16.msra.mxu0 0
      %1175 = vmatprep.mubr.bf16.mxu0 0
      %1176 = vmatmul.mubr.bf16.gmra.mrb[0].mxu0 %v1111
      %v1177 = vpop.f32.mrb[0].mxu0
      %v1178 = vadd.f32 0.0, %v1177
      %v1179 = vpop.f32.mrb[0].mxu0
      %v1180 = vpop.f32.mrb[0].mxu0
      %v1181 = vadd.f32 0.0, %v1180
      %v1182 = vpop.f32.mrb[0].mxu0
      %1183 = vmatprep.mubr.bf16.mxu0 0
      %1184 = vmatmul.mubr.bf16.gmra.mrb[0].mxu0 %v1112
      %v1185 = vpop.f32.mrb[0].mxu0
      %v1186 = vadd.f32 0.0, %v1185
      %v1187 = vpop.f32.mrb[0].mxu0
      %v1188 = vpop.f32.mrb[0].mxu0
      %v1189 = vadd.f32 0.0, %v1188
      %v1190 = vpop.f32.mrb[0].mxu0
      %1191 = vmatprep.mubr.bf16.mxu0 0
      %1192 = vmatmul.mubr.bf16.gmra.mrb[0].mxu0 %v1113
      %v1193 = vpop.f32.mrb[0].mxu0
      %v1194 = vadd.f32 0.0, %v1193
      %v1195 = vpop.f32.mrb[0].mxu0
      %v1196 = vpop.f32.mrb[0].mxu0
      %v1197 = vadd.f32 0.0, %v1196
      %v1198 = vpop.f32.mrb[0].mxu0
      %1199 = vmatprep.mubr.bf16.mxu0 0
      %1200 = vmatmul.mubr.bf16.gmra.mrb[0].mxu0 %v1114
      %v1201 = vpop.f32.mrb[0].mxu0
      %v1202 = vadd.f32 0.0, %v1201
      %v1203 = vpop.f32.mrb[0].mxu0
      %v1204 = vpop.f32.mrb[0].mxu0
      %v1205 = vadd.f32 0.0, %v1204
      %v1206 = vpop.f32.mrb[0].mxu0
      %1207 = vmatprep.mubr.bf16.mxu0 0
      %1208 = vmatmul.mubr.bf16.gmra.mrb[0].mxu0 %v1115
      %v1209 = vpop.f32.mrb[0].mxu0
      %v1210 = vadd.f32 0.0, %v1209
      %v1211 = vpop.f32.mrb[0].mxu0
      %v1212 = vpop.f32.mrb[0].mxu0
      %v1213 = vadd.f32 0.0, %v1212
      %v1214 = vpop.f32.mrb[0].mxu0
      %1215 = vmatprep.mubr.bf16.mxu0 0
      %1216 = vmatmul.mubr.bf16.gmra.mrb[0].mxu0 %v1116
      %v1217 = vpop.f32.mrb[0].mxu0
      %v1218 = vadd.f32 0.0, %v1217
      %v1219 = vpop.f32.mrb[0].mxu0
      %v1220 = vpop.f32.mrb[0].mxu0
      %v1221 = vadd.f32 0.0, %v1220
      %v1222 = vpop.f32.mrb[0].mxu0
      %1223 = vmatprep.mubr.bf16.mxu0 0
      %1224 = vmatmul.mubr.bf16.gmra.mrb[0].mxu0 %v1117
      %v1225 = vpop.f32.mrb[0].mxu0
      %v1226 = vadd.f32 0.0, %v1225
      %v1227 = vpop.f32.mrb[0].mxu0
      %v1228 = vpop.f32.mrb[0].mxu0
      %v1229 = vadd.f32 0.0, %v1228
      %v1230 = vpop.f32.mrb[0].mxu0
      %1231 = vmatprep.mubr.bf16.mxu0 0
      %1232 = vmatmul.mubr.bf16.gmra.mrb[0].mxu0 %v1118
      %v1233 = vpop.f32.mrb[0].mxu0
      %v1234 = vadd.f32 0.0, %v1233
      %v1235 = vpop.f32.mrb[0].mxu0
      %v1236 = vpop.f32.mrb[0].mxu0
      %v1237 = vadd.f32 0.0, %v1236
      %v1238 = vpop.f32.mrb[0].mxu0
      %1239 = vmatprep.mubr.bf16.mxu0 0
      %1240 = vmatmul.mubr.bf16.gmra.mrb[0].mxu0 %v1119
      %v1241 = vpop.f32.mrb[0].mxu0
      %v1242 = vadd.f32 0.0, %v1241
      %v1243 = vpop.f32.mrb[0].mxu0
      %v1244 = vpop.f32.mrb[0].mxu0
      %v1245 = vadd.f32 0.0, %v1244
      %v1246 = vpop.f32.mrb[0].mxu0
      %1247 = vmatprep.mubr.bf16.mxu0 0
      %1248 = vmatmul.mubr.bf16.gmra.mrb[0].mxu0 %v1120
      %v1249 = vpop.f32.mrb[0].mxu0
      %v1250 = vadd.f32 0.0, %v1249
      %v1251 = vpop.f32.mrb[0].mxu0
      %v1252 = vpop.f32.mrb[0].mxu0
      %v1253 = vadd.f32 0.0, %v1252
      %v1254 = vpop.f32.mrb[0].mxu0
      %1255 = vmatprep.mubr.bf16.mxu0 0
      %1256 = vmatmul.mubr.bf16.gmra.mrb[0].mxu0 %v1121
      %v1257 = vpop.f32.mrb[0].mxu0
      %v1258 = vadd.f32 0.0, %v1257
      %v1259 = vpop.f32.mrb[0].mxu0
      %v1260 = vpop.f32.mrb[0].mxu0
      %v1261 = vadd.f32 0.0, %v1260
      %v1262 = vpop.f32.mrb[0].mxu0
      %1263 = vmatprep.mubr.bf16.mxu0 0
      %1264 = vmatmul.mubr.bf16.gmra.mrb[0].mxu0 %v1122
      %v1265 = vpop.f32.mrb[0].mxu0
      %v1266 = vadd.f32 0.0, %v1265
      %v1267 = vpop.f32.mrb[0].mxu0
      %v1268 = vpop.f32.mrb[0].mxu0
      %v1269 = vadd.f32 0.0, %v1268
      %v1270 = vpop.f32.mrb[0].mxu0
      %1271 = vmatprep.mubr.bf16.mxu0 0
      %1272 = vmatmul.mubr.bf16.gmra.mrb[0].mxu0 %v1123
      %v1273 = vpop.f32.mrb[0].mxu0
      %v1274 = vadd.f32 0.0, %v1273
      %v1275 = vpop.f32.mrb[0].mxu0
      %v1276 = vpop.f32.mrb[0].mxu0
      %v1277 = vadd.f32 0.0, %v1276
      %v1278 = vpop.f32.mrb[0].mxu0
      %1279 = vmatprep.mubr.bf16.mxu0 0
      %1280 = vmatmul.mubr.bf16.gmra.mrb[0].mxu0 %v1124
      %v1281 = vpop.f32.mrb[0].mxu0
      %v1282 = vadd.f32 0.0, %v1281
      %v1283 = vpop.f32.mrb[0].mxu0
      %v1284 = vpop.f32.mrb[0].mxu0
      %v1285 = vadd.f32 0.0, %v1284
      %v1286 = vpop.f32.mrb[0].mxu0
      %1287 = vmatprep.mubr.bf16.mxu0 0
      %1288 = vmatmul.mubr.bf16.gmra.mrb[0].mxu0 %v1125
      %v1289 = vpop.f32.mrb[0].mxu0
      %v1290 = vadd.f32 0.0, %v1289
      %v1291 = vpop.f32.mrb[0].mxu0
      %v1292 = vpop.f32.mrb[0].mxu0
      %v1293 = vadd.f32 0.0, %v1292
      %v1294 = vpop.f32.mrb[0].mxu0
      %1295 = vmatprep.mubr.bf16.mxu0 0
      %1296 = vmatmul.mubr.bf16.gmra.mrb[0].mxu0 %v1126
      %v1297 = vpop.f32.mrb[0].mxu0
      %v1298 = vadd.f32 0.0, %v1297
      %v1299 = vpop.f32.mrb[0].mxu0
      %v1300 = vpop.f32.mrb[0].mxu0
      %v1301 = vadd.f32 0.0, %v1300
      %v1302 = vpop.f32.mrb[0].mxu0
      %1303 = vdwg.mxu0
      %v1304 = vadd.f32 %v983, %v1178
      %v1305 = vadd.f32 %v984, %v1181
      %v1306 = vadd.f32 %v985, %v1186
      %v1307 = vadd.f32 %v986, %v1189
      %v1308 = vadd.f32 %v987, %v1194
      %v1309 = vadd.f32 %v988, %v1197
      %v1310 = vadd.f32 %v989, %v1202
      %v1311 = vadd.f32 %v990, %v1205
      %v1312 = vadd.f32 %v991, %v1210
      %v1313 = vadd.f32 %v992, %v1213
      %v1314 = vadd.f32 %v993, %v1218
      %v1315 = vadd.f32 %v994, %v1221
      %v1316 = vadd.f32 %v995, %v1226
      %v1317 = vadd.f32 %v996, %v1229
      %v1318 = vadd.f32 %v997, %v1234
      %v1319 = vadd.f32 %v998, %v1237
      %v1320 = vadd.f32 %v999, %v1242
      %v1321 = vadd.f32 %v1000, %v1245
      %v1322 = vadd.f32 %v1001, %v1250
      %v1323 = vadd.f32 %v1002, %v1253
      %v1324 = vadd.f32 %v1003, %v1258
      %v1325 = vadd.f32 %v1004, %v1261
      %v1326 = vadd.f32 %v1005, %v1266
      %v1327 = vadd.f32 %v1006, %v1269
      %v1328 = vadd.f32 %v1007, %v1274
      %v1329 = vadd.f32 %v1008, %v1277
      %v1330 = vadd.f32 %v1009, %v1282
      %v1331 = vadd.f32 %v1010, %v1285
      %v1332 = vadd.f32 %v1011, %v1290
      %v1333 = vadd.f32 %v1012, %v1293
      %v1334 = vadd.f32 %v1013, %v1298
      %v1335 = vadd.f32 %v1014, %v1301
      %1336 = vst.msk [vmem:[#allocation3] sm:$0xff] %vm950, %v1304
      %1337 = vst.msk [vmem:[#allocation3 + $0x8] sm:$0xff] %vm950, %v1305
      %1338 = vst.msk [vmem:[#allocation3 + $0x10] sm:$0xff] %vm950, %v1306
      %1339 = vst.msk [vmem:[#allocation3 + $0x18] sm:$0xff] %vm950, %v1307
      %1340 = vst.msk [vmem:[#allocation3 + $0x20] sm:$0xff] %vm950, %v1308
      %1341 = vst.msk [vmem:[#allocation3 + $0x28] sm:$0xff] %vm950, %v1309
      %1342 = vst.msk [vmem:[#allocation3 + $0x30] sm:$0xff] %vm950, %v1310
      %1343 = vst.msk [vmem:[#allocation3 + $0x38] sm:$0xff] %vm950, %v1311
      %1344 = vst.msk [vmem:[#allocation3 + $0x40] sm:$0xff] %vm950, %v1312
      %1345 = vst.msk [vmem:[#allocation3 + $0x48] sm:$0xff] %vm950, %v1313
      %1346 = vst.msk [vmem:[#allocation3 + $0x50] sm:$0xff] %vm950, %v1314
      %1347 = vst.msk [vmem:[#allocation3 + $0x58] sm:$0xff] %vm950, %v1315
      %1348 = vst.msk [vmem:[#allocation3 + $0x60] sm:$0xff] %vm950, %v1316
      %1349 = vst.msk [vmem:[#allocation3 + $0x68] sm:$0xff] %vm950, %v1317
      %1350 = vst.msk [vmem:[#allocation3 + $0x70] sm:$0xff] %vm950, %v1318
      %1351 = vst.msk [vmem:[#allocation3 + $0x78] sm:$0xff] %vm950, %v1319
      %1352 = vst.msk [vmem:[#allocation3 + $0x80] sm:$0xff] %vm950, %v1320
      %1353 = vst.msk [vmem:[#allocation3 + $0x88] sm:$0xff] %vm950, %v1321
      %1354 = vst.msk [vmem:[#allocation3 + $0x90] sm:$0xff] %vm950, %v1322
      %1355 = vst.msk [vmem:[#allocation3 + $0x98] sm:$0xff] %vm950, %v1323
      %1356 = vst.msk [vmem:[#allocation3 + $0xa0] sm:$0xff] %vm950, %v1324
      %1357 = vst.msk [vmem:[#allocation3 + $0xa8] sm:$0xff] %vm950, %v1325
      %1358 = vst.msk [vmem:[#allocation3 + $0xb0] sm:$0xff] %vm950, %v1326
      %1359 = vst.msk [vmem:[#allocation3 + $0xb8] sm:$0xff] %vm950, %v1327
      %1360 = vst.msk [vmem:[#allocation3 + $0xc0] sm:$0xff] %vm950, %v1328
      %1361 = vst.msk [vmem:[#allocation3 + $0xc8] sm:$0xff] %vm950, %v1329
      %1362 = vst.msk [vmem:[#allocation3 + $0xd0] sm:$0xff] %vm950, %v1330
      %1363 = vst.msk [vmem:[#allocation3 + $0xd8] sm:$0xff] %vm950, %v1331
      %1364 = vst.msk [vmem:[#allocation3 + $0xe0] sm:$0xff] %vm950, %v1332
      %1365 = vst.msk [vmem:[#allocation3 + $0xe8] sm:$0xff] %vm950, %v1333
      %1366 = vst.msk [vmem:[#allocation3 + $0xf0] sm:$0xff] %vm950, %v1334
      %1367 = vst.msk [vmem:[#allocation3 + $0xf8] sm:$0xff] %vm950, %v1335
      %v1368 = vld [vmem:[#allocation4] sm:$0xff]
      %v1369 = vld [vmem:[#allocation4 + $0x8] sm:$0xff]
      %v1370 = vld [vmem:[#allocation4 + $0x10] sm:$0xff]
      %v1371 = vld [vmem:[#allocation4 + $0x18] sm:$0xff]
      %v1372 = vld [vmem:[#allocation4 + $0x20] sm:$0xff]
      %v1373 = vld [vmem:[#allocation4 + $0x28] sm:$0xff]
      %v1374 = vld [vmem:[#allocation4 + $0x30] sm:$0xff]
      %v1375 = vld [vmem:[#allocation4 + $0x38] sm:$0xff]
      %v1376 = vld [vmem:[#allocation4 + $0x40] sm:$0xff]
      %v1377 = vld [vmem:[#allocation4 + $0x48] sm:$0xff]
      %v1378 = vld [vmem:[#allocation4 + $0x50] sm:$0xff]
      %v1379 = vld [vmem:[#allocation4 + $0x58] sm:$0xff]
      %v1380 = vld [vmem:[#allocation4 + $0x60] sm:$0xff]
      %v1381 = vld [vmem:[#allocation4 + $0x68] sm:$0xff]
      %v1382 = vld [vmem:[#allocation4 + $0x70] sm:$0xff]
      %v1383 = vld [vmem:[#allocation4 + $0x78] sm:$0xff]
      %v1384 = vld [vmem:[#allocation4 + $0x80] sm:$0xff]
      %v1385 = vld [vmem:[#allocation4 + $0x88] sm:$0xff]
      %v1386 = vld [vmem:[#allocation4 + $0x90] sm:$0xff]
      %v1387 = vld [vmem:[#allocation4 + $0x98] sm:$0xff]
      %v1388 = vld [vmem:[#allocation4 + $0xa0] sm:$0xff]
      %v1389 = vld [vmem:[#allocation4 + $0xa8] sm:$0xff]
      %v1390 = vld [vmem:[#allocation4 + $0xb0] sm:$0xff]
      %v1391 = vld [vmem:[#allocation4 + $0xb8] sm:$0xff]
      %v1392 = vld [vmem:[#allocation4 + $0xc0] sm:$0xff]
      %v1393 = vld [vmem:[#allocation4 + $0xc8] sm:$0xff]
      %v1394 = vld [vmem:[#allocation4 + $0xd0] sm:$0xff]
      %v1395 = vld [vmem:[#allocation4 + $0xd8] sm:$0xff]
      %v1396 = vld [vmem:[#allocation4 + $0xe0] sm:$0xff]
      %v1397 = vld [vmem:[#allocation4 + $0xe8] sm:$0xff]
      %v1398 = vld [vmem:[#allocation4 + $0xf0] sm:$0xff]
      %v1399 = vld [vmem:[#allocation4 + $0xf8] sm:$0xff]
      %v1400 = vld [vmem:[%s376] sm:$0xf]
      %v1401 = vld [vmem:[%s376 + $0x4] sm:$0xf]
      %v1402 = vld [vmem:[%s376 + $0x8] sm:$0xf]
      %v1403 = vld [vmem:[%s376 + $0xc] sm:$0xf]
      %v1404 = vld [vmem:[%s376 + $0x10] sm:$0xf]
      %v1405 = vld [vmem:[%s376 + $0x14] sm:$0xf]
      %v1406 = vld [vmem:[%s376 + $0x18] sm:$0xf]
      %v1407 = vld [vmem:[%s376 + $0x1c] sm:$0xf]
      %v1408 = vld [vmem:[%s376 + $0x20] sm:$0xf]
      %v1409 = vld [vmem:[%s376 + $0x24] sm:$0xf]
      %v1410 = vld [vmem:[%s376 + $0x28] sm:$0xf]
      %v1411 = vld [vmem:[%s376 + $0x2c] sm:$0xf]
      %v1412 = vld [vmem:[%s376 + $0x30] sm:$0xf]
      %v1413 = vld [vmem:[%s376 + $0x34] sm:$0xf]
      %v1414 = vld [vmem:[%s376 + $0x38] sm:$0xf]
      %v1415 = vld [vmem:[%s376 + $0x3c] sm:$0xf]
      %v1416 = vld [vmem:[%s376 + $0x40] sm:$0xf]
      %v1417 = vld [vmem:[%s376 + $0x44] sm:$0xf]
      %v1418 = vld [vmem:[%s376 + $0x48] sm:$0xf]
      %v1419 = vld [vmem:[%s376 + $0x4c] sm:$0xf]
      %v1420 = vld [vmem:[%s376 + $0x50] sm:$0xf]
      %v1421 = vld [vmem:[%s376 + $0x54] sm:$0xf]
      %v1422 = vld [vmem:[%s376 + $0x58] sm:$0xf]
      %v1423 = vld [vmem:[%s376 + $0x5c] sm:$0xf]
      %v1424 = vld [vmem:[%s376 + $0x60] sm:$0xf]
      %v1425 = vld [vmem:[%s376 + $0x64] sm:$0xf]
      %v1426 = vld [vmem:[%s376 + $0x68] sm:$0xf]
      %v1427 = vld [vmem:[%s376 + $0x6c] sm:$0xf]
      %v1428 = vld [vmem:[%s376 + $0x70] sm:$0xf]
      %v1429 = vld [vmem:[%s376 + $0x74] sm:$0xf]
      %v1430 = vld [vmem:[%s376 + $0x78] sm:$0xf]
      %v1431 = vld [vmem:[%s376 + $0x7c] sm:$0xf]
      %v1464 = vunpack.c.l.b16 %v1400
      %v1465 = vunpack.c.l.b16 %v1401
      %v1466 = vunpack.c.l.b16 %v1402
      %v1467 = vunpack.c.l.b16 %v1403
      %v1468 = vunpack.c.l.b16 %v1404
      %v1469 = vunpack.c.l.b16 %v1405
      %v1470 = vunpack.c.l.b16 %v1406
      %v1471 = vunpack.c.l.b16 %v1407
      %v1472 = vunpack.c.l.b16 %v1408
      %v1473 = vunpack.c.l.b16 %v1409
      %v1474 = vunpack.c.l.b16 %v1410
      %v1475 = vunpack.c.l.b16 %v1411
      %v1476 = vunpack.c.l.b16 %v1412
      %v1477 = vunpack.c.l.b16 %v1413
      %v1478 = vunpack.c.l.b16 %v1414
      %v1479 = vunpack.c.l.b16 %v1415
      %v1480 = vunpack.c.l.b16 %v1416
      %v1481 = vunpack.c.l.b16 %v1417
      %v1482 = vunpack.c.l.b16 %v1418
      %v1483 = vunpack.c.l.b16 %v1419
      %v1484 = vunpack.c.l.b16 %v1420
      %v1485 = vunpack.c.l.b16 %v1421
      %v1486 = vunpack.c.l.b16 %v1422
      %v1487 = vunpack.c.l.b16 %v1423
      %v1488 = vunpack.c.l.b16 %v1424
      %v1489 = vunpack.c.l.b16 %v1425
      %v1490 = vunpack.c.l.b16 %v1426
      %v1491 = vunpack.c.l.b16 %v1427
      %v1492 = vunpack.c.l.b16 %v1428
      %v1493 = vunpack.c.l.b16 %v1429
      %v1494 = vunpack.c.l.b16 %v1430
      %v1495 = vunpack.c.l.b16 %v1431
      %v1496 = vpack.c.b16 %v1465, %v1464
      %v1497 = vpack.c.b16 %v1467, %v1466
      %v1498 = vpack.c.b16 %v1469, %v1468
      %v1499 = vpack.c.b16 %v1471, %v1470
      %v1500 = vpack.c.b16 %v1473, %v1472
      %v1501 = vpack.c.b16 %v1475, %v1474
      %v1502 = vpack.c.b16 %v1477, %v1476
      %v1503 = vpack.c.b16 %v1479, %v1478
      %v1504 = vpack.c.b16 %v1481, %v1480
      %v1505 = vpack.c.b16 %v1483, %v1482
      %v1506 = vpack.c.b16 %v1485, %v1484
      %v1507 = vpack.c.b16 %v1487, %v1486
      %v1508 = vpack.c.b16 %v1489, %v1488
      %v1509 = vpack.c.b16 %v1491, %v1490
      %v1510 = vpack.c.b16 %v1493, %v1492
      %v1511 = vpack.c.b16 %v1495, %v1494
      %1528 = vmatprep.subr.bf16.mxu0 0
      %1529 = vmatpush1.bf16.msra.mxu0 %v741
      %1530 = vmatprep.subr.bf16.mxu0 0
      %1531 = vmatpush1.bf16.msra.mxu0 %v742
      %1532 = vmatprep.subr.bf16.mxu0 0
      %1533 = vmatpush1.bf16.msra.mxu0 %v743
      %1534 = vmatprep.subr.bf16.mxu0 0
      %1535 = vmatpush1.bf16.msra.mxu0 %v744
      %1536 = vmatprep.subr.bf16.mxu0 0
      %1537 = vmatpush1.bf16.msra.mxu0 %v745
      %1538 = vmatprep.subr.bf16.mxu0 0
      %1539 = vmatpush1.bf16.msra.mxu0 %v746
      %1540 = vmatprep.subr.bf16.mxu0 0
      %1541 = vmatpush1.bf16.msra.mxu0 %v747
      %1542 = vmatprep.subr.bf16.mxu0 0
      %1543 = vmatpush1.bf16.msra.mxu0 %v748
      %1544 = vmatprep.subr.bf16.mxu0 0
      %1545 = vmatpush1.bf16.msra.mxu0 0
      %1546 = vmatprep.subr.bf16.mxu0 0
      %1547 = vmatpush1.bf16.msra.mxu0 0
      %1548 = vmatprep.subr.bf16.mxu0 0
      %1549 = vmatpush1.bf16.msra.mxu0 0
      %1550 = vmatprep.subr.bf16.mxu0 0
      %1551 = vmatpush1.bf16.msra.mxu0 0
      %1552 = vmatprep.subr.bf16.mxu0 0
      %1553 = vmatpush1.bf16.msra.mxu0 0
      %1554 = vmatprep.subr.bf16.mxu0 0
      %1555 = vmatpush1.bf16.msra.mxu0 0
      %1556 = vmatprep.subr.bf16.mxu0 0
      %1557 = vmatpush1.bf16.msra.mxu0 0
      %1558 = vmatprep.subr.bf16.mxu0 0
      %1559 = vmatpush1.bf16.msra.mxu0 0
      %1560 = vmatprep.mubr.bf16.mxu0 0
      %1561 = vmatmul.mubr.bf16.gmra.mrb[0].mxu0 %v1496
      %v1562 = vpop.f32.mrb[0].mxu0
      %v1563 = vadd.f32 0.0, %v1562
      %v1564 = vpop.f32.mrb[0].mxu0
      %v1565 = vpop.f32.mrb[0].mxu0
      %v1566 = vadd.f32 0.0, %v1565
      %v1567 = vpop.f32.mrb[0].mxu0
      %1568 = vmatprep.mubr.bf16.mxu0 0
      %1569 = vmatmul.mubr.bf16.gmra.mrb[0].mxu0 %v1497
      %v1570 = vpop.f32.mrb[0].mxu0
      %v1571 = vadd.f32 0.0, %v1570
      %v1572 = vpop.f32.mrb[0].mxu0
      %v1573 = vpop.f32.mrb[0].mxu0
      %v1574 = vadd.f32 0.0, %v1573
      %v1575 = vpop.f32.mrb[0].mxu0
      %1576 = vmatprep.mubr.bf16.mxu0 0
      %1577 = vmatmul.mubr.bf16.gmra.mrb[0].mxu0 %v1498
      %v1578 = vpop.f32.mrb[0].mxu0
      %v1579 = vadd.f32 0.0, %v1578
      %v1580 = vpop.f32.mrb[0].mxu0
      %v1581 = vpop.f32.mrb[0].mxu0
      %v1582 = vadd.f32 0.0, %v1581
      %v1583 = vpop.f32.mrb[0].mxu0
      %1584 = vmatprep.mubr.bf16.mxu0 0
      %1585 = vmatmul.mubr.bf16.gmra.mrb[0].mxu0 %v1499
      %v1586 = vpop.f32.mrb[0].mxu0
      %v1587 = vadd.f32 0.0, %v1586
      %v1588 = vpop.f32.mrb[0].mxu0
      %v1589 = vpop.f32.mrb[0].mxu0
      %v1590 = vadd.f32 0.0, %v1589
      %v1591 = vpop.f32.mrb[0].mxu0
      %1592 = vmatprep.mubr.bf16.mxu0 0
      %1593 = vmatmul.mubr.bf16.gmra.mrb[0].mxu0 %v1500
      %v1594 = vpop.f32.mrb[0].mxu0
      %v1595 = vadd.f32 0.0, %v1594
      %v1596 = vpop.f32.mrb[0].mxu0
      %v1597 = vpop.f32.mrb[0].mxu0
      %v1598 = vadd.f32 0.0, %v1597
      %v1599 = vpop.f32.mrb[0].mxu0
      %1600 = vmatprep.mubr.bf16.mxu0 0
      %1601 = vmatmul.mubr.bf16.gmra.mrb[0].mxu0 %v1501
      %v1602 = vpop.f32.mrb[0].mxu0
      %v1603 = vadd.f32 0.0, %v1602
      %v1604 = vpop.f32.mrb[0].mxu0
      %v1605 = vpop.f32.mrb[0].mxu0
      %v1606 = vadd.f32 0.0, %v1605
      %v1607 = vpop.f32.mrb[0].mxu0
      %1608 = vmatprep.mubr.bf16.mxu0 0
      %1609 = vmatmul.mubr.bf16.gmra.mrb[0].mxu0 %v1502
      %v1610 = vpop.f32.mrb[0].mxu0
      %v1611 = vadd.f32 0.0, %v1610
      %v1612 = vpop.f32.mrb[0].mxu0
      %v1613 = vpop.f32.mrb[0].mxu0
      %v1614 = vadd.f32 0.0, %v1613
      %v1615 = vpop.f32.mrb[0].mxu0
      %1616 = vmatprep.mubr.bf16.mxu0 0
      %1617 = vmatmul.mubr.bf16.gmra.mrb[0].mxu0 %v1503
      %v1618 = vpop.f32.mrb[0].mxu0
      %v1619 = vadd.f32 0.0, %v1618
      %v1620 = vpop.f32.mrb[0].mxu0
      %v1621 = vpop.f32.mrb[0].mxu0
      %v1622 = vadd.f32 0.0, %v1621
      %v1623 = vpop.f32.mrb[0].mxu0
      %1624 = vmatprep.mubr.bf16.mxu0 0
      %1625 = vmatmul.mubr.bf16.gmra.mrb[0].mxu0 %v1504
      %v1626 = vpop.f32.mrb[0].mxu0
      %v1627 = vadd.f32 0.0, %v1626
      %v1628 = vpop.f32.mrb[0].mxu0
      %v1629 = vpop.f32.mrb[0].mxu0
      %v1630 = vadd.f32 0.0, %v1629
      %v1631 = vpop.f32.mrb[0].mxu0
      %1632 = vmatprep.mubr.bf16.mxu0 0
      %1633 = vmatmul.mubr.bf16.gmra.mrb[0].mxu0 %v1505
      %v1634 = vpop.f32.mrb[0].mxu0
      %v1635 = vadd.f32 0.0, %v1634
      %v1636 = vpop.f32.mrb[0].mxu0
      %v1637 = vpop.f32.mrb[0].mxu0
      %v1638 = vadd.f32 0.0, %v1637
      %v1639 = vpop.f32.mrb[0].mxu0
      %1640 = vmatprep.mubr.bf16.mxu0 0
      %1641 = vmatmul.mubr.bf16.gmra.mrb[0].mxu0 %v1506
      %v1642 = vpop.f32.mrb[0].mxu0
      %v1643 = vadd.f32 0.0, %v1642
      %v1644 = vpop.f32.mrb[0].mxu0
      %v1645 = vpop.f32.mrb[0].mxu0
      %v1646 = vadd.f32 0.0, %v1645
      %v1647 = vpop.f32.mrb[0].mxu0
      %1648 = vmatprep.mubr.bf16.mxu0 0
      %1649 = vmatmul.mubr.bf16.gmra.mrb[0].mxu0 %v1507
      %v1650 = vpop.f32.mrb[0].mxu0
      %v1651 = vadd.f32 0.0, %v1650
      %v1652 = vpop.f32.mrb[0].mxu0
      %v1653 = vpop.f32.mrb[0].mxu0
      %v1654 = vadd.f32 0.0, %v1653
      %v1655 = vpop.f32.mrb[0].mxu0
      %1656 = vmatprep.mubr.bf16.mxu0 0
      %1657 = vmatmul.mubr.bf16.gmra.mrb[0].mxu0 %v1508
      %v1658 = vpop.f32.mrb[0].mxu0
      %v1659 = vadd.f32 0.0, %v1658
      %v1660 = vpop.f32.mrb[0].mxu0
      %v1661 = vpop.f32.mrb[0].mxu0
      %v1662 = vadd.f32 0.0, %v1661
      %v1663 = vpop.f32.mrb[0].mxu0
      %1664 = vmatprep.mubr.bf16.mxu0 0
      %1665 = vmatmul.mubr.bf16.gmra.mrb[0].mxu0 %v1509
      %v1666 = vpop.f32.mrb[0].mxu0
      %v1667 = vadd.f32 0.0, %v1666
      %v1668 = vpop.f32.mrb[0].mxu0
      %v1669 = vpop.f32.mrb[0].mxu0
      %v1670 = vadd.f32 0.0, %v1669
      %v1671 = vpop.f32.mrb[0].mxu0
      %1672 = vmatprep.mubr.bf16.mxu0 0
      %1673 = vmatmul.mubr.bf16.gmra.mrb[0].mxu0 %v1510
      %v1674 = vpop.f32.mrb[0].mxu0
      %v1675 = vadd.f32 0.0, %v1674
      %v1676 = vpop.f32.mrb[0].mxu0
      %v1677 = vpop.f32.mrb[0].mxu0
      %v1678 = vadd.f32 0.0, %v1677
      %v1679 = vpop.f32.mrb[0].mxu0
      %1680 = vmatprep.mubr.bf16.mxu0 0
      %1681 = vmatmul.mubr.bf16.gmra.mrb[0].mxu0 %v1511
      %v1682 = vpop.f32.mrb[0].mxu0
      %v1683 = vadd.f32 0.0, %v1682
      %v1684 = vpop.f32.mrb[0].mxu0
      %v1685 = vpop.f32.mrb[0].mxu0
      %v1686 = vadd.f32 0.0, %v1685
      %v1687 = vpop.f32.mrb[0].mxu0
      %1688 = vdwg.mxu0
      %v1689 = vadd.f32 %v1368, %v1563
      %v1690 = vadd.f32 %v1369, %v1566
      %v1691 = vadd.f32 %v1370, %v1571
      %v1692 = vadd.f32 %v1371, %v1574
      %v1693 = vadd.f32 %v1372, %v1579
      %v1694 = vadd.f32 %v1373, %v1582
      %v1695 = vadd.f32 %v1374, %v1587
      %v1696 = vadd.f32 %v1375, %v1590
      %v1697 = vadd.f32 %v1376, %v1595
      %v1698 = vadd.f32 %v1377, %v1598
      %v1699 = vadd.f32 %v1378, %v1603
      %v1700 = vadd.f32 %v1379, %v1606
      %v1701 = vadd.f32 %v1380, %v1611
      %v1702 = vadd.f32 %v1381, %v1614
      %v1703 = vadd.f32 %v1382, %v1619
      %v1704 = vadd.f32 %v1383, %v1622
      %v1705 = vadd.f32 %v1384, %v1627
      %v1706 = vadd.f32 %v1385, %v1630
      %v1707 = vadd.f32 %v1386, %v1635
      %v1708 = vadd.f32 %v1387, %v1638
      %v1709 = vadd.f32 %v1388, %v1643
      %v1710 = vadd.f32 %v1389, %v1646
      %v1711 = vadd.f32 %v1390, %v1651
      %v1712 = vadd.f32 %v1391, %v1654
      %v1713 = vadd.f32 %v1392, %v1659
      %v1714 = vadd.f32 %v1393, %v1662
      %v1715 = vadd.f32 %v1394, %v1667
      %v1716 = vadd.f32 %v1395, %v1670
      %v1717 = vadd.f32 %v1396, %v1675
      %v1718 = vadd.f32 %v1397, %v1678
      %v1719 = vadd.f32 %v1398, %v1683
      %v1720 = vadd.f32 %v1399, %v1686
      %1721 = vst.msk [vmem:[#allocation4] sm:$0xff] %vm950, %v1689
      %1722 = vst.msk [vmem:[#allocation4 + $0x8] sm:$0xff] %vm950, %v1690
      %1723 = vst.msk [vmem:[#allocation4 + $0x10] sm:$0xff] %vm950, %v1691
      %1724 = vst.msk [vmem:[#allocation4 + $0x18] sm:$0xff] %vm950, %v1692
      %1725 = vst.msk [vmem:[#allocation4 + $0x20] sm:$0xff] %vm950, %v1693
      %1726 = vst.msk [vmem:[#allocation4 + $0x28] sm:$0xff] %vm950, %v1694
      %1727 = vst.msk [vmem:[#allocation4 + $0x30] sm:$0xff] %vm950, %v1695
      %1728 = vst.msk [vmem:[#allocation4 + $0x38] sm:$0xff] %vm950, %v1696
      %1729 = vst.msk [vmem:[#allocation4 + $0x40] sm:$0xff] %vm950, %v1697
      %1730 = vst.msk [vmem:[#allocation4 + $0x48] sm:$0xff] %vm950, %v1698
      %1731 = vst.msk [vmem:[#allocation4 + $0x50] sm:$0xff] %vm950, %v1699
      %1732 = vst.msk [vmem:[#allocation4 + $0x58] sm:$0xff] %vm950, %v1700
      %1733 = vst.msk [vmem:[#allocation4 + $0x60] sm:$0xff] %vm950, %v1701
      %1734 = vst.msk [vmem:[#allocation4 + $0x68] sm:$0xff] %vm950, %v1702
      %1735 = vst.msk [vmem:[#allocation4 + $0x70] sm:$0xff] %vm950, %v1703
      %1736 = vst.msk [vmem:[#allocation4 + $0x78] sm:$0xff] %vm950, %v1704
      %1737 = vst.msk [vmem:[#allocation4 + $0x80] sm:$0xff] %vm950, %v1705
      %1738 = vst.msk [vmem:[#allocation4 + $0x88] sm:$0xff] %vm950, %v1706
      %1739 = vst.msk [vmem:[#allocation4 + $0x90] sm:$0xff] %vm950, %v1707
      %1740 = vst.msk [vmem:[#allocation4 + $0x98] sm:$0xff] %vm950, %v1708
      %1741 = vst.msk [vmem:[#allocation4 + $0xa0] sm:$0xff] %vm950, %v1709
      %1742 = vst.msk [vmem:[#allocation4 + $0xa8] sm:$0xff] %vm950, %v1710
      %1743 = vst.msk [vmem:[#allocation4 + $0xb0] sm:$0xff] %vm950, %v1711
      %1744 = vst.msk [vmem:[#allocation4 + $0xb8] sm:$0xff] %vm950, %v1712
      %1745 = vst.msk [vmem:[#allocation4 + $0xc0] sm:$0xff] %vm950, %v1713
      %1746 = vst.msk [vmem:[#allocation4 + $0xc8] sm:$0xff] %vm950, %v1714
      %1747 = vst.msk [vmem:[#allocation4 + $0xd0] sm:$0xff] %vm950, %v1715
      %1748 = vst.msk [vmem:[#allocation4 + $0xd8] sm:$0xff] %vm950, %v1716
      %1749 = vst.msk [vmem:[#allocation4 + $0xe0] sm:$0xff] %vm950, %v1717
      %1750 = vst.msk [vmem:[#allocation4 + $0xe8] sm:$0xff] %vm950, %v1718
      %1751 = vst.msk [vmem:[#allocation4 + $0xf0] sm:$0xff] %vm950, %v1719
      %1752 = vst.msk [vmem:[#allocation4 + $0xf8] sm:$0xff] %vm950, %v1720
      %v1753 = vld [vmem:[#allocation5] sm:$0xff]
      %v1754 = vld [vmem:[#allocation5 + $0x8] sm:$0xff]
      %v1755 = vld [vmem:[#allocation5 + $0x10] sm:$0xff]
      %v1756 = vld [vmem:[#allocation5 + $0x18] sm:$0xff]
      %v1757 = vld [vmem:[#allocation5 + $0x20] sm:$0xff]
      %v1758 = vld [vmem:[#allocation5 + $0x28] sm:$0xff]
      %v1759 = vld [vmem:[#allocation5 + $0x30] sm:$0xff]
      %v1760 = vld [vmem:[#allocation5 + $0x38] sm:$0xff]
      %v1761 = vld [vmem:[#allocation5 + $0x40] sm:$0xff]
      %v1762 = vld [vmem:[#allocation5 + $0x48] sm:$0xff]
      %v1763 = vld [vmem:[#allocation5 + $0x50] sm:$0xff]
      %v1764 = vld [vmem:[#allocation5 + $0x58] sm:$0xff]
      %v1765 = vld [vmem:[#allocation5 + $0x60] sm:$0xff]
      %v1766 = vld [vmem:[#allocation5 + $0x68] sm:$0xff]
      %v1767 = vld [vmem:[#allocation5 + $0x70] sm:$0xff]
      %v1768 = vld [vmem:[#allocation5 + $0x78] sm:$0xff]
      %v1769 = vld [vmem:[#allocation5 + $0x80] sm:$0xff]
      %v1770 = vld [vmem:[#allocation5 + $0x88] sm:$0xff]
      %v1771 = vld [vmem:[#allocation5 + $0x90] sm:$0xff]
      %v1772 = vld [vmem:[#allocation5 + $0x98] sm:$0xff]
      %v1773 = vld [vmem:[#allocation5 + $0xa0] sm:$0xff]
      %v1774 = vld [vmem:[#allocation5 + $0xa8] sm:$0xff]
      %v1775 = vld [vmem:[#allocation5 + $0xb0] sm:$0xff]
      %v1776 = vld [vmem:[#allocation5 + $0xb8] sm:$0xff]
      %v1777 = vld [vmem:[#allocation5 + $0xc0] sm:$0xff]
      %v1778 = vld [vmem:[#allocation5 + $0xc8] sm:$0xff]
      %v1779 = vld [vmem:[#allocation5 + $0xd0] sm:$0xff]
      %v1780 = vld [vmem:[#allocation5 + $0xd8] sm:$0xff]
      %v1781 = vld [vmem:[#allocation5 + $0xe0] sm:$0xff]
      %v1782 = vld [vmem:[#allocation5 + $0xe8] sm:$0xff]
      %v1783 = vld [vmem:[#allocation5 + $0xf0] sm:$0xff]
      %v1784 = vld [vmem:[#allocation5 + $0xf8] sm:$0xff]
      %v1785 = vld [vmem:[%s385] sm:$0xf]
      %v1786 = vld [vmem:[%s385 + $0x4] sm:$0xf]
      %v1787 = vld [vmem:[%s385 + $0x8] sm:$0xf]
      %v1788 = vld [vmem:[%s385 + $0xc] sm:$0xf]
      %v1789 = vld [vmem:[%s385 + $0x10] sm:$0xf]
      %v1790 = vld [vmem:[%s385 + $0x14] sm:$0xf]
      %v1791 = vld [vmem:[%s385 + $0x18] sm:$0xf]
      %v1792 = vld [vmem:[%s385 + $0x1c] sm:$0xf]
      %v1793 = vld [vmem:[%s385 + $0x20] sm:$0xf]
      %v1794 = vld [vmem:[%s385 + $0x24] sm:$0xf]
      %v1795 = vld [vmem:[%s385 + $0x28] sm:$0xf]
      %v1796 = vld [vmem:[%s385 + $0x2c] sm:$0xf]
      %v1797 = vld [vmem:[%s385 + $0x30] sm:$0xf]
      %v1798 = vld [vmem:[%s385 + $0x34] sm:$0xf]
      %v1799 = vld [vmem:[%s385 + $0x38] sm:$0xf]
      %v1800 = vld [vmem:[%s385 + $0x3c] sm:$0xf]
      %v1801 = vld [vmem:[%s385 + $0x40] sm:$0xf]
      %v1802 = vld [vmem:[%s385 + $0x44] sm:$0xf]
      %v1803 = vld [vmem:[%s385 + $0x48] sm:$0xf]
      %v1804 = vld [vmem:[%s385 + $0x4c] sm:$0xf]
      %v1805 = vld [vmem:[%s385 + $0x50] sm:$0xf]
      %v1806 = vld [vmem:[%s385 + $0x54] sm:$0xf]
      %v1807 = vld [vmem:[%s385 + $0x58] sm:$0xf]
      %v1808 = vld [vmem:[%s385 + $0x5c] sm:$0xf]
      %v1809 = vld [vmem:[%s385 + $0x60] sm:$0xf]
      %v1810 = vld [vmem:[%s385 + $0x64] sm:$0xf]
      %v1811 = vld [vmem:[%s385 + $0x68] sm:$0xf]
      %v1812 = vld [vmem:[%s385 + $0x6c] sm:$0xf]
      %v1813 = vld [vmem:[%s385 + $0x70] sm:$0xf]
      %v1814 = vld [vmem:[%s385 + $0x74] sm:$0xf]
      %v1815 = vld [vmem:[%s385 + $0x78] sm:$0xf]
      %v1816 = vld [vmem:[%s385 + $0x7c] sm:$0xf]
      %v1849 = vunpack.c.l.b16 %v1785
      %v1850 = vunpack.c.l.b16 %v1786
      %v1851 = vunpack.c.l.b16 %v1787
      %v1852 = vunpack.c.l.b16 %v1788
      %v1853 = vunpack.c.l.b16 %v1789
      %v1854 = vunpack.c.l.b16 %v1790
      %v1855 = vunpack.c.l.b16 %v1791
      %v1856 = vunpack.c.l.b16 %v1792
      %v1857 = vunpack.c.l.b16 %v1793
      %v1858 = vunpack.c.l.b16 %v1794
      %v1859 = vunpack.c.l.b16 %v1795
      %v1860 = vunpack.c.l.b16 %v1796
      %v1861 = vunpack.c.l.b16 %v1797
      %v1862 = vunpack.c.l.b16 %v1798
      %v1863 = vunpack.c.l.b16 %v1799
      %v1864 = vunpack.c.l.b16 %v1800
      %v1865 = vunpack.c.l.b16 %v1801
      %v1866 = vunpack.c.l.b16 %v1802
      %v1867 = vunpack.c.l.b16 %v1803
      %v1868 = vunpack.c.l.b16 %v1804
      %v1869 = vunpack.c.l.b16 %v1805
      %v1870 = vunpack.c.l.b16 %v1806
      %v1871 = vunpack.c.l.b16 %v1807
      %v1872 = vunpack.c.l.b16 %v1808
      %v1873 = vunpack.c.l.b16 %v1809
      %v1874 = vunpack.c.l.b16 %v1810
      %v1875 = vunpack.c.l.b16 %v1811
      %v1876 = vunpack.c.l.b16 %v1812
      %v1877 = vunpack.c.l.b16 %v1813
      %v1878 = vunpack.c.l.b16 %v1814
      %v1879 = vunpack.c.l.b16 %v1815
      %v1880 = vunpack.c.l.b16 %v1816
      %v1881 = vpack.c.b16 %v1850, %v1849
      %v1882 = vpack.c.b16 %v1852, %v1851
      %v1883 = vpack.c.b16 %v1854, %v1853
      %v1884 = vpack.c.b16 %v1856, %v1855
      %v1885 = vpack.c.b16 %v1858, %v1857
      %v1886 = vpack.c.b16 %v1860, %v1859
      %v1887 = vpack.c.b16 %v1862, %v1861
      %v1888 = vpack.c.b16 %v1864, %v1863
      %v1889 = vpack.c.b16 %v1866, %v1865
      %v1890 = vpack.c.b16 %v1868, %v1867
      %v1891 = vpack.c.b16 %v1870, %v1869
      %v1892 = vpack.c.b16 %v1872, %v1871
      %v1893 = vpack.c.b16 %v1874, %v1873
      %v1894 = vpack.c.b16 %v1876, %v1875
      %v1895 = vpack.c.b16 %v1878, %v1877
      %v1896 = vpack.c.b16 %v1880, %v1879
      %1913 = vmatprep.subr.bf16.mxu0 0
      %1914 = vmatpush1.bf16.msra.mxu0 %v741
      %1915 = vmatprep.subr.bf16.mxu0 0
      %1916 = vmatpush1.bf16.msra.mxu0 %v742
      %1917 = vmatprep.subr.bf16.mxu0 0
      %1918 = vmatpush1.bf16.msra.mxu0 %v743
      %1919 = vmatprep.subr.bf16.mxu0 0
      %1920 = vmatpush1.bf16.msra.mxu0 %v744
      %1921 = vmatprep.subr.bf16.mxu0 0
      %1922 = vmatpush1.bf16.msra.mxu0 %v745
      %1923 = vmatprep.subr.bf16.mxu0 0
      %1924 = vmatpush1.bf16.msra.mxu0 %v746
      %1925 = vmatprep.subr.bf16.mxu0 0
      %1926 = vmatpush1.bf16.msra.mxu0 %v747
      %1927 = vmatprep.subr.bf16.mxu0 0
      %1928 = vmatpush1.bf16.msra.mxu0 %v748
      %1929 = vmatprep.subr.bf16.mxu0 0
      %1930 = vmatpush1.bf16.msra.mxu0 0
      %1931 = vmatprep.subr.bf16.mxu0 0
      %1932 = vmatpush1.bf16.msra.mxu0 0
      %1933 = vmatprep.subr.bf16.mxu0 0
      %1934 = vmatpush1.bf16.msra.mxu0 0
      %1935 = vmatprep.subr.bf16.mxu0 0
      %1936 = vmatpush1.bf16.msra.mxu0 0
      %1937 = vmatprep.subr.bf16.mxu0 0
      %1938 = vmatpush1.bf16.msra.mxu0 0
      %1939 = vmatprep.subr.bf16.mxu0 0
      %1940 = vmatpush1.bf16.msra.mxu0 0
      %1941 = vmatprep.subr.bf16.mxu0 0
      %1942 = vmatpush1.bf16.msra.mxu0 0
      %1943 = vmatprep.subr.bf16.mxu0 0
      %1944 = vmatpush1.bf16.msra.mxu0 0
      %1945 = vmatprep.mubr.bf16.mxu0 0
      %1946 = vmatmul.mubr.bf16.gmra.mrb[0].mxu0 %v1881
      %v1947 = vpop.f32.mrb[0].mxu0
      %v1948 = vadd.f32 0.0, %v1947
      %v1949 = vpop.f32.mrb[0].mxu0
      %v1950 = vpop.f32.mrb[0].mxu0
      %v1951 = vadd.f32 0.0, %v1950
      %v1952 = vpop.f32.mrb[0].mxu0
      %1953 = vmatprep.mubr.bf16.mxu0 0
      %1954 = vmatmul.mubr.bf16.gmra.mrb[0].mxu0 %v1882
      %v1955 = vpop.f32.mrb[0].mxu0
      %v1956 = vadd.f32 0.0, %v1955
      %v1957 = vpop.f32.mrb[0].mxu0
      %v1958 = vpop.f32.mrb[0].mxu0
      %v1959 = vadd.f32 0.0, %v1958
      %v1960 = vpop.f32.mrb[0].mxu0
      %1961 = vmatprep.mubr.bf16.mxu0 0
      %1962 = vmatmul.mubr.bf16.gmra.mrb[0].mxu0 %v1883
      %v1963 = vpop.f32.mrb[0].mxu0
      %v1964 = vadd.f32 0.0, %v1963
      %v1965 = vpop.f32.mrb[0].mxu0
      %v1966 = vpop.f32.mrb[0].mxu0
      %v1967 = vadd.f32 0.0, %v1966
      %v1968 = vpop.f32.mrb[0].mxu0
      %1969 = vmatprep.mubr.bf16.mxu0 0
      %1970 = vmatmul.mubr.bf16.gmra.mrb[0].mxu0 %v1884
      %v1971 = vpop.f32.mrb[0].mxu0
      %v1972 = vadd.f32 0.0, %v1971
      %v1973 = vpop.f32.mrb[0].mxu0
      %v1974 = vpop.f32.mrb[0].mxu0
      %v1975 = vadd.f32 0.0, %v1974
      %v1976 = vpop.f32.mrb[0].mxu0
      %1977 = vmatprep.mubr.bf16.mxu0 0
      %1978 = vmatmul.mubr.bf16.gmra.mrb[0].mxu0 %v1885
      %v1979 = vpop.f32.mrb[0].mxu0
      %v1980 = vadd.f32 0.0, %v1979
      %v1981 = vpop.f32.mrb[0].mxu0
      %v1982 = vpop.f32.mrb[0].mxu0
      %v1983 = vadd.f32 0.0, %v1982
      %v1984 = vpop.f32.mrb[0].mxu0
      %1985 = vmatprep.mubr.bf16.mxu0 0
      %1986 = vmatmul.mubr.bf16.gmra.mrb[0].mxu0 %v1886
      %v1987 = vpop.f32.mrb[0].mxu0
      %v1988 = vadd.f32 0.0, %v1987
      %v1989 = vpop.f32.mrb[0].mxu0
      %v1990 = vpop.f32.mrb[0].mxu0
      %v1991 = vadd.f32 0.0, %v1990
      %v1992 = vpop.f32.mrb[0].mxu0
      %1993 = vmatprep.mubr.bf16.mxu0 0
      %1994 = vmatmul.mubr.bf16.gmra.mrb[0].mxu0 %v1887
      %v1995 = vpop.f32.mrb[0].mxu0
      %v1996 = vadd.f32 0.0, %v1995
      %v1997 = vpop.f32.mrb[0].mxu0
      %v1998 = vpop.f32.mrb[0].mxu0
      %v1999 = vadd.f32 0.0, %v1998
      %v2000 = vpop.f32.mrb[0].mxu0
      %2001 = vmatprep.mubr.bf16.mxu0 0
      %2002 = vmatmul.mubr.bf16.gmra.mrb[0].mxu0 %v1888
      %v2003 = vpop.f32.mrb[0].mxu0
      %v2004 = vadd.f32 0.0, %v2003
      %v2005 = vpop.f32.mrb[0].mxu0
      %v2006 = vpop.f32.mrb[0].mxu0
      %v2007 = vadd.f32 0.0, %v2006
      %v2008 = vpop.f32.mrb[0].mxu0
      %2009 = vmatprep.mubr.bf16.mxu0 0
      %2010 = vmatmul.mubr.bf16.gmra.mrb[0].mxu0 %v1889
      %v2011 = vpop.f32.mrb[0].mxu0
      %v2012 = vadd.f32 0.0, %v2011
      %v2013 = vpop.f32.mrb[0].mxu0
      %v2014 = vpop.f32.mrb[0].mxu0
      %v2015 = vadd.f32 0.0, %v2014
      %v2016 = vpop.f32.mrb[0].mxu0
      %2017 = vmatprep.mubr.bf16.mxu0 0
      %2018 = vmatmul.mubr.bf16.gmra.mrb[0].mxu0 %v1890
      %v2019 = vpop.f32.mrb[0].mxu0
      %v2020 = vadd.f32 0.0, %v2019
      %v2021 = vpop.f32.mrb[0].mxu0
      %v2022 = vpop.f32.mrb[0].mxu0
      %v2023 = vadd.f32 0.0, %v2022
      %v2024 = vpop.f32.mrb[0].mxu0
      %2025 = vmatprep.mubr.bf16.mxu0 0
      %2026 = vmatmul.mubr.bf16.gmra.mrb[0].mxu0 %v1891
      %v2027 = vpop.f32.mrb[0].mxu0
      %v2028 = vadd.f32 0.0, %v2027
      %v2029 = vpop.f32.mrb[0].mxu0
      %v2030 = vpop.f32.mrb[0].mxu0
      %v2031 = vadd.f32 0.0, %v2030
      %v2032 = vpop.f32.mrb[0].mxu0
      %2033 = vmatprep.mubr.bf16.mxu0 0
      %2034 = vmatmul.mubr.bf16.gmra.mrb[0].mxu0 %v1892
      %v2035 = vpop.f32.mrb[0].mxu0
      %v2036 = vadd.f32 0.0, %v2035
      %v2037 = vpop.f32.mrb[0].mxu0
      %v2038 = vpop.f32.mrb[0].mxu0
      %v2039 = vadd.f32 0.0, %v2038
      %v2040 = vpop.f32.mrb[0].mxu0
      %2041 = vmatprep.mubr.bf16.mxu0 0
      %2042 = vmatmul.mubr.bf16.gmra.mrb[0].mxu0 %v1893
      %v2043 = vpop.f32.mrb[0].mxu0
      %v2044 = vadd.f32 0.0, %v2043
      %v2045 = vpop.f32.mrb[0].mxu0
      %v2046 = vpop.f32.mrb[0].mxu0
      %v2047 = vadd.f32 0.0, %v2046
      %v2048 = vpop.f32.mrb[0].mxu0
      %2049 = vmatprep.mubr.bf16.mxu0 0
      %2050 = vmatmul.mubr.bf16.gmra.mrb[0].mxu0 %v1894
      %v2051 = vpop.f32.mrb[0].mxu0
      %v2052 = vadd.f32 0.0, %v2051
      %v2053 = vpop.f32.mrb[0].mxu0
      %v2054 = vpop.f32.mrb[0].mxu0
      %v2055 = vadd.f32 0.0, %v2054
      %v2056 = vpop.f32.mrb[0].mxu0
      %2057 = vmatprep.mubr.bf16.mxu0 0
      %2058 = vmatmul.mubr.bf16.gmra.mrb[0].mxu0 %v1895
      %v2059 = vpop.f32.mrb[0].mxu0
      %v2060 = vadd.f32 0.0, %v2059
      %v2061 = vpop.f32.mrb[0].mxu0
      %v2062 = vpop.f32.mrb[0].mxu0
      %v2063 = vadd.f32 0.0, %v2062
      %v2064 = vpop.f32.mrb[0].mxu0
      %2065 = vmatprep.mubr.bf16.mxu0 0
      %2066 = vmatmul.mubr.bf16.gmra.mrb[0].mxu0 %v1896
      %v2067 = vpop.f32.mrb[0].mxu0
      %v2068 = vadd.f32 0.0, %v2067
      %v2069 = vpop.f32.mrb[0].mxu0
      %v2070 = vpop.f32.mrb[0].mxu0
      %v2071 = vadd.f32 0.0, %v2070
      %v2072 = vpop.f32.mrb[0].mxu0
      %2073 = vdwg.mxu0
      %v2074 = vadd.f32 %v1753, %v1948
      %v2075 = vadd.f32 %v1754, %v1951
      %v2076 = vadd.f32 %v1755, %v1956
      %v2077 = vadd.f32 %v1756, %v1959
      %v2078 = vadd.f32 %v1757, %v1964
      %v2079 = vadd.f32 %v1758, %v1967
      %v2080 = vadd.f32 %v1759, %v1972
      %v2081 = vadd.f32 %v1760, %v1975
      %v2082 = vadd.f32 %v1761, %v1980
      %v2083 = vadd.f32 %v1762, %v1983
      %v2084 = vadd.f32 %v1763, %v1988
      %v2085 = vadd.f32 %v1764, %v1991
      %v2086 = vadd.f32 %v1765, %v1996
      %v2087 = vadd.f32 %v1766, %v1999
      %v2088 = vadd.f32 %v1767, %v2004
      %v2089 = vadd.f32 %v1768, %v2007
      %v2090 = vadd.f32 %v1769, %v2012
      %v2091 = vadd.f32 %v1770, %v2015
      %v2092 = vadd.f32 %v1771, %v2020
      %v2093 = vadd.f32 %v1772, %v2023
      %v2094 = vadd.f32 %v1773, %v2028
      %v2095 = vadd.f32 %v1774, %v2031
      %v2096 = vadd.f32 %v1775, %v2036
      %v2097 = vadd.f32 %v1776, %v2039
      %v2098 = vadd.f32 %v1777, %v2044
      %v2099 = vadd.f32 %v1778, %v2047
      %v2100 = vadd.f32 %v1779, %v2052
      %v2101 = vadd.f32 %v1780, %v2055
      %v2102 = vadd.f32 %v1781, %v2060
      %v2103 = vadd.f32 %v1782, %v2063
      %v2104 = vadd.f32 %v1783, %v2068
      %v2105 = vadd.f32 %v1784, %v2071
      %2106 = vst.msk [vmem:[#allocation5] sm:$0xff] %vm950, %v2074
      %2107 = vst.msk [vmem:[#allocation5 + $0x8] sm:$0xff] %vm950, %v2075
      %2108 = vst.msk [vmem:[#allocation5 + $0x10] sm:$0xff] %vm950, %v2076
      %2109 = vst.msk [vmem:[#allocation5 + $0x18] sm:$0xff] %vm950, %v2077
      %2110 = vst.msk [vmem:[#allocation5 + $0x20] sm:$0xff] %vm950, %v2078
      %2111 = vst.msk [vmem:[#allocation5 + $0x28] sm:$0xff] %vm950, %v2079
      %2112 = vst.msk [vmem:[#allocation5 + $0x30] sm:$0xff] %vm950, %v2080
      %2113 = vst.msk [vmem:[#allocation5 + $0x38] sm:$0xff] %vm950, %v2081
      %2114 = vst.msk [vmem:[#allocation5 + $0x40] sm:$0xff] %vm950, %v2082
      %2115 = vst.msk [vmem:[#allocation5 + $0x48] sm:$0xff] %vm950, %v2083
      %2116 = vst.msk [vmem:[#allocation5 + $0x50] sm:$0xff] %vm950, %v2084
      %2117 = vst.msk [vmem:[#allocation5 + $0x58] sm:$0xff] %vm950, %v2085
      %2118 = vst.msk [vmem:[#allocation5 + $0x60] sm:$0xff] %vm950, %v2086
      %2119 = vst.msk [vmem:[#allocation5 + $0x68] sm:$0xff] %vm950, %v2087
      %2120 = vst.msk [vmem:[#allocation5 + $0x70] sm:$0xff] %vm950, %v2088
      %2121 = vst.msk [vmem:[#allocation5 + $0x78] sm:$0xff] %vm950, %v2089
      %2122 = vst.msk [vmem:[#allocation5 + $0x80] sm:$0xff] %vm950, %v2090
      %2123 = vst.msk [vmem:[#allocation5 + $0x88] sm:$0xff] %vm950, %v2091
      %2124 = vst.msk [vmem:[#allocation5 + $0x90] sm:$0xff] %vm950, %v2092
      %2125 = vst.msk [vmem:[#allocation5 + $0x98] sm:$0xff] %vm950, %v2093
      %2126 = vst.msk [vmem:[#allocation5 + $0xa0] sm:$0xff] %vm950, %v2094
      %2127 = vst.msk [vmem:[#allocation5 + $0xa8] sm:$0xff] %vm950, %v2095
      %2128 = vst.msk [vmem:[#allocation5 + $0xb0] sm:$0xff] %vm950, %v2096
      %2129 = vst.msk [vmem:[#allocation5 + $0xb8] sm:$0xff] %vm950, %v2097
      %2130 = vst.msk [vmem:[#allocation5 + $0xc0] sm:$0xff] %vm950, %v2098
      %2131 = vst.msk [vmem:[#allocation5 + $0xc8] sm:$0xff] %vm950, %v2099
      %2132 = vst.msk [vmem:[#allocation5 + $0xd0] sm:$0xff] %vm950, %v2100
      %2133 = vst.msk [vmem:[#allocation5 + $0xd8] sm:$0xff] %vm950, %v2101
      %2134 = vst.msk [vmem:[#allocation5 + $0xe0] sm:$0xff] %vm950, %v2102
      %2135 = vst.msk [vmem:[#allocation5 + $0xe8] sm:$0xff] %vm950, %v2103
      %2136 = vst.msk [vmem:[#allocation5 + $0xf0] sm:$0xff] %vm950, %v2104
      %2137 = vst.msk [vmem:[#allocation5 + $0xf8] sm:$0xff] %vm950, %v2105
      // Predicated region
      $region49: #{private_encoder_forward.3} parent=43 // pred_check
        %p2138 = pneg %p400
      $region50: #{private_encoder_forward.3} parent=43 // pred_check_branch
        %2140 = sbr.rel (%p2138) target = $region52
      $region51: #{private_encoder_forward.3} parent=43 // pred_region
        %v2141 = vld [vmem:[#allocation2] sm:$0xff]
        %v2142 = vld [vmem:[#allocation2 + $0x8] sm:$0xff]
        %v2143 = vld [vmem:[#allocation2 + $0x10] sm:$0xff]
        %v2144 = vld [vmem:[#allocation2 + $0x18] sm:$0xff]
        %v2145 = vld [vmem:[#allocation2 + $0x20] sm:$0xff]
        %v2146 = vld [vmem:[#allocation2 + $0x28] sm:$0xff]
        %v2147 = vld [vmem:[#allocation2 + $0x30] sm:$0xff]
        %v2148 = vld [vmem:[#allocation2 + $0x38] sm:$0xff]
        %v2149 = vld [vmem:[#allocation2 + $0x40] sm:$0xff]
        %v2150 = vld [vmem:[#allocation2 + $0x48] sm:$0xff]
        %v2151 = vld [vmem:[#allocation2 + $0x50] sm:$0xff]
        %v2152 = vld [vmem:[#allocation2 + $0x58] sm:$0xff]
        %v2153 = vld [vmem:[#allocation2 + $0x60] sm:$0xff]
        %v2154 = vld [vmem:[#allocation2 + $0x68] sm:$0xff]
        %v2155 = vld [vmem:[#allocation2 + $0x70] sm:$0xff]
        %v2156 = vld [vmem:[#allocation2 + $0x78] sm:$0xff]
        %v2157 = vld [vmem:[#allocation2 + $0x80] sm:$0xff]
        %v2158 = vld [vmem:[#allocation2 + $0x88] sm:$0xff]
        %v2159 = vld [vmem:[#allocation2 + $0x90] sm:$0xff]
        %v2160 = vld [vmem:[#allocation2 + $0x98] sm:$0xff]
        %v2161 = vld [vmem:[#allocation2 + $0xa0] sm:$0xff]
        %v2162 = vld [vmem:[#allocation2 + $0xa8] sm:$0xff]
        %v2163 = vld [vmem:[#allocation2 + $0xb0] sm:$0xff]
        %v2164 = vld [vmem:[#allocation2 + $0xb8] sm:$0xff]
        %v2165 = vld [vmem:[#allocation2 + $0xc0] sm:$0xff]
        %v2166 = vld [vmem:[#allocation2 + $0xc8] sm:$0xff]
        %v2167 = vld [vmem:[#allocation2 + $0xd0] sm:$0xff]
        %v2168 = vld [vmem:[#allocation2 + $0xd8] sm:$0xff]
        %v2169 = vld [vmem:[#allocation2 + $0xe0] sm:$0xff]
        %v2170 = vld [vmem:[#allocation2 + $0xe8] sm:$0xff]
        %v2171 = vld [vmem:[#allocation2 + $0xf0] sm:$0xff]
        %v2172 = vld [vmem:[#allocation2 + $0xf8] sm:$0xff]
        %v2173 = vld [vmem:[#allocation3] sm:$0xff]
        %v2174 = vld [vmem:[#allocation3 + $0x8] sm:$0xff]
        %v2175 = vld [vmem:[#allocation3 + $0x10] sm:$0xff]
        %v2176 = vld [vmem:[#allocation3 + $0x18] sm:$0xff]
        %v2177 = vld [vmem:[#allocation3 + $0x20] sm:$0xff]
        %v2178 = vld [vmem:[#allocation3 + $0x28] sm:$0xff]
        %v2179 = vld [vmem:[#allocation3 + $0x30] sm:$0xff]
        %v2180 = vld [vmem:[#allocation3 + $0x38] sm:$0xff]
        %v2181 = vld [vmem:[#allocation3 + $0x40] sm:$0xff]
        %v2182 = vld [vmem:[#allocation3 + $0x48] sm:$0xff]
        %v2183 = vld [vmem:[#allocation3 + $0x50] sm:$0xff]
        %v2184 = vld [vmem:[#allocation3 + $0x58] sm:$0xff]
        %v2185 = vld [vmem:[#allocation3 + $0x60] sm:$0xff]
        %v2186 = vld [vmem:[#allocation3 + $0x68] sm:$0xff]
        %v2187 = vld [vmem:[#allocation3 + $0x70] sm:$0xff]
        %v2188 = vld [vmem:[#allocation3 + $0x78] sm:$0xff]
        %v2189 = vld [vmem:[#allocation3 + $0x80] sm:$0xff]
        %v2190 = vld [vmem:[#allocation3 + $0x88] sm:$0xff]
        %v2191 = vld [vmem:[#allocation3 + $0x90] sm:$0xff]
        %v2192 = vld [vmem:[#allocation3 + $0x98] sm:$0xff]
        %v2193 = vld [vmem:[#allocation3 + $0xa0] sm:$0xff]
        %v2194 = vld [vmem:[#allocation3 + $0xa8] sm:$0xff]
        %v2195 = vld [vmem:[#allocation3 + $0xb0] sm:$0xff]
        %v2196 = vld [vmem:[#allocation3 + $0xb8] sm:$0xff]
        %v2197 = vld [vmem:[#allocation3 + $0xc0] sm:$0xff]
        %v2198 = vld [vmem:[#allocation3 + $0xc8] sm:$0xff]
        %v2199 = vld [vmem:[#allocation3 + $0xd0] sm:$0xff]
        %v2200 = vld [vmem:[#allocation3 + $0xd8] sm:$0xff]
        %v2201 = vld [vmem:[#allocation3 + $0xe0] sm:$0xff]
        %v2202 = vld [vmem:[#allocation3 + $0xe8] sm:$0xff]
        %v2203 = vld [vmem:[#allocation3 + $0xf0] sm:$0xff]
        %v2204 = vld [vmem:[#allocation3 + $0xf8] sm:$0xff]
        %v2205 = vmax.f32 %v2141, %v2173
        %v2206 = vmax.f32 %v2142, %v2174
        %v2207 = vmax.f32 %v2143, %v2175
        %v2208 = vmax.f32 %v2144, %v2176
        %v2209 = vmax.f32 %v2145, %v2177
        %v2210 = vmax.f32 %v2146, %v2178
        %v2211 = vmax.f32 %v2147, %v2179
        %v2212 = vmax.f32 %v2148, %v2180
        %v2213 = vmax.f32 %v2149, %v2181
        %v2214 = vmax.f32 %v2150, %v2182
        %v2215 = vmax.f32 %v2151, %v2183
        %v2216 = vmax.f32 %v2152, %v2184
        %v2217 = vmax.f32 %v2153, %v2185
        %v2218 = vmax.f32 %v2154, %v2186
        %v2219 = vmax.f32 %v2155, %v2187
        %v2220 = vmax.f32 %v2156, %v2188
        %v2221 = vmax.f32 %v2157, %v2189
        %v2222 = vmax.f32 %v2158, %v2190
        %v2223 = vmax.f32 %v2159, %v2191
        %v2224 = vmax.f32 %v2160, %v2192
        %v2225 = vmax.f32 %v2161, %v2193
        %v2226 = vmax.f32 %v2162, %v2194
        %v2227 = vmax.f32 %v2163, %v2195
        %v2228 = vmax.f32 %v2164, %v2196
        %v2229 = vmax.f32 %v2165, %v2197
        %v2230 = vmax.f32 %v2166, %v2198
        %v2231 = vmax.f32 %v2167, %v2199
        %v2232 = vmax.f32 %v2168, %v2200
        %v2233 = vmax.f32 %v2169, %v2201
        %v2234 = vmax.f32 %v2170, %v2202
        %v2235 = vmax.f32 %v2171, %v2203
        %v2236 = vmax.f32 %v2172, %v2204
        %v2237 = vld [vmem:[#allocation4] sm:$0xff]
        %v2238 = vld [vmem:[#allocation4 + $0x8] sm:$0xff]
        %v2239 = vld [vmem:[#allocation4 + $0x10] sm:$0xff]
        %v2240 = vld [vmem:[#allocation4 + $0x18] sm:$0xff]
        %v2241 = vld [vmem:[#allocation4 + $0x20] sm:$0xff]
        %v2242 = vld [vmem:[#allocation4 + $0x28] sm:$0xff]
        %v2243 = vld [vmem:[#allocation4 + $0x30] sm:$0xff]
        %v2244 = vld [vmem:[#allocation4 + $0x38] sm:$0xff]
        %v2245 = vld [vmem:[#allocation4 + $0x40] sm:$0xff]
        %v2246 = vld [vmem:[#allocation4 + $0x48] sm:$0xff]
        %v2247 = vld [vmem:[#allocation4 + $0x50] sm:$0xff]
        %v2248 = vld [vmem:[#allocation4 + $0x58] sm:$0xff]
        %v2249 = vld [vmem:[#allocation4 + $0x60] sm:$0xff]
        %v2250 = vld [vmem:[#allocation4 + $0x68] sm:$0xff]
        %v2251 = vld [vmem:[#allocation4 + $0x70] sm:$0xff]
        %v2252 = vld [vmem:[#allocation4 + $0x78] sm:$0xff]
        %v2253 = vld [vmem:[#allocation4 + $0x80] sm:$0xff]
        %v2254 = vld [vmem:[#allocation4 + $0x88] sm:$0xff]
        %v2255 = vld [vmem:[#allocation4 + $0x90] sm:$0xff]
        %v2256 = vld [vmem:[#allocation4 + $0x98] sm:$0xff]
        %v2257 = vld [vmem:[#allocation4 + $0xa0] sm:$0xff]
        %v2258 = vld [vmem:[#allocation4 + $0xa8] sm:$0xff]
        %v2259 = vld [vmem:[#allocation4 + $0xb0] sm:$0xff]
        %v2260 = vld [vmem:[#allocation4 + $0xb8] sm:$0xff]
        %v2261 = vld [vmem:[#allocation4 + $0xc0] sm:$0xff]
        %v2262 = vld [vmem:[#allocation4 + $0xc8] sm:$0xff]
        %v2263 = vld [vmem:[#allocation4 + $0xd0] sm:$0xff]
        %v2264 = vld [vmem:[#allocation4 + $0xd8] sm:$0xff]
        %v2265 = vld [vmem:[#allocation4 + $0xe0] sm:$0xff]
        %v2266 = vld [vmem:[#allocation4 + $0xe8] sm:$0xff]
        %v2267 = vld [vmem:[#allocation4 + $0xf0] sm:$0xff]
        %v2268 = vld [vmem:[#allocation4 + $0xf8] sm:$0xff]
        %v2269 = vld [vmem:[#allocation5] sm:$0xff]
        %v2270 = vld [vmem:[#allocation5 + $0x8] sm:$0xff]
        %v2271 = vld [vmem:[#allocation5 + $0x10] sm:$0xff]
        %v2272 = vld [vmem:[#allocation5 + $0x18] sm:$0xff]
        %v2273 = vld [vmem:[#allocation5 + $0x20] sm:$0xff]
        %v2274 = vld [vmem:[#allocation5 + $0x28] sm:$0xff]
        %v2275 = vld [vmem:[#allocation5 + $0x30] sm:$0xff]
        %v2276 = vld [vmem:[#allocation5 + $0x38] sm:$0xff]
        %v2277 = vld [vmem:[#allocation5 + $0x40] sm:$0xff]
        %v2278 = vld [vmem:[#allocation5 + $0x48] sm:$0xff]
        %v2279 = vld [vmem:[#allocation5 + $0x50] sm:$0xff]
        %v2280 = vld [vmem:[#allocation5 + $0x58] sm:$0xff]
        %v2281 = vld [vmem:[#allocation5 + $0x60] sm:$0xff]
        %v2282 = vld [vmem:[#allocation5 + $0x68] sm:$0xff]
        %v2283 = vld [vmem:[#allocation5 + $0x70] sm:$0xff]
        %v2284 = vld [vmem:[#allocation5 + $0x78] sm:$0xff]
        %v2285 = vld [vmem:[#allocation5 + $0x80] sm:$0xff]
        %v2286 = vld [vmem:[#allocation5 + $0x88] sm:$0xff]
        %v2287 = vld [vmem:[#allocation5 + $0x90] sm:$0xff]
        %v2288 = vld [vmem:[#allocation5 + $0x98] sm:$0xff]
        %v2289 = vld [vmem:[#allocation5 + $0xa0] sm:$0xff]
        %v2290 = vld [vmem:[#allocation5 + $0xa8] sm:$0xff]
        %v2291 = vld [vmem:[#allocation5 + $0xb0] sm:$0xff]
        %v2292 = vld [vmem:[#allocation5 + $0xb8] sm:$0xff]
        %v2293 = vld [vmem:[#allocation5 + $0xc0] sm:$0xff]
        %v2294 = vld [vmem:[#allocation5 + $0xc8] sm:$0xff]
        %v2295 = vld [vmem:[#allocation5 + $0xd0] sm:$0xff]
        %v2296 = vld [vmem:[#allocation5 + $0xd8] sm:$0xff]
        %v2297 = vld [vmem:[#allocation5 + $0xe0] sm:$0xff]
        %v2298 = vld [vmem:[#allocation5 + $0xe8] sm:$0xff]
        %v2299 = vld [vmem:[#allocation5 + $0xf0] sm:$0xff]
        %v2300 = vld [vmem:[#allocation5 + $0xf8] sm:$0xff]
        %v2301 = vmax.f32 %v2237, %v2269
        %v2302 = vmax.f32 %v2238, %v2270
        %v2303 = vmax.f32 %v2239, %v2271
        %v2304 = vmax.f32 %v2240, %v2272
        %v2305 = vmax.f32 %v2241, %v2273
        %v2306 = vmax.f32 %v2242, %v2274
        %v2307 = vmax.f32 %v2243, %v2275
        %v2308 = vmax.f32 %v2244, %v2276
        %v2309 = vmax.f32 %v2245, %v2277
        %v2310 = vmax.f32 %v2246, %v2278
        %v2311 = vmax.f32 %v2247, %v2279
        %v2312 = vmax.f32 %v2248, %v2280
        %v2313 = vmax.f32 %v2249, %v2281
        %v2314 = vmax.f32 %v2250, %v2282
        %v2315 = vmax.f32 %v2251, %v2283
        %v2316 = vmax.f32 %v2252, %v2284
        %v2317 = vmax.f32 %v2253, %v2285
        %v2318 = vmax.f32 %v2254, %v2286
        %v2319 = vmax.f32 %v2255, %v2287
        %v2320 = vmax.f32 %v2256, %v2288
        %v2321 = vmax.f32 %v2257, %v2289
        %v2322 = vmax.f32 %v2258, %v2290
        %v2323 = vmax.f32 %v2259, %v2291
        %v2324 = vmax.f32 %v2260, %v2292
        %v2325 = vmax.f32 %v2261, %v2293
        %v2326 = vmax.f32 %v2262, %v2294
        %v2327 = vmax.f32 %v2263, %v2295
        %v2328 = vmax.f32 %v2264, %v2296
        %v2329 = vmax.f32 %v2265, %v2297
        %v2330 = vmax.f32 %v2266, %v2298
        %v2331 = vmax.f32 %v2267, %v2299
        %v2332 = vmax.f32 %v2268, %v2300
        %v2333 = vmax.f32 %v2205, %v2301
        %v2334 = vmax.f32 %v2206, %v2302
        %v2335 = vmax.f32 %v2207, %v2303
        %v2336 = vmax.f32 %v2208, %v2304
        %v2337 = vmax.f32 %v2209, %v2305
        %v2338 = vmax.f32 %v2210, %v2306
        %v2339 = vmax.f32 %v2211, %v2307
        %v2340 = vmax.f32 %v2212, %v2308
        %v2341 = vmax.f32 %v2213, %v2309
        %v2342 = vmax.f32 %v2214, %v2310
        %v2343 = vmax.f32 %v2215, %v2311
        %v2344 = vmax.f32 %v2216, %v2312
        %v2345 = vmax.f32 %v2217, %v2313
        %v2346 = vmax.f32 %v2218, %v2314
        %v2347 = vmax.f32 %v2219, %v2315
        %v2348 = vmax.f32 %v2220, %v2316
        %v2349 = vmax.f32 %v2221, %v2317
        %v2350 = vmax.f32 %v2222, %v2318
        %v2351 = vmax.f32 %v2223, %v2319
        %v2352 = vmax.f32 %v2224, %v2320
        %v2353 = vmax.f32 %v2225, %v2321
        %v2354 = vmax.f32 %v2226, %v2322
        %v2355 = vmax.f32 %v2227, %v2323
        %v2356 = vmax.f32 %v2228, %v2324
        %v2357 = vmax.f32 %v2229, %v2325
        %v2358 = vmax.f32 %v2230, %v2326
        %v2359 = vmax.f32 %v2231, %v2327
        %v2360 = vmax.f32 %v2232, %v2328
        %v2361 = vmax.f32 %v2233, %v2329
        %v2362 = vmax.f32 %v2234, %v2330
        %v2363 = vmax.f32 %v2235, %v2331
        %v2364 = vmax.f32 %v2236, %v2332
        %v2365 = vld [vmem:[%s5] sm:$0x1]
        %v2367 = vlaneseq
        %v2368 = vshrl.u32 %v2367, 7
        %v2369 = vsub.s32 0, %v2368
        %v2370 = vrot.slane %v2365, %v2369
        %v2372 = vadd.f32 %v2333, %v2370
        %v2373 = vadd.f32 %v2334, %v2370
        %v2374 = vadd.f32 %v2335, %v2370
        %v2375 = vadd.f32 %v2336, %v2370
        %v2376 = vadd.f32 %v2337, %v2370
        %v2377 = vadd.f32 %v2338, %v2370
        %v2378 = vadd.f32 %v2339, %v2370
        %v2379 = vadd.f32 %v2340, %v2370
        %v2380 = vadd.f32 %v2341, %v2370
        %v2381 = vadd.f32 %v2342, %v2370
        %v2382 = vadd.f32 %v2343, %v2370
        %v2383 = vadd.f32 %v2344, %v2370
        %v2384 = vadd.f32 %v2345, %v2370
        %v2385 = vadd.f32 %v2346, %v2370
        %v2386 = vadd.f32 %v2347, %v2370
        %v2387 = vadd.f32 %v2348, %v2370
        %v2388 = vadd.f32 %v2349, %v2370
        %v2389 = vadd.f32 %v2350, %v2370
        %v2390 = vadd.f32 %v2351, %v2370
        %v2391 = vadd.f32 %v2352, %v2370
        %v2392 = vadd.f32 %v2353, %v2370
        %v2393 = vadd.f32 %v2354, %v2370
        %v2394 = vadd.f32 %v2355, %v2370
        %v2395 = vadd.f32 %v2356, %v2370
        %v2396 = vadd.f32 %v2357, %v2370
        %v2397 = vadd.f32 %v2358, %v2370
        %v2398 = vadd.f32 %v2359, %v2370
        %v2399 = vadd.f32 %v2360, %v2370
        %v2400 = vadd.f32 %v2361, %v2370
        %v2401 = vadd.f32 %v2362, %v2370
        %v2402 = vadd.f32 %v2363, %v2370
        %v2403 = vadd.f32 %v2364, %v2370
        %v2404 = vmax.f32 %v2372, 0.0
        %v2405 = vmax.f32 %v2373, 0.0
        %v2406 = vmax.f32 %v2374, 0.0
        %v2407 = vmax.f32 %v2375, 0.0
        %v2408 = vmax.f32 %v2376, 0.0
        %v2409 = vmax.f32 %v2377, 0.0
        %v2410 = vmax.f32 %v2378, 0.0
        %v2411 = vmax.f32 %v2379, 0.0
        %v2412 = vmax.f32 %v2380, 0.0
        %v2413 = vmax.f32 %v2381, 0.0
        %v2414 = vmax.f32 %v2382, 0.0
        %v2415 = vmax.f32 %v2383, 0.0
        %v2416 = vmax.f32 %v2384, 0.0
        %v2417 = vmax.f32 %v2385, 0.0
        %v2418 = vmax.f32 %v2386, 0.0
        %v2419 = vmax.f32 %v2387, 0.0
        %v2420 = vmax.f32 %v2388, 0.0
        %v2421 = vmax.f32 %v2389, 0.0
        %v2422 = vmax.f32 %v2390, 0.0
        %v2423 = vmax.f32 %v2391, 0.0
        %v2424 = vmax.f32 %v2392, 0.0
        %v2425 = vmax.f32 %v2393, 0.0
        %v2426 = vmax.f32 %v2394, 0.0
        %v2427 = vmax.f32 %v2395, 0.0
        %v2428 = vmax.f32 %v2396, 0.0
        %v2429 = vmax.f32 %v2397, 0.0
        %v2430 = vmax.f32 %v2398, 0.0
        %v2431 = vmax.f32 %v2399, 0.0
        %v2432 = vmax.f32 %v2400, 0.0
        %v2433 = vmax.f32 %v2401, 0.0
        %v2434 = vmax.f32 %v2402, 0.0
        %v2435 = vmax.f32 %v2403, 0.0
        %v2436 = vpack.c.bf16 %v2405, %v2404
        %v2437 = vpack.c.bf16 %v2407, %v2406
        %v2438 = vpack.c.bf16 %v2409, %v2408
        %v2439 = vpack.c.bf16 %v2411, %v2410
        %v2440 = vpack.c.bf16 %v2413, %v2412
        %v2441 = vpack.c.bf16 %v2415, %v2414
        %v2442 = vpack.c.bf16 %v2417, %v2416
        %v2443 = vpack.c.bf16 %v2419, %v2418
        %v2444 = vpack.c.bf16 %v2421, %v2420
        %v2445 = vpack.c.bf16 %v2423, %v2422
        %v2446 = vpack.c.bf16 %v2425, %v2424
        %v2447 = vpack.c.bf16 %v2427, %v2426
        %v2448 = vpack.c.bf16 %v2429, %v2428
        %v2449 = vpack.c.bf16 %v2431, %v2430
        %v2450 = vpack.c.bf16 %v2433, %v2432
        %v2451 = vpack.c.bf16 %v2435, %v2434
        %v2468 = vunpack.c.l.b16 %v2436
        %v2469 = vunpack.c.h.b16 %v2436
        %v2470 = vunpack.c.l.b16 %v2437
        %v2471 = vunpack.c.h.b16 %v2437
        %v2472 = vunpack.c.l.b16 %v2438
        %v2473 = vunpack.c.h.b16 %v2438
        %v2474 = vunpack.c.l.b16 %v2439
        %v2475 = vunpack.c.h.b16 %v2439
        %v2476 = vunpack.c.l.b16 %v2440
        %v2477 = vunpack.c.h.b16 %v2440
        %v2478 = vunpack.c.l.b16 %v2441
        %v2479 = vunpack.c.h.b16 %v2441
        %v2480 = vunpack.c.l.b16 %v2442
        %v2481 = vunpack.c.h.b16 %v2442
        %v2482 = vunpack.c.l.b16 %v2443
        %v2483 = vunpack.c.h.b16 %v2443
        %v2484 = vunpack.c.l.b16 %v2444
        %v2485 = vunpack.c.h.b16 %v2444
        %v2486 = vunpack.c.l.b16 %v2445
        %v2487 = vunpack.c.h.b16 %v2445
        %v2488 = vunpack.c.l.b16 %v2446
        %v2489 = vunpack.c.h.b16 %v2446
        %v2490 = vunpack.c.l.b16 %v2447
        %v2491 = vunpack.c.h.b16 %v2447
        %v2492 = vunpack.c.l.b16 %v2448
        %v2493 = vunpack.c.h.b16 %v2448
        %v2494 = vunpack.c.l.b16 %v2449
        %v2495 = vunpack.c.h.b16 %v2449
        %v2496 = vunpack.c.l.b16 %v2450
        %v2497 = vunpack.c.h.b16 %v2450
        %v2498 = vunpack.c.l.b16 %v2451
        %v2499 = vunpack.c.h.b16 %v2451
        %v2500 = vpack.c.b16 %v2468, %v2468
        %v2501 = vpack.c.b16 %v2469, %v2469
        %v2502 = vpack.c.b16 %v2470, %v2470
        %v2503 = vpack.c.b16 %v2471, %v2471
        %v2504 = vpack.c.b16 %v2472, %v2472
        %v2505 = vpack.c.b16 %v2473, %v2473
        %v2506 = vpack.c.b16 %v2474, %v2474
        %v2507 = vpack.c.b16 %v2475, %v2475
        %v2508 = vpack.c.b16 %v2476, %v2476
        %v2509 = vpack.c.b16 %v2477, %v2477
        %v2510 = vpack.c.b16 %v2478, %v2478
        %v2511 = vpack.c.b16 %v2479, %v2479
        %v2512 = vpack.c.b16 %v2480, %v2480
        %v2513 = vpack.c.b16 %v2481, %v2481
        %v2514 = vpack.c.b16 %v2482, %v2482
        %v2515 = vpack.c.b16 %v2483, %v2483
        %v2516 = vpack.c.b16 %v2484, %v2484
        %v2517 = vpack.c.b16 %v2485, %v2485
        %v2518 = vpack.c.b16 %v2486, %v2486
        %v2519 = vpack.c.b16 %v2487, %v2487
        %v2520 = vpack.c.b16 %v2488, %v2488
        %v2521 = vpack.c.b16 %v2489, %v2489
        %v2522 = vpack.c.b16 %v2490, %v2490
        %v2523 = vpack.c.b16 %v2491, %v2491
        %v2524 = vpack.c.b16 %v2492, %v2492
        %v2525 = vpack.c.b16 %v2493, %v2493
        %v2526 = vpack.c.b16 %v2494, %v2494
        %v2527 = vpack.c.b16 %v2495, %v2495
        %v2528 = vpack.c.b16 %v2496, %v2496
        %v2529 = vpack.c.b16 %v2497, %v2497
        %v2530 = vpack.c.b16 %v2498, %v2498
        %v2531 = vpack.c.b16 %v2499, %v2499
        %vm2564 = vcmask 257024
        %2565 = vst.msk [vmem:[%s397] sm:$0xf] %vm2564, %v2500
        %2566 = vst.msk [vmem:[%s397 + $0x4] sm:$0xf] %vm2564, %v2501
        %2567 = vst.msk [vmem:[%s397 + $0x8] sm:$0xf] %vm2564, %v2502
        %2568 = vst.msk [vmem:[%s397 + $0xc] sm:$0xf] %vm2564, %v2503
        %2569 = vst.msk [vmem:[%s397 + $0x10] sm:$0xf] %vm2564, %v2504
        %2570 = vst.msk [vmem:[%s397 + $0x14] sm:$0xf] %vm2564, %v2505
        %2571 = vst.msk [vmem:[%s397 + $0x18] sm:$0xf] %vm2564, %v2506
        %2572 = vst.msk [vmem:[%s397 + $0x1c] sm:$0xf] %vm2564, %v2507
        %2573 = vst.msk [vmem:[%s397 + $0x20] sm:$0xf] %vm2564, %v2508
        %2574 = vst.msk [vmem:[%s397 + $0x24] sm:$0xf] %vm2564, %v2509
        %2575 = vst.msk [vmem:[%s397 + $0x28] sm:$0xf] %vm2564, %v2510
        %2576 = vst.msk [vmem:[%s397 + $0x2c] sm:$0xf] %vm2564, %v2511
        %2577 = vst.msk [vmem:[%s397 + $0x30] sm:$0xf] %vm2564, %v2512
        %2578 = vst.msk [vmem:[%s397 + $0x34] sm:$0xf] %vm2564, %v2513
        %2579 = vst.msk [vmem:[%s397 + $0x38] sm:$0xf] %vm2564, %v2514
        %2580 = vst.msk [vmem:[%s397 + $0x3c] sm:$0xf] %vm2564, %v2515
        %2581 = vst.msk [vmem:[%s397 + $0x40] sm:$0xf] %vm2564, %v2516
        %2582 = vst.msk [vmem:[%s397 + $0x44] sm:$0xf] %vm2564, %v2517
        %2583 = vst.msk [vmem:[%s397 + $0x48] sm:$0xf] %vm2564, %v2518
        %2584 = vst.msk [vmem:[%s397 + $0x4c] sm:$0xf] %vm2564, %v2519
        %2585 = vst.msk [vmem:[%s397 + $0x50] sm:$0xf] %vm2564, %v2520
        %2586 = vst.msk [vmem:[%s397 + $0x54] sm:$0xf] %vm2564, %v2521
        %2587 = vst.msk [vmem:[%s397 + $0x58] sm:$0xf] %vm2564, %v2522
        %2588 = vst.msk [vmem:[%s397 + $0x5c] sm:$0xf] %vm2564, %v2523
        %2589 = vst.msk [vmem:[%s397 + $0x60] sm:$0xf] %vm2564, %v2524
        %2590 = vst.msk [vmem:[%s397 + $0x64] sm:$0xf] %vm2564, %v2525
        %2591 = vst.msk [vmem:[%s397 + $0x68] sm:$0xf] %vm2564, %v2526
        %2592 = vst.msk [vmem:[%s397 + $0x6c] sm:$0xf] %vm2564, %v2527
        %2593 = vst.msk [vmem:[%s397 + $0x70] sm:$0xf] %vm2564, %v2528
        %2594 = vst.msk [vmem:[%s397 + $0x74] sm:$0xf] %vm2564, %v2529
        %2595 = vst.msk [vmem:[%s397 + $0x78] sm:$0xf] %vm2564, %v2530
        %2596 = vst.msk [vmem:[%s397 + $0x7c] sm:$0xf] %vm2564, %v2531
      $region52: #{private_encoder_forward.3} parent=43 // pred_fallthru
        _
      %s2597 = smul.u32 32, %s21
      %p2598 = scmp.lt.s32.totalorder %s2597, 63
      %s2599 = scalar_select %p2598, %s2597, 63
      %s2600 = smul.addr %s2599, 4
      %s2601 = scalar_lea.vmem %s6, %s2600
      // Predicated region
      $region53: #{private_encoder_forward.3} parent=43 // pred_check
        %p2602 = pneg %p206
      $region54: #{private_encoder_forward.3} parent=43 // pred_check_branch
        %2604 = sbr.rel (%p2602) target = $region56
      $region55: #{private_encoder_forward.3} parent=43 // pred_region
        %s2605 = smul.u32 32, %s21
      $region56: #{private_encoder_forward.3} parent=43 // pred_fallthru
        _
    $region44: #{private_encoder_forward.3} parent=5 // pred_fallthru
      _
    %p2606 = scmp.le.s32.totalorder 2, %s12
    // Predicated region
    $region57: #{private_encoder_forward.3} parent=5 // pred_check
      %p2607 = pneg %p2606
    $region58: #{private_encoder_forward.3} parent=5 // pred_check_branch
      %2609 = sbr.rel (%p2607) target = $region60
    $region59: #{private_encoder_forward.3} parent=5 // pred_region
      %s2610 = ssub.s32 %s12, 2
      // Predicated region
      $region61: #{private_encoder_forward.3} parent=59 // pred_check
        %p2611 = pneg %p212
      $region62: #{private_encoder_forward.3} parent=59 // pred_check_branch
        %2613 = sbr.rel (%p2611) target = $region64
      $region63: #{private_encoder_forward.3} parent=59 // pred_region
        %s2614 = smul.u32 32, %s23
        %p2615 = scmp.lt.s32.totalorder %s2614, 63
        %s2616 = scalar_select %p2615, %s2614, 63
        %s2617 = smul.addr %s2616, 4
        %s2618 = scalar_lea.vmem %s6, %s2617
      $region64: #{private_encoder_forward.3} parent=59 // pred_fallthru
        _
    $region60: #{private_encoder_forward.3} parent=5 // pred_fallthru
      _
  $region6: #{private_encoder_forward.3} parent=0 // loop_footer
    %s16 = sadd.s32 1, %s12
  $region7: #{private_encoder_forward.3} parent=0 // loop_footer_branch
    %11 = sbr.rel target = $region3
  $region8: #{private_encoder_forward.3} parent=0 // loop_exit
    _

// kernel: private_encoder_forward.4
$region0: #{private_encoder_forward.4}
  #allocation0 [shape = 'u32[]', space=smem, size = 0x4, offset = 0x4, fixed_abs, tag = 'smem constant byte address 0x4 - core index']
  #allocation1 [shape = 'u32[144,128]{1,0:T(1,128)}', space=vmem, size = 0x12000, scoped, tag = 'internal scratch']
  #allocation2 [shape = 'f32[128,64]{1,0:T(8,128)}', space=vmem, size = 0x10000, scoped, tag = 'scratch operand']
  #allocation3 [shape = 'f32[128,64]{1,0:T(8,128)}', space=vmem, size = 0x10000, scoped, tag = 'scratch operand']
  #allocation4 [shape = 'f32[128,64]{1,0:T(8,128)}', space=vmem, size = 0x10000, scoped, tag = 'scratch operand']
  #allocation5 [shape = 'f32[128,64]{1,0:T(8,128)}', space=vmem, size = 0x10000, scoped, tag = 'scratch operand']
  %s0 = inlined_call_operand.vmem [shape: bf16[128,1024], index: 0, kind: input, shape index: {}]
  %s1 = inlined_call_operand.vmem [shape: bf16[128,1024], index: 1, kind: input, shape index: {}]
  %s2 = inlined_call_operand.vmem [shape: bf16[128,1024], index: 2, kind: input, shape index: {}]
  %s3 = inlined_call_operand.vmem [shape: bf16[128,1024], index: 3, kind: input, shape index: {}]
  %s4 = inlined_call_operand.vmem [shape: bf16[1024,64], index: 4, kind: input, shape index: {}]
  %s5 = inlined_call_operand.vmem [shape: f32[1,64], index: 5, kind: input, shape index: {}]
  %s6 = inlined_call_operand.vmem [shape: bf16[128,64], index: 6, kind: output, shape index: {}]
  %s7 = sld [smem:[#allocation0]]
  $region157: #{private_encoder_forward.4} parent=0
    _
  %s9 = ssub.s32 1, %s7
  %s10 = scalar_select 0, %s9, %s7
  $region1: #{private_encoder_forward.4} parent=0
    #allocation6 [shape = 'u8[262144]{0}', space=vmem, size = 0x40000, scoped, tag = 'input window, operand 0']
    #allocation7 [shape = 'u8[262144]{0}', space=vmem, size = 0x40000, scoped, tag = 'input window, operand 1']
    #allocation8 [shape = 'u8[262144]{0}', space=vmem, size = 0x40000, scoped, tag = 'input window, operand 2']
    #allocation9 [shape = 'u8[262144]{0}', space=vmem, size = 0x40000, scoped, tag = 'input window, operand 3']
    loop: start=0, step=1, limit=4
    $region2: #{private_encoder_forward.4} parent=1 // loop_pre_header
      _
    $region3: #{private_encoder_forward.4} parent=1 // loop_header
      %s12 = sphi 0, %s16
      %p13 = scmp.ge.s32.totalorder %s12, 4
      %s19 = sphi 0, %s31
      %s20 = sphi 0, %s27
      %s21 = sphi 0, %s19
      %s22 = sphi 0, %s20
      %s23 = sphi 0, %s21
      %s24 = sphi 0, %s22
      %s36 = sphi 0, %s38
      %s39 = sphi 0, %s36
      %s40 = sphi 0, %s39
      %s56 = sphi 0, %s40
      %s64 = sphi 0, %s66
      %s67 = sphi 0, %s64
      %s68 = sphi 0, %s67
      %s84 = sphi 0, %s68
      %s92 = sphi 0, %s94
      %s95 = sphi 0, %s92
      %s96 = sphi 0, %s95
      %s112 = sphi 0, %s96
      %s120 = sphi 0, %s122
      %s123 = sphi 0, %s120
      %s124 = sphi 0, %s123
      %s140 = sphi 0, %s124
      %s146 = sphi 0, %s148
      %s149 = sphi 0, %s146
      %s150 = sphi 0, %s149
      %s166 = sphi 0, %s150
      %s170 = sphi 0, %s170
      %s172 = sphi 0, %s170
      %s173 = sphi 0, %s172
      %s187 = sphi 0, %s173
      %s193 = sphi 0, %s195
      %s196 = sphi 0, %s193
      %s197 = sphi 0, %s196
      %s213 = sphi 0, %s197
    $region4: #{private_encoder_forward.4} parent=1 // loop_header_branch
      %15 = sbr.rel (%p13) target = $region8
    $region5: #{private_encoder_forward.4} parent=1 // loop_body
      %s17 = ssub.s32 %s12, 1
      %s18 = ssub.s32 %s12, 2
      %s25 = sadd.s32 1, %s20
      %p26 = scmp.ge.s32.totalorder %s25, 2
      %s27 = scalar_select %p26, 0, %s25
      %s28 = sadd.s32 1, %s19
      %s29 = scalar_select %p26, %s28, %s19
      %p30 = scmp.ge.s32.totalorder %s29, 1
      %s31 = scalar_select %p30, 0, %s29
      %s32 = ssub.s32 %s19, %s31
      %s33 = ssub.s32 %s20, %s27
      %s34 = sor.u32 %s32, %s33
      %p35 = scmp.eq.s32.totalorder %s34, 0
      %s37 = sadd.s32 %s36, 1
      %s38 = scalar_select %p35, %s36, %s37
      %p41 = pneg %p35
      %p42 = scmp.eq.s32.totalorder %s12, 1
      %p43 = por %p41, %p42
      %p44 = scmp.ne.s32.totalorder %s36, %s39
      %p45 = scmp.eq.s32.totalorder %s12, 0
      %p46 = por %p44, %p45
      %p47 = scmp.ne.s32.totalorder %s36, %s39
      %p48 = scmp.eq.s32.totalorder %s17, 1
      %p49 = por %p47, %p48
      %p50 = scmp.ne.s32.totalorder %s39, %s40
      %p51 = scmp.eq.s32.totalorder %s17, 0
      %p52 = por %p50, %p51
      %p53 = scmp.ne.s32.totalorder %s39, %s40
      %p54 = scmp.eq.s32.totalorder %s18, 1
      %p55 = por %p53, %p54
      %p57 = scmp.ne.s32.totalorder %s40, %s56
      %p58 = scmp.eq.s32.totalorder %s18, 0
      %p59 = por %p57, %p58
      %s60 = ssub.s32 %s19, %s31
      %s61 = ssub.s32 %s20, %s27
      %s62 = sor.u32 %s60, %s61
      %p63 = scmp.eq.s32.totalorder %s62, 0
      %s65 = sadd.s32 %s64, 1
      %s66 = scalar_select %p63, %s64, %s65
      %p69 = pneg %p63
      %p70 = scmp.eq.s32.totalorder %s12, 1
      %p71 = por %p69, %p70
      %p72 = scmp.ne.s32.totalorder %s64, %s67
      %p73 = scmp.eq.s32.totalorder %s12, 0
      %p74 = por %p72, %p73
      %p75 = scmp.ne.s32.totalorder %s64, %s67
      %p76 = scmp.eq.s32.totalorder %s17, 1
      %p77 = por %p75, %p76
      %p78 = scmp.ne.s32.totalorder %s67, %s68
      %p79 = scmp.eq.s32.totalorder %s17, 0
      %p80 = por %p78, %p79
      %p81 = scmp.ne.s32.totalorder %s67, %s68
      %p82 = scmp.eq.s32.totalorder %s18, 1
      %p83 = por %p81, %p82
      %p85 = scmp.ne.s32.totalorder %s68, %s84
      %p86 = scmp.eq.s32.totalorder %s18, 0
      %p87 = por %p85, %p86
      %s88 = ssub.s32 %s19, %s31
      %s89 = ssub.s32 %s20, %s27
      %s90 = sor.u32 %s88, %s89
      %p91 = scmp.eq.s32.totalorder %s90, 0
      %s93 = sadd.s32 %s92, 1
      %s94 = scalar_select %p91, %s92, %s93
      %p97 = pneg %p91
      %p98 = scmp.eq.s32.totalorder %s12, 1
      %p99 = por %p97, %p98
      %p100 = scmp.ne.s32.totalorder %s92, %s95
      %p101 = scmp.eq.s32.totalorder %s12, 0
      %p102 = por %p100, %p101
      %p103 = scmp.ne.s32.totalorder %s92, %s95
      %p104 = scmp.eq.s32.totalorder %s17, 1
      %p105 = por %p103, %p104
      %p106 = scmp.ne.s32.totalorder %s95, %s96
      %p107 = scmp.eq.s32.totalorder %s17, 0
      %p108 = por %p106, %p107
      %p109 = scmp.ne.s32.totalorder %s95, %s96
      %p110 = scmp.eq.s32.totalorder %s18, 1
      %p111 = por %p109, %p110
      %p113 = scmp.ne.s32.totalorder %s96, %s112
      %p114 = scmp.eq.s32.totalorder %s18, 0
      %p115 = por %p113, %p114
      %s116 = ssub.s32 %s19, %s31
      %s117 = ssub.s32 %s20, %s27
      %s118 = sor.u32 %s116, %s117
      %p119 = scmp.eq.s32.totalorder %s118, 0
      %s121 = sadd.s32 %s120, 1
      %s122 = scalar_select %p119, %s120, %s121
      %p125 = pneg %p119
      %p126 = scmp.eq.s32.totalorder %s12, 1
      %p127 = por %p125, %p126
      %p128 = scmp.ne.s32.totalorder %s120, %s123
      %p129 = scmp.eq.s32.totalorder %s12, 0
      %p130 = por %p128, %p129
      %p131 = scmp.ne.s32.totalorder %s120, %s123
      %p132 = scmp.eq.s32.totalorder %s17, 1
      %p133 = por %p131, %p132
      %p134 = scmp.ne.s32.totalorder %s123, %s124
      %p135 = scmp.eq.s32.totalorder %s17, 0
      %p136 = por %p134, %p135
      %p137 = scmp.ne.s32.totalorder %s123, %s124
      %p138 = scmp.eq.s32.totalorder %s18, 1
      %p139 = por %p137, %p138
      %p141 = scmp.ne.s32.totalorder %s124, %s140
      %p142 = scmp.eq.s32.totalorder %s18, 0
      %p143 = por %p141, %p142
      %s144 = ssub.s32 %s20, %s27
      %p145 = scmp.eq.s32.totalorder %s144, 0
      %s147 = sadd.s32 %s146, 1
      %s148 = scalar_select %p145, %s146, %s147
      %p151 = pneg %p145
      %p152 = scmp.eq.s32.totalorder %s12, 1
      %p153 = por %p151, %p152
      %p154 = scmp.ne.s32.totalorder %s146, %s149
      %p155 = scmp.eq.s32.totalorder %s12, 0
      %p156 = por %p154, %p155
      %p157 = scmp.ne.s32.totalorder %s146, %s149
      %p158 = scmp.eq.s32.totalorder %s17, 1
      %p159 = por %p157, %p158
      %p160 = scmp.ne.s32.totalorder %s149, %s150
      %p161 = scmp.eq.s32.totalorder %s17, 0
      %p162 = por %p160, %p161
      %p163 = scmp.ne.s32.totalorder %s149, %s150
      %p164 = scmp.eq.s32.totalorder %s18, 1
      %p165 = por %p163, %p164
      %p167 = scmp.ne.s32.totalorder %s150, %s166
      %p168 = scmp.eq.s32.totalorder %s18, 0
      %p169 = por %p167, %p168
      %s171 = sadd.s32 %s170, 1
      %p174 = scmp.eq.s32.totalorder %s12, 1
      %p175 = scmp.ne.s32.totalorder %s170, %s172
      %p176 = scmp.eq.s32.totalorder %s12, 0
      %p177 = por %p175, %p176
      %p178 = scmp.ne.s32.totalorder %s170, %s172
      %p179 = scmp.eq.s32.totalorder %s17, 1
      %p180 = por %p178, %p179
      %p181 = scmp.ne.s32.totalorder %s172, %s173
      %p182 = scmp.eq.s32.totalorder %s17, 0
      %p183 = por %p181, %p182
      %p184 = scmp.ne.s32.totalorder %s172, %s173
      %p185 = scmp.eq.s32.totalorder %s18, 1
      %p186 = por %p184, %p185
      %p188 = scmp.ne.s32.totalorder %s173, %s187
      %p189 = scmp.eq.s32.totalorder %s18, 0
      %p190 = por %p188, %p189
      %s191 = ssub.s32 %s19, %s31
      %p192 = scmp.eq.s32.totalorder %s191, 0
      %s194 = sadd.s32 %s193, 1
      %s195 = scalar_select %p192, %s193, %s194
      %p198 = pneg %p192
      %p199 = scmp.eq.s32.totalorder %s12, 1
      %p200 = por %p198, %p199
      %p201 = scmp.ne.s32.totalorder %s193, %s196
      %p202 = scmp.eq.s32.totalorder %s12, 0
      %p203 = por %p201, %p202
      %p204 = scmp.ne.s32.totalorder %s193, %s196
      %p205 = scmp.eq.s32.totalorder %s17, 1
      %p206 = por %p204, %p205
      %p207 = scmp.ne.s32.totalorder %s196, %s197
      %p208 = scmp.eq.s32.totalorder %s17, 0
      %p209 = por %p207, %p208
      %p210 = scmp.ne.s32.totalorder %s196, %s197
      %p211 = scmp.eq.s32.totalorder %s18, 1
      %p212 = por %p210, %p211
      %p214 = scmp.ne.s32.totalorder %s197, %s213
      %p215 = scmp.eq.s32.totalorder %s18, 0
      %p216 = por %p214, %p215
      %p217 = scmp.le.s32.totalorder 1, %s12
      %p218 = scmp.lt.s32.totalorder %s12, 3
      %p219 = pnand %p217, %p218
      %p220 = pneg %p219
      // Predicated region
      $region9: #{private_encoder_forward.4} parent=5 // pred_check
        _
      $region10: #{private_encoder_forward.4} parent=5 // pred_check_branch
        %222 = sbr.rel (%p219) target = $region12
      $region11: #{private_encoder_forward.4} parent=5 // pred_region
        %s223 = ssub.s32 %s12, 1
        // Predicated region
        $region13: #{private_encoder_forward.4} parent=11 // pred_check
          %p224 = pneg %p183
        $region14: #{private_encoder_forward.4} parent=11 // pred_check_branch
          %226 = sbr.rel (%p224) target = $region16
        $region15: #{private_encoder_forward.4} parent=11 // pred_region
          _
        $region16: #{private_encoder_forward.4} parent=11 // pred_fallthru
          _
      $region12: #{private_encoder_forward.4} parent=5 // pred_fallthru
        _
      %p227 = scmp.lt.s32.totalorder %s12, 2
      // Predicated region
      $region17: #{private_encoder_forward.4} parent=5 // pred_check
        %p228 = pneg %p227
      $region18: #{private_encoder_forward.4} parent=5 // pred_check_branch
        %230 = sbr.rel (%p228) target = $region20
      $region19: #{private_encoder_forward.4} parent=5 // pred_region
        // Predicated region
        $region21: #{private_encoder_forward.4} parent=19 // pred_check
          %p231 = pneg %p46
        $region22: #{private_encoder_forward.4} parent=19 // pred_check_branch
          %233 = sbr.rel (%p231) target = $region24
        $region23: #{private_encoder_forward.4} parent=19 // pred_region
          %s234 = sand.u32 %s36, 1
          %s235 = sand.u32 %s36, 1
          %s236 = smul.addr %s235, 256
          %s237 = scalar_lea.vmem [#allocation6], %s236
          %s238 = smul.u32 16, %s19
          %s239 = smul.u32 4, %s20
          %s240 = smul.addr %s238, 8
          %s241 = sadd.s32 %s239, %s240
          %s242 = smul.addr %s241, 4
          %s243 = scalar_lea.vmem %s0, %s242
          // Predicated region
          $region25: #{private_encoder_forward.4} parent=23 // pred_check
            _
          $region26: #{private_encoder_forward.4} parent=23 // pred_check_branch
            %245 = sbr.rel (0) target = $region28
          $region27: #{private_encoder_forward.4} parent=23 // pred_region
            // Predicated region
            $region29: #{private_encoder_forward.4} parent=27 // pred_check
              _
            $region30: #{private_encoder_forward.4} parent=27 // pred_check_branch
              %247 = sbr.rel (0) target = $region32
            $region31: #{private_encoder_forward.4} parent=27 // pred_region
              loop: start=0, step=1, limit=1
              $region33: #{private_encoder_forward.4} parent=31 // loop_pre_header
                _
              $region34: #{private_encoder_forward.4} parent=31 // loop_header
                %s249 = sphi 0, %s253
                %p250 = scmp.ge.s32.totalorder %s249, 1
                %s254 = sphi %s243, %s243
                %s255 = sphi %s237, %s237
              $region35: #{private_encoder_forward.4} parent=31 // loop_header_branch
                %252 = sbr.rel (%p250) target = $region39
              $region36: #{private_encoder_forward.4} parent=31 // loop_body
                %v256 = vld [vmem:[%s254] sm:$0xff]
                %257 = vst [vmem:[%s255] sm:$0xff] %v256
                %v258 = vld [vmem:[%s254 + $0x8] sm:$0xff]
                %259 = vst [vmem:[%s255 + $0x8] sm:$0xff] %v258
                %v260 = vld [vmem:[%s254 + $0x20] sm:$0xff]
                %261 = vst [vmem:[%s255 + $0x10] sm:$0xff] %v260
                %v262 = vld [vmem:[%s254 + $0x28] sm:$0xff]
                %263 = vst [vmem:[%s255 + $0x18] sm:$0xff] %v262
                %v264 = vld [vmem:[%s254 + $0x40] sm:$0xff]
                %265 = vst [vmem:[%s255 + $0x20] sm:$0xff] %v264
                %v266 = vld [vmem:[%s254 + $0x48] sm:$0xff]
                %267 = vst [vmem:[%s255 + $0x28] sm:$0xff] %v266
                %v268 = vld [vmem:[%s254 + $0x60] sm:$0xff]
                %269 = vst [vmem:[%s255 + $0x30] sm:$0xff] %v268
                %v270 = vld [vmem:[%s254 + $0x68] sm:$0xff]
                %271 = vst [vmem:[%s255 + $0x38] sm:$0xff] %v270
                %v272 = vld [vmem:[%s254 + $0x80] sm:$0xff]
                %273 = vst [vmem:[%s255 + $0x40] sm:$0xff] %v272
                %v274 = vld [vmem:[%s254 + $0x88] sm:$0xff]
                %275 = vst [vmem:[%s255 + $0x48] sm:$0xff] %v274
                %v276 = vld [vmem:[%s254 + $0xa0] sm:$0xff]
                %277 = vst [vmem:[%s255 + $0x50] sm:$0xff] %v276
                %v278 = vld [vmem:[%s254 + $0xa8] sm:$0xff]
                %279 = vst [vmem:[%s255 + $0x58] sm:$0xff] %v278
                %v280 = vld [vmem:[%s254 + $0xc0] sm:$0xff]
                %281 = vst [vmem:[%s255 + $0x60] sm:$0xff] %v280
                %v282 = vld [vmem:[%s254 + $0xc8] sm:$0xff]
                %283 = vst [vmem:[%s255 + $0x68] sm:$0xff] %v282
                %v284 = vld [vmem:[%s254 + $0xe0] sm:$0xff]
                %285 = vst [vmem:[%s255 + $0x70] sm:$0xff] %v284
                %v286 = vld [vmem:[%s254 + $0xe8] sm:$0xff]
                %287 = vst [vmem:[%s255 + $0x78] sm:$0xff] %v286
                %v288 = vld [vmem:[%s254 + $0x100] sm:$0xff]
                %289 = vst [vmem:[%s255 + $0x80] sm:$0xff] %v288
                %v290 = vld [vmem:[%s254 + $0x108] sm:$0xff]
                %291 = vst [vmem:[%s255 + $0x88] sm:$0xff] %v290
                %v292 = vld [vmem:[%s254 + $0x120] sm:$0xff]
                %293 = vst [vmem:[%s255 + $0x90] sm:$0xff] %v292
                %v294 = vld [vmem:[%s254 + $0x128] sm:$0xff]
                %295 = vst [vmem:[%s255 + $0x98] sm:$0xff] %v294
                %v296 = vld [vmem:[%s254 + $0x140] sm:$0xff]
                %297 = vst [vmem:[%s255 + $0xa0] sm:$0xff] %v296
                %v298 = vld [vmem:[%s254 + $0x148] sm:$0xff]
                %299 = vst [vmem:[%s255 + $0xa8] sm:$0xff] %v298
                %v300 = vld [vmem:[%s254 + $0x160] sm:$0xff]
                %301 = vst [vmem:[%s255 + $0xb0] sm:$0xff] %v300
                %v302 = vld [vmem:[%s254 + $0x168] sm:$0xff]
                %303 = vst [vmem:[%s255 + $0xb8] sm:$0xff] %v302
                %v304 = vld [vmem:[%s254 + $0x180] sm:$0xff]
                %305 = vst [vmem:[%s255 + $0xc0] sm:$0xff] %v304
                %v306 = vld [vmem:[%s254 + $0x188] sm:$0xff]
                %307 = vst [vmem:[%s255 + $0xc8] sm:$0xff] %v306
                %v308 = vld [vmem:[%s254 + $0x1a0] sm:$0xff]
                %309 = vst [vmem:[%s255 + $0xd0] sm:$0xff] %v308
                %v310 = vld [vmem:[%s254 + $0x1a8] sm:$0xff]
                %311 = vst [vmem:[%s255 + $0xd8] sm:$0xff] %v310
                %v312 = vld [vmem:[%s254 + $0x1c0] sm:$0xff]
                %313 = vst [vmem:[%s255 + $0xe0] sm:$0xff] %v312
                %v314 = vld [vmem:[%s254 + $0x1c8] sm:$0xff]
                %315 = vst [vmem:[%s255 + $0xe8] sm:$0xff] %v314
                %v316 = vld [vmem:[%s254 + $0x1e0] sm:$0xff]
                %317 = vst [vmem:[%s255 + $0xf0] sm:$0xff] %v316
                %v318 = vld [vmem:[%s254 + $0x1e8] sm:$0xff]
                %319 = vst [vmem:[%s255 + $0xf8] sm:$0xff] %v318
              $region37: #{private_encoder_forward.4} parent=31 // loop_footer
                %s253 = sadd.s32 1, %s249
              $region38: #{private_encoder_forward.4} parent=31 // loop_footer_branch
                %248 = sbr.rel target = $region34
              $region39: #{private_encoder_forward.4} parent=31 // loop_exit
                _
            $region32: #{private_encoder_forward.4} parent=27 // pred_fallthru
              _
            // Predicated region
            $region40: #{private_encoder_forward.4} parent=27 // pred_check
              _
            $region41: #{private_encoder_forward.4} parent=27 // pred_check_branch
              %321 = sbr.rel target = $region43
            $region42: #{private_encoder_forward.4} parent=27 // pred_region
              _
            $region43: #{private_encoder_forward.4} parent=27 // pred_fallthru
              _
          $region28: #{private_encoder_forward.4} parent=23 // pred_fallthru
            _
          %322 = vnop
        $region24: #{private_encoder_forward.4} parent=19 // pred_fallthru
          _
        // Predicated region
        $region44: #{private_encoder_forward.4} parent=19 // pred_check
          %p323 = pneg %p74
        $region45: #{private_encoder_forward.4} parent=19 // pred_check_branch
          %325 = sbr.rel (%p323) target = $region47
        $region46: #{private_encoder_forward.4} parent=19 // pred_region
          %s326 = sand.u32 %s64, 1
          %s327 = sand.u32 %s64, 1
          %s328 = smul.addr %s327, 256
          %s329 = scalar_lea.vmem [#allocation7], %s328
          %s330 = smul.u32 16, %s19
          %s331 = smul.u32 4, %s20
          %s332 = smul.addr %s330, 8
          %s333 = sadd.s32 %s331, %s332
          %s334 = smul.addr %s333, 4
          %s335 = scalar_lea.vmem %s1, %s334
          // Predicated region
          $region48: #{private_encoder_forward.4} parent=46 // pred_check
            _
          $region49: #{private_encoder_forward.4} parent=46 // pred_check_branch
            %337 = sbr.rel (0) target = $region51
          $region50: #{private_encoder_forward.4} parent=46 // pred_region
            // Predicated region
            $region52: #{private_encoder_forward.4} parent=50 // pred_check
              _
            $region53: #{private_encoder_forward.4} parent=50 // pred_check_branch
              %339 = sbr.rel (0) target = $region55
            $region54: #{private_encoder_forward.4} parent=50 // pred_region
              loop: start=0, step=1, limit=1
              $region56: #{private_encoder_forward.4} parent=54 // loop_pre_header
                _
              $region57: #{private_encoder_forward.4} parent=54 // loop_header
                %s341 = sphi 0, %s345
                %p342 = scmp.ge.s32.totalorder %s341, 1
                %s346 = sphi %s335, %s335
                %s347 = sphi %s329, %s329
              $region58: #{private_encoder_forward.4} parent=54 // loop_header_branch
                %344 = sbr.rel (%p342) target = $region62
              $region59: #{private_encoder_forward.4} parent=54 // loop_body
                %v348 = vld [vmem:[%s346] sm:$0xff]
                %349 = vst [vmem:[%s347] sm:$0xff] %v348
                %v350 = vld [vmem:[%s346 + $0x8] sm:$0xff]
                %351 = vst [vmem:[%s347 + $0x8] sm:$0xff] %v350
                %v352 = vld [vmem:[%s346 + $0x20] sm:$0xff]
                %353 = vst [vmem:[%s347 + $0x10] sm:$0xff] %v352
                %v354 = vld [vmem:[%s346 + $0x28] sm:$0xff]
                %355 = vst [vmem:[%s347 + $0x18] sm:$0xff] %v354
                %v356 = vld [vmem:[%s346 + $0x40] sm:$0xff]
                %357 = vst [vmem:[%s347 + $0x20] sm:$0xff] %v356
                %v358 = vld [vmem:[%s346 + $0x48] sm:$0xff]
                %359 = vst [vmem:[%s347 + $0x28] sm:$0xff] %v358
                %v360 = vld [vmem:[%s346 + $0x60] sm:$0xff]
                %361 = vst [vmem:[%s347 + $0x30] sm:$0xff] %v360
                %v362 = vld [vmem:[%s346 + $0x68] sm:$0xff]
                %363 = vst [vmem:[%s347 + $0x38] sm:$0xff] %v362
                %v364 = vld [vmem:[%s346 + $0x80] sm:$0xff]
                %365 = vst [vmem:[%s347 + $0x40] sm:$0xff] %v364
                %v366 = vld [vmem:[%s346 + $0x88] sm:$0xff]
                %367 = vst [vmem:[%s347 + $0x48] sm:$0xff] %v366
                %v368 = vld [vmem:[%s346 + $0xa0] sm:$0xff]
                %369 = vst [vmem:[%s347 + $0x50] sm:$0xff] %v368
                %v370 = vld [vmem:[%s346 + $0xa8] sm:$0xff]
                %371 = vst [vmem:[%s347 + $0x58] sm:$0xff] %v370
                %v372 = vld [vmem:[%s346 + $0xc0] sm:$0xff]
                %373 = vst [vmem:[%s347 + $0x60] sm:$0xff] %v372
                %v374 = vld [vmem:[%s346 + $0xc8] sm:$0xff]
                %375 = vst [vmem:[%s347 + $0x68] sm:$0xff] %v374
                %v376 = vld [vmem:[%s346 + $0xe0] sm:$0xff]
                %377 = vst [vmem:[%s347 + $0x70] sm:$0xff] %v376
                %v378 = vld [vmem:[%s346 + $0xe8] sm:$0xff]
                %379 = vst [vmem:[%s347 + $0x78] sm:$0xff] %v378
                %v380 = vld [vmem:[%s346 + $0x100] sm:$0xff]
                %381 = vst [vmem:[%s347 + $0x80] sm:$0xff] %v380
                %v382 = vld [vmem:[%s346 + $0x108] sm:$0xff]
                %383 = vst [vmem:[%s347 + $0x88] sm:$0xff] %v382
                %v384 = vld [vmem:[%s346 + $0x120] sm:$0xff]
                %385 = vst [vmem:[%s347 + $0x90] sm:$0xff] %v384
                %v386 = vld [vmem:[%s346 + $0x128] sm:$0xff]
                %387 = vst [vmem:[%s347 + $0x98] sm:$0xff] %v386
                %v388 = vld [vmem:[%s346 + $0x140] sm:$0xff]
                %389 = vst [vmem:[%s347 + $0xa0] sm:$0xff] %v388
                %v390 = vld [vmem:[%s346 + $0x148] sm:$0xff]
                %391 = vst [vmem:[%s347 + $0xa8] sm:$0xff] %v390
                %v392 = vld [vmem:[%s346 + $0x160] sm:$0xff]
                %393 = vst [vmem:[%s347 + $0xb0] sm:$0xff] %v392
                %v394 = vld [vmem:[%s346 + $0x168] sm:$0xff]
                %395 = vst [vmem:[%s347 + $0xb8] sm:$0xff] %v394
                %v396 = vld [vmem:[%s346 + $0x180] sm:$0xff]
                %397 = vst [vmem:[%s347 + $0xc0] sm:$0xff] %v396
                %v398 = vld [vmem:[%s346 + $0x188] sm:$0xff]
                %399 = vst [vmem:[%s347 + $0xc8] sm:$0xff] %v398
                %v400 = vld [vmem:[%s346 + $0x1a0] sm:$0xff]
                %401 = vst [vmem:[%s347 + $0xd0] sm:$0xff] %v400
                %v402 = vld [vmem:[%s346 + $0x1a8] sm:$0xff]
                %403 = vst [vmem:[%s347 + $0xd8] sm:$0xff] %v402
                %v404 = vld [vmem:[%s346 + $0x1c0] sm:$0xff]
                %405 = vst [vmem:[%s347 + $0xe0] sm:$0xff] %v404
                %v406 = vld [vmem:[%s346 + $0x1c8] sm:$0xff]
                %407 = vst [vmem:[%s347 + $0xe8] sm:$0xff] %v406
                %v408 = vld [vmem:[%s346 + $0x1e0] sm:$0xff]
                %409 = vst [vmem:[%s347 + $0xf0] sm:$0xff] %v408
                %v410 = vld [vmem:[%s346 + $0x1e8] sm:$0xff]
                %411 = vst [vmem:[%s347 + $0xf8] sm:$0xff] %v410
              $region60: #{private_encoder_forward.4} parent=54 // loop_footer
                %s345 = sadd.s32 1, %s341
              $region61: #{private_encoder_forward.4} parent=54 // loop_footer_branch
                %340 = sbr.rel target = $region57
              $region62: #{private_encoder_forward.4} parent=54 // loop_exit
                _
            $region55: #{private_encoder_forward.4} parent=50 // pred_fallthru
              _
            // Predicated region
            $region63: #{private_encoder_forward.4} parent=50 // pred_check
              _
            $region64: #{private_encoder_forward.4} parent=50 // pred_check_branch
              %413 = sbr.rel target = $region66
            $region65: #{private_encoder_forward.4} parent=50 // pred_region
              _
            $region66: #{private_encoder_forward.4} parent=50 // pred_fallthru
              _
          $region51: #{private_encoder_forward.4} parent=46 // pred_fallthru
            _
          %414 = vnop
        $region47: #{private_encoder_forward.4} parent=19 // pred_fallthru
          _
        // Predicated region
        $region67: #{private_encoder_forward.4} parent=19 // pred_check
          %p415 = pneg %p102
        $region68: #{private_encoder_forward.4} parent=19 // pred_check_branch
          %417 = sbr.rel (%p415) target = $region70
        $region69: #{private_encoder_forward.4} parent=19 // pred_region
          %s418 = sand.u32 %s92, 1
          %s419 = sand.u32 %s92, 1
          %s420 = smul.addr %s419, 256
          %s421 = scalar_lea.vmem [#allocation8], %s420
          %s422 = smul.u32 16, %s19
          %s423 = smul.u32 4, %s20
          %s424 = smul.addr %s422, 8
          %s425 = sadd.s32 %s423, %s424
          %s426 = smul.addr %s425, 4
          %s427 = scalar_lea.vmem %s2, %s426
          // Predicated region
          $region71: #{private_encoder_forward.4} parent=69 // pred_check
            _
          $region72: #{private_encoder_forward.4} parent=69 // pred_check_branch
            %429 = sbr.rel (0) target = $region74
          $region73: #{private_encoder_forward.4} parent=69 // pred_region
            // Predicated region
            $region75: #{private_encoder_forward.4} parent=73 // pred_check
              _
            $region76: #{private_encoder_forward.4} parent=73 // pred_check_branch
              %431 = sbr.rel (0) target = $region78
            $region77: #{private_encoder_forward.4} parent=73 // pred_region
              loop: start=0, step=1, limit=1
              $region79: #{private_encoder_forward.4} parent=77 // loop_pre_header
                _
              $region80: #{private_encoder_forward.4} parent=77 // loop_header
                %s433 = sphi 0, %s437
                %p434 = scmp.ge.s32.totalorder %s433, 1
                %s438 = sphi %s427, %s427
                %s439 = sphi %s421, %s421
              $region81: #{private_encoder_forward.4} parent=77 // loop_header_branch
                %436 = sbr.rel (%p434) target = $region85
              $region82: #{private_encoder_forward.4} parent=77 // loop_body
                %v440 = vld [vmem:[%s438] sm:$0xff]
                %441 = vst [vmem:[%s439] sm:$0xff] %v440
                %v442 = vld [vmem:[%s438 + $0x8] sm:$0xff]
                %443 = vst [vmem:[%s439 + $0x8] sm:$0xff] %v442
                %v444 = vld [vmem:[%s438 + $0x20] sm:$0xff]
                %445 = vst [vmem:[%s439 + $0x10] sm:$0xff] %v444
                %v446 = vld [vmem:[%s438 + $0x28] sm:$0xff]
                %447 = vst [vmem:[%s439 + $0x18] sm:$0xff] %v446
                %v448 = vld [vmem:[%s438 + $0x40] sm:$0xff]
                %449 = vst [vmem:[%s439 + $0x20] sm:$0xff] %v448
                %v450 = vld [vmem:[%s438 + $0x48] sm:$0xff]
                %451 = vst [vmem:[%s439 + $0x28] sm:$0xff] %v450
                %v452 = vld [vmem:[%s438 + $0x60] sm:$0xff]
                %453 = vst [vmem:[%s439 + $0x30] sm:$0xff] %v452
                %v454 = vld [vmem:[%s438 + $0x68] sm:$0xff]
                %455 = vst [vmem:[%s439 + $0x38] sm:$0xff] %v454
                %v456 = vld [vmem:[%s438 + $0x80] sm:$0xff]
                %457 = vst [vmem:[%s439 + $0x40] sm:$0xff] %v456
                %v458 = vld [vmem:[%s438 + $0x88] sm:$0xff]
                %459 = vst [vmem:[%s439 + $0x48] sm:$0xff] %v458
                %v460 = vld [vmem:[%s438 + $0xa0] sm:$0xff]
                %461 = vst [vmem:[%s439 + $0x50] sm:$0xff] %v460
                %v462 = vld [vmem:[%s438 + $0xa8] sm:$0xff]
                %463 = vst [vmem:[%s439 + $0x58] sm:$0xff] %v462
                %v464 = vld [vmem:[%s438 + $0xc0] sm:$0xff]
                %465 = vst [vmem:[%s439 + $0x60] sm:$0xff] %v464
                %v466 = vld [vmem:[%s438 + $0xc8] sm:$0xff]
                %467 = vst [vmem:[%s439 + $0x68] sm:$0xff] %v466
                %v468 = vld [vmem:[%s438 + $0xe0] sm:$0xff]
                %469 = vst [vmem:[%s439 + $0x70] sm:$0xff] %v468
                %v470 = vld [vmem:[%s438 + $0xe8] sm:$0xff]
                %471 = vst [vmem:[%s439 + $0x78] sm:$0xff] %v470
                %v472 = vld [vmem:[%s438 + $0x100] sm:$0xff]
                %473 = vst [vmem:[%s439 + $0x80] sm:$0xff] %v472
                %v474 = vld [vmem:[%s438 + $0x108] sm:$0xff]
                %475 = vst [vmem:[%s439 + $0x88] sm:$0xff] %v474
                %v476 = vld [vmem:[%s438 + $0x120] sm:$0xff]
                %477 = vst [vmem:[%s439 + $0x90] sm:$0xff] %v476
                %v478 = vld [vmem:[%s438 + $0x128] sm:$0xff]
                %479 = vst [vmem:[%s439 + $0x98] sm:$0xff] %v478
                %v480 = vld [vmem:[%s438 + $0x140] sm:$0xff]
                %481 = vst [vmem:[%s439 + $0xa0] sm:$0xff] %v480
                %v482 = vld [vmem:[%s438 + $0x148] sm:$0xff]
                %483 = vst [vmem:[%s439 + $0xa8] sm:$0xff] %v482
                %v484 = vld [vmem:[%s438 + $0x160] sm:$0xff]
                %485 = vst [vmem:[%s439 + $0xb0] sm:$0xff] %v484
                %v486 = vld [vmem:[%s438 + $0x168] sm:$0xff]
                %487 = vst [vmem:[%s439 + $0xb8] sm:$0xff] %v486
                %v488 = vld [vmem:[%s438 + $0x180] sm:$0xff]
                %489 = vst [vmem:[%s439 + $0xc0] sm:$0xff] %v488
                %v490 = vld [vmem:[%s438 + $0x188] sm:$0xff]
                %491 = vst [vmem:[%s439 + $0xc8] sm:$0xff] %v490
                %v492 = vld [vmem:[%s438 + $0x1a0] sm:$0xff]
                %493 = vst [vmem:[%s439 + $0xd0] sm:$0xff] %v492
                %v494 = vld [vmem:[%s438 + $0x1a8] sm:$0xff]
                %495 = vst [vmem:[%s439 + $0xd8] sm:$0xff] %v494
                %v496 = vld [vmem:[%s438 + $0x1c0] sm:$0xff]
                %497 = vst [vmem:[%s439 + $0xe0] sm:$0xff] %v496
                %v498 = vld [vmem:[%s438 + $0x1c8] sm:$0xff]
                %499 = vst [vmem:[%s439 + $0xe8] sm:$0xff] %v498
                %v500 = vld [vmem:[%s438 + $0x1e0] sm:$0xff]
                %501 = vst [vmem:[%s439 + $0xf0] sm:$0xff] %v500
                %v502 = vld [vmem:[%s438 + $0x1e8] sm:$0xff]
                %503 = vst [vmem:[%s439 + $0xf8] sm:$0xff] %v502
              $region83: #{private_encoder_forward.4} parent=77 // loop_footer
                %s437 = sadd.s32 1, %s433
              $region84: #{private_encoder_forward.4} parent=77 // loop_footer_branch
                %432 = sbr.rel target = $region80
              $region85: #{private_encoder_forward.4} parent=77 // loop_exit
                _
            $region78: #{private_encoder_forward.4} parent=73 // pred_fallthru
              _
            // Predicated region
            $region86: #{private_encoder_forward.4} parent=73 // pred_check
              _
            $region87: #{private_encoder_forward.4} parent=73 // pred_check_branch
              %505 = sbr.rel target = $region89
            $region88: #{private_encoder_forward.4} parent=73 // pred_region
              _
            $region89: #{private_encoder_forward.4} parent=73 // pred_fallthru
              _
          $region74: #{private_encoder_forward.4} parent=69 // pred_fallthru
            _
          %506 = vnop
        $region70: #{private_encoder_forward.4} parent=19 // pred_fallthru
          _
        // Predicated region
        $region90: #{private_encoder_forward.4} parent=19 // pred_check
          %p507 = pneg %p130
        $region91: #{private_encoder_forward.4} parent=19 // pred_check_branch
          %509 = sbr.rel (%p507) target = $region93
        $region92: #{private_encoder_forward.4} parent=19 // pred_region
          %s510 = sand.u32 %s120, 1
          %s511 = sand.u32 %s120, 1
          %s512 = smul.addr %s511, 256
          %s513 = scalar_lea.vmem [#allocation9], %s512
          %s514 = smul.u32 16, %s19
          %s515 = smul.u32 4, %s20
          %s516 = smul.addr %s514, 8
          %s517 = sadd.s32 %s515, %s516
          %s518 = smul.addr %s517, 4
          %s519 = scalar_lea.vmem %s3, %s518
          // Predicated region
          $region94: #{private_encoder_forward.4} parent=92 // pred_check
            _
          $region95: #{private_encoder_forward.4} parent=92 // pred_check_branch
            %521 = sbr.rel (0) target = $region97
          $region96: #{private_encoder_forward.4} parent=92 // pred_region
            // Predicated region
            $region98: #{private_encoder_forward.4} parent=96 // pred_check
              _
            $region99: #{private_encoder_forward.4} parent=96 // pred_check_branch
              %523 = sbr.rel (0) target = $region101
            $region100: #{private_encoder_forward.4} parent=96 // pred_region
              loop: start=0, step=1, limit=1
              $region102: #{private_encoder_forward.4} parent=100 // loop_pre_header
                _
              $region103: #{private_encoder_forward.4} parent=100 // loop_header
                %s525 = sphi 0, %s529
                %p526 = scmp.ge.s32.totalorder %s525, 1
                %s530 = sphi %s519, %s519
                %s531 = sphi %s513, %s513
              $region104: #{private_encoder_forward.4} parent=100 // loop_header_branch
                %528 = sbr.rel (%p526) target = $region108
              $region105: #{private_encoder_forward.4} parent=100 // loop_body
                %v532 = vld [vmem:[%s530] sm:$0xff]
                %533 = vst [vmem:[%s531] sm:$0xff] %v532
                %v534 = vld [vmem:[%s530 + $0x8] sm:$0xff]
                %535 = vst [vmem:[%s531 + $0x8] sm:$0xff] %v534
                %v536 = vld [vmem:[%s530 + $0x20] sm:$0xff]
                %537 = vst [vmem:[%s531 + $0x10] sm:$0xff] %v536
                %v538 = vld [vmem:[%s530 + $0x28] sm:$0xff]
                %539 = vst [vmem:[%s531 + $0x18] sm:$0xff] %v538
                %v540 = vld [vmem:[%s530 + $0x40] sm:$0xff]
                %541 = vst [vmem:[%s531 + $0x20] sm:$0xff] %v540
                %v542 = vld [vmem:[%s530 + $0x48] sm:$0xff]
                %543 = vst [vmem:[%s531 + $0x28] sm:$0xff] %v542
                %v544 = vld [vmem:[%s530 + $0x60] sm:$0xff]
                %545 = vst [vmem:[%s531 + $0x30] sm:$0xff] %v544
                %v546 = vld [vmem:[%s530 + $0x68] sm:$0xff]
                %547 = vst [vmem:[%s531 + $0x38] sm:$0xff] %v546
                %v548 = vld [vmem:[%s530 + $0x80] sm:$0xff]
                %549 = vst [vmem:[%s531 + $0x40] sm:$0xff] %v548
                %v550 = vld [vmem:[%s530 + $0x88] sm:$0xff]
                %551 = vst [vmem:[%s531 + $0x48] sm:$0xff] %v550
                %v552 = vld [vmem:[%s530 + $0xa0] sm:$0xff]
                %553 = vst [vmem:[%s531 + $0x50] sm:$0xff] %v552
                %v554 = vld [vmem:[%s530 + $0xa8] sm:$0xff]
                %555 = vst [vmem:[%s531 + $0x58] sm:$0xff] %v554
                %v556 = vld [vmem:[%s530 + $0xc0] sm:$0xff]
                %557 = vst [vmem:[%s531 + $0x60] sm:$0xff] %v556
                %v558 = vld [vmem:[%s530 + $0xc8] sm:$0xff]
                %559 = vst [vmem:[%s531 + $0x68] sm:$0xff] %v558
                %v560 = vld [vmem:[%s530 + $0xe0] sm:$0xff]
                %561 = vst [vmem:[%s531 + $0x70] sm:$0xff] %v560
                %v562 = vld [vmem:[%s530 + $0xe8] sm:$0xff]
                %563 = vst [vmem:[%s531 + $0x78] sm:$0xff] %v562
                %v564 = vld [vmem:[%s530 + $0x100] sm:$0xff]
                %565 = vst [vmem:[%s531 + $0x80] sm:$0xff] %v564
                %v566 = vld [vmem:[%s530 + $0x108] sm:$0xff]
                %567 = vst [vmem:[%s531 + $0x88] sm:$0xff] %v566
                %v568 = vld [vmem:[%s530 + $0x120] sm:$0xff]
                %569 = vst [vmem:[%s531 + $0x90] sm:$0xff] %v568
                %v570 = vld [vmem:[%s530 + $0x128] sm:$0xff]
                %571 = vst [vmem:[%s531 + $0x98] sm:$0xff] %v570
                %v572 = vld [vmem:[%s530 + $0x140] sm:$0xff]
                %573 = vst [vmem:[%s531 + $0xa0] sm:$0xff] %v572
                %v574 = vld [vmem:[%s530 + $0x148] sm:$0xff]
                %575 = vst [vmem:[%s531 + $0xa8] sm:$0xff] %v574
                %v576 = vld [vmem:[%s530 + $0x160] sm:$0xff]
                %577 = vst [vmem:[%s531 + $0xb0] sm:$0xff] %v576
                %v578 = vld [vmem:[%s530 + $0x168] sm:$0xff]
                %579 = vst [vmem:[%s531 + $0xb8] sm:$0xff] %v578
                %v580 = vld [vmem:[%s530 + $0x180] sm:$0xff]
                %581 = vst [vmem:[%s531 + $0xc0] sm:$0xff] %v580
                %v582 = vld [vmem:[%s530 + $0x188] sm:$0xff]
                %583 = vst [vmem:[%s531 + $0xc8] sm:$0xff] %v582
                %v584 = vld [vmem:[%s530 + $0x1a0] sm:$0xff]
                %585 = vst [vmem:[%s531 + $0xd0] sm:$0xff] %v584
                %v586 = vld [vmem:[%s530 + $0x1a8] sm:$0xff]
                %587 = vst [vmem:[%s531 + $0xd8] sm:$0xff] %v586
                %v588 = vld [vmem:[%s530 + $0x1c0] sm:$0xff]
                %589 = vst [vmem:[%s531 + $0xe0] sm:$0xff] %v588
                %v590 = vld [vmem:[%s530 + $0x1c8] sm:$0xff]
                %591 = vst [vmem:[%s531 + $0xe8] sm:$0xff] %v590
                %v592 = vld [vmem:[%s530 + $0x1e0] sm:$0xff]
                %593 = vst [vmem:[%s531 + $0xf0] sm:$0xff] %v592
                %v594 = vld [vmem:[%s530 + $0x1e8] sm:$0xff]
                %595 = vst [vmem:[%s531 + $0xf8] sm:$0xff] %v594
              $region106: #{private_encoder_forward.4} parent=100 // loop_footer
                %s529 = sadd.s32 1, %s525
              $region107: #{private_encoder_forward.4} parent=100 // loop_footer_branch
                %524 = sbr.rel target = $region103
              $region108: #{private_encoder_forward.4} parent=100 // loop_exit
                _
            $region101: #{private_encoder_forward.4} parent=96 // pred_fallthru
              _
            // Predicated region
            $region109: #{private_encoder_forward.4} parent=96 // pred_check
              _
            $region110: #{private_encoder_forward.4} parent=96 // pred_check_branch
              %597 = sbr.rel target = $region112
            $region111: #{private_encoder_forward.4} parent=96 // pred_region
              _
            $region112: #{private_encoder_forward.4} parent=96 // pred_fallthru
              _
          $region97: #{private_encoder_forward.4} parent=92 // pred_fallthru
            _
          %598 = vnop
        $region93: #{private_encoder_forward.4} parent=19 // pred_fallthru
          _
        // Predicated region
        $region113: #{private_encoder_forward.4} parent=19 // pred_check
          %p599 = pneg %p156
        $region114: #{private_encoder_forward.4} parent=19 // pred_check_branch
          %601 = sbr.rel (%p599) target = $region116
        $region115: #{private_encoder_forward.4} parent=19 // pred_region
          %s602 = smul.u32 64, %s20
          %p603 = scmp.lt.s32.totalorder %s602, 127
          %s604 = scalar_select %p603, %s602, 127
          %s605 = smul.addr %s604, 4
          %s606 = scalar_lea.vmem %s4, %s605
          %s607 = smul.u32 64, %s20
        $region116: #{private_encoder_forward.4} parent=19 // pred_fallthru
          _
      $region20: #{private_encoder_forward.4} parent=5 // pred_fallthru
        _
      %p608 = scmp.le.s32.totalorder 1, %s12
      %p609 = scmp.lt.s32.totalorder %s12, 3
      %p610 = pnand %p608, %p609
      %p611 = pneg %p610
      // Predicated region
      $region117: #{private_encoder_forward.4} parent=5 // pred_check
        _
      $region118: #{private_encoder_forward.4} parent=5 // pred_check_branch
        %613 = sbr.rel (%p610) target = $region120
      $region119: #{private_encoder_forward.4} parent=5 // pred_region
        %s614 = ssub.s32 %s12, 1
        %s615 = sand.u32 %s39, 1
        %s616 = sand.u32 %s39, 1
        %s617 = smul.addr %s616, 256
        %s618 = scalar_lea.vmem [#allocation6], %s617
        // Predicated region
        $region121: #{private_encoder_forward.4} parent=119 // pred_check
          %p619 = pneg %p52
        $region122: #{private_encoder_forward.4} parent=119 // pred_check_branch
          %621 = sbr.rel (%p619) target = $region124
        $region123: #{private_encoder_forward.4} parent=119 // pred_region
          _
        $region124: #{private_encoder_forward.4} parent=119 // pred_fallthru
          _
        %s622 = sand.u32 %s67, 1
        %s623 = sand.u32 %s67, 1
        %s624 = smul.addr %s623, 256
        %s625 = scalar_lea.vmem [#allocation7], %s624
        // Predicated region
        $region125: #{private_encoder_forward.4} parent=119 // pred_check
          %p626 = pneg %p80
        $region126: #{private_encoder_forward.4} parent=119 // pred_check_branch
          %628 = sbr.rel (%p626) target = $region128
        $region127: #{private_encoder_forward.4} parent=119 // pred_region
          _
        $region128: #{private_encoder_forward.4} parent=119 // pred_fallthru
          _
        %s629 = sand.u32 %s95, 1
        %s630 = sand.u32 %s95, 1
        %s631 = smul.addr %s630, 256
        %s632 = scalar_lea.vmem [#allocation8], %s631
        // Predicated region
        $region129: #{private_encoder_forward.4} parent=119 // pred_check
          %p633 = pneg %p108
        $region130: #{private_encoder_forward.4} parent=119 // pred_check_branch
          %635 = sbr.rel (%p633) target = $region132
        $region131: #{private_encoder_forward.4} parent=119 // pred_region
          _
        $region132: #{private_encoder_forward.4} parent=119 // pred_fallthru
          _
        %s636 = sand.u32 %s123, 1
        %s637 = sand.u32 %s123, 1
        %s638 = smul.addr %s637, 256
        %s639 = scalar_lea.vmem [#allocation9], %s638
        // Predicated region
        $region133: #{private_encoder_forward.4} parent=119 // pred_check
          %p640 = pneg %p136
        $region134: #{private_encoder_forward.4} parent=119 // pred_check_branch
          %642 = sbr.rel (%p640) target = $region136
        $region135: #{private_encoder_forward.4} parent=119 // pred_region
          _
        $region136: #{private_encoder_forward.4} parent=119 // pred_fallthru
          _
        %s643 = sand.u32 %s39, 1
        %s644 = sand.u32 %s39, 1
        %s645 = smul.addr %s644, 256
        %s646 = scalar_lea.vmem [#allocation6], %s645
        %p647 = pneg %p52
        %p648 = pneg %p49
        %s649 = sand.u32 %s67, 1
        %s650 = sand.u32 %s67, 1
        %s651 = smul.addr %s650, 256
        %s652 = scalar_lea.vmem [#allocation7], %s651
        %p653 = pneg %p80
        %p654 = pneg %p77
        %s655 = sand.u32 %s95, 1
        %s656 = sand.u32 %s95, 1
        %s657 = smul.addr %s656, 256
        %s658 = scalar_lea.vmem [#allocation8], %s657
        %p659 = pneg %p108
        %p660 = pneg %p105
        %s661 = sand.u32 %s123, 1
        %s662 = sand.u32 %s123, 1
        %s663 = smul.addr %s662, 256
        %s664 = scalar_lea.vmem [#allocation9], %s663
        %p665 = pneg %p136
        %p666 = pneg %p133
        %s667 = smul.u32 64, %s22
        %p668 = scmp.lt.s32.totalorder %s667, 127
        %s669 = scalar_select %p668, %s667, 127
        %s670 = smul.addr %s669, 4
        %s671 = scalar_lea.vmem %s4, %s670
        %p672 = pneg %p162
        %p673 = pneg %p159
        %p674 = pneg %p183
        %p675 = pneg %p180
        %p676 = pneg %p209
        %p677 = pneg %p206
        %s678 = smul.u32 16, %s21
        %p679 = scmp.lt.s32.totalorder %s678, 15
        %s680 = scalar_select %p679, %s678, 15
        %s681 = smul.addr %s680, 4
        %s682 = scalar_lea.vmem %s6, %s681
        %s683 = smul.u32 16, %s21
        %s684 = smul.u32 4, %s22
        %s685 = smul.u32 16, %s21
        %s686 = smul.u32 4, %s22
        %s687 = smul.u32 16, %s21
        %s688 = smul.u32 4, %s22
        %s689 = smul.u32 16, %s21
        %s690 = smul.u32 4, %s22
        %s691 = smul.u32 64, %s22
        %p692 = scmp.lt.s32.totalorder %s691, 127
        %s693 = scalar_select %p692, %s691, 127
        %s694 = smul.addr %s693, 4
        %s695 = scalar_lea.vmem %s4, %s694
        %s696 = smul.u32 64, %s22
        %s697 = smul.u32 16, %s21
        %p698 = scmp.lt.s32.totalorder %s697, 15
        %s699 = scalar_select %p698, %s697, 15
        %s700 = smul.addr %s699, 4
        %s701 = scalar_lea.vmem %s6, %s700
        %s702 = smul.u32 16, %s21
        %p704 = scmp.eq.s32.totalorder %s22, 0
        // Predicated region
        $region137: #{private_encoder_forward.4} parent=119 // pred_check
          %p705 = pneg %p704
        $region138: #{private_encoder_forward.4} parent=119 // pred_check_branch
          %707 = sbr.rel (%p705) target = $region140
        $region139: #{private_encoder_forward.4} parent=119 // pred_region
          %vm708 = vcmask 523264
          %709 = vst.msk [vmem:[#allocation2] sm:$0xff] %vm708, 0.0
          %710 = vst.msk [vmem:[#allocation2 + $0x8] sm:$0xff] %vm708, 0.0
          %711 = vst.msk [vmem:[#allocation2 + $0x10] sm:$0xff] %vm708, 0.0
          %712 = vst.msk [vmem:[#allocation2 + $0x18] sm:$0xff] %vm708, 0.0
          %713 = vst.msk [vmem:[#allocation2 + $0x20] sm:$0xff] %vm708, 0.0
          %714 = vst.msk [vmem:[#allocation2 + $0x28] sm:$0xff] %vm708, 0.0
          %715 = vst.msk [vmem:[#allocation2 + $0x30] sm:$0xff] %vm708, 0.0
          %716 = vst.msk [vmem:[#allocation2 + $0x38] sm:$0xff] %vm708, 0.0
          %717 = vst.msk [vmem:[#allocation2 + $0x40] sm:$0xff] %vm708, 0.0
          %718 = vst.msk [vmem:[#allocation2 + $0x48] sm:$0xff] %vm708, 0.0
          %719 = vst.msk [vmem:[#allocation2 + $0x50] sm:$0xff] %vm708, 0.0
          %720 = vst.msk [vmem:[#allocation2 + $0x58] sm:$0xff] %vm708, 0.0
          %721 = vst.msk [vmem:[#allocation2 + $0x60] sm:$0xff] %vm708, 0.0
          %722 = vst.msk [vmem:[#allocation2 + $0x68] sm:$0xff] %vm708, 0.0
          %723 = vst.msk [vmem:[#allocation2 + $0x70] sm:$0xff] %vm708, 0.0
          %724 = vst.msk [vmem:[#allocation2 + $0x78] sm:$0xff] %vm708, 0.0
          %725 = vst.msk [vmem:[#allocation3] sm:$0xff] %vm708, 0.0
          %726 = vst.msk [vmem:[#allocation3 + $0x8] sm:$0xff] %vm708, 0.0
          %727 = vst.msk [vmem:[#allocation3 + $0x10] sm:$0xff] %vm708, 0.0
          %728 = vst.msk [vmem:[#allocation3 + $0x18] sm:$0xff] %vm708, 0.0
          %729 = vst.msk [vmem:[#allocation3 + $0x20] sm:$0xff] %vm708, 0.0
          %730 = vst.msk [vmem:[#allocation3 + $0x28] sm:$0xff] %vm708, 0.0
          %731 = vst.msk [vmem:[#allocation3 + $0x30] sm:$0xff] %vm708, 0.0
          %732 = vst.msk [vmem:[#allocation3 + $0x38] sm:$0xff] %vm708, 0.0
          %733 = vst.msk [vmem:[#allocation3 + $0x40] sm:$0xff] %vm708, 0.0
          %734 = vst.msk [vmem:[#allocation3 + $0x48] sm:$0xff] %vm708, 0.0
          %735 = vst.msk [vmem:[#allocation3 + $0x50] sm:$0xff] %vm708, 0.0
          %736 = vst.msk [vmem:[#allocation3 + $0x58] sm:$0xff] %vm708, 0.0
          %737 = vst.msk [vmem:[#allocation3 + $0x60] sm:$0xff] %vm708, 0.0
          %738 = vst.msk [vmem:[#allocation3 + $0x68] sm:$0xff] %vm708, 0.0
          %739 = vst.msk [vmem:[#allocation3 + $0x70] sm:$0xff] %vm708, 0.0
          %740 = vst.msk [vmem:[#allocation3 + $0x78] sm:$0xff] %vm708, 0.0
          %741 = vst.msk [vmem:[#allocation4] sm:$0xff] %vm708, 0.0
          %742 = vst.msk [vmem:[#allocation4 + $0x8] sm:$0xff] %vm708, 0.0
          %743 = vst.msk [vmem:[#allocation4 + $0x10] sm:$0xff] %vm708, 0.0
          %744 = vst.msk [vmem:[#allocation4 + $0x18] sm:$0xff] %vm708, 0.0
          %745 = vst.msk [vmem:[#allocation4 + $0x20] sm:$0xff] %vm708, 0.0
          %746 = vst.msk [vmem:[#allocation4 + $0x28] sm:$0xff] %vm708, 0.0
          %747 = vst.msk [vmem:[#allocation4 + $0x30] sm:$0xff] %vm708, 0.0
          %748 = vst.msk [vmem:[#allocation4 + $0x38] sm:$0xff] %vm708, 0.0
          %749 = vst.msk [vmem:[#allocation4 + $0x40] sm:$0xff] %vm708, 0.0
          %750 = vst.msk [vmem:[#allocation4 + $0x48] sm:$0xff] %vm708, 0.0
          %751 = vst.msk [vmem:[#allocation4 + $0x50] sm:$0xff] %vm708, 0.0
          %752 = vst.msk [vmem:[#allocation4 + $0x58] sm:$0xff] %vm708, 0.0
          %753 = vst.msk [vmem:[#allocation4 + $0x60] sm:$0xff] %vm708, 0.0
          %754 = vst.msk [vmem:[#allocation4 + $0x68] sm:$0xff] %vm708, 0.0
          %755 = vst.msk [vmem:[#allocation4 + $0x70] sm:$0xff] %vm708, 0.0
          %756 = vst.msk [vmem:[#allocation4 + $0x78] sm:$0xff] %vm708, 0.0
          %757 = vst.msk [vmem:[#allocation5] sm:$0xff] %vm708, 0.0
          %758 = vst.msk [vmem:[#allocation5 + $0x8] sm:$0xff] %vm708, 0.0
          %759 = vst.msk [vmem:[#allocation5 + $0x10] sm:$0xff] %vm708, 0.0
          %760 = vst.msk [vmem:[#allocation5 + $0x18] sm:$0xff] %vm708, 0.0
          %761 = vst.msk [vmem:[#allocation5 + $0x20] sm:$0xff] %vm708, 0.0
          %762 = vst.msk [vmem:[#allocation5 + $0x28] sm:$0xff] %vm708, 0.0
          %763 = vst.msk [vmem:[#allocation5 + $0x30] sm:$0xff] %vm708, 0.0
          %764 = vst.msk [vmem:[#allocation5 + $0x38] sm:$0xff] %vm708, 0.0
          %765 = vst.msk [vmem:[#allocation5 + $0x40] sm:$0xff] %vm708, 0.0
          %766 = vst.msk [vmem:[#allocation5 + $0x48] sm:$0xff] %vm708, 0.0
          %767 = vst.msk [vmem:[#allocation5 + $0x50] sm:$0xff] %vm708, 0.0
          %768 = vst.msk [vmem:[#allocation5 + $0x58] sm:$0xff] %vm708, 0.0
          %769 = vst.msk [vmem:[#allocation5 + $0x60] sm:$0xff] %vm708, 0.0
          %770 = vst.msk [vmem:[#allocation5 + $0x68] sm:$0xff] %vm708, 0.0
          %771 = vst.msk [vmem:[#allocation5 + $0x70] sm:$0xff] %vm708, 0.0
          %772 = vst.msk [vmem:[#allocation5 + $0x78] sm:$0xff] %vm708, 0.0
        $region140: #{private_encoder_forward.4} parent=119 // pred_fallthru
          _
        %v773 = vld [vmem:[%s695] sm:$0xf]
        %v774 = vld [vmem:[%s695 + $0x4] sm:$0xf]
        %v775 = vld [vmem:[%s695 + $0x8] sm:$0xf]
        %v776 = vld [vmem:[%s695 + $0xc] sm:$0xf]
        %v777 = vld [vmem:[%s695 + $0x10] sm:$0xf]
        %v778 = vld [vmem:[%s695 + $0x14] sm:$0xf]
        %v779 = vld [vmem:[%s695 + $0x18] sm:$0xf]
        %v780 = vld [vmem:[%s695 + $0x1c] sm:$0xf]
        %v781 = vld [vmem:[%s695 + $0x20] sm:$0xf]
        %v782 = vld [vmem:[%s695 + $0x24] sm:$0xf]
        %v783 = vld [vmem:[%s695 + $0x28] sm:$0xf]
        %v784 = vld [vmem:[%s695 + $0x2c] sm:$0xf]
        %v785 = vld [vmem:[%s695 + $0x30] sm:$0xf]
        %v786 = vld [vmem:[%s695 + $0x34] sm:$0xf]
        %v787 = vld [vmem:[%s695 + $0x38] sm:$0xf]
        %v788 = vld [vmem:[%s695 + $0x3c] sm:$0xf]
        %v789 = vld [vmem:[%s695 + $0x40] sm:$0xf]
        %v790 = vld [vmem:[%s695 + $0x44] sm:$0xf]
        %v791 = vld [vmem:[%s695 + $0x48] sm:$0xf]
        %v792 = vld [vmem:[%s695 + $0x4c] sm:$0xf]
        %v793 = vld [vmem:[%s695 + $0x50] sm:$0xf]
        %v794 = vld [vmem:[%s695 + $0x54] sm:$0xf]
        %v795 = vld [vmem:[%s695 + $0x58] sm:$0xf]
        %v796 = vld [vmem:[%s695 + $0x5c] sm:$0xf]
        %v797 = vld [vmem:[%s695 + $0x60] sm:$0xf]
        %v798 = vld [vmem:[%s695 + $0x64] sm:$0xf]
        %v799 = vld [vmem:[%s695 + $0x68] sm:$0xf]
        %v800 = vld [vmem:[%s695 + $0x6c] sm:$0xf]
        %v801 = vld [vmem:[%s695 + $0x70] sm:$0xf]
        %v802 = vld [vmem:[%s695 + $0x74] sm:$0xf]
        %v803 = vld [vmem:[%s695 + $0x78] sm:$0xf]
        %v804 = vld [vmem:[%s695 + $0x7c] sm:$0xf]
        %v805 = vld [vmem:[%s695 + $0x80] sm:$0xf]
        %v806 = vld [vmem:[%s695 + $0x84] sm:$0xf]
        %v807 = vld [vmem:[%s695 + $0x88] sm:$0xf]
        %v808 = vld [vmem:[%s695 + $0x8c] sm:$0xf]
        %v809 = vld [vmem:[%s695 + $0x90] sm:$0xf]
        %v810 = vld [vmem:[%s695 + $0x94] sm:$0xf]
        %v811 = vld [vmem:[%s695 + $0x98] sm:$0xf]
        %v812 = vld [vmem:[%s695 + $0x9c] sm:$0xf]
        %v813 = vld [vmem:[%s695 + $0xa0] sm:$0xf]
        %v814 = vld [vmem:[%s695 + $0xa4] sm:$0xf]
        %v815 = vld [vmem:[%s695 + $0xa8] sm:$0xf]
        %v816 = vld [vmem:[%s695 + $0xac] sm:$0xf]
        %v817 = vld [vmem:[%s695 + $0xb0] sm:$0xf]
        %v818 = vld [vmem:[%s695 + $0xb4] sm:$0xf]
        %v819 = vld [vmem:[%s695 + $0xb8] sm:$0xf]
        %v820 = vld [vmem:[%s695 + $0xbc] sm:$0xf]
        %v821 = vld [vmem:[%s695 + $0xc0] sm:$0xf]
        %v822 = vld [vmem:[%s695 + $0xc4] sm:$0xf]
        %v823 = vld [vmem:[%s695 + $0xc8] sm:$0xf]
        %v824 = vld [vmem:[%s695 + $0xcc] sm:$0xf]
        %v825 = vld [vmem:[%s695 + $0xd0] sm:$0xf]
        %v826 = vld [vmem:[%s695 + $0xd4] sm:$0xf]
        %v827 = vld [vmem:[%s695 + $0xd8] sm:$0xf]
        %v828 = vld [vmem:[%s695 + $0xdc] sm:$0xf]
        %v829 = vld [vmem:[%s695 + $0xe0] sm:$0xf]
        %v830 = vld [vmem:[%s695 + $0xe4] sm:$0xf]
        %v831 = vld [vmem:[%s695 + $0xe8] sm:$0xf]
        %v832 = vld [vmem:[%s695 + $0xec] sm:$0xf]
        %v833 = vld [vmem:[%s695 + $0xf0] sm:$0xf]
        %v834 = vld [vmem:[%s695 + $0xf4] sm:$0xf]
        %v835 = vld [vmem:[%s695 + $0xf8] sm:$0xf]
        %v836 = vld [vmem:[%s695 + $0xfc] sm:$0xf]
        %v837 = vld [vmem:[#allocation2] sm:$0xff]
        %v838 = vld [vmem:[#allocation2 + $0x8] sm:$0xff]
        %v839 = vld [vmem:[#allocation2 + $0x10] sm:$0xff]
        %v840 = vld [vmem:[#allocation2 + $0x18] sm:$0xff]
        %v841 = vld [vmem:[#allocation2 + $0x20] sm:$0xff]
        %v842 = vld [vmem:[#allocation2 + $0x28] sm:$0xff]
        %v843 = vld [vmem:[#allocation2 + $0x30] sm:$0xff]
        %v844 = vld [vmem:[#allocation2 + $0x38] sm:$0xff]
        %v845 = vld [vmem:[#allocation2 + $0x40] sm:$0xff]
        %v846 = vld [vmem:[#allocation2 + $0x48] sm:$0xff]
        %v847 = vld [vmem:[#allocation2 + $0x50] sm:$0xff]
        %v848 = vld [vmem:[#allocation2 + $0x58] sm:$0xff]
        %v849 = vld [vmem:[#allocation2 + $0x60] sm:$0xff]
        %v850 = vld [vmem:[#allocation2 + $0x68] sm:$0xff]
        %v851 = vld [vmem:[#allocation2 + $0x70] sm:$0xff]
        %v852 = vld [vmem:[#allocation2 + $0x78] sm:$0xff]
        %v853 = vld [vmem:[%s618] sm:$0xff]
        %v854 = vld [vmem:[%s618 + $0x8] sm:$0xff]
        %v855 = vld [vmem:[%s618 + $0x10] sm:$0xff]
        %v856 = vld [vmem:[%s618 + $0x18] sm:$0xff]
        %v857 = vld [vmem:[%s618 + $0x20] sm:$0xff]
        %v858 = vld [vmem:[%s618 + $0x28] sm:$0xff]
        %v859 = vld [vmem:[%s618 + $0x30] sm:$0xff]
        %v860 = vld [vmem:[%s618 + $0x38] sm:$0xff]
        %v861 = vld [vmem:[%s618 + $0x40] sm:$0xff]
        %v862 = vld [vmem:[%s618 + $0x48] sm:$0xff]
        %v863 = vld [vmem:[%s618 + $0x50] sm:$0xff]
        %v864 = vld [vmem:[%s618 + $0x58] sm:$0xff]
        %v865 = vld [vmem:[%s618 + $0x60] sm:$0xff]
        %v866 = vld [vmem:[%s618 + $0x68] sm:$0xff]
        %v867 = vld [vmem:[%s618 + $0x70] sm:$0xff]
        %v868 = vld [vmem:[%s618 + $0x78] sm:$0xff]
        %v869 = vld [vmem:[%s618 + $0x80] sm:$0xff]
        %v870 = vld [vmem:[%s618 + $0x88] sm:$0xff]
        %v871 = vld [vmem:[%s618 + $0x90] sm:$0xff]
        %v872 = vld [vmem:[%s618 + $0x98] sm:$0xff]
        %v873 = vld [vmem:[%s618 + $0xa0] sm:$0xff]
        %v874 = vld [vmem:[%s618 + $0xa8] sm:$0xff]
        %v875 = vld [vmem:[%s618 + $0xb0] sm:$0xff]
        %v876 = vld [vmem:[%s618 + $0xb8] sm:$0xff]
        %v877 = vld [vmem:[%s618 + $0xc0] sm:$0xff]
        %v878 = vld [vmem:[%s618 + $0xc8] sm:$0xff]
        %v879 = vld [vmem:[%s618 + $0xd0] sm:$0xff]
        %v880 = vld [vmem:[%s618 + $0xd8] sm:$0xff]
        %v881 = vld [vmem:[%s618 + $0xe0] sm:$0xff]
        %v882 = vld [vmem:[%s618 + $0xe8] sm:$0xff]
        %v883 = vld [vmem:[%s618 + $0xf0] sm:$0xff]
        %v884 = vld [vmem:[%s618 + $0xf8] sm:$0xff]
        %v917 = vunpack.c.l.b16 %v853
        %v918 = vunpack.c.h.b16 %v853
        %v919 = vunpack.c.l.b16 %v854
        %v920 = vunpack.c.h.b16 %v854
        %v921 = vunpack.c.l.b16 %v855
        %v922 = vunpack.c.h.b16 %v855
        %v923 = vunpack.c.l.b16 %v856
        %v924 = vunpack.c.h.b16 %v856
        %v925 = vunpack.c.l.b16 %v857
        %v926 = vunpack.c.h.b16 %v857
        %v927 = vunpack.c.l.b16 %v858
        %v928 = vunpack.c.h.b16 %v858
        %v929 = vunpack.c.l.b16 %v859
        %v930 = vunpack.c.h.b16 %v859
        %v931 = vunpack.c.l.b16 %v860
        %v932 = vunpack.c.h.b16 %v860
        %v933 = vunpack.c.l.b16 %v861
        %v934 = vunpack.c.h.b16 %v861
        %v935 = vunpack.c.l.b16 %v862
        %v936 = vunpack.c.h.b16 %v862
        %v937 = vunpack.c.l.b16 %v863
        %v938 = vunpack.c.h.b16 %v863
        %v939 = vunpack.c.l.b16 %v864
        %v940 = vunpack.c.h.b16 %v864
        %v941 = vunpack.c.l.b16 %v865
        %v942 = vunpack.c.h.b16 %v865
        %v943 = vunpack.c.l.b16 %v866
        %v944 = vunpack.c.h.b16 %v866
        %v945 = vunpack.c.l.b16 %v867
        %v946 = vunpack.c.h.b16 %v867
        %v947 = vunpack.c.l.b16 %v868
        %v948 = vunpack.c.h.b16 %v868
        %v949 = vunpack.c.l.b16 %v869
        %v950 = vunpack.c.h.b16 %v869
        %v951 = vunpack.c.l.b16 %v870
        %v952 = vunpack.c.h.b16 %v870
        %v953 = vunpack.c.l.b16 %v871
        %v954 = vunpack.c.h.b16 %v871
        %v955 = vunpack.c.l.b16 %v872
        %v956 = vunpack.c.h.b16 %v872
        %v957 = vunpack.c.l.b16 %v873
        %v958 = vunpack.c.h.b16 %v873
        %v959 = vunpack.c.l.b16 %v874
        %v960 = vunpack.c.h.b16 %v874
        %v961 = vunpack.c.l.b16 %v875
        %v962 = vunpack.c.h.b16 %v875
        %v963 = vunpack.c.l.b16 %v876
        %v964 = vunpack.c.h.b16 %v876
        %v965 = vunpack.c.l.b16 %v877
        %v966 = vunpack.c.h.b16 %v877
        %v967 = vunpack.c.l.b16 %v878
        %v968 = vunpack.c.h.b16 %v878
        %v969 = vunpack.c.l.b16 %v879
        %v970 = vunpack.c.h.b16 %v879
        %v971 = vunpack.c.l.b16 %v880
        %v972 = vunpack.c.h.b16 %v880
        %v973 = vunpack.c.l.b16 %v881
        %v974 = vunpack.c.h.b16 %v881
        %v975 = vunpack.c.l.b16 %v882
        %v976 = vunpack.c.h.b16 %v882
        %v977 = vunpack.c.l.b16 %v883
        %v978 = vunpack.c.h.b16 %v883
        %v979 = vunpack.c.l.b16 %v884
        %v980 = vunpack.c.h.b16 %v884
        %v981 = vpack.c.b16 %v921, %v917
        %v982 = vpack.c.b16 %v922, %v918
        %v983 = vpack.c.b16 %v923, %v919
        %v984 = vpack.c.b16 %v924, %v920
        %v985 = vpack.c.b16 %v929, %v925
        %v986 = vpack.c.b16 %v930, %v926
        %v987 = vpack.c.b16 %v931, %v927
        %v988 = vpack.c.b16 %v932, %v928
        %v989 = vpack.c.b16 %v937, %v933
        %v990 = vpack.c.b16 %v938, %v934
        %v991 = vpack.c.b16 %v939, %v935
        %v992 = vpack.c.b16 %v940, %v936
        %v993 = vpack.c.b16 %v945, %v941
        %v994 = vpack.c.b16 %v946, %v942
        %v995 = vpack.c.b16 %v947, %v943
        %v996 = vpack.c.b16 %v948, %v944
        %v997 = vpack.c.b16 %v953, %v949
        %v998 = vpack.c.b16 %v954, %v950
        %v999 = vpack.c.b16 %v955, %v951
        %v1000 = vpack.c.b16 %v956, %v952
        %v1001 = vpack.c.b16 %v961, %v957
        %v1002 = vpack.c.b16 %v962, %v958
        %v1003 = vpack.c.b16 %v963, %v959
        %v1004 = vpack.c.b16 %v964, %v960
        %v1005 = vpack.c.b16 %v969, %v965
        %v1006 = vpack.c.b16 %v970, %v966
        %v1007 = vpack.c.b16 %v971, %v967
        %v1008 = vpack.c.b16 %v972, %v968
        %v1009 = vpack.c.b16 %v977, %v973
        %v1010 = vpack.c.b16 %v978, %v974
        %v1011 = vpack.c.b16 %v979, %v975
        %v1012 = vpack.c.b16 %v980, %v976
        %v1109 = vunpack.c.l.b16 %v773
        %v1110 = vunpack.c.l.b16 %v774
        %v1111 = vunpack.c.l.b16 %v775
        %v1112 = vunpack.c.l.b16 %v776
        %v1113 = vunpack.c.l.b16 %v777
        %v1114 = vunpack.c.l.b16 %v778
        %v1115 = vunpack.c.l.b16 %v779
        %v1116 = vunpack.c.l.b16 %v780
        %v1117 = vunpack.c.l.b16 %v781
        %v1118 = vunpack.c.l.b16 %v782
        %v1119 = vunpack.c.l.b16 %v783
        %v1120 = vunpack.c.l.b16 %v784
        %v1121 = vunpack.c.l.b16 %v785
        %v1122 = vunpack.c.l.b16 %v786
        %v1123 = vunpack.c.l.b16 %v787
        %v1124 = vunpack.c.l.b16 %v788
        %v1125 = vunpack.c.l.b16 %v789
        %v1126 = vunpack.c.l.b16 %v790
        %v1127 = vunpack.c.l.b16 %v791
        %v1128 = vunpack.c.l.b16 %v792
        %v1129 = vunpack.c.l.b16 %v793
        %v1130 = vunpack.c.l.b16 %v794
        %v1131 = vunpack.c.l.b16 %v795
        %v1132 = vunpack.c.l.b16 %v796
        %v1133 = vunpack.c.l.b16 %v797
        %v1134 = vunpack.c.l.b16 %v798
        %v1135 = vunpack.c.l.b16 %v799
        %v1136 = vunpack.c.l.b16 %v800
        %v1137 = vunpack.c.l.b16 %v801
        %v1138 = vunpack.c.l.b16 %v802
        %v1139 = vunpack.c.l.b16 %v803
        %v1140 = vunpack.c.l.b16 %v804
        %v1141 = vunpack.c.l.b16 %v805
        %v1142 = vunpack.c.l.b16 %v806
        %v1143 = vunpack.c.l.b16 %v807
        %v1144 = vunpack.c.l.b16 %v808
        %v1145 = vunpack.c.l.b16 %v809
        %v1146 = vunpack.c.l.b16 %v810
        %v1147 = vunpack.c.l.b16 %v811
        %v1148 = vunpack.c.l.b16 %v812
        %v1149 = vunpack.c.l.b16 %v813
        %v1150 = vunpack.c.l.b16 %v814
        %v1151 = vunpack.c.l.b16 %v815
        %v1152 = vunpack.c.l.b16 %v816
        %v1153 = vunpack.c.l.b16 %v817
        %v1154 = vunpack.c.l.b16 %v818
        %v1155 = vunpack.c.l.b16 %v819
        %v1156 = vunpack.c.l.b16 %v820
        %v1157 = vunpack.c.l.b16 %v821
        %v1158 = vunpack.c.l.b16 %v822
        %v1159 = vunpack.c.l.b16 %v823
        %v1160 = vunpack.c.l.b16 %v824
        %v1161 = vunpack.c.l.b16 %v825
        %v1162 = vunpack.c.l.b16 %v826
        %v1163 = vunpack.c.l.b16 %v827
        %v1164 = vunpack.c.l.b16 %v828
        %v1165 = vunpack.c.l.b16 %v829
        %v1166 = vunpack.c.l.b16 %v830
        %v1167 = vunpack.c.l.b16 %v831
        %v1168 = vunpack.c.l.b16 %v832
        %v1169 = vunpack.c.l.b16 %v833
        %v1170 = vunpack.c.l.b16 %v834
        %v1171 = vunpack.c.l.b16 %v835
        %v1172 = vunpack.c.l.b16 %v836
        %v1173 = vpack.c.b16 %v1110, %v1109
        %v1174 = vpack.c.b16 %v1112, %v1111
        %v1175 = vpack.c.b16 %v1114, %v1113
        %v1176 = vpack.c.b16 %v1116, %v1115
        %v1177 = vpack.c.b16 %v1118, %v1117
        %v1178 = vpack.c.b16 %v1120, %v1119
        %v1179 = vpack.c.b16 %v1122, %v1121
        %v1180 = vpack.c.b16 %v1124, %v1123
        %v1181 = vpack.c.b16 %v1126, %v1125
        %v1182 = vpack.c.b16 %v1128, %v1127
        %v1183 = vpack.c.b16 %v1130, %v1129
        %v1184 = vpack.c.b16 %v1132, %v1131
        %v1185 = vpack.c.b16 %v1134, %v1133
        %v1186 = vpack.c.b16 %v1136, %v1135
        %v1187 = vpack.c.b16 %v1138, %v1137
        %v1188 = vpack.c.b16 %v1140, %v1139
        %v1189 = vpack.c.b16 %v1142, %v1141
        %v1190 = vpack.c.b16 %v1144, %v1143
        %v1191 = vpack.c.b16 %v1146, %v1145
        %v1192 = vpack.c.b16 %v1148, %v1147
        %v1193 = vpack.c.b16 %v1150, %v1149
        %v1194 = vpack.c.b16 %v1152, %v1151
        %v1195 = vpack.c.b16 %v1154, %v1153
        %v1196 = vpack.c.b16 %v1156, %v1155
        %v1197 = vpack.c.b16 %v1158, %v1157
        %v1198 = vpack.c.b16 %v1160, %v1159
        %v1199 = vpack.c.b16 %v1162, %v1161
        %v1200 = vpack.c.b16 %v1164, %v1163
        %v1201 = vpack.c.b16 %v1166, %v1165
        %v1202 = vpack.c.b16 %v1168, %v1167
        %v1203 = vpack.c.b16 %v1170, %v1169
        %v1204 = vpack.c.b16 %v1172, %v1171
        %1237 = vmatprep.subr.bf16.mxu0 0
        %1238 = vmatpush1.bf16.msra.mxu0 %v1173
        %1239 = vmatprep.subr.bf16.mxu0 0
        %1240 = vmatpush1.bf16.msra.mxu0 %v1174
        %1241 = vmatprep.subr.bf16.mxu0 0
        %1242 = vmatpush1.bf16.msra.mxu0 %v1175
        %1243 = vmatprep.subr.bf16.mxu0 0
        %1244 = vmatpush1.bf16.msra.mxu0 %v1176
        %1245 = vmatprep.subr.bf16.mxu0 0
        %1246 = vmatpush1.bf16.msra.mxu0 %v1177
        %1247 = vmatprep.subr.bf16.mxu0 0
        %1248 = vmatpush1.bf16.msra.mxu0 %v1178
        %1249 = vmatprep.subr.bf16.mxu0 0
        %1250 = vmatpush1.bf16.msra.mxu0 %v1179
        %1251 = vmatprep.subr.bf16.mxu0 0
        %1252 = vmatpush1.bf16.msra.mxu0 %v1180
        %1253 = vmatprep.subr.bf16.mxu0 0
        %1254 = vmatpush1.bf16.msra.mxu0 %v1181
        %1255 = vmatprep.subr.bf16.mxu0 0
        %1256 = vmatpush1.bf16.msra.mxu0 %v1182
        %1257 = vmatprep.subr.bf16.mxu0 0
        %1258 = vmatpush1.bf16.msra.mxu0 %v1183
        %1259 = vmatprep.subr.bf16.mxu0 0
        %1260 = vmatpush1.bf16.msra.mxu0 %v1184
        %1261 = vmatprep.subr.bf16.mxu0 0
        %1262 = vmatpush1.bf16.msra.mxu0 %v1185
        %1263 = vmatprep.subr.bf16.mxu0 0
        %1264 = vmatpush1.bf16.msra.mxu0 %v1186
        %1265 = vmatprep.subr.bf16.mxu0 0
        %1266 = vmatpush1.bf16.msra.mxu0 %v1187
        %1267 = vmatprep.subr.bf16.mxu0 0
        %1268 = vmatpush1.bf16.msra.mxu0 %v1188
        %1269 = vmatprep.mubr.bf16.mxu0 %v982
        %1270 = vmatmul.mubr.bf16.gmra.mrb[0].mxu0 %v981
        %v1271 = vpop.f32.mrb[0].mxu0
        %v1272 = vadd.f32 0.0, %v1271
        %v1273 = vpop.f32.mrb[0].mxu0
        %v1274 = vpop.f32.mrb[0].mxu0
        %v1275 = vadd.f32 0.0, %v1274
        %v1276 = vpop.f32.mrb[0].mxu0
        %1277 = vmatprep.mubr.bf16.mxu0 %v986
        %1278 = vmatmul.mubr.bf16.gmra.mrb[0].mxu0 %v985
        %v1279 = vpop.f32.mrb[0].mxu0
        %v1280 = vadd.f32 0.0, %v1279
        %v1281 = vpop.f32.mrb[0].mxu0
        %v1282 = vpop.f32.mrb[0].mxu0
        %v1283 = vadd.f32 0.0, %v1282
        %v1284 = vpop.f32.mrb[0].mxu0
        %1285 = vmatprep.mubr.bf16.mxu0 %v990
        %1286 = vmatmul.mubr.bf16.gmra.mrb[0].mxu0 %v989
        %v1287 = vpop.f32.mrb[0].mxu0
        %v1288 = vadd.f32 0.0, %v1287
        %v1289 = vpop.f32.mrb[0].mxu0
        %v1290 = vpop.f32.mrb[0].mxu0
        %v1291 = vadd.f32 0.0, %v1290
        %v1292 = vpop.f32.mrb[0].mxu0
        %1293 = vmatprep.mubr.bf16.mxu0 %v994
        %1294 = vmatmul.mubr.bf16.gmra.mrb[0].mxu0 %v993
        %v1295 = vpop.f32.mrb[0].mxu0
        %v1296 = vadd.f32 0.0, %v1295
        %v1297 = vpop.f32.mrb[0].mxu0
        %v1298 = vpop.f32.mrb[0].mxu0
        %v1299 = vadd.f32 0.0, %v1298
        %v1300 = vpop.f32.mrb[0].mxu0
        %1301 = vmatprep.mubr.bf16.mxu0 %v998
        %1302 = vmatmul.mubr.bf16.gmra.mrb[0].mxu0 %v997
        %v1303 = vpop.f32.mrb[0].mxu0
        %v1304 = vadd.f32 0.0, %v1303
        %v1305 = vpop.f32.mrb[0].mxu0
        %v1306 = vpop.f32.mrb[0].mxu0
        %v1307 = vadd.f32 0.0, %v1306
        %v1308 = vpop.f32.mrb[0].mxu0
        %1309 = vmatprep.mubr.bf16.mxu0 %v1002
        %1310 = vmatmul.mubr.bf16.gmra.mrb[0].mxu0 %v1001
        %v1311 = vpop.f32.mrb[0].mxu0
        %v1312 = vadd.f32 0.0, %v1311
        %v1313 = vpop.f32.mrb[0].mxu0
        %v1314 = vpop.f32.mrb[0].mxu0
        %v1315 = vadd.f32 0.0, %v1314
        %v1316 = vpop.f32.mrb[0].mxu0
        %1317 = vmatprep.mubr.bf16.mxu0 %v1006
        %1318 = vmatmul.mubr.bf16.gmra.mrb[0].mxu0 %v1005
        %v1319 = vpop.f32.mrb[0].mxu0
        %v1320 = vadd.f32 0.0, %v1319
        %v1321 = vpop.f32.mrb[0].mxu0
        %v1322 = vpop.f32.mrb[0].mxu0
        %v1323 = vadd.f32 0.0, %v1322
        %v1324 = vpop.f32.mrb[0].mxu0
        %1325 = vmatprep.mubr.bf16.mxu0 %v1010
        %1326 = vmatmul.mubr.bf16.gmra.mrb[0].mxu0 %v1009
        %v1327 = vpop.f32.mrb[0].mxu0
        %v1328 = vadd.f32 0.0, %v1327
        %v1329 = vpop.f32.mrb[0].mxu0
        %v1330 = vpop.f32.mrb[0].mxu0
        %v1331 = vadd.f32 0.0, %v1330
        %v1332 = vpop.f32.mrb[0].mxu0
        %1333 = vdwg.mxu0
        %1334 = vmatprep.subr.bf16.mxu0 0
        %1335 = vmatpush1.bf16.msra.mxu0 %v1189
        %1336 = vmatprep.subr.bf16.mxu0 0
        %1337 = vmatpush1.bf16.msra.mxu0 %v1190
        %1338 = vmatprep.subr.bf16.mxu0 0
        %1339 = vmatpush1.bf16.msra.mxu0 %v1191
        %1340 = vmatprep.subr.bf16.mxu0 0
        %1341 = vmatpush1.bf16.msra.mxu0 %v1192
        %1342 = vmatprep.subr.bf16.mxu0 0
        %1343 = vmatpush1.bf16.msra.mxu0 %v1193
        %1344 = vmatprep.subr.bf16.mxu0 0
        %1345 = vmatpush1.bf16.msra.mxu0 %v1194
        %1346 = vmatprep.subr.bf16.mxu0 0
        %1347 = vmatpush1.bf16.msra.mxu0 %v1195
        %1348 = vmatprep.subr.bf16.mxu0 0
        %1349 = vmatpush1.bf16.msra.mxu0 %v1196
        %1350 = vmatprep.subr.bf16.mxu0 0
        %1351 = vmatpush1.bf16.msra.mxu0 %v1197
        %1352 = vmatprep.subr.bf16.mxu0 0
        %1353 = vmatpush1.bf16.msra.mxu0 %v1198
        %1354 = vmatprep.subr.bf16.mxu0 0
        %1355 = vmatpush1.bf16.msra.mxu0 %v1199
        %1356 = vmatprep.subr.bf16.mxu0 0
        %1357 = vmatpush1.bf16.msra.mxu0 %v1200
        %1358 = vmatprep.subr.bf16.mxu0 0
        %1359 = vmatpush1.bf16.msra.mxu0 %v1201
        %1360 = vmatprep.subr.bf16.mxu0 0
        %1361 = vmatpush1.bf16.msra.mxu0 %v1202
        %1362 = vmatprep.subr.bf16.mxu0 0
        %1363 = vmatpush1.bf16.msra.mxu0 %v1203
        %1364 = vmatprep.subr.bf16.mxu0 0
        %1365 = vmatpush1.bf16.msra.mxu0 %v1204
        %1366 = vmatprep.mubr.bf16.mxu0 %v984
        %1367 = vmatmul.mubr.bf16.gmra.mrb[0].mxu0 %v983
        %v1368 = vpop.f32.mrb[0].mxu0
        %v1369 = vadd.f32 %v1272, %v1368
        %v1370 = vpop.f32.mrb[0].mxu0
        %v1371 = vpop.f32.mrb[0].mxu0
        %v1372 = vadd.f32 %v1275, %v1371
        %v1373 = vpop.f32.mrb[0].mxu0
        %1374 = vmatprep.mubr.bf16.mxu0 %v988
        %1375 = vmatmul.mubr.bf16.gmra.mrb[0].mxu0 %v987
        %v1376 = vpop.f32.mrb[0].mxu0
        %v1377 = vadd.f32 %v1280, %v1376
        %v1378 = vpop.f32.mrb[0].mxu0
        %v1379 = vpop.f32.mrb[0].mxu0
        %v1380 = vadd.f32 %v1283, %v1379
        %v1381 = vpop.f32.mrb[0].mxu0
        %1382 = vmatprep.mubr.bf16.mxu0 %v992
        %1383 = vmatmul.mubr.bf16.gmra.mrb[0].mxu0 %v991
        %v1384 = vpop.f32.mrb[0].mxu0
        %v1385 = vadd.f32 %v1288, %v1384
        %v1386 = vpop.f32.mrb[0].mxu0
        %v1387 = vpop.f32.mrb[0].mxu0
        %v1388 = vadd.f32 %v1291, %v1387
        %v1389 = vpop.f32.mrb[0].mxu0
        %1390 = vmatprep.mubr.bf16.mxu0 %v996
        %1391 = vmatmul.mubr.bf16.gmra.mrb[0].mxu0 %v995
        %v1392 = vpop.f32.mrb[0].mxu0
        %v1393 = vadd.f32 %v1296, %v1392
        %v1394 = vpop.f32.mrb[0].mxu0
        %v1395 = vpop.f32.mrb[0].mxu0
        %v1396 = vadd.f32 %v1299, %v1395
        %v1397 = vpop.f32.mrb[0].mxu0
        %1398 = vmatprep.mubr.bf16.mxu0 %v1000
        %1399 = vmatmul.mubr.bf16.gmra.mrb[0].mxu0 %v999
        %v1400 = vpop.f32.mrb[0].mxu0
        %v1401 = vadd.f32 %v1304, %v1400
        %v1402 = vpop.f32.mrb[0].mxu0
        %v1403 = vpop.f32.mrb[0].mxu0
        %v1404 = vadd.f32 %v1307, %v1403
        %v1405 = vpop.f32.mrb[0].mxu0
        %1406 = vmatprep.mubr.bf16.mxu0 %v1004
        %1407 = vmatmul.mubr.bf16.gmra.mrb[0].mxu0 %v1003
        %v1408 = vpop.f32.mrb[0].mxu0
        %v1409 = vadd.f32 %v1312, %v1408
        %v1410 = vpop.f32.mrb[0].mxu0
        %v1411 = vpop.f32.mrb[0].mxu0
        %v1412 = vadd.f32 %v1315, %v1411
        %v1413 = vpop.f32.mrb[0].mxu0
        %1414 = vmatprep.mubr.bf16.mxu0 %v1008
        %1415 = vmatmul.mubr.bf16.gmra.mrb[0].mxu0 %v1007
        %v1416 = vpop.f32.mrb[0].mxu0
        %v1417 = vadd.f32 %v1320, %v1416
        %v1418 = vpop.f32.mrb[0].mxu0
        %v1419 = vpop.f32.mrb[0].mxu0
        %v1420 = vadd.f32 %v1323, %v1419
        %v1421 = vpop.f32.mrb[0].mxu0
        %1422 = vmatprep.mubr.bf16.mxu0 %v1012
        %1423 = vmatmul.mubr.bf16.gmra.mrb[0].mxu0 %v1011
        %v1424 = vpop.f32.mrb[0].mxu0
        %v1425 = vadd.f32 %v1328, %v1424
        %v1426 = vpop.f32.mrb[0].mxu0
        %v1427 = vpop.f32.mrb[0].mxu0
        %v1428 = vadd.f32 %v1331, %v1427
        %v1429 = vpop.f32.mrb[0].mxu0
        %1430 = vdwg.mxu0
        %v1431 = vadd.f32 %v837, %v1369
        %v1432 = vadd.f32 %v838, %v1372
        %v1433 = vadd.f32 %v839, %v1377
        %v1434 = vadd.f32 %v840, %v1380
        %v1435 = vadd.f32 %v841, %v1385
        %v1436 = vadd.f32 %v842, %v1388
        %v1437 = vadd.f32 %v843, %v1393
        %v1438 = vadd.f32 %v844, %v1396
        %v1439 = vadd.f32 %v845, %v1401
        %v1440 = vadd.f32 %v846, %v1404
        %v1441 = vadd.f32 %v847, %v1409
        %v1442 = vadd.f32 %v848, %v1412
        %v1443 = vadd.f32 %v849, %v1417
        %v1444 = vadd.f32 %v850, %v1420
        %v1445 = vadd.f32 %v851, %v1425
        %v1446 = vadd.f32 %v852, %v1428
        %vm1447 = vcmask 523264
        %1448 = vst.msk [vmem:[#allocation2] sm:$0xff] %vm1447, %v1431
        %1449 = vst.msk [vmem:[#allocation2 + $0x8] sm:$0xff] %vm1447, %v1432
        %1450 = vst.msk [vmem:[#allocation2 + $0x10] sm:$0xff] %vm1447, %v1433
        %1451 = vst.msk [vmem:[#allocation2 + $0x18] sm:$0xff] %vm1447, %v1434
        %1452 = vst.msk [vmem:[#allocation2 + $0x20] sm:$0xff] %vm1447, %v1435
        %1453 = vst.msk [vmem:[#allocation2 + $0x28] sm:$0xff] %vm1447, %v1436
        %1454 = vst.msk [vmem:[#allocation2 + $0x30] sm:$0xff] %vm1447, %v1437
        %1455 = vst.msk [vmem:[#allocation2 + $0x38] sm:$0xff] %vm1447, %v1438
        %1456 = vst.msk [vmem:[#allocation2 + $0x40] sm:$0xff] %vm1447, %v1439
        %1457 = vst.msk [vmem:[#allocation2 + $0x48] sm:$0xff] %vm1447, %v1440
        %1458 = vst.msk [vmem:[#allocation2 + $0x50] sm:$0xff] %vm1447, %v1441
        %1459 = vst.msk [vmem:[#allocation2 + $0x58] sm:$0xff] %vm1447, %v1442
        %1460 = vst.msk [vmem:[#allocation2 + $0x60] sm:$0xff] %vm1447, %v1443
        %1461 = vst.msk [vmem:[#allocation2 + $0x68] sm:$0xff] %vm1447, %v1444
        %1462 = vst.msk [vmem:[#allocation2 + $0x70] sm:$0xff] %vm1447, %v1445
        %1463 = vst.msk [vmem:[#allocation2 + $0x78] sm:$0xff] %vm1447, %v1446
        %v1464 = vld [vmem:[#allocation3] sm:$0xff]
        %v1465 = vld [vmem:[#allocation3 + $0x8] sm:$0xff]
        %v1466 = vld [vmem:[#allocation3 + $0x10] sm:$0xff]
        %v1467 = vld [vmem:[#allocation3 + $0x18] sm:$0xff]
        %v1468 = vld [vmem:[#allocation3 + $0x20] sm:$0xff]
        %v1469 = vld [vmem:[#allocation3 + $0x28] sm:$0xff]
        %v1470 = vld [vmem:[#allocation3 + $0x30] sm:$0xff]
        %v1471 = vld [vmem:[#allocation3 + $0x38] sm:$0xff]
        %v1472 = vld [vmem:[#allocation3 + $0x40] sm:$0xff]
        %v1473 = vld [vmem:[#allocation3 + $0x48] sm:$0xff]
        %v1474 = vld [vmem:[#allocation3 + $0x50] sm:$0xff]
        %v1475 = vld [vmem:[#allocation3 + $0x58] sm:$0xff]
        %v1476 = vld [vmem:[#allocation3 + $0x60] sm:$0xff]
        %v1477 = vld [vmem:[#allocation3 + $0x68] sm:$0xff]
        %v1478 = vld [vmem:[#allocation3 + $0x70] sm:$0xff]
        %v1479 = vld [vmem:[#allocation3 + $0x78] sm:$0xff]
        %v1480 = vld [vmem:[%s625] sm:$0xff]
        %v1481 = vld [vmem:[%s625 + $0x8] sm:$0xff]
        %v1482 = vld [vmem:[%s625 + $0x10] sm:$0xff]
        %v1483 = vld [vmem:[%s625 + $0x18] sm:$0xff]
        %v1484 = vld [vmem:[%s625 + $0x20] sm:$0xff]
        %v1485 = vld [vmem:[%s625 + $0x28] sm:$0xff]
        %v1486 = vld [vmem:[%s625 + $0x30] sm:$0xff]
        %v1487 = vld [vmem:[%s625 + $0x38] sm:$0xff]
        %v1488 = vld [vmem:[%s625 + $0x40] sm:$0xff]
        %v1489 = vld [vmem:[%s625 + $0x48] sm:$0xff]
        %v1490 = vld [vmem:[%s625 + $0x50] sm:$0xff]
        %v1491 = vld [vmem:[%s625 + $0x58] sm:$0xff]
        %v1492 = vld [vmem:[%s625 + $0x60] sm:$0xff]
        %v1493 = vld [vmem:[%s625 + $0x68] sm:$0xff]
        %v1494 = vld [vmem:[%s625 + $0x70] sm:$0xff]
        %v1495 = vld [vmem:[%s625 + $0x78] sm:$0xff]
        %v1496 = vld [vmem:[%s625 + $0x80] sm:$0xff]
        %v1497 = vld [vmem:[%s625 + $0x88] sm:$0xff]
        %v1498 = vld [vmem:[%s625 + $0x90] sm:$0xff]
        %v1499 = vld [vmem:[%s625 + $0x98] sm:$0xff]
        %v1500 = vld [vmem:[%s625 + $0xa0] sm:$0xff]
        %v1501 = vld [vmem:[%s625 + $0xa8] sm:$0xff]
        %v1502 = vld [vmem:[%s625 + $0xb0] sm:$0xff]
        %v1503 = vld [vmem:[%s625 + $0xb8] sm:$0xff]
        %v1504 = vld [vmem:[%s625 + $0xc0] sm:$0xff]
        %v1505 = vld [vmem:[%s625 + $0xc8] sm:$0xff]
        %v1506 = vld [vmem:[%s625 + $0xd0] sm:$0xff]
        %v1507 = vld [vmem:[%s625 + $0xd8] sm:$0xff]
        %v1508 = vld [vmem:[%s625 + $0xe0] sm:$0xff]
        %v1509 = vld [vmem:[%s625 + $0xe8] sm:$0xff]
        %v1510 = vld [vmem:[%s625 + $0xf0] sm:$0xff]
        %v1511 = vld [vmem:[%s625 + $0xf8] sm:$0xff]
        %v1544 = vunpack.c.l.b16 %v1480
        %v1545 = vunpack.c.h.b16 %v1480
        %v1546 = vunpack.c.l.b16 %v1481
        %v1547 = vunpack.c.h.b16 %v1481
        %v1548 = vunpack.c.l.b16 %v1482
        %v1549 = vunpack.c.h.b16 %v1482
        %v1550 = vunpack.c.l.b16 %v1483
        %v1551 = vunpack.c.h.b16 %v1483
        %v1552 = vunpack.c.l.b16 %v1484
        %v1553 = vunpack.c.h.b16 %v1484
        %v1554 = vunpack.c.l.b16 %v1485
        %v1555 = vunpack.c.h.b16 %v1485
        %v1556 = vunpack.c.l.b16 %v1486
        %v1557 = vunpack.c.h.b16 %v1486
        %v1558 = vunpack.c.l.b16 %v1487
        %v1559 = vunpack.c.h.b16 %v1487
        %v1560 = vunpack.c.l.b16 %v1488
        %v1561 = vunpack.c.h.b16 %v1488
        %v1562 = vunpack.c.l.b16 %v1489
        %v1563 = vunpack.c.h.b16 %v1489
        %v1564 = vunpack.c.l.b16 %v1490
        %v1565 = vunpack.c.h.b16 %v1490
        %v1566 = vunpack.c.l.b16 %v1491
        %v1567 = vunpack.c.h.b16 %v1491
        %v1568 = vunpack.c.l.b16 %v1492
        %v1569 = vunpack.c.h.b16 %v1492
        %v1570 = vunpack.c.l.b16 %v1493
        %v1571 = vunpack.c.h.b16 %v1493
        %v1572 = vunpack.c.l.b16 %v1494
        %v1573 = vunpack.c.h.b16 %v1494
        %v1574 = vunpack.c.l.b16 %v1495
        %v1575 = vunpack.c.h.b16 %v1495
        %v1576 = vunpack.c.l.b16 %v1496
        %v1577 = vunpack.c.h.b16 %v1496
        %v1578 = vunpack.c.l.b16 %v1497
        %v1579 = vunpack.c.h.b16 %v1497
        %v1580 = vunpack.c.l.b16 %v1498
        %v1581 = vunpack.c.h.b16 %v1498
        %v1582 = vunpack.c.l.b16 %v1499
        %v1583 = vunpack.c.h.b16 %v1499
        %v1584 = vunpack.c.l.b16 %v1500
        %v1585 = vunpack.c.h.b16 %v1500
        %v1586 = vunpack.c.l.b16 %v1501
        %v1587 = vunpack.c.h.b16 %v1501
        %v1588 = vunpack.c.l.b16 %v1502
        %v1589 = vunpack.c.h.b16 %v1502
        %v1590 = vunpack.c.l.b16 %v1503
        %v1591 = vunpack.c.h.b16 %v1503
        %v1592 = vunpack.c.l.b16 %v1504
        %v1593 = vunpack.c.h.b16 %v1504
        %v1594 = vunpack.c.l.b16 %v1505
        %v1595 = vunpack.c.h.b16 %v1505
        %v1596 = vunpack.c.l.b16 %v1506
        %v1597 = vunpack.c.h.b16 %v1506
        %v1598 = vunpack.c.l.b16 %v1507
        %v1599 = vunpack.c.h.b16 %v1507
        %v1600 = vunpack.c.l.b16 %v1508
        %v1601 = vunpack.c.h.b16 %v1508
        %v1602 = vunpack.c.l.b16 %v1509
        %v1603 = vunpack.c.h.b16 %v1509
        %v1604 = vunpack.c.l.b16 %v1510
        %v1605 = vunpack.c.h.b16 %v1510
        %v1606 = vunpack.c.l.b16 %v1511
        %v1607 = vunpack.c.h.b16 %v1511
        %v1608 = vpack.c.b16 %v1548, %v1544
        %v1609 = vpack.c.b16 %v1549, %v1545
        %v1610 = vpack.c.b16 %v1550, %v1546
        %v1611 = vpack.c.b16 %v1551, %v1547
        %v1612 = vpack.c.b16 %v1556, %v1552
        %v1613 = vpack.c.b16 %v1557, %v1553
        %v1614 = vpack.c.b16 %v1558, %v1554
        %v1615 = vpack.c.b16 %v1559, %v1555
        %v1616 = vpack.c.b16 %v1564, %v1560
        %v1617 = vpack.c.b16 %v1565, %v1561
        %v1618 = vpack.c.b16 %v1566, %v1562
        %v1619 = vpack.c.b16 %v1567, %v1563
        %v1620 = vpack.c.b16 %v1572, %v1568
        %v1621 = vpack.c.b16 %v1573, %v1569
        %v1622 = vpack.c.b16 %v1574, %v1570
        %v1623 = vpack.c.b16 %v1575, %v1571
        %v1624 = vpack.c.b16 %v1580, %v1576
        %v1625 = vpack.c.b16 %v1581, %v1577
        %v1626 = vpack.c.b16 %v1582, %v1578
        %v1627 = vpack.c.b16 %v1583, %v1579
        %v1628 = vpack.c.b16 %v1588, %v1584
        %v1629 = vpack.c.b16 %v1589, %v1585
        %v1630 = vpack.c.b16 %v1590, %v1586
        %v1631 = vpack.c.b16 %v1591, %v1587
        %v1632 = vpack.c.b16 %v1596, %v1592
        %v1633 = vpack.c.b16 %v1597, %v1593
        %v1634 = vpack.c.b16 %v1598, %v1594
        %v1635 = vpack.c.b16 %v1599, %v1595
        %v1636 = vpack.c.b16 %v1604, %v1600
        %v1637 = vpack.c.b16 %v1605, %v1601
        %v1638 = vpack.c.b16 %v1606, %v1602
        %v1639 = vpack.c.b16 %v1607, %v1603
        %1672 = vmatprep.subr.bf16.mxu0 0
        %1673 = vmatpush1.bf16.msra.mxu0 %v1173
        %1674 = vmatprep.subr.bf16.mxu0 0
        %1675 = vmatpush1.bf16.msra.mxu0 %v1174
        %1676 = vmatprep.subr.bf16.mxu0 0
        %1677 = vmatpush1.bf16.msra.mxu0 %v1175
        %1678 = vmatprep.subr.bf16.mxu0 0
        %1679 = vmatpush1.bf16.msra.mxu0 %v1176
        %1680 = vmatprep.subr.bf16.mxu0 0
        %1681 = vmatpush1.bf16.msra.mxu0 %v1177
        %1682 = vmatprep.subr.bf16.mxu0 0
        %1683 = vmatpush1.bf16.msra.mxu0 %v1178
        %1684 = vmatprep.subr.bf16.mxu0 0
        %1685 = vmatpush1.bf16.msra.mxu0 %v1179
        %1686 = vmatprep.subr.bf16.mxu0 0
        %1687 = vmatpush1.bf16.msra.mxu0 %v1180
        %1688 = vmatprep.subr.bf16.mxu0 0
        %1689 = vmatpush1.bf16.msra.mxu0 %v1181
        %1690 = vmatprep.subr.bf16.mxu0 0
        %1691 = vmatpush1.bf16.msra.mxu0 %v1182
        %1692 = vmatprep.subr.bf16.mxu0 0
        %1693 = vmatpush1.bf16.msra.mxu0 %v1183
        %1694 = vmatprep.subr.bf16.mxu0 0
        %1695 = vmatpush1.bf16.msra.mxu0 %v1184
        %1696 = vmatprep.subr.bf16.mxu0 0
        %1697 = vmatpush1.bf16.msra.mxu0 %v1185
        %1698 = vmatprep.subr.bf16.mxu0 0
        %1699 = vmatpush1.bf16.msra.mxu0 %v1186
        %1700 = vmatprep.subr.bf16.mxu0 0
        %1701 = vmatpush1.bf16.msra.mxu0 %v1187
        %1702 = vmatprep.subr.bf16.mxu0 0
        %1703 = vmatpush1.bf16.msra.mxu0 %v1188
        %1704 = vmatprep.mubr.bf16.mxu0 %v1609
        %1705 = vmatmul.mubr.bf16.gmra.mrb[0].mxu0 %v1608
        %v1706 = vpop.f32.mrb[0].mxu0
        %v1707 = vadd.f32 0.0, %v1706
        %v1708 = vpop.f32.mrb[0].mxu0
        %v1709 = vpop.f32.mrb[0].mxu0
        %v1710 = vadd.f32 0.0, %v1709
        %v1711 = vpop.f32.mrb[0].mxu0
        %1712 = vmatprep.mubr.bf16.mxu0 %v1613
        %1713 = vmatmul.mubr.bf16.gmra.mrb[0].mxu0 %v1612
        %v1714 = vpop.f32.mrb[0].mxu0
        %v1715 = vadd.f32 0.0, %v1714
        %v1716 = vpop.f32.mrb[0].mxu0
        %v1717 = vpop.f32.mrb[0].mxu0
        %v1718 = vadd.f32 0.0, %v1717
        %v1719 = vpop.f32.mrb[0].mxu0
        %1720 = vmatprep.mubr.bf16.mxu0 %v1617
        %1721 = vmatmul.mubr.bf16.gmra.mrb[0].mxu0 %v1616
        %v1722 = vpop.f32.mrb[0].mxu0
        %v1723 = vadd.f32 0.0, %v1722
        %v1724 = vpop.f32.mrb[0].mxu0
        %v1725 = vpop.f32.mrb[0].mxu0
        %v1726 = vadd.f32 0.0, %v1725
        %v1727 = vpop.f32.mrb[0].mxu0
        %1728 = vmatprep.mubr.bf16.mxu0 %v1621
        %1729 = vmatmul.mubr.bf16.gmra.mrb[0].mxu0 %v1620
        %v1730 = vpop.f32.mrb[0].mxu0
        %v1731 = vadd.f32 0.0, %v1730
        %v1732 = vpop.f32.mrb[0].mxu0
        %v1733 = vpop.f32.mrb[0].mxu0
        %v1734 = vadd.f32 0.0, %v1733
        %v1735 = vpop.f32.mrb[0].mxu0
        %1736 = vmatprep.mubr.bf16.mxu0 %v1625
        %1737 = vmatmul.mubr.bf16.gmra.mrb[0].mxu0 %v1624
        %v1738 = vpop.f32.mrb[0].mxu0
        %v1739 = vadd.f32 0.0, %v1738
        %v1740 = vpop.f32.mrb[0].mxu0
        %v1741 = vpop.f32.mrb[0].mxu0
        %v1742 = vadd.f32 0.0, %v1741
        %v1743 = vpop.f32.mrb[0].mxu0
        %1744 = vmatprep.mubr.bf16.mxu0 %v1629
        %1745 = vmatmul.mubr.bf16.gmra.mrb[0].mxu0 %v1628
        %v1746 = vpop.f32.mrb[0].mxu0
        %v1747 = vadd.f32 0.0, %v1746
        %v1748 = vpop.f32.mrb[0].mxu0
        %v1749 = vpop.f32.mrb[0].mxu0
        %v1750 = vadd.f32 0.0, %v1749
        %v1751 = vpop.f32.mrb[0].mxu0
        %1752 = vmatprep.mubr.bf16.mxu0 %v1633
        %1753 = vmatmul.mubr.bf16.gmra.mrb[0].mxu0 %v1632
        %v1754 = vpop.f32.mrb[0].mxu0
        %v1755 = vadd.f32 0.0, %v1754
        %v1756 = vpop.f32.mrb[0].mxu0
        %v1757 = vpop.f32.mrb[0].mxu0
        %v1758 = vadd.f32 0.0, %v1757
        %v1759 = vpop.f32.mrb[0].mxu0
        %1760 = vmatprep.mubr.bf16.mxu0 %v1637
        %1761 = vmatmul.mubr.bf16.gmra.mrb[0].mxu0 %v1636
        %v1762 = vpop.f32.mrb[0].mxu0
        %v1763 = vadd.f32 0.0, %v1762
        %v1764 = vpop.f32.mrb[0].mxu0
        %v1765 = vpop.f32.mrb[0].mxu0
        %v1766 = vadd.f32 0.0, %v1765
        %v1767 = vpop.f32.mrb[0].mxu0
        %1768 = vdwg.mxu0
        %1769 = vmatprep.subr.bf16.mxu0 0
        %1770 = vmatpush1.bf16.msra.mxu0 %v1189
        %1771 = vmatprep.subr.bf16.mxu0 0
        %1772 = vmatpush1.bf16.msra.mxu0 %v1190
        %1773 = vmatprep.subr.bf16.mxu0 0
        %1774 = vmatpush1.bf16.msra.mxu0 %v1191
        %1775 = vmatprep.subr.bf16.mxu0 0
        %1776 = vmatpush1.bf16.msra.mxu0 %v1192
        %1777 = vmatprep.subr.bf16.mxu0 0
        %1778 = vmatpush1.bf16.msra.mxu0 %v1193
        %1779 = vmatprep.subr.bf16.mxu0 0
        %1780 = vmatpush1.bf16.msra.mxu0 %v1194
        %1781 = vmatprep.subr.bf16.mxu0 0
        %1782 = vmatpush1.bf16.msra.mxu0 %v1195
        %1783 = vmatprep.subr.bf16.mxu0 0
        %1784 = vmatpush1.bf16.msra.mxu0 %v1196
        %1785 = vmatprep.subr.bf16.mxu0 0
        %1786 = vmatpush1.bf16.msra.mxu0 %v1197
        %1787 = vmatprep.subr.bf16.mxu0 0
        %1788 = vmatpush1.bf16.msra.mxu0 %v1198
        %1789 = vmatprep.subr.bf16.mxu0 0
        %1790 = vmatpush1.bf16.msra.mxu0 %v1199
        %1791 = vmatprep.subr.bf16.mxu0 0
        %1792 = vmatpush1.bf16.msra.mxu0 %v1200
        %1793 = vmatprep.subr.bf16.mxu0 0
        %1794 = vmatpush1.bf16.msra.mxu0 %v1201
        %1795 = vmatprep.subr.bf16.mxu0 0
        %1796 = vmatpush1.bf16.msra.mxu0 %v1202
        %1797 = vmatprep.subr.bf16.mxu0 0
        %1798 = vmatpush1.bf16.msra.mxu0 %v1203
        %1799 = vmatprep.subr.bf16.mxu0 0
        %1800 = vmatpush1.bf16.msra.mxu0 %v1204
        %1801 = vmatprep.mubr.bf16.mxu0 %v1611
        %1802 = vmatmul.mubr.bf16.gmra.mrb[0].mxu0 %v1610
        %v1803 = vpop.f32.mrb[0].mxu0
        %v1804 = vadd.f32 %v1707, %v1803
        %v1805 = vpop.f32.mrb[0].mxu0
        %v1806 = vpop.f32.mrb[0].mxu0
        %v1807 = vadd.f32 %v1710, %v1806
        %v1808 = vpop.f32.mrb[0].mxu0
        %1809 = vmatprep.mubr.bf16.mxu0 %v1615
        %1810 = vmatmul.mubr.bf16.gmra.mrb[0].mxu0 %v1614
        %v1811 = vpop.f32.mrb[0].mxu0
        %v1812 = vadd.f32 %v1715, %v1811
        %v1813 = vpop.f32.mrb[0].mxu0
        %v1814 = vpop.f32.mrb[0].mxu0
        %v1815 = vadd.f32 %v1718, %v1814
        %v1816 = vpop.f32.mrb[0].mxu0
        %1817 = vmatprep.mubr.bf16.mxu0 %v1619
        %1818 = vmatmul.mubr.bf16.gmra.mrb[0].mxu0 %v1618
        %v1819 = vpop.f32.mrb[0].mxu0
        %v1820 = vadd.f32 %v1723, %v1819
        %v1821 = vpop.f32.mrb[0].mxu0
        %v1822 = vpop.f32.mrb[0].mxu0
        %v1823 = vadd.f32 %v1726, %v1822
        %v1824 = vpop.f32.mrb[0].mxu0
        %1825 = vmatprep.mubr.bf16.mxu0 %v1623
        %1826 = vmatmul.mubr.bf16.gmra.mrb[0].mxu0 %v1622
        %v1827 = vpop.f32.mrb[0].mxu0
        %v1828 = vadd.f32 %v1731, %v1827
        %v1829 = vpop.f32.mrb[0].mxu0
        %v1830 = vpop.f32.mrb[0].mxu0
        %v1831 = vadd.f32 %v1734, %v1830
        %v1832 = vpop.f32.mrb[0].mxu0
        %1833 = vmatprep.mubr.bf16.mxu0 %v1627
        %1834 = vmatmul.mubr.bf16.gmra.mrb[0].mxu0 %v1626
        %v1835 = vpop.f32.mrb[0].mxu0
        %v1836 = vadd.f32 %v1739, %v1835
        %v1837 = vpop.f32.mrb[0].mxu0
        %v1838 = vpop.f32.mrb[0].mxu0
        %v1839 = vadd.f32 %v1742, %v1838
        %v1840 = vpop.f32.mrb[0].mxu0
        %1841 = vmatprep.mubr.bf16.mxu0 %v1631
        %1842 = vmatmul.mubr.bf16.gmra.mrb[0].mxu0 %v1630
        %v1843 = vpop.f32.mrb[0].mxu0
        %v1844 = vadd.f32 %v1747, %v1843
        %v1845 = vpop.f32.mrb[0].mxu0
        %v1846 = vpop.f32.mrb[0].mxu0
        %v1847 = vadd.f32 %v1750, %v1846
        %v1848 = vpop.f32.mrb[0].mxu0
        %1849 = vmatprep.mubr.bf16.mxu0 %v1635
        %1850 = vmatmul.mubr.bf16.gmra.mrb[0].mxu0 %v1634
        %v1851 = vpop.f32.mrb[0].mxu0
        %v1852 = vadd.f32 %v1755, %v1851
        %v1853 = vpop.f32.mrb[0].mxu0
        %v1854 = vpop.f32.mrb[0].mxu0
        %v1855 = vadd.f32 %v1758, %v1854
        %v1856 = vpop.f32.mrb[0].mxu0
        %1857 = vmatprep.mubr.bf16.mxu0 %v1639
        %1858 = vmatmul.mubr.bf16.gmra.mrb[0].mxu0 %v1638
        %v1859 = vpop.f32.mrb[0].mxu0
        %v1860 = vadd.f32 %v1763, %v1859
        %v1861 = vpop.f32.mrb[0].mxu0
        %v1862 = vpop.f32.mrb[0].mxu0
        %v1863 = vadd.f32 %v1766, %v1862
        %v1864 = vpop.f32.mrb[0].mxu0
        %1865 = vdwg.mxu0
        %v1866 = vadd.f32 %v1464, %v1804
        %v1867 = vadd.f32 %v1465, %v1807
        %v1868 = vadd.f32 %v1466, %v1812
        %v1869 = vadd.f32 %v1467, %v1815
        %v1870 = vadd.f32 %v1468, %v1820
        %v1871 = vadd.f32 %v1469, %v1823
        %v1872 = vadd.f32 %v1470, %v1828
        %v1873 = vadd.f32 %v1471, %v1831
        %v1874 = vadd.f32 %v1472, %v1836
        %v1875 = vadd.f32 %v1473, %v1839
        %v1876 = vadd.f32 %v1474, %v1844
        %v1877 = vadd.f32 %v1475, %v1847
        %v1878 = vadd.f32 %v1476, %v1852
        %v1879 = vadd.f32 %v1477, %v1855
        %v1880 = vadd.f32 %v1478, %v1860
        %v1881 = vadd.f32 %v1479, %v1863
        %1882 = vst.msk [vmem:[#allocation3] sm:$0xff] %vm1447, %v1866
        %1883 = vst.msk [vmem:[#allocation3 + $0x8] sm:$0xff] %vm1447, %v1867
        %1884 = vst.msk [vmem:[#allocation3 + $0x10] sm:$0xff] %vm1447, %v1868
        %1885 = vst.msk [vmem:[#allocation3 + $0x18] sm:$0xff] %vm1447, %v1869
        %1886 = vst.msk [vmem:[#allocation3 + $0x20] sm:$0xff] %vm1447, %v1870
        %1887 = vst.msk [vmem:[#allocation3 + $0x28] sm:$0xff] %vm1447, %v1871
        %1888 = vst.msk [vmem:[#allocation3 + $0x30] sm:$0xff] %vm1447, %v1872
        %1889 = vst.msk [vmem:[#allocation3 + $0x38] sm:$0xff] %vm1447, %v1873
        %1890 = vst.msk [vmem:[#allocation3 + $0x40] sm:$0xff] %vm1447, %v1874
        %1891 = vst.msk [vmem:[#allocation3 + $0x48] sm:$0xff] %vm1447, %v1875
        %1892 = vst.msk [vmem:[#allocation3 + $0x50] sm:$0xff] %vm1447, %v1876
        %1893 = vst.msk [vmem:[#allocation3 + $0x58] sm:$0xff] %vm1447, %v1877
        %1894 = vst.msk [vmem:[#allocation3 + $0x60] sm:$0xff] %vm1447, %v1878
        %1895 = vst.msk [vmem:[#allocation3 + $0x68] sm:$0xff] %vm1447, %v1879
        %1896 = vst.msk [vmem:[#allocation3 + $0x70] sm:$0xff] %vm1447, %v1880
        %1897 = vst.msk [vmem:[#allocation3 + $0x78] sm:$0xff] %vm1447, %v1881
        %v1898 = vld [vmem:[#allocation4] sm:$0xff]
        %v1899 = vld [vmem:[#allocation4 + $0x8] sm:$0xff]
        %v1900 = vld [vmem:[#allocation4 + $0x10] sm:$0xff]
        %v1901 = vld [vmem:[#allocation4 + $0x18] sm:$0xff]
        %v1902 = vld [vmem:[#allocation4 + $0x20] sm:$0xff]
        %v1903 = vld [vmem:[#allocation4 + $0x28] sm:$0xff]
        %v1904 = vld [vmem:[#allocation4 + $0x30] sm:$0xff]
        %v1905 = vld [vmem:[#allocation4 + $0x38] sm:$0xff]
        %v1906 = vld [vmem:[#allocation4 + $0x40] sm:$0xff]
        %v1907 = vld [vmem:[#allocation4 + $0x48] sm:$0xff]
        %v1908 = vld [vmem:[#allocation4 + $0x50] sm:$0xff]
        %v1909 = vld [vmem:[#allocation4 + $0x58] sm:$0xff]
        %v1910 = vld [vmem:[#allocation4 + $0x60] sm:$0xff]
        %v1911 = vld [vmem:[#allocation4 + $0x68] sm:$0xff]
        %v1912 = vld [vmem:[#allocation4 + $0x70] sm:$0xff]
        %v1913 = vld [vmem:[#allocation4 + $0x78] sm:$0xff]
        %v1914 = vld [vmem:[%s632] sm:$0xff]
        %v1915 = vld [vmem:[%s632 + $0x8] sm:$0xff]
        %v1916 = vld [vmem:[%s632 + $0x10] sm:$0xff]
        %v1917 = vld [vmem:[%s632 + $0x18] sm:$0xff]
        %v1918 = vld [vmem:[%s632 + $0x20] sm:$0xff]
        %v1919 = vld [vmem:[%s632 + $0x28] sm:$0xff]
        %v1920 = vld [vmem:[%s632 + $0x30] sm:$0xff]
        %v1921 = vld [vmem:[%s632 + $0x38] sm:$0xff]
        %v1922 = vld [vmem:[%s632 + $0x40] sm:$0xff]
        %v1923 = vld [vmem:[%s632 + $0x48] sm:$0xff]
        %v1924 = vld [vmem:[%s632 + $0x50] sm:$0xff]
        %v1925 = vld [vmem:[%s632 + $0x58] sm:$0xff]
        %v1926 = vld [vmem:[%s632 + $0x60] sm:$0xff]
        %v1927 = vld [vmem:[%s632 + $0x68] sm:$0xff]
        %v1928 = vld [vmem:[%s632 + $0x70] sm:$0xff]
        %v1929 = vld [vmem:[%s632 + $0x78] sm:$0xff]
        %v1930 = vld [vmem:[%s632 + $0x80] sm:$0xff]
        %v1931 = vld [vmem:[%s632 + $0x88] sm:$0xff]
        %v1932 = vld [vmem:[%s632 + $0x90] sm:$0xff]
        %v1933 = vld [vmem:[%s632 + $0x98] sm:$0xff]
        %v1934 = vld [vmem:[%s632 + $0xa0] sm:$0xff]
        %v1935 = vld [vmem:[%s632 + $0xa8] sm:$0xff]
        %v1936 = vld [vmem:[%s632 + $0xb0] sm:$0xff]
        %v1937 = vld [vmem:[%s632 + $0xb8] sm:$0xff]
        %v1938 = vld [vmem:[%s632 + $0xc0] sm:$0xff]
        %v1939 = vld [vmem:[%s632 + $0xc8] sm:$0xff]
        %v1940 = vld [vmem:[%s632 + $0xd0] sm:$0xff]
        %v1941 = vld [vmem:[%s632 + $0xd8] sm:$0xff]
        %v1942 = vld [vmem:[%s632 + $0xe0] sm:$0xff]
        %v1943 = vld [vmem:[%s632 + $0xe8] sm:$0xff]
        %v1944 = vld [vmem:[%s632 + $0xf0] sm:$0xff]
        %v1945 = vld [vmem:[%s632 + $0xf8] sm:$0xff]
        %v1978 = vunpack.c.l.b16 %v1914
        %v1979 = vunpack.c.h.b16 %v1914
        %v1980 = vunpack.c.l.b16 %v1915
        %v1981 = vunpack.c.h.b16 %v1915
        %v1982 = vunpack.c.l.b16 %v1916
        %v1983 = vunpack.c.h.b16 %v1916
        %v1984 = vunpack.c.l.b16 %v1917
        %v1985 = vunpack.c.h.b16 %v1917
        %v1986 = vunpack.c.l.b16 %v1918
        %v1987 = vunpack.c.h.b16 %v1918
        %v1988 = vunpack.c.l.b16 %v1919
        %v1989 = vunpack.c.h.b16 %v1919
        %v1990 = vunpack.c.l.b16 %v1920
        %v1991 = vunpack.c.h.b16 %v1920
        %v1992 = vunpack.c.l.b16 %v1921
        %v1993 = vunpack.c.h.b16 %v1921
        %v1994 = vunpack.c.l.b16 %v1922
        %v1995 = vunpack.c.h.b16 %v1922
        %v1996 = vunpack.c.l.b16 %v1923
        %v1997 = vunpack.c.h.b16 %v1923
        %v1998 = vunpack.c.l.b16 %v1924
        %v1999 = vunpack.c.h.b16 %v1924
        %v2000 = vunpack.c.l.b16 %v1925
        %v2001 = vunpack.c.h.b16 %v1925
        %v2002 = vunpack.c.l.b16 %v1926
        %v2003 = vunpack.c.h.b16 %v1926
        %v2004 = vunpack.c.l.b16 %v1927
        %v2005 = vunpack.c.h.b16 %v1927
        %v2006 = vunpack.c.l.b16 %v1928
        %v2007 = vunpack.c.h.b16 %v1928
        %v2008 = vunpack.c.l.b16 %v1929
        %v2009 = vunpack.c.h.b16 %v1929
        %v2010 = vunpack.c.l.b16 %v1930
        %v2011 = vunpack.c.h.b16 %v1930
        %v2012 = vunpack.c.l.b16 %v1931
        %v2013 = vunpack.c.h.b16 %v1931
        %v2014 = vunpack.c.l.b16 %v1932
        %v2015 = vunpack.c.h.b16 %v1932
        %v2016 = vunpack.c.l.b16 %v1933
        %v2017 = vunpack.c.h.b16 %v1933
        %v2018 = vunpack.c.l.b16 %v1934
        %v2019 = vunpack.c.h.b16 %v1934
        %v2020 = vunpack.c.l.b16 %v1935
        %v2021 = vunpack.c.h.b16 %v1935
        %v2022 = vunpack.c.l.b16 %v1936
        %v2023 = vunpack.c.h.b16 %v1936
        %v2024 = vunpack.c.l.b16 %v1937
        %v2025 = vunpack.c.h.b16 %v1937
        %v2026 = vunpack.c.l.b16 %v1938
        %v2027 = vunpack.c.h.b16 %v1938
        %v2028 = vunpack.c.l.b16 %v1939
        %v2029 = vunpack.c.h.b16 %v1939
        %v2030 = vunpack.c.l.b16 %v1940
        %v2031 = vunpack.c.h.b16 %v1940
        %v2032 = vunpack.c.l.b16 %v1941
        %v2033 = vunpack.c.h.b16 %v1941
        %v2034 = vunpack.c.l.b16 %v1942
        %v2035 = vunpack.c.h.b16 %v1942
        %v2036 = vunpack.c.l.b16 %v1943
        %v2037 = vunpack.c.h.b16 %v1943
        %v2038 = vunpack.c.l.b16 %v1944
        %v2039 = vunpack.c.h.b16 %v1944
        %v2040 = vunpack.c.l.b16 %v1945
        %v2041 = vunpack.c.h.b16 %v1945
        %v2042 = vpack.c.b16 %v1982, %v1978
        %v2043 = vpack.c.b16 %v1983, %v1979
        %v2044 = vpack.c.b16 %v1984, %v1980
        %v2045 = vpack.c.b16 %v1985, %v1981
        %v2046 = vpack.c.b16 %v1990, %v1986
        %v2047 = vpack.c.b16 %v1991, %v1987
        %v2048 = vpack.c.b16 %v1992, %v1988
        %v2049 = vpack.c.b16 %v1993, %v1989
        %v2050 = vpack.c.b16 %v1998, %v1994
        %v2051 = vpack.c.b16 %v1999, %v1995
        %v2052 = vpack.c.b16 %v2000, %v1996
        %v2053 = vpack.c.b16 %v2001, %v1997
        %v2054 = vpack.c.b16 %v2006, %v2002
        %v2055 = vpack.c.b16 %v2007, %v2003
        %v2056 = vpack.c.b16 %v2008, %v2004
        %v2057 = vpack.c.b16 %v2009, %v2005
        %v2058 = vpack.c.b16 %v2014, %v2010
        %v2059 = vpack.c.b16 %v2015, %v2011
        %v2060 = vpack.c.b16 %v2016, %v2012
        %v2061 = vpack.c.b16 %v2017, %v2013
        %v2062 = vpack.c.b16 %v2022, %v2018
        %v2063 = vpack.c.b16 %v2023, %v2019
        %v2064 = vpack.c.b16 %v2024, %v2020
        %v2065 = vpack.c.b16 %v2025, %v2021
        %v2066 = vpack.c.b16 %v2030, %v2026
        %v2067 = vpack.c.b16 %v2031, %v2027
        %v2068 = vpack.c.b16 %v2032, %v2028
        %v2069 = vpack.c.b16 %v2033, %v2029
        %v2070 = vpack.c.b16 %v2038, %v2034
        %v2071 = vpack.c.b16 %v2039, %v2035
        %v2072 = vpack.c.b16 %v2040, %v2036
        %v2073 = vpack.c.b16 %v2041, %v2037
        %2106 = vmatprep.subr.bf16.mxu0 0
        %2107 = vmatpush1.bf16.msra.mxu0 %v1173
        %2108 = vmatprep.subr.bf16.mxu0 0
        %2109 = vmatpush1.bf16.msra.mxu0 %v1174
        %2110 = vmatprep.subr.bf16.mxu0 0
        %2111 = vmatpush1.bf16.msra.mxu0 %v1175
        %2112 = vmatprep.subr.bf16.mxu0 0
        %2113 = vmatpush1.bf16.msra.mxu0 %v1176
        %2114 = vmatprep.subr.bf16.mxu0 0
        %2115 = vmatpush1.bf16.msra.mxu0 %v1177
        %2116 = vmatprep.subr.bf16.mxu0 0
        %2117 = vmatpush1.bf16.msra.mxu0 %v1178
        %2118 = vmatprep.subr.bf16.mxu0 0
        %2119 = vmatpush1.bf16.msra.mxu0 %v1179
        %2120 = vmatprep.subr.bf16.mxu0 0
        %2121 = vmatpush1.bf16.msra.mxu0 %v1180
        %2122 = vmatprep.subr.bf16.mxu0 0
        %2123 = vmatpush1.bf16.msra.mxu0 %v1181
        %2124 = vmatprep.subr.bf16.mxu0 0
        %2125 = vmatpush1.bf16.msra.mxu0 %v1182
        %2126 = vmatprep.subr.bf16.mxu0 0
        %2127 = vmatpush1.bf16.msra.mxu0 %v1183
        %2128 = vmatprep.subr.bf16.mxu0 0
        %2129 = vmatpush1.bf16.msra.mxu0 %v1184
        %2130 = vmatprep.subr.bf16.mxu0 0
        %2131 = vmatpush1.bf16.msra.mxu0 %v1185
        %2132 = vmatprep.subr.bf16.mxu0 0
        %2133 = vmatpush1.bf16.msra.mxu0 %v1186
        %2134 = vmatprep.subr.bf16.mxu0 0
        %2135 = vmatpush1.bf16.msra.mxu0 %v1187
        %2136 = vmatprep.subr.bf16.mxu0 0
        %2137 = vmatpush1.bf16.msra.mxu0 %v1188
        %2138 = vmatprep.mubr.bf16.mxu0 %v2043
        %2139 = vmatmul.mubr.bf16.gmra.mrb[0].mxu0 %v2042
        %v2140 = vpop.f32.mrb[0].mxu0
        %v2141 = vadd.f32 0.0, %v2140
        %v2142 = vpop.f32.mrb[0].mxu0
        %v2143 = vpop.f32.mrb[0].mxu0
        %v2144 = vadd.f32 0.0, %v2143
        %v2145 = vpop.f32.mrb[0].mxu0
        %2146 = vmatprep.mubr.bf16.mxu0 %v2047
        %2147 = vmatmul.mubr.bf16.gmra.mrb[0].mxu0 %v2046
        %v2148 = vpop.f32.mrb[0].mxu0
        %v2149 = vadd.f32 0.0, %v2148
        %v2150 = vpop.f32.mrb[0].mxu0
        %v2151 = vpop.f32.mrb[0].mxu0
        %v2152 = vadd.f32 0.0, %v2151
        %v2153 = vpop.f32.mrb[0].mxu0
        %2154 = vmatprep.mubr.bf16.mxu0 %v2051
        %2155 = vmatmul.mubr.bf16.gmra.mrb[0].mxu0 %v2050
        %v2156 = vpop.f32.mrb[0].mxu0
        %v2157 = vadd.f32 0.0, %v2156
        %v2158 = vpop.f32.mrb[0].mxu0
        %v2159 = vpop.f32.mrb[0].mxu0
        %v2160 = vadd.f32 0.0, %v2159
        %v2161 = vpop.f32.mrb[0].mxu0
        %2162 = vmatprep.mubr.bf16.mxu0 %v2055
        %2163 = vmatmul.mubr.bf16.gmra.mrb[0].mxu0 %v2054
        %v2164 = vpop.f32.mrb[0].mxu0
        %v2165 = vadd.f32 0.0, %v2164
        %v2166 = vpop.f32.mrb[0].mxu0
        %v2167 = vpop.f32.mrb[0].mxu0
        %v2168 = vadd.f32 0.0, %v2167
        %v2169 = vpop.f32.mrb[0].mxu0
        %2170 = vmatprep.mubr.bf16.mxu0 %v2059
        %2171 = vmatmul.mubr.bf16.gmra.mrb[0].mxu0 %v2058
        %v2172 = vpop.f32.mrb[0].mxu0
        %v2173 = vadd.f32 0.0, %v2172
        %v2174 = vpop.f32.mrb[0].mxu0
        %v2175 = vpop.f32.mrb[0].mxu0
        %v2176 = vadd.f32 0.0, %v2175
        %v2177 = vpop.f32.mrb[0].mxu0
        %2178 = vmatprep.mubr.bf16.mxu0 %v2063
        %2179 = vmatmul.mubr.bf16.gmra.mrb[0].mxu0 %v2062
        %v2180 = vpop.f32.mrb[0].mxu0
        %v2181 = vadd.f32 0.0, %v2180
        %v2182 = vpop.f32.mrb[0].mxu0
        %v2183 = vpop.f32.mrb[0].mxu0
        %v2184 = vadd.f32 0.0, %v2183
        %v2185 = vpop.f32.mrb[0].mxu0
        %2186 = vmatprep.mubr.bf16.mxu0 %v2067
        %2187 = vmatmul.mubr.bf16.gmra.mrb[0].mxu0 %v2066
        %v2188 = vpop.f32.mrb[0].mxu0
        %v2189 = vadd.f32 0.0, %v2188
        %v2190 = vpop.f32.mrb[0].mxu0
        %v2191 = vpop.f32.mrb[0].mxu0
        %v2192 = vadd.f32 0.0, %v2191
        %v2193 = vpop.f32.mrb[0].mxu0
        %2194 = vmatprep.mubr.bf16.mxu0 %v2071
        %2195 = vmatmul.mubr.bf16.gmra.mrb[0].mxu0 %v2070
        %v2196 = vpop.f32.mrb[0].mxu0
        %v2197 = vadd.f32 0.0, %v2196
        %v2198 = vpop.f32.mrb[0].mxu0
        %v2199 = vpop.f32.mrb[0].mxu0
        %v2200 = vadd.f32 0.0, %v2199
        %v2201 = vpop.f32.mrb[0].mxu0
        %2202 = vdwg.mxu0
        %2203 = vmatprep.subr.bf16.mxu0 0
        %2204 = vmatpush1.bf16.msra.mxu0 %v1189
        %2205 = vmatprep.subr.bf16.mxu0 0
        %2206 = vmatpush1.bf16.msra.mxu0 %v1190
        %2207 = vmatprep.subr.bf16.mxu0 0
        %2208 = vmatpush1.bf16.msra.mxu0 %v1191
        %2209 = vmatprep.subr.bf16.mxu0 0
        %2210 = vmatpush1.bf16.msra.mxu0 %v1192
        %2211 = vmatprep.subr.bf16.mxu0 0
        %2212 = vmatpush1.bf16.msra.mxu0 %v1193
        %2213 = vmatprep.subr.bf16.mxu0 0
        %2214 = vmatpush1.bf16.msra.mxu0 %v1194
        %2215 = vmatprep.subr.bf16.mxu0 0
        %2216 = vmatpush1.bf16.msra.mxu0 %v1195
        %2217 = vmatprep.subr.bf16.mxu0 0
        %2218 = vmatpush1.bf16.msra.mxu0 %v1196
        %2219 = vmatprep.subr.bf16.mxu0 0
        %2220 = vmatpush1.bf16.msra.mxu0 %v1197
        %2221 = vmatprep.subr.bf16.mxu0 0
        %2222 = vmatpush1.bf16.msra.mxu0 %v1198
        %2223 = vmatprep.subr.bf16.mxu0 0
        %2224 = vmatpush1.bf16.msra.mxu0 %v1199
        %2225 = vmatprep.subr.bf16.mxu0 0
        %2226 = vmatpush1.bf16.msra.mxu0 %v1200
        %2227 = vmatprep.subr.bf16.mxu0 0
        %2228 = vmatpush1.bf16.msra.mxu0 %v1201
        %2229 = vmatprep.subr.bf16.mxu0 0
        %2230 = vmatpush1.bf16.msra.mxu0 %v1202
        %2231 = vmatprep.subr.bf16.mxu0 0
        %2232 = vmatpush1.bf16.msra.mxu0 %v1203
        %2233 = vmatprep.subr.bf16.mxu0 0
        %2234 = vmatpush1.bf16.msra.mxu0 %v1204
        %2235 = vmatprep.mubr.bf16.mxu0 %v2045
        %2236 = vmatmul.mubr.bf16.gmra.mrb[0].mxu0 %v2044
        %v2237 = vpop.f32.mrb[0].mxu0
        %v2238 = vadd.f32 %v2141, %v2237
        %v2239 = vpop.f32.mrb[0].mxu0
        %v2240 = vpop.f32.mrb[0].mxu0
        %v2241 = vadd.f32 %v2144, %v2240
        %v2242 = vpop.f32.mrb[0].mxu0
        %2243 = vmatprep.mubr.bf16.mxu0 %v2049
        %2244 = vmatmul.mubr.bf16.gmra.mrb[0].mxu0 %v2048
        %v2245 = vpop.f32.mrb[0].mxu0
        %v2246 = vadd.f32 %v2149, %v2245
        %v2247 = vpop.f32.mrb[0].mxu0
        %v2248 = vpop.f32.mrb[0].mxu0
        %v2249 = vadd.f32 %v2152, %v2248
        %v2250 = vpop.f32.mrb[0].mxu0
        %2251 = vmatprep.mubr.bf16.mxu0 %v2053
        %2252 = vmatmul.mubr.bf16.gmra.mrb[0].mxu0 %v2052
        %v2253 = vpop.f32.mrb[0].mxu0
        %v2254 = vadd.f32 %v2157, %v2253
        %v2255 = vpop.f32.mrb[0].mxu0
        %v2256 = vpop.f32.mrb[0].mxu0
        %v2257 = vadd.f32 %v2160, %v2256
        %v2258 = vpop.f32.mrb[0].mxu0
        %2259 = vmatprep.mubr.bf16.mxu0 %v2057
        %2260 = vmatmul.mubr.bf16.gmra.mrb[0].mxu0 %v2056
        %v2261 = vpop.f32.mrb[0].mxu0
        %v2262 = vadd.f32 %v2165, %v2261
        %v2263 = vpop.f32.mrb[0].mxu0
        %v2264 = vpop.f32.mrb[0].mxu0
        %v2265 = vadd.f32 %v2168, %v2264
        %v2266 = vpop.f32.mrb[0].mxu0
        %2267 = vmatprep.mubr.bf16.mxu0 %v2061
        %2268 = vmatmul.mubr.bf16.gmra.mrb[0].mxu0 %v2060
        %v2269 = vpop.f32.mrb[0].mxu0
        %v2270 = vadd.f32 %v2173, %v2269
        %v2271 = vpop.f32.mrb[0].mxu0
        %v2272 = vpop.f32.mrb[0].mxu0
        %v2273 = vadd.f32 %v2176, %v2272
        %v2274 = vpop.f32.mrb[0].mxu0
        %2275 = vmatprep.mubr.bf16.mxu0 %v2065
        %2276 = vmatmul.mubr.bf16.gmra.mrb[0].mxu0 %v2064
        %v2277 = vpop.f32.mrb[0].mxu0
        %v2278 = vadd.f32 %v2181, %v2277
        %v2279 = vpop.f32.mrb[0].mxu0
        %v2280 = vpop.f32.mrb[0].mxu0
        %v2281 = vadd.f32 %v2184, %v2280
        %v2282 = vpop.f32.mrb[0].mxu0
        %2283 = vmatprep.mubr.bf16.mxu0 %v2069
        %2284 = vmatmul.mubr.bf16.gmra.mrb[0].mxu0 %v2068
        %v2285 = vpop.f32.mrb[0].mxu0
        %v2286 = vadd.f32 %v2189, %v2285
        %v2287 = vpop.f32.mrb[0].mxu0
        %v2288 = vpop.f32.mrb[0].mxu0
        %v2289 = vadd.f32 %v2192, %v2288
        %v2290 = vpop.f32.mrb[0].mxu0
        %2291 = vmatprep.mubr.bf16.mxu0 %v2073
        %2292 = vmatmul.mubr.bf16.gmra.mrb[0].mxu0 %v2072
        %v2293 = vpop.f32.mrb[0].mxu0
        %v2294 = vadd.f32 %v2197, %v2293
        %v2295 = vpop.f32.mrb[0].mxu0
        %v2296 = vpop.f32.mrb[0].mxu0
        %v2297 = vadd.f32 %v2200, %v2296
        %v2298 = vpop.f32.mrb[0].mxu0
        %2299 = vdwg.mxu0
        %v2300 = vadd.f32 %v1898, %v2238
        %v2301 = vadd.f32 %v1899, %v2241
        %v2302 = vadd.f32 %v1900, %v2246
        %v2303 = vadd.f32 %v1901, %v2249
        %v2304 = vadd.f32 %v1902, %v2254
        %v2305 = vadd.f32 %v1903, %v2257
        %v2306 = vadd.f32 %v1904, %v2262
        %v2307 = vadd.f32 %v1905, %v2265
        %v2308 = vadd.f32 %v1906, %v2270
        %v2309 = vadd.f32 %v1907, %v2273
        %v2310 = vadd.f32 %v1908, %v2278
        %v2311 = vadd.f32 %v1909, %v2281
        %v2312 = vadd.f32 %v1910, %v2286
        %v2313 = vadd.f32 %v1911, %v2289
        %v2314 = vadd.f32 %v1912, %v2294
        %v2315 = vadd.f32 %v1913, %v2297
        %2316 = vst.msk [vmem:[#allocation4] sm:$0xff] %vm1447, %v2300
        %2317 = vst.msk [vmem:[#allocation4 + $0x8] sm:$0xff] %vm1447, %v2301
        %2318 = vst.msk [vmem:[#allocation4 + $0x10] sm:$0xff] %vm1447, %v2302
        %2319 = vst.msk [vmem:[#allocation4 + $0x18] sm:$0xff] %vm1447, %v2303
        %2320 = vst.msk [vmem:[#allocation4 + $0x20] sm:$0xff] %vm1447, %v2304
        %2321 = vst.msk [vmem:[#allocation4 + $0x28] sm:$0xff] %vm1447, %v2305
        %2322 = vst.msk [vmem:[#allocation4 + $0x30] sm:$0xff] %vm1447, %v2306
        %2323 = vst.msk [vmem:[#allocation4 + $0x38] sm:$0xff] %vm1447, %v2307
        %2324 = vst.msk [vmem:[#allocation4 + $0x40] sm:$0xff] %vm1447, %v2308
        %2325 = vst.msk [vmem:[#allocation4 + $0x48] sm:$0xff] %vm1447, %v2309
        %2326 = vst.msk [vmem:[#allocation4 + $0x50] sm:$0xff] %vm1447, %v2310
        %2327 = vst.msk [vmem:[#allocation4 + $0x58] sm:$0xff] %vm1447, %v2311
        %2328 = vst.msk [vmem:[#allocation4 + $0x60] sm:$0xff] %vm1447, %v2312
        %2329 = vst.msk [vmem:[#allocation4 + $0x68] sm:$0xff] %vm1447, %v2313
        %2330 = vst.msk [vmem:[#allocation4 + $0x70] sm:$0xff] %vm1447, %v2314
        %2331 = vst.msk [vmem:[#allocation4 + $0x78] sm:$0xff] %vm1447, %v2315
        %v2332 = vld [vmem:[#allocation5] sm:$0xff]
        %v2333 = vld [vmem:[#allocation5 + $0x8] sm:$0xff]
        %v2334 = vld [vmem:[#allocation5 + $0x10] sm:$0xff]
        %v2335 = vld [vmem:[#allocation5 + $0x18] sm:$0xff]
        %v2336 = vld [vmem:[#allocation5 + $0x20] sm:$0xff]
        %v2337 = vld [vmem:[#allocation5 + $0x28] sm:$0xff]
        %v2338 = vld [vmem:[#allocation5 + $0x30] sm:$0xff]
        %v2339 = vld [vmem:[#allocation5 + $0x38] sm:$0xff]
        %v2340 = vld [vmem:[#allocation5 + $0x40] sm:$0xff]
        %v2341 = vld [vmem:[#allocation5 + $0x48] sm:$0xff]
        %v2342 = vld [vmem:[#allocation5 + $0x50] sm:$0xff]
        %v2343 = vld [vmem:[#allocation5 + $0x58] sm:$0xff]
        %v2344 = vld [vmem:[#allocation5 + $0x60] sm:$0xff]
        %v2345 = vld [vmem:[#allocation5 + $0x68] sm:$0xff]
        %v2346 = vld [vmem:[#allocation5 + $0x70] sm:$0xff]
        %v2347 = vld [vmem:[#allocation5 + $0x78] sm:$0xff]
        %v2348 = vld [vmem:[%s639] sm:$0xff]
        %v2349 = vld [vmem:[%s639 + $0x8] sm:$0xff]
        %v2350 = vld [vmem:[%s639 + $0x10] sm:$0xff]
        %v2351 = vld [vmem:[%s639 + $0x18] sm:$0xff]
        %v2352 = vld [vmem:[%s639 + $0x20] sm:$0xff]
        %v2353 = vld [vmem:[%s639 + $0x28] sm:$0xff]
        %v2354 = vld [vmem:[%s639 + $0x30] sm:$0xff]
        %v2355 = vld [vmem:[%s639 + $0x38] sm:$0xff]
        %v2356 = vld [vmem:[%s639 + $0x40] sm:$0xff]
        %v2357 = vld [vmem:[%s639 + $0x48] sm:$0xff]
        %v2358 = vld [vmem:[%s639 + $0x50] sm:$0xff]
        %v2359 = vld [vmem:[%s639 + $0x58] sm:$0xff]
        %v2360 = vld [vmem:[%s639 + $0x60] sm:$0xff]
        %v2361 = vld [vmem:[%s639 + $0x68] sm:$0xff]
        %v2362 = vld [vmem:[%s639 + $0x70] sm:$0xff]
        %v2363 = vld [vmem:[%s639 + $0x78] sm:$0xff]
        %v2364 = vld [vmem:[%s639 + $0x80] sm:$0xff]
        %v2365 = vld [vmem:[%s639 + $0x88] sm:$0xff]
        %v2366 = vld [vmem:[%s639 + $0x90] sm:$0xff]
        %v2367 = vld [vmem:[%s639 + $0x98] sm:$0xff]
        %v2368 = vld [vmem:[%s639 + $0xa0] sm:$0xff]
        %v2369 = vld [vmem:[%s639 + $0xa8] sm:$0xff]
        %v2370 = vld [vmem:[%s639 + $0xb0] sm:$0xff]
        %v2371 = vld [vmem:[%s639 + $0xb8] sm:$0xff]
        %v2372 = vld [vmem:[%s639 + $0xc0] sm:$0xff]
        %v2373 = vld [vmem:[%s639 + $0xc8] sm:$0xff]
        %v2374 = vld [vmem:[%s639 + $0xd0] sm:$0xff]
        %v2375 = vld [vmem:[%s639 + $0xd8] sm:$0xff]
        %v2376 = vld [vmem:[%s639 + $0xe0] sm:$0xff]
        %v2377 = vld [vmem:[%s639 + $0xe8] sm:$0xff]
        %v2378 = vld [vmem:[%s639 + $0xf0] sm:$0xff]
        %v2379 = vld [vmem:[%s639 + $0xf8] sm:$0xff]
        %v2412 = vunpack.c.l.b16 %v2348
        %v2413 = vunpack.c.h.b16 %v2348
        %v2414 = vunpack.c.l.b16 %v2349
        %v2415 = vunpack.c.h.b16 %v2349
        %v2416 = vunpack.c.l.b16 %v2350
        %v2417 = vunpack.c.h.b16 %v2350
        %v2418 = vunpack.c.l.b16 %v2351
        %v2419 = vunpack.c.h.b16 %v2351
        %v2420 = vunpack.c.l.b16 %v2352
        %v2421 = vunpack.c.h.b16 %v2352
        %v2422 = vunpack.c.l.b16 %v2353
        %v2423 = vunpack.c.h.b16 %v2353
        %v2424 = vunpack.c.l.b16 %v2354
        %v2425 = vunpack.c.h.b16 %v2354
        %v2426 = vunpack.c.l.b16 %v2355
        %v2427 = vunpack.c.h.b16 %v2355
        %v2428 = vunpack.c.l.b16 %v2356
        %v2429 = vunpack.c.h.b16 %v2356
        %v2430 = vunpack.c.l.b16 %v2357
        %v2431 = vunpack.c.h.b16 %v2357
        %v2432 = vunpack.c.l.b16 %v2358
        %v2433 = vunpack.c.h.b16 %v2358
        %v2434 = vunpack.c.l.b16 %v2359
        %v2435 = vunpack.c.h.b16 %v2359
        %v2436 = vunpack.c.l.b16 %v2360
        %v2437 = vunpack.c.h.b16 %v2360
        %v2438 = vunpack.c.l.b16 %v2361
        %v2439 = vunpack.c.h.b16 %v2361
        %v2440 = vunpack.c.l.b16 %v2362
        %v2441 = vunpack.c.h.b16 %v2362
        %v2442 = vunpack.c.l.b16 %v2363
        %v2443 = vunpack.c.h.b16 %v2363
        %v2444 = vunpack.c.l.b16 %v2364
        %v2445 = vunpack.c.h.b16 %v2364
        %v2446 = vunpack.c.l.b16 %v2365
        %v2447 = vunpack.c.h.b16 %v2365
        %v2448 = vunpack.c.l.b16 %v2366
        %v2449 = vunpack.c.h.b16 %v2366
        %v2450 = vunpack.c.l.b16 %v2367
        %v2451 = vunpack.c.h.b16 %v2367
        %v2452 = vunpack.c.l.b16 %v2368
        %v2453 = vunpack.c.h.b16 %v2368
        %v2454 = vunpack.c.l.b16 %v2369
        %v2455 = vunpack.c.h.b16 %v2369
        %v2456 = vunpack.c.l.b16 %v2370
        %v2457 = vunpack.c.h.b16 %v2370
        %v2458 = vunpack.c.l.b16 %v2371
        %v2459 = vunpack.c.h.b16 %v2371
        %v2460 = vunpack.c.l.b16 %v2372
        %v2461 = vunpack.c.h.b16 %v2372
        %v2462 = vunpack.c.l.b16 %v2373
        %v2463 = vunpack.c.h.b16 %v2373
        %v2464 = vunpack.c.l.b16 %v2374
        %v2465 = vunpack.c.h.b16 %v2374
        %v2466 = vunpack.c.l.b16 %v2375
        %v2467 = vunpack.c.h.b16 %v2375
        %v2468 = vunpack.c.l.b16 %v2376
        %v2469 = vunpack.c.h.b16 %v2376
        %v2470 = vunpack.c.l.b16 %v2377
        %v2471 = vunpack.c.h.b16 %v2377
        %v2472 = vunpack.c.l.b16 %v2378
        %v2473 = vunpack.c.h.b16 %v2378
        %v2474 = vunpack.c.l.b16 %v2379
        %v2475 = vunpack.c.h.b16 %v2379
        %v2476 = vpack.c.b16 %v2416, %v2412
        %v2477 = vpack.c.b16 %v2417, %v2413
        %v2478 = vpack.c.b16 %v2418, %v2414
        %v2479 = vpack.c.b16 %v2419, %v2415
        %v2480 = vpack.c.b16 %v2424, %v2420
        %v2481 = vpack.c.b16 %v2425, %v2421
        %v2482 = vpack.c.b16 %v2426, %v2422
        %v2483 = vpack.c.b16 %v2427, %v2423
        %v2484 = vpack.c.b16 %v2432, %v2428
        %v2485 = vpack.c.b16 %v2433, %v2429
        %v2486 = vpack.c.b16 %v2434, %v2430
        %v2487 = vpack.c.b16 %v2435, %v2431
        %v2488 = vpack.c.b16 %v2440, %v2436
        %v2489 = vpack.c.b16 %v2441, %v2437
        %v2490 = vpack.c.b16 %v2442, %v2438
        %v2491 = vpack.c.b16 %v2443, %v2439
        %v2492 = vpack.c.b16 %v2448, %v2444
        %v2493 = vpack.c.b16 %v2449, %v2445
        %v2494 = vpack.c.b16 %v2450, %v2446
        %v2495 = vpack.c.b16 %v2451, %v2447
        %v2496 = vpack.c.b16 %v2456, %v2452
        %v2497 = vpack.c.b16 %v2457, %v2453
        %v2498 = vpack.c.b16 %v2458, %v2454
        %v2499 = vpack.c.b16 %v2459, %v2455
        %v2500 = vpack.c.b16 %v2464, %v2460
        %v2501 = vpack.c.b16 %v2465, %v2461
        %v2502 = vpack.c.b16 %v2466, %v2462
        %v2503 = vpack.c.b16 %v2467, %v2463
        %v2504 = vpack.c.b16 %v2472, %v2468
        %v2505 = vpack.c.b16 %v2473, %v2469
        %v2506 = vpack.c.b16 %v2474, %v2470
        %v2507 = vpack.c.b16 %v2475, %v2471
        %2540 = vmatprep.subr.bf16.mxu0 0
        %2541 = vmatpush1.bf16.msra.mxu0 %v1173
        %2542 = vmatprep.subr.bf16.mxu0 0
        %2543 = vmatpush1.bf16.msra.mxu0 %v1174
        %2544 = vmatprep.subr.bf16.mxu0 0
        %2545 = vmatpush1.bf16.msra.mxu0 %v1175
        %2546 = vmatprep.subr.bf16.mxu0 0
        %2547 = vmatpush1.bf16.msra.mxu0 %v1176
        %2548 = vmatprep.subr.bf16.mxu0 0
        %2549 = vmatpush1.bf16.msra.mxu0 %v1177
        %2550 = vmatprep.subr.bf16.mxu0 0
        %2551 = vmatpush1.bf16.msra.mxu0 %v1178
        %2552 = vmatprep.subr.bf16.mxu0 0
        %2553 = vmatpush1.bf16.msra.mxu0 %v1179
        %2554 = vmatprep.subr.bf16.mxu0 0
        %2555 = vmatpush1.bf16.msra.mxu0 %v1180
        %2556 = vmatprep.subr.bf16.mxu0 0
        %2557 = vmatpush1.bf16.msra.mxu0 %v1181
        %2558 = vmatprep.subr.bf16.mxu0 0
        %2559 = vmatpush1.bf16.msra.mxu0 %v1182
        %2560 = vmatprep.subr.bf16.mxu0 0
        %2561 = vmatpush1.bf16.msra.mxu0 %v1183
        %2562 = vmatprep.subr.bf16.mxu0 0
        %2563 = vmatpush1.bf16.msra.mxu0 %v1184
        %2564 = vmatprep.subr.bf16.mxu0 0
        %2565 = vmatpush1.bf16.msra.mxu0 %v1185
        %2566 = vmatprep.subr.bf16.mxu0 0
        %2567 = vmatpush1.bf16.msra.mxu0 %v1186
        %2568 = vmatprep.subr.bf16.mxu0 0
        %2569 = vmatpush1.bf16.msra.mxu0 %v1187
        %2570 = vmatprep.subr.bf16.mxu0 0
        %2571 = vmatpush1.bf16.msra.mxu0 %v1188
        %2572 = vmatprep.mubr.bf16.mxu0 %v2477
        %2573 = vmatmul.mubr.bf16.gmra.mrb[0].mxu0 %v2476
        %v2574 = vpop.f32.mrb[0].mxu0
        %v2575 = vadd.f32 0.0, %v2574
        %v2576 = vpop.f32.mrb[0].mxu0
        %v2577 = vpop.f32.mrb[0].mxu0
        %v2578 = vadd.f32 0.0, %v2577
        %v2579 = vpop.f32.mrb[0].mxu0
        %2580 = vmatprep.mubr.bf16.mxu0 %v2481
        %2581 = vmatmul.mubr.bf16.gmra.mrb[0].mxu0 %v2480
        %v2582 = vpop.f32.mrb[0].mxu0
        %v2583 = vadd.f32 0.0, %v2582
        %v2584 = vpop.f32.mrb[0].mxu0
        %v2585 = vpop.f32.mrb[0].mxu0
        %v2586 = vadd.f32 0.0, %v2585
        %v2587 = vpop.f32.mrb[0].mxu0
        %2588 = vmatprep.mubr.bf16.mxu0 %v2485
        %2589 = vmatmul.mubr.bf16.gmra.mrb[0].mxu0 %v2484
        %v2590 = vpop.f32.mrb[0].mxu0
        %v2591 = vadd.f32 0.0, %v2590
        %v2592 = vpop.f32.mrb[0].mxu0
        %v2593 = vpop.f32.mrb[0].mxu0
        %v2594 = vadd.f32 0.0, %v2593
        %v2595 = vpop.f32.mrb[0].mxu0
        %2596 = vmatprep.mubr.bf16.mxu0 %v2489
        %2597 = vmatmul.mubr.bf16.gmra.mrb[0].mxu0 %v2488
        %v2598 = vpop.f32.mrb[0].mxu0
        %v2599 = vadd.f32 0.0, %v2598
        %v2600 = vpop.f32.mrb[0].mxu0
        %v2601 = vpop.f32.mrb[0].mxu0
        %v2602 = vadd.f32 0.0, %v2601
        %v2603 = vpop.f32.mrb[0].mxu0
        %2604 = vmatprep.mubr.bf16.mxu0 %v2493
        %2605 = vmatmul.mubr.bf16.gmra.mrb[0].mxu0 %v2492
        %v2606 = vpop.f32.mrb[0].mxu0
        %v2607 = vadd.f32 0.0, %v2606
        %v2608 = vpop.f32.mrb[0].mxu0
        %v2609 = vpop.f32.mrb[0].mxu0
        %v2610 = vadd.f32 0.0, %v2609
        %v2611 = vpop.f32.mrb[0].mxu0
        %2612 = vmatprep.mubr.bf16.mxu0 %v2497
        %2613 = vmatmul.mubr.bf16.gmra.mrb[0].mxu0 %v2496
        %v2614 = vpop.f32.mrb[0].mxu0
        %v2615 = vadd.f32 0.0, %v2614
        %v2616 = vpop.f32.mrb[0].mxu0
        %v2617 = vpop.f32.mrb[0].mxu0
        %v2618 = vadd.f32 0.0, %v2617
        %v2619 = vpop.f32.mrb[0].mxu0
        %2620 = vmatprep.mubr.bf16.mxu0 %v2501
        %2621 = vmatmul.mubr.bf16.gmra.mrb[0].mxu0 %v2500
        %v2622 = vpop.f32.mrb[0].mxu0
        %v2623 = vadd.f32 0.0, %v2622
        %v2624 = vpop.f32.mrb[0].mxu0
        %v2625 = vpop.f32.mrb[0].mxu0
        %v2626 = vadd.f32 0.0, %v2625
        %v2627 = vpop.f32.mrb[0].mxu0
        %2628 = vmatprep.mubr.bf16.mxu0 %v2505
        %2629 = vmatmul.mubr.bf16.gmra.mrb[0].mxu0 %v2504
        %v2630 = vpop.f32.mrb[0].mxu0
        %v2631 = vadd.f32 0.0, %v2630
        %v2632 = vpop.f32.mrb[0].mxu0
        %v2633 = vpop.f32.mrb[0].mxu0
        %v2634 = vadd.f32 0.0, %v2633
        %v2635 = vpop.f32.mrb[0].mxu0
        %2636 = vdwg.mxu0
        %2637 = vmatprep.subr.bf16.mxu0 0
        %2638 = vmatpush1.bf16.msra.mxu0 %v1189
        %2639 = vmatprep.subr.bf16.mxu0 0
        %2640 = vmatpush1.bf16.msra.mxu0 %v1190
        %2641 = vmatprep.subr.bf16.mxu0 0
        %2642 = vmatpush1.bf16.msra.mxu0 %v1191
        %2643 = vmatprep.subr.bf16.mxu0 0
        %2644 = vmatpush1.bf16.msra.mxu0 %v1192
        %2645 = vmatprep.subr.bf16.mxu0 0
        %2646 = vmatpush1.bf16.msra.mxu0 %v1193
        %2647 = vmatprep.subr.bf16.mxu0 0
        %2648 = vmatpush1.bf16.msra.mxu0 %v1194
        %2649 = vmatprep.subr.bf16.mxu0 0
        %2650 = vmatpush1.bf16.msra.mxu0 %v1195
        %2651 = vmatprep.subr.bf16.mxu0 0
        %2652 = vmatpush1.bf16.msra.mxu0 %v1196
        %2653 = vmatprep.subr.bf16.mxu0 0
        %2654 = vmatpush1.bf16.msra.mxu0 %v1197
        %2655 = vmatprep.subr.bf16.mxu0 0
        %2656 = vmatpush1.bf16.msra.mxu0 %v1198
        %2657 = vmatprep.subr.bf16.mxu0 0
        %2658 = vmatpush1.bf16.msra.mxu0 %v1199
        %2659 = vmatprep.subr.bf16.mxu0 0
        %2660 = vmatpush1.bf16.msra.mxu0 %v1200
        %2661 = vmatprep.subr.bf16.mxu0 0
        %2662 = vmatpush1.bf16.msra.mxu0 %v1201
        %2663 = vmatprep.subr.bf16.mxu0 0
        %2664 = vmatpush1.bf16.msra.mxu0 %v1202
        %2665 = vmatprep.subr.bf16.mxu0 0
        %2666 = vmatpush1.bf16.msra.mxu0 %v1203
        %2667 = vmatprep.subr.bf16.mxu0 0
        %2668 = vmatpush1.bf16.msra.mxu0 %v1204
        %2669 = vmatprep.mubr.bf16.mxu0 %v2479
        %2670 = vmatmul.mubr.bf16.gmra.mrb[0].mxu0 %v2478
        %v2671 = vpop.f32.mrb[0].mxu0
        %v2672 = vadd.f32 %v2575, %v2671
        %v2673 = vpop.f32.mrb[0].mxu0
        %v2674 = vpop.f32.mrb[0].mxu0
        %v2675 = vadd.f32 %v2578, %v2674
        %v2676 = vpop.f32.mrb[0].mxu0
        %2677 = vmatprep.mubr.bf16.mxu0 %v2483
        %2678 = vmatmul.mubr.bf16.gmra.mrb[0].mxu0 %v2482
        %v2679 = vpop.f32.mrb[0].mxu0
        %v2680 = vadd.f32 %v2583, %v2679
        %v2681 = vpop.f32.mrb[0].mxu0
        %v2682 = vpop.f32.mrb[0].mxu0
        %v2683 = vadd.f32 %v2586, %v2682
        %v2684 = vpop.f32.mrb[0].mxu0
        %2685 = vmatprep.mubr.bf16.mxu0 %v2487
        %2686 = vmatmul.mubr.bf16.gmra.mrb[0].mxu0 %v2486
        %v2687 = vpop.f32.mrb[0].mxu0
        %v2688 = vadd.f32 %v2591, %v2687
        %v2689 = vpop.f32.mrb[0].mxu0
        %v2690 = vpop.f32.mrb[0].mxu0
        %v2691 = vadd.f32 %v2594, %v2690
        %v2692 = vpop.f32.mrb[0].mxu0
        %2693 = vmatprep.mubr.bf16.mxu0 %v2491
        %2694 = vmatmul.mubr.bf16.gmra.mrb[0].mxu0 %v2490
        %v2695 = vpop.f32.mrb[0].mxu0
        %v2696 = vadd.f32 %v2599, %v2695
        %v2697 = vpop.f32.mrb[0].mxu0
        %v2698 = vpop.f32.mrb[0].mxu0
        %v2699 = vadd.f32 %v2602, %v2698
        %v2700 = vpop.f32.mrb[0].mxu0
        %2701 = vmatprep.mubr.bf16.mxu0 %v2495
        %2702 = vmatmul.mubr.bf16.gmra.mrb[0].mxu0 %v2494
        %v2703 = vpop.f32.mrb[0].mxu0
        %v2704 = vadd.f32 %v2607, %v2703
        %v2705 = vpop.f32.mrb[0].mxu0
        %v2706 = vpop.f32.mrb[0].mxu0
        %v2707 = vadd.f32 %v2610, %v2706
        %v2708 = vpop.f32.mrb[0].mxu0
        %2709 = vmatprep.mubr.bf16.mxu0 %v2499
        %2710 = vmatmul.mubr.bf16.gmra.mrb[0].mxu0 %v2498
        %v2711 = vpop.f32.mrb[0].mxu0
        %v2712 = vadd.f32 %v2615, %v2711
        %v2713 = vpop.f32.mrb[0].mxu0
        %v2714 = vpop.f32.mrb[0].mxu0
        %v2715 = vadd.f32 %v2618, %v2714
        %v2716 = vpop.f32.mrb[0].mxu0
        %2717 = vmatprep.mubr.bf16.mxu0 %v2503
        %2718 = vmatmul.mubr.bf16.gmra.mrb[0].mxu0 %v2502
        %v2719 = vpop.f32.mrb[0].mxu0
        %v2720 = vadd.f32 %v2623, %v2719
        %v2721 = vpop.f32.mrb[0].mxu0
        %v2722 = vpop.f32.mrb[0].mxu0
        %v2723 = vadd.f32 %v2626, %v2722
        %v2724 = vpop.f32.mrb[0].mxu0
        %2725 = vmatprep.mubr.bf16.mxu0 %v2507
        %2726 = vmatmul.mubr.bf16.gmra.mrb[0].mxu0 %v2506
        %v2727 = vpop.f32.mrb[0].mxu0
        %v2728 = vadd.f32 %v2631, %v2727
        %v2729 = vpop.f32.mrb[0].mxu0
        %v2730 = vpop.f32.mrb[0].mxu0
        %v2731 = vadd.f32 %v2634, %v2730
        %v2732 = vpop.f32.mrb[0].mxu0
        %2733 = vdwg.mxu0
        %v2734 = vadd.f32 %v2332, %v2672
        %v2735 = vadd.f32 %v2333, %v2675
        %v2736 = vadd.f32 %v2334, %v2680
        %v2737 = vadd.f32 %v2335, %v2683
        %v2738 = vadd.f32 %v2336, %v2688
        %v2739 = vadd.f32 %v2337, %v2691
        %v2740 = vadd.f32 %v2338, %v2696
        %v2741 = vadd.f32 %v2339, %v2699
        %v2742 = vadd.f32 %v2340, %v2704
        %v2743 = vadd.f32 %v2341, %v2707
        %v2744 = vadd.f32 %v2342, %v2712
        %v2745 = vadd.f32 %v2343, %v2715
        %v2746 = vadd.f32 %v2344, %v2720
        %v2747 = vadd.f32 %v2345, %v2723
        %v2748 = vadd.f32 %v2346, %v2728
        %v2749 = vadd.f32 %v2347, %v2731
        %2750 = vst.msk [vmem:[#allocation5] sm:$0xff] %vm1447, %v2734
        %2751 = vst.msk [vmem:[#allocation5 + $0x8] sm:$0xff] %vm1447, %v2735
        %2752 = vst.msk [vmem:[#allocation5 + $0x10] sm:$0xff] %vm1447, %v2736
        %2753 = vst.msk [vmem:[#allocation5 + $0x18] sm:$0xff] %vm1447, %v2737
        %2754 = vst.msk [vmem:[#allocation5 + $0x20] sm:$0xff] %vm1447, %v2738
        %2755 = vst.msk [vmem:[#allocation5 + $0x28] sm:$0xff] %vm1447, %v2739
        %2756 = vst.msk [vmem:[#allocation5 + $0x30] sm:$0xff] %vm1447, %v2740
        %2757 = vst.msk [vmem:[#allocation5 + $0x38] sm:$0xff] %vm1447, %v2741
        %2758 = vst.msk [vmem:[#allocation5 + $0x40] sm:$0xff] %vm1447, %v2742
        %2759 = vst.msk [vmem:[#allocation5 + $0x48] sm:$0xff] %vm1447, %v2743
        %2760 = vst.msk [vmem:[#allocation5 + $0x50] sm:$0xff] %vm1447, %v2744
        %2761 = vst.msk [vmem:[#allocation5 + $0x58] sm:$0xff] %vm1447, %v2745
        %2762 = vst.msk [vmem:[#allocation5 + $0x60] sm:$0xff] %vm1447, %v2746
        %2763 = vst.msk [vmem:[#allocation5 + $0x68] sm:$0xff] %vm1447, %v2747
        %2764 = vst.msk [vmem:[#allocation5 + $0x70] sm:$0xff] %vm1447, %v2748
        %2765 = vst.msk [vmem:[#allocation5 + $0x78] sm:$0xff] %vm1447, %v2749
        %p2766 = scmp.eq.s32.totalorder %s22, 1
        // Predicated region
        $region141: #{private_encoder_forward.4} parent=119 // pred_check
          %p2767 = pneg %p2766
        $region142: #{private_encoder_forward.4} parent=119 // pred_check_branch
          %2769 = sbr.rel (%p2767) target = $region144
        $region143: #{private_encoder_forward.4} parent=119 // pred_region
          %v2770 = vld [vmem:[#allocation2] sm:$0xff]
          %v2771 = vld [vmem:[#allocation2 + $0x8] sm:$0xff]
          %v2772 = vld [vmem:[#allocation2 + $0x10] sm:$0xff]
          %v2773 = vld [vmem:[#allocation2 + $0x18] sm:$0xff]
          %v2774 = vld [vmem:[#allocation2 + $0x20] sm:$0xff]
          %v2775 = vld [vmem:[#allocation2 + $0x28] sm:$0xff]
          %v2776 = vld [vmem:[#allocation2 + $0x30] sm:$0xff]
          %v2777 = vld [vmem:[#allocation2 + $0x38] sm:$0xff]
          %v2778 = vld [vmem:[#allocation2 + $0x40] sm:$0xff]
          %v2779 = vld [vmem:[#allocation2 + $0x48] sm:$0xff]
          %v2780 = vld [vmem:[#allocation2 + $0x50] sm:$0xff]
          %v2781 = vld [vmem:[#allocation2 + $0x58] sm:$0xff]
          %v2782 = vld [vmem:[#allocation2 + $0x60] sm:$0xff]
          %v2783 = vld [vmem:[#allocation2 + $0x68] sm:$0xff]
          %v2784 = vld [vmem:[#allocation2 + $0x70] sm:$0xff]
          %v2785 = vld [vmem:[#allocation2 + $0x78] sm:$0xff]
          %v2786 = vld [vmem:[#allocation3] sm:$0xff]
          %v2787 = vld [vmem:[#allocation3 + $0x8] sm:$0xff]
          %v2788 = vld [vmem:[#allocation3 + $0x10] sm:$0xff]
          %v2789 = vld [vmem:[#allocation3 + $0x18] sm:$0xff]
          %v2790 = vld [vmem:[#allocation3 + $0x20] sm:$0xff]
          %v2791 = vld [vmem:[#allocation3 + $0x28] sm:$0xff]
          %v2792 = vld [vmem:[#allocation3 + $0x30] sm:$0xff]
          %v2793 = vld [vmem:[#allocation3 + $0x38] sm:$0xff]
          %v2794 = vld [vmem:[#allocation3 + $0x40] sm:$0xff]
          %v2795 = vld [vmem:[#allocation3 + $0x48] sm:$0xff]
          %v2796 = vld [vmem:[#allocation3 + $0x50] sm:$0xff]
          %v2797 = vld [vmem:[#allocation3 + $0x58] sm:$0xff]
          %v2798 = vld [vmem:[#allocation3 + $0x60] sm:$0xff]
          %v2799 = vld [vmem:[#allocation3 + $0x68] sm:$0xff]
          %v2800 = vld [vmem:[#allocation3 + $0x70] sm:$0xff]
          %v2801 = vld [vmem:[#allocation3 + $0x78] sm:$0xff]
          %v2802 = vmax.f32 %v2770, %v2786
          %v2803 = vmax.f32 %v2771, %v2787
          %v2804 = vmax.f32 %v2772, %v2788
          %v2805 = vmax.f32 %v2773, %v2789
          %v2806 = vmax.f32 %v2774, %v2790
          %v2807 = vmax.f32 %v2775, %v2791
          %v2808 = vmax.f32 %v2776, %v2792
          %v2809 = vmax.f32 %v2777, %v2793
          %v2810 = vmax.f32 %v2778, %v2794
          %v2811 = vmax.f32 %v2779, %v2795
          %v2812 = vmax.f32 %v2780, %v2796
          %v2813 = vmax.f32 %v2781, %v2797
          %v2814 = vmax.f32 %v2782, %v2798
          %v2815 = vmax.f32 %v2783, %v2799
          %v2816 = vmax.f32 %v2784, %v2800
          %v2817 = vmax.f32 %v2785, %v2801
          %v2818 = vld [vmem:[#allocation4] sm:$0xff]
          %v2819 = vld [vmem:[#allocation4 + $0x8] sm:$0xff]
          %v2820 = vld [vmem:[#allocation4 + $0x10] sm:$0xff]
          %v2821 = vld [vmem:[#allocation4 + $0x18] sm:$0xff]
          %v2822 = vld [vmem:[#allocation4 + $0x20] sm:$0xff]
          %v2823 = vld [vmem:[#allocation4 + $0x28] sm:$0xff]
          %v2824 = vld [vmem:[#allocation4 + $0x30] sm:$0xff]
          %v2825 = vld [vmem:[#allocation4 + $0x38] sm:$0xff]
          %v2826 = vld [vmem:[#allocation4 + $0x40] sm:$0xff]
          %v2827 = vld [vmem:[#allocation4 + $0x48] sm:$0xff]
          %v2828 = vld [vmem:[#allocation4 + $0x50] sm:$0xff]
          %v2829 = vld [vmem:[#allocation4 + $0x58] sm:$0xff]
          %v2830 = vld [vmem:[#allocation4 + $0x60] sm:$0xff]
          %v2831 = vld [vmem:[#allocation4 + $0x68] sm:$0xff]
          %v2832 = vld [vmem:[#allocation4 + $0x70] sm:$0xff]
          %v2833 = vld [vmem:[#allocation4 + $0x78] sm:$0xff]
          %v2834 = vld [vmem:[#allocation5] sm:$0xff]
          %v2835 = vld [vmem:[#allocation5 + $0x8] sm:$0xff]
          %v2836 = vld [vmem:[#allocation5 + $0x10] sm:$0xff]
          %v2837 = vld [vmem:[#allocation5 + $0x18] sm:$0xff]
          %v2838 = vld [vmem:[#allocation5 + $0x20] sm:$0xff]
          %v2839 = vld [vmem:[#allocation5 + $0x28] sm:$0xff]
          %v2840 = vld [vmem:[#allocation5 + $0x30] sm:$0xff]
          %v2841 = vld [vmem:[#allocation5 + $0x38] sm:$0xff]
          %v2842 = vld [vmem:[#allocation5 + $0x40] sm:$0xff]
          %v2843 = vld [vmem:[#allocation5 + $0x48] sm:$0xff]
          %v2844 = vld [vmem:[#allocation5 + $0x50] sm:$0xff]
          %v2845 = vld [vmem:[#allocation5 + $0x58] sm:$0xff]
          %v2846 = vld [vmem:[#allocation5 + $0x60] sm:$0xff]
          %v2847 = vld [vmem:[#allocation5 + $0x68] sm:$0xff]
          %v2848 = vld [vmem:[#allocation5 + $0x70] sm:$0xff]
          %v2849 = vld [vmem:[#allocation5 + $0x78] sm:$0xff]
          %v2850 = vmax.f32 %v2818, %v2834
          %v2851 = vmax.f32 %v2819, %v2835
          %v2852 = vmax.f32 %v2820, %v2836
          %v2853 = vmax.f32 %v2821, %v2837
          %v2854 = vmax.f32 %v2822, %v2838
          %v2855 = vmax.f32 %v2823, %v2839
          %v2856 = vmax.f32 %v2824, %v2840
          %v2857 = vmax.f32 %v2825, %v2841
          %v2858 = vmax.f32 %v2826, %v2842
          %v2859 = vmax.f32 %v2827, %v2843
          %v2860 = vmax.f32 %v2828, %v2844
          %v2861 = vmax.f32 %v2829, %v2845
          %v2862 = vmax.f32 %v2830, %v2846
          %v2863 = vmax.f32 %v2831, %v2847
          %v2864 = vmax.f32 %v2832, %v2848
          %v2865 = vmax.f32 %v2833, %v2849
          %v2866 = vmax.f32 %v2802, %v2850
          %v2867 = vmax.f32 %v2803, %v2851
          %v2868 = vmax.f32 %v2804, %v2852
          %v2869 = vmax.f32 %v2805, %v2853
          %v2870 = vmax.f32 %v2806, %v2854
          %v2871 = vmax.f32 %v2807, %v2855
          %v2872 = vmax.f32 %v2808, %v2856
          %v2873 = vmax.f32 %v2809, %v2857
          %v2874 = vmax.f32 %v2810, %v2858
          %v2875 = vmax.f32 %v2811, %v2859
          %v2876 = vmax.f32 %v2812, %v2860
          %v2877 = vmax.f32 %v2813, %v2861
          %v2878 = vmax.f32 %v2814, %v2862
          %v2879 = vmax.f32 %v2815, %v2863
          %v2880 = vmax.f32 %v2816, %v2864
          %v2881 = vmax.f32 %v2817, %v2865
          %v2882 = vld [vmem:[%s5] sm:$0x1]
          %v2884 = vlaneseq
          %v2885 = vshrl.u32 %v2884, 7
          %v2886 = vsub.s32 0, %v2885
          %v2887 = vrot.slane %v2882, %v2886
          %v2889 = vadd.f32 %v2866, %v2887
          %v2890 = vadd.f32 %v2867, %v2887
          %v2891 = vadd.f32 %v2868, %v2887
          %v2892 = vadd.f32 %v2869, %v2887
          %v2893 = vadd.f32 %v2870, %v2887
          %v2894 = vadd.f32 %v2871, %v2887
          %v2895 = vadd.f32 %v2872, %v2887
          %v2896 = vadd.f32 %v2873, %v2887
          %v2897 = vadd.f32 %v2874, %v2887
          %v2898 = vadd.f32 %v2875, %v2887
          %v2899 = vadd.f32 %v2876, %v2887
          %v2900 = vadd.f32 %v2877, %v2887
          %v2901 = vadd.f32 %v2878, %v2887
          %v2902 = vadd.f32 %v2879, %v2887
          %v2903 = vadd.f32 %v2880, %v2887
          %v2904 = vadd.f32 %v2881, %v2887
          %v2905 = vmax.f32 %v2889, 0.0
          %v2906 = vmax.f32 %v2890, 0.0
          %v2907 = vmax.f32 %v2891, 0.0
          %v2908 = vmax.f32 %v2892, 0.0
          %v2909 = vmax.f32 %v2893, 0.0
          %v2910 = vmax.f32 %v2894, 0.0
          %v2911 = vmax.f32 %v2895, 0.0
          %v2912 = vmax.f32 %v2896, 0.0
          %v2913 = vmax.f32 %v2897, 0.0
          %v2914 = vmax.f32 %v2898, 0.0
          %v2915 = vmax.f32 %v2899, 0.0
          %v2916 = vmax.f32 %v2900, 0.0
          %v2917 = vmax.f32 %v2901, 0.0
          %v2918 = vmax.f32 %v2902, 0.0
          %v2919 = vmax.f32 %v2903, 0.0
          %v2920 = vmax.f32 %v2904, 0.0
          %v2921 = vpack.c.bf16 %v2906, %v2905
          %v2922 = vpack.c.bf16 %v2908, %v2907
          %v2923 = vpack.c.bf16 %v2910, %v2909
          %v2924 = vpack.c.bf16 %v2912, %v2911
          %v2925 = vpack.c.bf16 %v2914, %v2913
          %v2926 = vpack.c.bf16 %v2916, %v2915
          %v2927 = vpack.c.bf16 %v2918, %v2917
          %v2928 = vpack.c.bf16 %v2920, %v2919
          %v2937 = vunpack.c.l.b16 %v2921
          %v2938 = vunpack.c.h.b16 %v2921
          %v2939 = vunpack.c.l.b16 %v2922
          %v2940 = vunpack.c.h.b16 %v2922
          %v2941 = vunpack.c.l.b16 %v2923
          %v2942 = vunpack.c.h.b16 %v2923
          %v2943 = vunpack.c.l.b16 %v2924
          %v2944 = vunpack.c.h.b16 %v2924
          %v2945 = vunpack.c.l.b16 %v2925
          %v2946 = vunpack.c.h.b16 %v2925
          %v2947 = vunpack.c.l.b16 %v2926
          %v2948 = vunpack.c.h.b16 %v2926
          %v2949 = vunpack.c.l.b16 %v2927
          %v2950 = vunpack.c.h.b16 %v2927
          %v2951 = vunpack.c.l.b16 %v2928
          %v2952 = vunpack.c.h.b16 %v2928
          %v2953 = vpack.c.b16 %v2937, %v2937
          %v2954 = vpack.c.b16 %v2938, %v2938
          %v2955 = vpack.c.b16 %v2939, %v2939
          %v2956 = vpack.c.b16 %v2940, %v2940
          %v2957 = vpack.c.b16 %v2941, %v2941
          %v2958 = vpack.c.b16 %v2942, %v2942
          %v2959 = vpack.c.b16 %v2943, %v2943
          %v2960 = vpack.c.b16 %v2944, %v2944
          %v2961 = vpack.c.b16 %v2945, %v2945
          %v2962 = vpack.c.b16 %v2946, %v2946
          %v2963 = vpack.c.b16 %v2947, %v2947
          %v2964 = vpack.c.b16 %v2948, %v2948
          %v2965 = vpack.c.b16 %v2949, %v2949
          %v2966 = vpack.c.b16 %v2950, %v2950
          %v2967 = vpack.c.b16 %v2951, %v2951
          %v2968 = vpack.c.b16 %v2952, %v2952
          %vm2985 = vcmask 519168
          %2986 = vst.msk [vmem:[%s701] sm:$0xf] %vm2985, %v2953
          %2987 = vst.msk [vmem:[%s701 + $0x4] sm:$0xf] %vm2985, %v2954
          %2988 = vst.msk [vmem:[%s701 + $0x8] sm:$0xf] %vm2985, %v2955
          %2989 = vst.msk [vmem:[%s701 + $0xc] sm:$0xf] %vm2985, %v2956
          %2990 = vst.msk [vmem:[%s701 + $0x10] sm:$0xf] %vm2985, %v2957
          %2991 = vst.msk [vmem:[%s701 + $0x14] sm:$0xf] %vm2985, %v2958
          %2992 = vst.msk [vmem:[%s701 + $0x18] sm:$0xf] %vm2985, %v2959
          %2993 = vst.msk [vmem:[%s701 + $0x1c] sm:$0xf] %vm2985, %v2960
          %2994 = vst.msk [vmem:[%s701 + $0x20] sm:$0xf] %vm2985, %v2961
          %2995 = vst.msk [vmem:[%s701 + $0x24] sm:$0xf] %vm2985, %v2962
          %2996 = vst.msk [vmem:[%s701 + $0x28] sm:$0xf] %vm2985, %v2963
          %2997 = vst.msk [vmem:[%s701 + $0x2c] sm:$0xf] %vm2985, %v2964
          %2998 = vst.msk [vmem:[%s701 + $0x30] sm:$0xf] %vm2985, %v2965
          %2999 = vst.msk [vmem:[%s701 + $0x34] sm:$0xf] %vm2985, %v2966
          %3000 = vst.msk [vmem:[%s701 + $0x38] sm:$0xf] %vm2985, %v2967
          %3001 = vst.msk [vmem:[%s701 + $0x3c] sm:$0xf] %vm2985, %v2968
        $region144: #{private_encoder_forward.4} parent=119 // pred_fallthru
          _
        %s3002 = smul.u32 16, %s21
        %p3003 = scmp.lt.s32.totalorder %s3002, 15
        %s3004 = scalar_select %p3003, %s3002, 15
        %s3005 = smul.addr %s3004, 4
        %s3006 = scalar_lea.vmem %s6, %s3005
        // Predicated region
        $region145: #{private_encoder_forward.4} parent=119 // pred_check
          %p3007 = pneg %p206
        $region146: #{private_encoder_forward.4} parent=119 // pred_check_branch
          %3009 = sbr.rel (%p3007) target = $region148
        $region147: #{private_encoder_forward.4} parent=119 // pred_region
          %s3010 = smul.u32 16, %s21
        $region148: #{private_encoder_forward.4} parent=119 // pred_fallthru
          _
        // Predicated region
        $region149: #{private_encoder_forward.4} parent=119 // pred_check
          %p3011 = pneg %p206
        $region150: #{private_encoder_forward.4} parent=119 // pred_check_branch
          %3013 = sbr.rel (%p3011) target = $region152
        $region151: #{private_encoder_forward.4} parent=119 // pred_region
          %s3014 = smul.u32 16, %s21
          %p3015 = scmp.lt.s32.totalorder %s3014, 15
          %s3016 = scalar_select %p3015, %s3014, 15
          %s3017 = smul.addr %s3016, 4
          %s3018 = scalar_lea.vmem %s6, %s3017
        $region152: #{private_encoder_forward.4} parent=119 // pred_fallthru
          _
      $region120: #{private_encoder_forward.4} parent=5 // pred_fallthru
        _
      %p3019 = scmp.le.s32.totalorder 2, %s12
      // Predicated region
      $region153: #{private_encoder_forward.4} parent=5 // pred_check
        %p3020 = pneg %p3019
      $region154: #{private_encoder_forward.4} parent=5 // pred_check_branch
        %3022 = sbr.rel (%p3020) target = $region156
      $region155: #{private_encoder_forward.4} parent=5 // pred_region
        %s3023 = ssub.s32 %s12, 2
      $region156: #{private_encoder_forward.4} parent=5 // pred_fallthru
        _
    $region6: #{private_encoder_forward.4} parent=1 // loop_footer
      %s16 = sadd.s32 1, %s12
    $region7: #{private_encoder_forward.4} parent=1 // loop_footer_branch
      %11 = sbr.rel target = $region3
    $region8: #{private_encoder_forward.4} parent=1 // loop_exit
      _

// kernel: private_encoder_forward.5
$region0: #{private_encoder_forward.5}
  #allocation0 [shape = 'u32[]', space=smem, size = 0x4, offset = 0x4, fixed_abs, tag = 'smem constant byte address 0x4 - core index']
  #allocation1 [shape = 'u32[144,128]{1,0:T(1,128)}', space=vmem, size = 0x12000, scoped, tag = 'internal scratch']
  #allocation2 [shape = 'f32[32,100]{1,0:T(8,128)}', space=vmem, size = 0x4000, scoped, tag = 'scratch operand']
  %s0 = inlined_call_operand.vmem [shape: bf16[32,3584], index: 0, kind: input, shape index: {}]
  %s1 = inlined_call_operand.vmem [shape: bf16[3584,100], index: 1, kind: input, shape index: {}]
  %s2 = inlined_call_operand.vmem [shape: f32[1,100], index: 2, kind: input, shape index: {}]
  %s3 = inlined_call_operand.vmem [shape: f32[32,100], index: 3, kind: output, shape index: {}]
  %s4 = sld [smem:[#allocation0]]
  $region76: #{private_encoder_forward.5} parent=0
    _
  %s6 = ssub.s32 1, %s4
  %s7 = scalar_select 0, %s6, %s4
  $region1: #{private_encoder_forward.5} parent=0
    #allocation3 [shape = 'u8[65536]{0}', space=vmem, size = 0x10000, scoped, tag = 'input window, operand 0']
    loop: start=0, step=1, limit=9
    $region2: #{private_encoder_forward.5} parent=1 // loop_pre_header
      _
    $region3: #{private_encoder_forward.5} parent=1 // loop_header
      %s9 = sphi 0, %s13
      %p10 = scmp.ge.s32.totalorder %s9, 9
      %s16 = sphi 0, %s28
      %s17 = sphi 0, %s24
      %s18 = sphi 0, %s16
      %s19 = sphi 0, %s17
      %s20 = sphi 0, %s18
      %s21 = sphi 0, %s19
      %s33 = sphi 0, %s35
      %s36 = sphi 0, %s33
      %s37 = sphi 0, %s36
      %s53 = sphi 0, %s37
      %s59 = sphi 0, %s61
      %s62 = sphi 0, %s59
      %s63 = sphi 0, %s62
      %s79 = sphi 0, %s63
      %s83 = sphi 0, %s83
      %s85 = sphi 0, %s83
      %s86 = sphi 0, %s85
      %s100 = sphi 0, %s86
      %s106 = sphi 0, %s108
      %s109 = sphi 0, %s106
      %s110 = sphi 0, %s109
      %s126 = sphi 0, %s110
    $region4: #{private_encoder_forward.5} parent=1 // loop_header_branch
      %12 = sbr.rel (%p10) target = $region8
    $region5: #{private_encoder_forward.5} parent=1 // loop_body
      %s14 = ssub.s32 %s9, 1
      %s15 = ssub.s32 %s9, 2
      %s22 = sadd.s32 1, %s17
      %p23 = scmp.ge.s32.totalorder %s22, 7
      %s24 = scalar_select %p23, 0, %s22
      %s25 = sadd.s32 1, %s16
      %s26 = scalar_select %p23, %s25, %s16
      %p27 = scmp.ge.s32.totalorder %s26, 1
      %s28 = scalar_select %p27, 0, %s26
      %s29 = ssub.s32 %s16, %s28
      %s30 = ssub.s32 %s17, %s24
      %s31 = sor.u32 %s29, %s30
      %p32 = scmp.eq.s32.totalorder %s31, 0
      %s34 = sadd.s32 %s33, 1
      %s35 = scalar_select %p32, %s33, %s34
      %p38 = pneg %p32
      %p39 = scmp.eq.s32.totalorder %s9, 6
      %p40 = por %p38, %p39
      %p41 = scmp.ne.s32.totalorder %s33, %s36
      %p42 = scmp.eq.s32.totalorder %s9, 0
      %p43 = por %p41, %p42
      %p44 = scmp.ne.s32.totalorder %s33, %s36
      %p45 = scmp.eq.s32.totalorder %s14, 6
      %p46 = por %p44, %p45
      %p47 = scmp.ne.s32.totalorder %s36, %s37
      %p48 = scmp.eq.s32.totalorder %s14, 0
      %p49 = por %p47, %p48
      %p50 = scmp.ne.s32.totalorder %s36, %s37
      %p51 = scmp.eq.s32.totalorder %s15, 6
      %p52 = por %p50, %p51
      %p54 = scmp.ne.s32.totalorder %s37, %s53
      %p55 = scmp.eq.s32.totalorder %s15, 0
      %p56 = por %p54, %p55
      %s57 = ssub.s32 %s17, %s24
      %p58 = scmp.eq.s32.totalorder %s57, 0
      %s60 = sadd.s32 %s59, 1
      %s61 = scalar_select %p58, %s59, %s60
      %p64 = pneg %p58
      %p65 = scmp.eq.s32.totalorder %s9, 6
      %p66 = por %p64, %p65
      %p67 = scmp.ne.s32.totalorder %s59, %s62
      %p68 = scmp.eq.s32.totalorder %s9, 0
      %p69 = por %p67, %p68
      %p70 = scmp.ne.s32.totalorder %s59, %s62
      %p71 = scmp.eq.s32.totalorder %s14, 6
      %p72 = por %p70, %p71
      %p73 = scmp.ne.s32.totalorder %s62, %s63
      %p74 = scmp.eq.s32.totalorder %s14, 0
      %p75 = por %p73, %p74
      %p76 = scmp.ne.s32.totalorder %s62, %s63
      %p77 = scmp.eq.s32.totalorder %s15, 6
      %p78 = por %p76, %p77
      %p80 = scmp.ne.s32.totalorder %s63, %s79
      %p81 = scmp.eq.s32.totalorder %s15, 0
      %p82 = por %p80, %p81
      %s84 = sadd.s32 %s83, 1
      %p87 = scmp.eq.s32.totalorder %s9, 6
      %p88 = scmp.ne.s32.totalorder %s83, %s85
      %p89 = scmp.eq.s32.totalorder %s9, 0
      %p90 = por %p88, %p89
      %p91 = scmp.ne.s32.totalorder %s83, %s85
      %p92 = scmp.eq.s32.totalorder %s14, 6
      %p93 = por %p91, %p92
      %p94 = scmp.ne.s32.totalorder %s85, %s86
      %p95 = scmp.eq.s32.totalorder %s14, 0
      %p96 = por %p94, %p95
      %p97 = scmp.ne.s32.totalorder %s85, %s86
      %p98 = scmp.eq.s32.totalorder %s15, 6
      %p99 = por %p97, %p98
      %p101 = scmp.ne.s32.totalorder %s86, %s100
      %p102 = scmp.eq.s32.totalorder %s15, 0
      %p103 = por %p101, %p102
      %s104 = ssub.s32 %s16, %s28
      %p105 = scmp.eq.s32.totalorder %s104, 0
      %s107 = sadd.s32 %s106, 1
      %s108 = scalar_select %p105, %s106, %s107
      %p111 = pneg %p105
      %p112 = scmp.eq.s32.totalorder %s9, 6
      %p113 = por %p111, %p112
      %p114 = scmp.ne.s32.totalorder %s106, %s109
      %p115 = scmp.eq.s32.totalorder %s9, 0
      %p116 = por %p114, %p115
      %p117 = scmp.ne.s32.totalorder %s106, %s109
      %p118 = scmp.eq.s32.totalorder %s14, 6
      %p119 = por %p117, %p118
      %p120 = scmp.ne.s32.totalorder %s109, %s110
      %p121 = scmp.eq.s32.totalorder %s14, 0
      %p122 = por %p120, %p121
      %p123 = scmp.ne.s32.totalorder %s109, %s110
      %p124 = scmp.eq.s32.totalorder %s15, 6
      %p125 = por %p123, %p124
      %p127 = scmp.ne.s32.totalorder %s110, %s126
      %p128 = scmp.eq.s32.totalorder %s15, 0
      %p129 = por %p127, %p128
      %p130 = scmp.le.s32.totalorder 1, %s9
      %p131 = scmp.lt.s32.totalorder %s9, 8
      %p132 = pnand %p130, %p131
      %p133 = pneg %p132
      // Predicated region
      $region9: #{private_encoder_forward.5} parent=5 // pred_check
        _
      $region10: #{private_encoder_forward.5} parent=5 // pred_check_branch
        %135 = sbr.rel (%p132) target = $region12
      $region11: #{private_encoder_forward.5} parent=5 // pred_region
        %s136 = ssub.s32 %s9, 1
        // Predicated region
        $region13: #{private_encoder_forward.5} parent=11 // pred_check
          %p137 = pneg %p96
        $region14: #{private_encoder_forward.5} parent=11 // pred_check_branch
          %139 = sbr.rel (%p137) target = $region16
        $region15: #{private_encoder_forward.5} parent=11 // pred_region
          _
        $region16: #{private_encoder_forward.5} parent=11 // pred_fallthru
          _
      $region12: #{private_encoder_forward.5} parent=5 // pred_fallthru
        _
      %p140 = scmp.lt.s32.totalorder %s9, 7
      // Predicated region
      $region17: #{private_encoder_forward.5} parent=5 // pred_check
        %p141 = pneg %p140
      $region18: #{private_encoder_forward.5} parent=5 // pred_check_branch
        %143 = sbr.rel (%p141) target = $region20
      $region19: #{private_encoder_forward.5} parent=5 // pred_region
        // Predicated region
        $region21: #{private_encoder_forward.5} parent=19 // pred_check
          %p144 = pneg %p43
        $region22: #{private_encoder_forward.5} parent=19 // pred_check_branch
          %146 = sbr.rel (%p144) target = $region24
        $region23: #{private_encoder_forward.5} parent=19 // pred_region
          %s147 = sand.u32 %s33, 1
          %s148 = sand.u32 %s33, 1
          %s149 = smul.addr %s148, 64
          %s150 = scalar_lea.vmem [#allocation3], %s149
          %s151 = smul.u32 4, %s16
          %s152 = smul.u32 4, %s17
          %s153 = smul.addr %s151, 28
          %s154 = sadd.s32 %s152, %s153
          %s155 = smul.addr %s154, 4
          %s156 = scalar_lea.vmem %s0, %s155
          // Predicated region
          $region25: #{private_encoder_forward.5} parent=23 // pred_check
            _
          $region26: #{private_encoder_forward.5} parent=23 // pred_check_branch
            %158 = sbr.rel (0) target = $region28
          $region27: #{private_encoder_forward.5} parent=23 // pred_region
            // Predicated region
            $region29: #{private_encoder_forward.5} parent=27 // pred_check
              _
            $region30: #{private_encoder_forward.5} parent=27 // pred_check_branch
              %160 = sbr.rel (0) target = $region32
            $region31: #{private_encoder_forward.5} parent=27 // pred_region
              loop: start=0, step=1, limit=1
              $region33: #{private_encoder_forward.5} parent=31 // loop_pre_header
                _
              $region34: #{private_encoder_forward.5} parent=31 // loop_header
                %s162 = sphi 0, %s166
                %p163 = scmp.ge.s32.totalorder %s162, 1
                %s167 = sphi %s156, %s156
                %s168 = sphi %s150, %s150
              $region35: #{private_encoder_forward.5} parent=31 // loop_header_branch
                %165 = sbr.rel (%p163) target = $region39
              $region36: #{private_encoder_forward.5} parent=31 // loop_body
                %v169 = vld [vmem:[%s167] sm:$0xff]
                %170 = vst [vmem:[%s168] sm:$0xff] %v169
                %v171 = vld [vmem:[%s167 + $0x8] sm:$0xff]
                %172 = vst [vmem:[%s168 + $0x8] sm:$0xff] %v171
                %v173 = vld [vmem:[%s167 + $0x70] sm:$0xff]
                %174 = vst [vmem:[%s168 + $0x10] sm:$0xff] %v173
                %v175 = vld [vmem:[%s167 + $0x78] sm:$0xff]
                %176 = vst [vmem:[%s168 + $0x18] sm:$0xff] %v175
                %v177 = vld [vmem:[%s167 + $0xe0] sm:$0xff]
                %178 = vst [vmem:[%s168 + $0x20] sm:$0xff] %v177
                %v179 = vld [vmem:[%s167 + $0xe8] sm:$0xff]
                %180 = vst [vmem:[%s168 + $0x28] sm:$0xff] %v179
                %v181 = vld [vmem:[%s167 + $0x150] sm:$0xff]
                %182 = vst [vmem:[%s168 + $0x30] sm:$0xff] %v181
                %v183 = vld [vmem:[%s167 + $0x158] sm:$0xff]
                %184 = vst [vmem:[%s168 + $0x38] sm:$0xff] %v183
              $region37: #{private_encoder_forward.5} parent=31 // loop_footer
                %s166 = sadd.s32 1, %s162
              $region38: #{private_encoder_forward.5} parent=31 // loop_footer_branch
                %161 = sbr.rel target = $region34
              $region39: #{private_encoder_forward.5} parent=31 // loop_exit
                _
            $region32: #{private_encoder_forward.5} parent=27 // pred_fallthru
              _
            // Predicated region
            $region40: #{private_encoder_forward.5} parent=27 // pred_check
              _
            $region41: #{private_encoder_forward.5} parent=27 // pred_check_branch
              %186 = sbr.rel target = $region43
            $region42: #{private_encoder_forward.5} parent=27 // pred_region
              _
            $region43: #{private_encoder_forward.5} parent=27 // pred_fallthru
              _
          $region28: #{private_encoder_forward.5} parent=23 // pred_fallthru
            _
          %187 = vnop
        $region24: #{private_encoder_forward.5} parent=19 // pred_fallthru
          _
        // Predicated region
        $region44: #{private_encoder_forward.5} parent=19 // pred_check
          %p188 = pneg %p69
        $region45: #{private_encoder_forward.5} parent=19 // pred_check_branch
          %190 = sbr.rel (%p188) target = $region47
        $region46: #{private_encoder_forward.5} parent=19 // pred_region
          %s191 = smul.u32 64, %s17
          %p192 = scmp.lt.s32.totalorder %s191, 447
          %s193 = scalar_select %p192, %s191, 447
          %s194 = smul.addr %s193, 4
          %s195 = scalar_lea.vmem %s1, %s194
          %s196 = smul.u32 64, %s17
        $region47: #{private_encoder_forward.5} parent=19 // pred_fallthru
          _
      $region20: #{private_encoder_forward.5} parent=5 // pred_fallthru
        _
      %p197 = scmp.le.s32.totalorder 1, %s9
      %p198 = scmp.lt.s32.totalorder %s9, 8
      %p199 = pnand %p197, %p198
      %p200 = pneg %p199
      // Predicated region
      $region48: #{private_encoder_forward.5} parent=5 // pred_check
        _
      $region49: #{private_encoder_forward.5} parent=5 // pred_check_branch
        %202 = sbr.rel (%p199) target = $region51
      $region50: #{private_encoder_forward.5} parent=5 // pred_region
        %s203 = ssub.s32 %s9, 1
        %s204 = sand.u32 %s36, 1
        %s205 = sand.u32 %s36, 1
        %s206 = smul.addr %s205, 64
        %s207 = scalar_lea.vmem [#allocation3], %s206
        // Predicated region
        $region52: #{private_encoder_forward.5} parent=50 // pred_check
          %p208 = pneg %p49
        $region53: #{private_encoder_forward.5} parent=50 // pred_check_branch
          %210 = sbr.rel (%p208) target = $region55
        $region54: #{private_encoder_forward.5} parent=50 // pred_region
          _
        $region55: #{private_encoder_forward.5} parent=50 // pred_fallthru
          _
        %s211 = sand.u32 %s36, 1
        %s212 = sand.u32 %s36, 1
        %s213 = smul.addr %s212, 64
        %s214 = scalar_lea.vmem [#allocation3], %s213
        %p215 = pneg %p49
        %p216 = pneg %p46
        %s217 = smul.u32 64, %s19
        %p218 = scmp.lt.s32.totalorder %s217, 447
        %s219 = scalar_select %p218, %s217, 447
        %s220 = smul.addr %s219, 4
        %s221 = scalar_lea.vmem %s1, %s220
        %p222 = pneg %p75
        %p223 = pneg %p72
        %p224 = pneg %p96
        %p225 = pneg %p93
        %p226 = pneg %p122
        %p227 = pneg %p119
        %s228 = smul.u32 4, %s18
        %p229 = scmp.lt.s32.totalorder %s228, 3
        %s230 = scalar_select %p229, %s228, 3
        %s231 = smul.addr %s230, 8
        %s232 = scalar_lea.vmem %s3, %s231
        %s233 = smul.u32 4, %s18
        %s234 = smul.u32 4, %s19
        %s235 = smul.u32 64, %s19
        %p236 = scmp.lt.s32.totalorder %s235, 447
        %s237 = scalar_select %p236, %s235, 447
        %s238 = smul.addr %s237, 4
        %s239 = scalar_lea.vmem %s1, %s238
        %s240 = smul.u32 64, %s19
        %s241 = smul.u32 4, %s18
        %p242 = scmp.lt.s32.totalorder %s241, 3
        %s243 = scalar_select %p242, %s241, 3
        %s244 = smul.addr %s243, 8
        %s245 = scalar_lea.vmem %s3, %s244
        %s246 = smul.u32 4, %s18
        %p248 = scmp.eq.s32.totalorder %s19, 0
        // Predicated region
        $region56: #{private_encoder_forward.5} parent=50 // pred_check
          %p249 = pneg %p248
        $region57: #{private_encoder_forward.5} parent=50 // pred_check_branch
          %251 = sbr.rel (%p249) target = $region59
        $region58: #{private_encoder_forward.5} parent=50 // pred_region
          %vm252 = vcmask 818176
          %253 = vst.msk [vmem:[#allocation2] sm:$0xff] %vm252, 0.0
          %254 = vst.msk [vmem:[#allocation2 + $0x8] sm:$0xff] %vm252, 0.0
          %255 = vst.msk [vmem:[#allocation2 + $0x10] sm:$0xff] %vm252, 0.0
          %256 = vst.msk [vmem:[#allocation2 + $0x18] sm:$0xff] %vm252, 0.0
        $region59: #{private_encoder_forward.5} parent=50 // pred_fallthru
          _
        %v257 = vld [vmem:[#allocation2] sm:$0xff]
        %v258 = vld [vmem:[#allocation2 + $0x8] sm:$0xff]
        %v259 = vld [vmem:[#allocation2 + $0x10] sm:$0xff]
        %v260 = vld [vmem:[#allocation2 + $0x18] sm:$0xff]
        %v261 = vld [vmem:[%s207] sm:$0xff]
        %v262 = vld [vmem:[%s207 + $0x8] sm:$0xff]
        %v263 = vld [vmem:[%s207 + $0x10] sm:$0xff]
        %v264 = vld [vmem:[%s207 + $0x18] sm:$0xff]
        %v265 = vld [vmem:[%s207 + $0x20] sm:$0xff]
        %v266 = vld [vmem:[%s207 + $0x28] sm:$0xff]
        %v267 = vld [vmem:[%s207 + $0x30] sm:$0xff]
        %v268 = vld [vmem:[%s207 + $0x38] sm:$0xff]
        %v269 = vld [vmem:[%s239] sm:$0xf]
        %v270 = vld [vmem:[%s239 + $0x4] sm:$0xf]
        %v271 = vld [vmem:[%s239 + $0x8] sm:$0xf]
        %v272 = vld [vmem:[%s239 + $0xc] sm:$0xf]
        %v273 = vld [vmem:[%s239 + $0x10] sm:$0xf]
        %v274 = vld [vmem:[%s239 + $0x14] sm:$0xf]
        %v275 = vld [vmem:[%s239 + $0x18] sm:$0xf]
        %v276 = vld [vmem:[%s239 + $0x1c] sm:$0xf]
        %v277 = vld [vmem:[%s239 + $0x20] sm:$0xf]
        %v278 = vld [vmem:[%s239 + $0x24] sm:$0xf]
        %v279 = vld [vmem:[%s239 + $0x28] sm:$0xf]
        %v280 = vld [vmem:[%s239 + $0x2c] sm:$0xf]
        %v281 = vld [vmem:[%s239 + $0x30] sm:$0xf]
        %v282 = vld [vmem:[%s239 + $0x34] sm:$0xf]
        %v283 = vld [vmem:[%s239 + $0x38] sm:$0xf]
        %v284 = vld [vmem:[%s239 + $0x3c] sm:$0xf]
        %v285 = vld [vmem:[%s239 + $0x40] sm:$0xf]
        %v286 = vld [vmem:[%s239 + $0x44] sm:$0xf]
        %v287 = vld [vmem:[%s239 + $0x48] sm:$0xf]
        %v288 = vld [vmem:[%s239 + $0x4c] sm:$0xf]
        %v289 = vld [vmem:[%s239 + $0x50] sm:$0xf]
        %v290 = vld [vmem:[%s239 + $0x54] sm:$0xf]
        %v291 = vld [vmem:[%s239 + $0x58] sm:$0xf]
        %v292 = vld [vmem:[%s239 + $0x5c] sm:$0xf]
        %v293 = vld [vmem:[%s239 + $0x60] sm:$0xf]
        %v294 = vld [vmem:[%s239 + $0x64] sm:$0xf]
        %v295 = vld [vmem:[%s239 + $0x68] sm:$0xf]
        %v296 = vld [vmem:[%s239 + $0x6c] sm:$0xf]
        %v297 = vld [vmem:[%s239 + $0x70] sm:$0xf]
        %v298 = vld [vmem:[%s239 + $0x74] sm:$0xf]
        %v299 = vld [vmem:[%s239 + $0x78] sm:$0xf]
        %v300 = vld [vmem:[%s239 + $0x7c] sm:$0xf]
        %v301 = vld [vmem:[%s239 + $0x80] sm:$0xf]
        %v302 = vld [vmem:[%s239 + $0x84] sm:$0xf]
        %v303 = vld [vmem:[%s239 + $0x88] sm:$0xf]
        %v304 = vld [vmem:[%s239 + $0x8c] sm:$0xf]
        %v305 = vld [vmem:[%s239 + $0x90] sm:$0xf]
        %v306 = vld [vmem:[%s239 + $0x94] sm:$0xf]
        %v307 = vld [vmem:[%s239 + $0x98] sm:$0xf]
        %v308 = vld [vmem:[%s239 + $0x9c] sm:$0xf]
        %v309 = vld [vmem:[%s239 + $0xa0] sm:$0xf]
        %v310 = vld [vmem:[%s239 + $0xa4] sm:$0xf]
        %v311 = vld [vmem:[%s239 + $0xa8] sm:$0xf]
        %v312 = vld [vmem:[%s239 + $0xac] sm:$0xf]
        %v313 = vld [vmem:[%s239 + $0xb0] sm:$0xf]
        %v314 = vld [vmem:[%s239 + $0xb4] sm:$0xf]
        %v315 = vld [vmem:[%s239 + $0xb8] sm:$0xf]
        %v316 = vld [vmem:[%s239 + $0xbc] sm:$0xf]
        %v317 = vld [vmem:[%s239 + $0xc0] sm:$0xf]
        %v318 = vld [vmem:[%s239 + $0xc4] sm:$0xf]
        %v319 = vld [vmem:[%s239 + $0xc8] sm:$0xf]
        %v320 = vld [vmem:[%s239 + $0xcc] sm:$0xf]
        %v321 = vld [vmem:[%s239 + $0xd0] sm:$0xf]
        %v322 = vld [vmem:[%s239 + $0xd4] sm:$0xf]
        %v323 = vld [vmem:[%s239 + $0xd8] sm:$0xf]
        %v324 = vld [vmem:[%s239 + $0xdc] sm:$0xf]
        %v325 = vld [vmem:[%s239 + $0xe0] sm:$0xf]
        %v326 = vld [vmem:[%s239 + $0xe4] sm:$0xf]
        %v327 = vld [vmem:[%s239 + $0xe8] sm:$0xf]
        %v328 = vld [vmem:[%s239 + $0xec] sm:$0xf]
        %v329 = vld [vmem:[%s239 + $0xf0] sm:$0xf]
        %v330 = vld [vmem:[%s239 + $0xf4] sm:$0xf]
        %v331 = vld [vmem:[%s239 + $0xf8] sm:$0xf]
        %v332 = vld [vmem:[%s239 + $0xfc] sm:$0xf]
        %v341 = vunpack.c.l.b16 %v261
        %v342 = vunpack.c.h.b16 %v261
        %v343 = vunpack.c.l.b16 %v262
        %v344 = vunpack.c.h.b16 %v262
        %v345 = vunpack.c.l.b16 %v263
        %v346 = vunpack.c.h.b16 %v263
        %v347 = vunpack.c.l.b16 %v264
        %v348 = vunpack.c.h.b16 %v264
        %v349 = vunpack.c.l.b16 %v265
        %v350 = vunpack.c.h.b16 %v265
        %v351 = vunpack.c.l.b16 %v266
        %v352 = vunpack.c.h.b16 %v266
        %v353 = vunpack.c.l.b16 %v267
        %v354 = vunpack.c.h.b16 %v267
        %v355 = vunpack.c.l.b16 %v268
        %v356 = vunpack.c.h.b16 %v268
        %v357 = vpack.c.b16 %v345, %v341
        %v358 = vpack.c.b16 %v346, %v342
        %v359 = vpack.c.b16 %v347, %v343
        %v360 = vpack.c.b16 %v348, %v344
        %v361 = vpack.c.b16 %v353, %v349
        %v362 = vpack.c.b16 %v354, %v350
        %v363 = vpack.c.b16 %v355, %v351
        %v364 = vpack.c.b16 %v356, %v352
        %v437 = vunpack.c.l.b16 %v269
        %v438 = vunpack.c.l.b16 %v270
        %v439 = vunpack.c.l.b16 %v271
        %v440 = vunpack.c.l.b16 %v272
        %v441 = vunpack.c.l.b16 %v273
        %v442 = vunpack.c.l.b16 %v274
        %v443 = vunpack.c.l.b16 %v275
        %v444 = vunpack.c.l.b16 %v276
        %v445 = vunpack.c.l.b16 %v277
        %v446 = vunpack.c.l.b16 %v278
        %v447 = vunpack.c.l.b16 %v279
        %v448 = vunpack.c.l.b16 %v280
        %v449 = vunpack.c.l.b16 %v281
        %v450 = vunpack.c.l.b16 %v282
        %v451 = vunpack.c.l.b16 %v283
        %v452 = vunpack.c.l.b16 %v284
        %v453 = vunpack.c.l.b16 %v285
        %v454 = vunpack.c.l.b16 %v286
        %v455 = vunpack.c.l.b16 %v287
        %v456 = vunpack.c.l.b16 %v288
        %v457 = vunpack.c.l.b16 %v289
        %v458 = vunpack.c.l.b16 %v290
        %v459 = vunpack.c.l.b16 %v291
        %v460 = vunpack.c.l.b16 %v292
        %v461 = vunpack.c.l.b16 %v293
        %v462 = vunpack.c.l.b16 %v294
        %v463 = vunpack.c.l.b16 %v295
        %v464 = vunpack.c.l.b16 %v296
        %v465 = vunpack.c.l.b16 %v297
        %v466 = vunpack.c.l.b16 %v298
        %v467 = vunpack.c.l.b16 %v299
        %v468 = vunpack.c.l.b16 %v300
        %v469 = vunpack.c.l.b16 %v301
        %v470 = vunpack.c.l.b16 %v302
        %v471 = vunpack.c.l.b16 %v303
        %v472 = vunpack.c.l.b16 %v304
        %v473 = vunpack.c.l.b16 %v305
        %v474 = vunpack.c.l.b16 %v306
        %v475 = vunpack.c.l.b16 %v307
        %v476 = vunpack.c.l.b16 %v308
        %v477 = vunpack.c.l.b16 %v309
        %v478 = vunpack.c.l.b16 %v310
        %v479 = vunpack.c.l.b16 %v311
        %v480 = vunpack.c.l.b16 %v312
        %v481 = vunpack.c.l.b16 %v313
        %v482 = vunpack.c.l.b16 %v314
        %v483 = vunpack.c.l.b16 %v315
        %v484 = vunpack.c.l.b16 %v316
        %v485 = vunpack.c.l.b16 %v317
        %v486 = vunpack.c.l.b16 %v318
        %v487 = vunpack.c.l.b16 %v319
        %v488 = vunpack.c.l.b16 %v320
        %v489 = vunpack.c.l.b16 %v321
        %v490 = vunpack.c.l.b16 %v322
        %v491 = vunpack.c.l.b16 %v323
        %v492 = vunpack.c.l.b16 %v324
        %v493 = vunpack.c.l.b16 %v325
        %v494 = vunpack.c.l.b16 %v326
        %v495 = vunpack.c.l.b16 %v327
        %v496 = vunpack.c.l.b16 %v328
        %v497 = vunpack.c.l.b16 %v329
        %v498 = vunpack.c.l.b16 %v330
        %v499 = vunpack.c.l.b16 %v331
        %v500 = vunpack.c.l.b16 %v332
        %v501 = vpack.c.b16 %v438, %v437
        %v502 = vpack.c.b16 %v440, %v439
        %v503 = vpack.c.b16 %v442, %v441
        %v504 = vpack.c.b16 %v444, %v443
        %v505 = vpack.c.b16 %v446, %v445
        %v506 = vpack.c.b16 %v448, %v447
        %v507 = vpack.c.b16 %v450, %v449
        %v508 = vpack.c.b16 %v452, %v451
        %v509 = vpack.c.b16 %v454, %v453
        %v510 = vpack.c.b16 %v456, %v455
        %v511 = vpack.c.b16 %v458, %v457
        %v512 = vpack.c.b16 %v460, %v459
        %v513 = vpack.c.b16 %v462, %v461
        %v514 = vpack.c.b16 %v464, %v463
        %v515 = vpack.c.b16 %v466, %v465
        %v516 = vpack.c.b16 %v468, %v467
        %v517 = vpack.c.b16 %v470, %v469
        %v518 = vpack.c.b16 %v472, %v471
        %v519 = vpack.c.b16 %v474, %v473
        %v520 = vpack.c.b16 %v476, %v475
        %v521 = vpack.c.b16 %v478, %v477
        %v522 = vpack.c.b16 %v480, %v479
        %v523 = vpack.c.b16 %v482, %v481
        %v524 = vpack.c.b16 %v484, %v483
        %v525 = vpack.c.b16 %v486, %v485
        %v526 = vpack.c.b16 %v488, %v487
        %v527 = vpack.c.b16 %v490, %v489
        %v528 = vpack.c.b16 %v492, %v491
        %v529 = vpack.c.b16 %v494, %v493
        %v530 = vpack.c.b16 %v496, %v495
        %v531 = vpack.c.b16 %v498, %v497
        %v532 = vpack.c.b16 %v500, %v499
        %565 = vmatprep.subr.bf16.mxu0 0
        %566 = vmatpush1.bf16.msra.mxu0 %v501
        %567 = vmatprep.subr.bf16.mxu0 0
        %568 = vmatpush1.bf16.msra.mxu0 %v502
        %569 = vmatprep.subr.bf16.mxu0 0
        %570 = vmatpush1.bf16.msra.mxu0 %v503
        %571 = vmatprep.subr.bf16.mxu0 0
        %572 = vmatpush1.bf16.msra.mxu0 %v504
        %573 = vmatprep.subr.bf16.mxu0 0
        %574 = vmatpush1.bf16.msra.mxu0 %v505
        %575 = vmatprep.subr.bf16.mxu0 0
        %576 = vmatpush1.bf16.msra.mxu0 %v506
        %577 = vmatprep.subr.bf16.mxu0 0
        %578 = vmatpush1.bf16.msra.mxu0 %v507
        %579 = vmatprep.subr.bf16.mxu0 0
        %580 = vmatpush1.bf16.msra.mxu0 %v508
        %581 = vmatprep.subr.bf16.mxu0 0
        %582 = vmatpush1.bf16.msra.mxu0 %v509
        %583 = vmatprep.subr.bf16.mxu0 0
        %584 = vmatpush1.bf16.msra.mxu0 %v510
        %585 = vmatprep.subr.bf16.mxu0 0
        %586 = vmatpush1.bf16.msra.mxu0 %v511
        %587 = vmatprep.subr.bf16.mxu0 0
        %588 = vmatpush1.bf16.msra.mxu0 %v512
        %589 = vmatprep.subr.bf16.mxu0 0
        %590 = vmatpush1.bf16.msra.mxu0 %v513
        %591 = vmatprep.subr.bf16.mxu0 0
        %592 = vmatpush1.bf16.msra.mxu0 %v514
        %593 = vmatprep.subr.bf16.mxu0 0
        %594 = vmatpush1.bf16.msra.mxu0 %v515
        %595 = vmatprep.subr.bf16.mxu0 0
        %596 = vmatpush1.bf16.msra.mxu0 %v516
        %597 = vmatprep.mubr.bf16.mxu0 %v358
        %598 = vmatmul.mubr.bf16.gmra.mrb[0].mxu0 %v357
        %v599 = vpop.f32.mrb[0].mxu0
        %v600 = vadd.f32 0.0, %v599
        %v601 = vpop.f32.mrb[0].mxu0
        %v602 = vpop.f32.mrb[0].mxu0
        %v603 = vadd.f32 0.0, %v602
        %v604 = vpop.f32.mrb[0].mxu0
        %605 = vmatprep.mubr.bf16.mxu0 %v362
        %606 = vmatmul.mubr.bf16.gmra.mrb[0].mxu0 %v361
        %v607 = vpop.f32.mrb[0].mxu0
        %v608 = vadd.f32 0.0, %v607
        %v609 = vpop.f32.mrb[0].mxu0
        %v610 = vpop.f32.mrb[0].mxu0
        %v611 = vadd.f32 0.0, %v610
        %v612 = vpop.f32.mrb[0].mxu0
        %613 = vdwg.mxu0
        %614 = vmatprep.subr.bf16.mxu0 0
        %615 = vmatpush1.bf16.msra.mxu0 %v517
        %616 = vmatprep.subr.bf16.mxu0 0
        %617 = vmatpush1.bf16.msra.mxu0 %v518
        %618 = vmatprep.subr.bf16.mxu0 0
        %619 = vmatpush1.bf16.msra.mxu0 %v519
        %620 = vmatprep.subr.bf16.mxu0 0
        %621 = vmatpush1.bf16.msra.mxu0 %v520
        %622 = vmatprep.subr.bf16.mxu0 0
        %623 = vmatpush1.bf16.msra.mxu0 %v521
        %624 = vmatprep.subr.bf16.mxu0 0
        %625 = vmatpush1.bf16.msra.mxu0 %v522
        %626 = vmatprep.subr.bf16.mxu0 0
        %627 = vmatpush1.bf16.msra.mxu0 %v523
        %628 = vmatprep.subr.bf16.mxu0 0
        %629 = vmatpush1.bf16.msra.mxu0 %v524
        %630 = vmatprep.subr.bf16.mxu0 0
        %631 = vmatpush1.bf16.msra.mxu0 %v525
        %632 = vmatprep.subr.bf16.mxu0 0
        %633 = vmatpush1.bf16.msra.mxu0 %v526
        %634 = vmatprep.subr.bf16.mxu0 0
        %635 = vmatpush1.bf16.msra.mxu0 %v527
        %636 = vmatprep.subr.bf16.mxu0 0
        %637 = vmatpush1.bf16.msra.mxu0 %v528
        %638 = vmatprep.subr.bf16.mxu0 0
        %639 = vmatpush1.bf16.msra.mxu0 %v529
        %640 = vmatprep.subr.bf16.mxu0 0
        %641 = vmatpush1.bf16.msra.mxu0 %v530
        %642 = vmatprep.subr.bf16.mxu0 0
        %643 = vmatpush1.bf16.msra.mxu0 %v531
        %644 = vmatprep.subr.bf16.mxu0 0
        %645 = vmatpush1.bf16.msra.mxu0 %v532
        %646 = vmatprep.mubr.bf16.mxu0 %v360
        %647 = vmatmul.mubr.bf16.gmra.mrb[0].mxu0 %v359
        %v648 = vpop.f32.mrb[0].mxu0
        %v649 = vadd.f32 %v600, %v648
        %v650 = vpop.f32.mrb[0].mxu0
        %v651 = vpop.f32.mrb[0].mxu0
        %v652 = vadd.f32 %v603, %v651
        %v653 = vpop.f32.mrb[0].mxu0
        %654 = vmatprep.mubr.bf16.mxu0 %v364
        %655 = vmatmul.mubr.bf16.gmra.mrb[0].mxu0 %v363
        %v656 = vpop.f32.mrb[0].mxu0
        %v657 = vadd.f32 %v608, %v656
        %v658 = vpop.f32.mrb[0].mxu0
        %v659 = vpop.f32.mrb[0].mxu0
        %v660 = vadd.f32 %v611, %v659
        %v661 = vpop.f32.mrb[0].mxu0
        %662 = vdwg.mxu0
        %v663 = vadd.f32 %v257, %v649
        %v664 = vadd.f32 %v258, %v652
        %v665 = vadd.f32 %v259, %v657
        %v666 = vadd.f32 %v260, %v660
        %vm667 = vcmask 818176
        %668 = vst.msk [vmem:[#allocation2] sm:$0xff] %vm667, %v663
        %669 = vst.msk [vmem:[#allocation2 + $0x8] sm:$0xff] %vm667, %v664
        %670 = vst.msk [vmem:[#allocation2 + $0x10] sm:$0xff] %vm667, %v665
        %671 = vst.msk [vmem:[#allocation2 + $0x18] sm:$0xff] %vm667, %v666
        %p672 = scmp.eq.s32.totalorder %s19, 6
        // Predicated region
        $region60: #{private_encoder_forward.5} parent=50 // pred_check
          %p673 = pneg %p672
        $region61: #{private_encoder_forward.5} parent=50 // pred_check_branch
          %675 = sbr.rel (%p673) target = $region63
        $region62: #{private_encoder_forward.5} parent=50 // pred_region
          %v676 = vld [vmem:[#allocation2] sm:$0xff]
          %v677 = vld [vmem:[#allocation2 + $0x8] sm:$0xff]
          %v678 = vld [vmem:[#allocation2 + $0x10] sm:$0xff]
          %v679 = vld [vmem:[#allocation2 + $0x18] sm:$0xff]
          %v680 = vld [vmem:[%s2] sm:$0x1]
          %v682 = vlaneseq
          %v683 = vshrl.u32 %v682, 7
          %v684 = vsub.s32 0, %v683
          %v685 = vrot.slane %v680, %v684
          %v687 = vadd.f32 %v676, %v685
          %v688 = vadd.f32 %v677, %v685
          %v689 = vadd.f32 %v678, %v685
          %v690 = vadd.f32 %v679, %v685
          %v691 = vmax.f32 %v687, 0.0
          %v692 = vmax.f32 %v688, 0.0
          %v693 = vmax.f32 %v689, 0.0
          %v694 = vmax.f32 %v690, 0.0
          %695 = vst.msk [vmem:[%s245] sm:$0xff] %vm667, %v691
          %696 = vst.msk [vmem:[%s245 + $0x8] sm:$0xff] %vm667, %v692
          %697 = vst.msk [vmem:[%s245 + $0x10] sm:$0xff] %vm667, %v693
          %698 = vst.msk [vmem:[%s245 + $0x18] sm:$0xff] %vm667, %v694
        $region63: #{private_encoder_forward.5} parent=50 // pred_fallthru
          _
        %s699 = smul.u32 4, %s18
        %p700 = scmp.lt.s32.totalorder %s699, 3
        %s701 = scalar_select %p700, %s699, 3
        %s702 = smul.addr %s701, 8
        %s703 = scalar_lea.vmem %s3, %s702
        // Predicated region
        $region64: #{private_encoder_forward.5} parent=50 // pred_check
          %p704 = pneg %p119
        $region65: #{private_encoder_forward.5} parent=50 // pred_check_branch
          %706 = sbr.rel (%p704) target = $region67
        $region66: #{private_encoder_forward.5} parent=50 // pred_region
          %s707 = smul.u32 4, %s18
        $region67: #{private_encoder_forward.5} parent=50 // pred_fallthru
          _
        // Predicated region
        $region68: #{private_encoder_forward.5} parent=50 // pred_check
          %p708 = pneg %p119
        $region69: #{private_encoder_forward.5} parent=50 // pred_check_branch
          %710 = sbr.rel (%p708) target = $region71
        $region70: #{private_encoder_forward.5} parent=50 // pred_region
          %s711 = smul.u32 4, %s18
          %p712 = scmp.lt.s32.totalorder %s711, 3
          %s713 = scalar_select %p712, %s711, 3
          %s714 = smul.addr %s713, 8
          %s715 = scalar_lea.vmem %s3, %s714
        $region71: #{private_encoder_forward.5} parent=50 // pred_fallthru
          _
      $region51: #{private_encoder_forward.5} parent=5 // pred_fallthru
        _
      %p716 = scmp.le.s32.totalorder 2, %s9
      // Predicated region
      $region72: #{private_encoder_forward.5} parent=5 // pred_check
        %p717 = pneg %p716
      $region73: #{private_encoder_forward.5} parent=5 // pred_check_branch
        %719 = sbr.rel (%p717) target = $region75
      $region74: #{private_encoder_forward.5} parent=5 // pred_region
        %s720 = ssub.s32 %s9, 2
      $region75: #{private_encoder_forward.5} parent=5 // pred_fallthru
        _
    $region6: #{private_encoder_forward.5} parent=1 // loop_footer
      %s13 = sadd.s32 1, %s9
    $region7: #{private_encoder_forward.5} parent=1 // loop_footer_branch
      %8 = sbr.rel target = $region3
    $region8: #{private_encoder_forward.5} parent=1 // loop_exit
      _

</llo_original>
